<compile_context>
chip_gen: v7x
topology: tpu7x:2x2x1
jax: 0.10.0
libtpu: 0.0.40
codegen_flags: <defaults>
</compile_context>

<pallas_src>
import numpy as np
import jax
import jax.numpy as jnp
from jax.experimental import pallas as pl
from jax.experimental.pallas import tpu as pltpu

LATENT_DIM = 20
BOARD = 4                  # 4x4 board -> GAME_BOARD_SIZE = 16 spatial cells
HW = BOARD * BOARD         # 16
IN_CH = 17
X_DIM = IN_CH * HW         # 272
X_PAD = 384                # 3 * 128, lane-dense padding of the 272-wide axis
PACK_W = 128               # packed [mu|logvar|q] output width
Q_OFF = 2 * LATENT_DIM     # q lanes 40:44 in the packed slab


# ---------------------------------------------------------------------------
# Parameter setup glue (plain JAX / numpy) — runs once in prepare_params()
# ---------------------------------------------------------------------------
def _shift_matrices():
    """S[t, p, s] = 1 iff spatial cell p feeds output cell s at 3x3 tap t (pad=1)."""
    S = np.zeros((9, HW, HW), np.float32)
    for ky in range(3):
        for kx in range(3):
            t = ky * 3 + kx
            for y in range(BOARD):
                for x in range(BOARD):
                    sy, sx = y + ky - 1, x + kx - 1
                    if 0 <= sy < BOARD and 0 <= sx < BOARD:
                        S[t, sy * BOARD + sx, y * BOARD + x] = 1.0
    return jnp.asarray(S)


def conv_to_dense(w, S):
    """OIHW 3x3 conv weight (stride 1, pad 1) -> dense (Cin*HW, Cout*HW) matrix."""
    c_out, c_in = w.shape[0], w.shape[1]
    wt = w.reshape(c_out, c_in, 9)
    E = jnp.einsum('oct,tps->cpos', wt, S, precision=jax.lax.Precision.HIGHEST)
    return E.reshape(c_in * HW, c_out * HW)


def convT_to_dense(w, S):
    """ConvTranspose2d weight (Cin, Cout, 3, 3), stride 1, pad 1 -> dense matrix.
    Identity: convT(x, W) == conv(x, flip_hw(W).transpose(1, 0))."""
    wc = jnp.flip(w, axis=(2, 3)).transpose(1, 0, 2, 3)
    return conv_to_dense(wc, S)


def flat_conv_bias(b):
    return jnp.repeat(b, HW)[None, :]     # bias_flat[o*HW + s] = b[o]


def init_params(key):
    ks = iter(jax.random.split(key, 16))

    def lin(out_f, in_f):
        lim = (6.0 / (in_f + out_f)) ** 0.5
        w = jax.random.uniform(next(ks), (out_f, in_f), jnp.float32, -lim, lim)
        return w, jnp.full((out_f,), 0.01, jnp.float32)

    def conv(out_c, in_c):
        lim = (6.0 / ((in_c + out_c) * 9)) ** 0.5
        w = jax.random.uniform(next(ks), (out_c, in_c, 3, 3), jnp.float32, -lim, lim)
        return w, jnp.full((out_c,), 0.01, jnp.float32)

    def convT(in_c, out_c):
        lim = (6.0 / ((in_c + out_c) * 9)) ** 0.5
        w = jax.random.uniform(next(ks), (in_c, out_c, 3, 3), jnp.float32, -lim, lim)
        return w, jnp.full((out_c,), 0.01, jnp.float32)

    p = {}
    p['we1'], p['be1'] = conv(40, IN_CH)            # encoder_l1
    p['we2'], p['be2'] = conv(40, 40)               # encoder_l2
    p['wl3'], p['bl3'] = lin(200, 40 * HW)          # encoder_l3
    p['wmu'], p['bmu'] = lin(LATENT_DIM, 200)       # fc_mu
    p['wsg'], p['bsg'] = lin(LATENT_DIM, 200)       # fc_sigma
    p['wd1'], p['bd1'] = lin(200, LATENT_DIM)       # decoder_l1
    p['wd2'], p['bd2'] = lin(40 * HW, 200)          # decoder_l2
    p['wd3'], p['bd3'] = convT(40, 40)              # decoder_l3 (ConvTranspose2d)
    p['wd4'], p['bd4'] = convT(40, IN_CH)           # decoder_l4 (ConvTranspose2d)
    p['wq1'], p['bq1'] = lin(100, LATENT_DIM)       # dqn.fc1
    p['wq2'], p['bq2'] = lin(4, 100)                # dqn.fc2
    return p


def prepare_params(p):
    """One-time lowering of the PyTorch-style params to kernel-ready, padded,
    bf16 dense matrices (f32 biases).  Hoisted out of the per-call path."""
    S = _shift_matrices()
    bf = lambda a: a.astype(jnp.bfloat16)

    # Conv1 rows / convT4 columns padded to the lane-dense 384-wide x axis.
    e1 = jnp.zeros((X_PAD, 40 * HW), jnp.float32).at[:X_DIM].set(
        conv_to_dense(p['we1'], S))
    d4 = jnp.zeros((40 * HW, X_PAD), jnp.float32).at[:, :X_DIM].set(
        convT_to_dense(p['wd4'], S))
    bd4 = jnp.zeros((1, X_PAD), jnp.float32).at[:, :X_DIM].set(
        flat_conv_bias(p['bd4']))

    # fc_mu | fc_sigma fused and padded to 128 lanes: [mu(0:20) | logvar(20:40) | 0].
    wms = (jnp.zeros((200, PACK_W), jnp.float32)
           .at[:, :LATENT_DIM].set(p['wmu'].T)
           .at[:, LATENT_DIM:2 * LATENT_DIM].set(p['wsg'].T))
    bms = (jnp.zeros((1, PACK_W), jnp.float32)
           .at[0, :LATENT_DIM].set(p['bmu'])
           .at[0, LATENT_DIM:2 * LATENT_DIM].set(p['bsg']))

    # dqn.fc2 padded to 128 lanes with q in lanes 40:44 (the lanes wms leaves 0),
    # so packed = ms + q_pad needs no concatenate / lane shuffles.
    wq2 = jnp.zeros((100, PACK_W), jnp.float32).at[:, Q_OFF:Q_OFF + 4].set(p['wq2'].T)
    bq2 = jnp.zeros((1, PACK_W), jnp.float32).at[0, Q_OFF:Q_OFF + 4].set(p['bq2'])

    weights = (
        bf(e1), flat_conv_bias(p['be1']),
        bf(conv_to_dense(p['we2'], S)), flat_conv_bias(p['be2']),
        bf(p['wl3'].T), p['bl3'][None, :],
        bf(wms), bms,
        bf(p['wd1'].T), p['bd1'][None, :],
        bf(p['wd2'].T), p['bd2'][None, :],
        bf(convT_to_dense(p['wd3'], S)), flat_conv_bias(p['bd3']),
        bf(d4), bd4,
        bf(p['wq1'].T), p['bq1'][None, :],
        bf(wq2), bq2,
    )
    return tuple(jax.block_until_ready(w) for w in weights)


# ---------------------------------------------------------------------------
# Pallas kernel: the entire forward pass (all matmuls + activations)
# ---------------------------------------------------------------------------
def _vae_dqn_kernel(x_ref,
                    e1_ref, be1_ref, e2_ref, be2_ref,
                    wl3_ref, bl3_ref, wms_ref, bms_ref,
                    wd1_ref, bd1_ref, wd2_ref, bd2_ref,
                    d3_ref, bd3_ref, d4_ref, bd4_ref,
                    wq1_ref, bq1_ref, wq2_ref, bq2_ref,
                    packed_ref, xhat_ref):
    # bf16 operands on the MXU, f32 accumulation; bias add / activations in f32.
    def mm(a, w_ref, b_ref):
        return jnp.dot(a.astype(jnp.bfloat16), w_ref[...],
                       preferred_element_type=jnp.float32) + b_ref[...]

    relu = lambda v: jnp.maximum(v, 0.0)
    # Exactly 1 exp + 1 EUP approx reciprocal per element (dead terms removed).
    sigmoid = lambda v: pl.reciprocal(1.0 + jnp.exp(-v), approx=True)

    xe = x_ref[...]                                      # (TB, 384) bf16
    # eps lives in the pad lanes 272:292 of the input slab (conv rows there are 0).
    eps = xe[:, X_DIM:X_DIM + LATENT_DIM].astype(jnp.float32)

    # --- VAE encoder ---
    h1 = relu(mm(xe, e1_ref, be1_ref))                   # conv1 + ReLU  -> (TB, 640)
    h2 = relu(mm(h1, e2_ref, be2_ref))                   # conv2 + ReLU  -> (TB, 640)
    h3 = jnp.tanh(mm(h2, wl3_ref, bl3_ref))              # linear + Tanh -> (TB, 200)
    ms = mm(h3, wms_ref, bms_ref)                        # [mu|logvar|0] (TB, 128)
    mu = ms[:, :LATENT_DIM]
    logvar = ms[:, LATENT_DIM:2 * LATENT_DIM]
    packed_ref[...] = ms                                 # store heads early

    # --- reparameterize ---
    std = jnp.exp(0.5 * logvar)
    z = eps * std + mu

    # --- VAE decoder ---
    h4 = jnp.tanh(mm(z, wd1_ref, bd1_ref))               # (TB, 200)
    h5 = relu(mm(h4, wd2_ref, bd2_ref))                  # (TB, 640)
    h6 = relu(mm(h5, d3_ref, bd3_ref))                   # convT3 + ReLU (TB, 640)
    xhat = sigmoid(mm(h6, d4_ref, bd4_ref))              # convT4 + sigmoid (TB, 384)
    xhat_ref[...] = xhat.astype(xhat_ref.dtype)          # bf16 store (half HBM traffic)

    # --- DQN on exp(0.5*logvar) + mu ---
    hq = relu(mm(std + mu, wq1_ref, bq1_ref))            # (TB, 100)
    qp = mm(hq, wq2_ref, bq2_ref)                        # [0|0|q|0]    (TB, 128)
    packed_ref[...] += qp                                # lane-dense add, no concat


def _default_vmem_limit():
    cap = 128 * 1024 * 1024
    try:
        cap = int(pltpu.get_tpu_info().vmem_capacity_bytes)
    except Exception:
        pass
    # ~5/8 of physical VMEM, capped at 96 MiB (=> ~40 MiB on v7x's 64 MiB parts).
    return int(min(96 * 1024 * 1024, cap * 5 // 8))


def vae_dqn_forward(x, eps, weights, tb=None):
    """x: (B, 17, 4, 4) NCHW float32;  eps: (B, LATENT_DIM) float32;
    weights: output of prepare_params()."""
    B = x.shape[0]

    # Batch tile: multiple of 16 (bf16 sublane packing); aim for >=2 grid steps
    # when the batch allows it (megacore / v7x 2-TC sharding); cap at 512.
    if tb is None:
        b16 = -(-B // 16) * 16
        if b16 >= 32:
            tb = max(16, min(512, -(-(b16 // 2) // 16) * 16))
        else:
            tb = -(-B // 8) * 8          # single step; block == full batch dim
    B_pad = -(-B // tb) * tb

    # Input slab (bf16): [ x_flat(272) | eps(20) | zeros(92) ].
    x_flat = x.reshape(B, X_DIM).astype(jnp.float32)
    slab = (jnp.zeros((B_pad, X_PAD), jnp.float32)
            .at[:B, :X_DIM].set(x_flat)
            .at[:B, X_DIM:X_DIM + LATENT_DIM].set(eps.astype(jnp.float32))
            ).astype(jnp.bfloat16)

    grid = (B_pad // tb,)
    batch_spec = lambda width: pl.BlockSpec((tb, width), lambda i: (i, 0))
    # Weights: full-shape blocks with constant index_map -> VMEM-resident across steps.
    # TODO(synk): on v7x, pipeline_mode=pl.Buffered(1) on these would free ~3 MB VMEM.
    const_spec = lambda arr: pl.BlockSpec(arr.shape, lambda i: (0, 0))

    in_specs = [batch_spec(X_PAD)] + [const_spec(w) for w in weights]
    out_specs = (batch_spec(PACK_W), batch_spec(X_PAD))
    out_shape = (
        jax.ShapeDtypeStruct((B_pad, PACK_W), jnp.float32),    # [mu|logvar|q|0]
        jax.ShapeDtypeStruct((B_pad, X_PAD), jnp.bfloat16),    # x_hat (padded flat)
    )

    packed, xhat = pl.pallas_call(
        _vae_dqn_kernel,
        grid=grid,
        in_specs=in_specs,
        out_specs=out_specs,
        out_shape=out_shape,
        compiler_params=pltpu.CompilerParams(
            dimension_semantics=("parallel",),
            vmem_limit_bytes=_default_vmem_limit()),
    )(slab, *weights)

    mu = packed[:B, :LATENT_DIM]
    logvar = packed[:B, LATENT_DIM:2 * LATENT_DIM]
    q = packed[:B, Q_OFF:Q_OFF + 4]
    xhat = xhat[:B, :X_DIM].astype(jnp.float32).reshape(B, IN_CH, BOARD, BOARD)
    return q, xhat, mu, logvar


# ---------------------------------------------------------------------------
# Pure-JAX reference (real f32 convs) for correctness checking
# ---------------------------------------------------------------------------
def reference_forward(x, eps, p):
    hi = jax.lax.Precision.HIGHEST
    mm = lambda a, b: jnp.dot(a, b, precision=hi)
    relu = lambda v: jnp.maximum(v, 0.0)
    sigmoid = lambda v: 1.0 / (1.0 + jnp.exp(-v))

    def conv(h, w, b):
        o = jax.lax.conv_general_dilated(
            h, w, window_strides=(1, 1), padding=((1, 1), (1, 1)),
            dimension_numbers=('NCHW', 'OIHW', 'NCHW'), precision=hi)
        return o + b[None, :, None, None]

    def convT_as_conv(w):  # ConvTranspose2d (stride 1, pad 1) == conv with flipped kernel
        return jnp.flip(w, axis=(2, 3)).transpose(1, 0, 2, 3)

    B = x.shape[0]
    h1 = relu(conv(x, p['we1'], p['be1']))
    h2 = relu(conv(h1, p['we2'], p['be2']))
    h3 = jnp.tanh(mm(h2.reshape(B, 40 * HW), p['wl3'].T) + p['bl3'])
    mu = mm(h3, p['wmu'].T) + p['bmu']
    logvar = mm(h3, p['wsg'].T) + p['bsg']
    std = jnp.exp(0.5 * logvar)
    z = eps * std + mu
    h4 = jnp.tanh(mm(z, p['wd1'].T) + p['bd1'])
    h5 = relu(mm(h4, p['wd2'].T) + p['bd2']).reshape(B, 40, BOARD, BOARD)
    h6 = relu(conv(h5, convT_as_conv(p['wd3']), p['bd3']))
    xhat = sigmoid(conv(h6, convT_as_conv(p['wd4']), p['bd4']))
    hq = relu(mm(std + mu, p['wq1'].T) + p['bq1'])
    q = mm(hq, p['wq2'].T) + p['bq2']
    return q, xhat, mu, logvar


if __name__ == "__main__":
    key = jax.random.PRNGKey(0)
    k_params, k_x, k_eps = jax.random.split(key, 3)

    B = 8                                   # multiple of 8 (sublane-friendly)
    params = init_params(k_params)
    lowered = prepare_params(params)        # one-time weight lowering

    x = jax.random.uniform(k_x, (B, IN_CH, BOARD, BOARD), jnp.float32)  # [0,1) board encoding
    eps = jax.random.normal(k_eps, (B, LATENT_DIM), jnp.float32)        # reparam noise
    # Round inputs to bf16-representable values so the bf16-I/O kernel and the
    # f32 reference consume identical data.
    x = x.astype(jnp.bfloat16).astype(jnp.float32)
    eps = eps.astype(jnp.bfloat16).astype(jnp.float32)

    q, xhat, mu, logvar = vae_dqn_forward(x, eps, lowered)
    jax.block_until_ready((q, xhat, mu, logvar))

    # Reference is full-f32; kernel uses bf16 MXU operands / bf16 x_hat output,
    # so compare with a bf16-appropriate tolerance.
    qr, xr, mr, lr = reference_forward(x, eps, params)
    np.testing.assert_allclose(np.asarray(q), np.asarray(qr), rtol=8e-2, atol=8e-2)
    np.testing.assert_allclose(np.asarray(xhat), np.asarray(xr), rtol=8e-2, atol=8e-2)
    np.testing.assert_allclose(np.asarray(mu), np.asarray(mr), rtol=8e-2, atol=8e-2)
    np.testing.assert_allclose(np.asarray(logvar), np.asarray(lr), rtol=8e-2, atol=8e-2)

    assert q.shape == (B, 4) and xhat.shape == (B, IN_CH, BOARD, BOARD)
    assert mu.shape == (B, LATENT_DIM) and logvar.shape == (B, LATENT_DIM)

    print("KERNEL_OK")
</pallas_src>

<mosaic_0001>
module attributes {stable_mosaic.version = 11 : i64} {
  func.func @_vae_dqn_kernel(%arg0: i32, %arg1: memref<8x384xbf16, #tpu.memory_space<vmem>>, %arg2: memref<384x640xbf16, #tpu.memory_space<vmem>>, %arg3: memref<1x640xf32, #tpu.memory_space<vmem>>, %arg4: memref<640x640xbf16, #tpu.memory_space<vmem>>, %arg5: memref<1x640xf32, #tpu.memory_space<vmem>>, %arg6: memref<640x200xbf16, #tpu.memory_space<vmem>>, %arg7: memref<1x200xf32, #tpu.memory_space<vmem>>, %arg8: memref<200x128xbf16, #tpu.memory_space<vmem>>, %arg9: memref<1x128xf32, #tpu.memory_space<vmem>>, %arg10: memref<20x200xbf16, #tpu.memory_space<vmem>>, %arg11: memref<1x200xf32, #tpu.memory_space<vmem>>, %arg12: memref<200x640xbf16, #tpu.memory_space<vmem>>, %arg13: memref<1x640xf32, #tpu.memory_space<vmem>>, %arg14: memref<640x640xbf16, #tpu.memory_space<vmem>>, %arg15: memref<1x640xf32, #tpu.memory_space<vmem>>, %arg16: memref<640x384xbf16, #tpu.memory_space<vmem>>, %arg17: memref<1x384xf32, #tpu.memory_space<vmem>>, %arg18: memref<20x100xbf16, #tpu.memory_space<vmem>>, %arg19: memref<1x100xf32, #tpu.memory_space<vmem>>, %arg20: memref<100x128xbf16, #tpu.memory_space<vmem>>, %arg21: memref<1x128xf32, #tpu.memory_space<vmem>>, %arg22: memref<8x128xf32, #tpu.memory_space<vmem>>, %arg23: memref<8x384xbf16, #tpu.memory_space<vmem>>) attributes {dimension_semantics = [#tpu.dimension_semantics<parallel>], iteration_bounds = array<i64: 1>, scalar_prefetch = 0 : i64, scratch_operands = 0 : i64, tpu.core_type = #tpu.core_type<tc>, window_params = [{transform_indices = @transform_0, window_bounds = array<i64: 8, 384>}, {pipeline_mode = #tpu.pipeline_mode<synchronous>, transform_indices = @transform_1, window_bounds = array<i64: 384, 640>}, {pipeline_mode = #tpu.pipeline_mode<synchronous>, transform_indices = @transform_2, window_bounds = array<i64: 1, 640>}, {pipeline_mode = #tpu.pipeline_mode<synchronous>, transform_indices = @transform_3, window_bounds = array<i64: 640, 640>}, {pipeline_mode = #tpu.pipeline_mode<synchronous>, transform_indices = @transform_4, window_bounds = array<i64: 1, 640>}, {pipeline_mode = #tpu.pipeline_mode<synchronous>, transform_indices = @transform_5, window_bounds = array<i64: 640, 200>}, {pipeline_mode = #tpu.pipeline_mode<synchronous>, transform_indices = @transform_6, window_bounds = array<i64: 1, 200>}, {pipeline_mode = #tpu.pipeline_mode<synchronous>, transform_indices = @transform_7, window_bounds = array<i64: 200, 128>}, {pipeline_mode = #tpu.pipeline_mode<synchronous>, transform_indices = @transform_8, window_bounds = array<i64: 1, 128>}, {pipeline_mode = #tpu.pipeline_mode<synchronous>, transform_indices = @transform_9, window_bounds = array<i64: 20, 200>}, {pipeline_mode = #tpu.pipeline_mode<synchronous>, transform_indices = @transform_10, window_bounds = array<i64: 1, 200>}, {pipeline_mode = #tpu.pipeline_mode<synchronous>, transform_indices = @transform_11, window_bounds = array<i64: 200, 640>}, {pipeline_mode = #tpu.pipeline_mode<synchronous>, transform_indices = @transform_12, window_bounds = array<i64: 1, 640>}, {pipeline_mode = #tpu.pipeline_mode<synchronous>, transform_indices = @transform_13, window_bounds = array<i64: 640, 640>}, {pipeline_mode = #tpu.pipeline_mode<synchronous>, transform_indices = @transform_14, window_bounds = array<i64: 1, 640>}, {pipeline_mode = #tpu.pipeline_mode<synchronous>, transform_indices = @transform_15, window_bounds = array<i64: 640, 384>}, {pipeline_mode = #tpu.pipeline_mode<synchronous>, transform_indices = @transform_16, window_bounds = array<i64: 1, 384>}, {pipeline_mode = #tpu.pipeline_mode<synchronous>, transform_indices = @transform_17, window_bounds = array<i64: 20, 100>}, {pipeline_mode = #tpu.pipeline_mode<synchronous>, transform_indices = @transform_18, window_bounds = array<i64: 1, 100>}, {pipeline_mode = #tpu.pipeline_mode<synchronous>, transform_indices = @transform_19, window_bounds = array<i64: 100, 128>}, {pipeline_mode = #tpu.pipeline_mode<synchronous>, transform_indices = @transform_20, window_bounds = array<i64: 1, 128>}, {transform_indices = @transform_21, window_bounds = array<i64: 8, 128>}, {transform_indices = @transform_22, window_bounds = array<i64: 8, 384>}]} {
    %c0 = arith.constant 0 : index
    %c0_0 = arith.constant 0 : index
    %0 = vector.load %arg1[%c0, %c0_0] : memref<8x384xbf16, #tpu.memory_space<vmem>>, vector<8x384xbf16>
    %1 = vector.extract_strided_slice %0 {offsets = [0, 272], sizes = [8, 20], strides = [1, 1]} : vector<8x384xbf16> to vector<8x20xbf16>
    %2 = arith.extf %1 : vector<8x20xbf16> to vector<8x20xf32>
    %c0_1 = arith.constant 0 : index
    %c0_2 = arith.constant 0 : index
    %3 = vector.load %arg2[%c0_1, %c0_2] : memref<384x640xbf16, #tpu.memory_space<vmem>>, vector<384x640xbf16>
    %cst = arith.constant dense<0.000000e+00> : vector<8x640xf32>
    %4 = tpu.matmul %0, %3, %cst {dimension_numbers = #tpu.dot_dimension_numbers<[1], [0], [0], [1], [0, 0, 1, 1], [], []>} : vector<8x384xbf16>, vector<384x640xbf16>, vector<8x640xf32> -> vector<8x640xf32>
    %c0_3 = arith.constant 0 : index
    %c0_4 = arith.constant 0 : index
    %5 = vector.load %arg3[%c0_3, %c0_4] : memref<1x640xf32, #tpu.memory_space<vmem>>, vector<1x640xf32>
    %6 = vector.broadcast %5 : vector<1x640xf32> to vector<8x640xf32>
    %7 = arith.addf %4, %6 : vector<8x640xf32>
    %cst_5 = arith.constant 0.000000e+00 : f32
    %8 = vector.broadcast %cst_5 : f32 to vector<8x640xf32>
    %9 = arith.maximumf %7, %8 : vector<8x640xf32>
    %10 = arith.truncf %9 : vector<8x640xf32> to vector<8x640xbf16>
    %c0_6 = arith.constant 0 : index
    %c0_7 = arith.constant 0 : index
    %11 = vector.load %arg4[%c0_6, %c0_7] : memref<640x640xbf16, #tpu.memory_space<vmem>>, vector<640x640xbf16>
    %cst_8 = arith.constant dense<0.000000e+00> : vector<8x640xf32>
    %12 = tpu.matmul %10, %11, %cst_8 {dimension_numbers = #tpu.dot_dimension_numbers<[1], [0], [0], [1], [0, 0, 1, 1], [], []>} : vector<8x640xbf16>, vector<640x640xbf16>, vector<8x640xf32> -> vector<8x640xf32>
    %c0_9 = arith.constant 0 : index
    %c0_10 = arith.constant 0 : index
    %13 = vector.load %arg5[%c0_9, %c0_10] : memref<1x640xf32, #tpu.memory_space<vmem>>, vector<1x640xf32>
    %14 = vector.broadcast %13 : vector<1x640xf32> to vector<8x640xf32>
    %15 = arith.addf %12, %14 : vector<8x640xf32>
    %cst_11 = arith.constant 0.000000e+00 : f32
    %16 = vector.broadcast %cst_11 : f32 to vector<8x640xf32>
    %17 = arith.maximumf %15, %16 : vector<8x640xf32>
    %18 = arith.truncf %17 : vector<8x640xf32> to vector<8x640xbf16>
    %c0_12 = arith.constant 0 : index
    %c0_13 = arith.constant 0 : index
    %19 = vector.load %arg6[%c0_12, %c0_13] : memref<640x200xbf16, #tpu.memory_space<vmem>>, vector<640x200xbf16>
    %cst_14 = arith.constant dense<0.000000e+00> : vector<8x200xf32>
    %20 = tpu.matmul %18, %19, %cst_14 {dimension_numbers = #tpu.dot_dimension_numbers<[1], [0], [0], [1], [0, 0, 1, 1], [], []>} : vector<8x640xbf16>, vector<640x200xbf16>, vector<8x200xf32> -> vector<8x200xf32>
    %c0_15 = arith.constant 0 : index
    %c0_16 = arith.constant 0 : index
    %21 = vector.load %arg7[%c0_15, %c0_16] : memref<1x200xf32, #tpu.memory_space<vmem>>, vector<1x200xf32>
    %22 = vector.broadcast %21 : vector<1x200xf32> to vector<8x200xf32>
    %23 = arith.addf %20, %22 : vector<8x200xf32>
    %24 = math.tanh %23 : vector<8x200xf32>
    %25 = arith.truncf %24 : vector<8x200xf32> to vector<8x200xbf16>
    %c0_17 = arith.constant 0 : index
    %c0_18 = arith.constant 0 : index
    %26 = vector.load %arg8[%c0_17, %c0_18] : memref<200x128xbf16, #tpu.memory_space<vmem>>, vector<200x128xbf16>
    %cst_19 = arith.constant dense<0.000000e+00> : vector<8x128xf32>
    %27 = tpu.matmul %25, %26, %cst_19 {dimension_numbers = #tpu.dot_dimension_numbers<[1], [0], [0], [1], [0, 0, 1, 1], [], []>} : vector<8x200xbf16>, vector<200x128xbf16>, vector<8x128xf32> -> vector<8x128xf32>
    %c0_20 = arith.constant 0 : index
    %c0_21 = arith.constant 0 : index
    %28 = vector.load %arg9[%c0_20, %c0_21] : memref<1x128xf32, #tpu.memory_space<vmem>>, vector<1x128xf32>
    %29 = vector.broadcast %28 : vector<1x128xf32> to vector<8x128xf32>
    %30 = arith.addf %27, %29 : vector<8x128xf32>
    %31 = vector.extract_strided_slice %30 {offsets = [0, 0], sizes = [8, 20], strides = [1, 1]} : vector<8x128xf32> to vector<8x20xf32>
    %32 = vector.extract_strided_slice %30 {offsets = [0, 20], sizes = [8, 20], strides = [1, 1]} : vector<8x128xf32> to vector<8x20xf32>
    %c0_22 = arith.constant 0 : index
    %c0_23 = arith.constant 0 : index
    %33 = vector.load %arg22[%c0_22, %c0_23] : memref<8x128xf32, #tpu.memory_space<vmem>>, vector<8x128xf32>
    tpu.vector_store %arg22[%c0_22, %c0_23], %30 {strides = array<i32>} : memref<8x128xf32, #tpu.memory_space<vmem>>, vector<8x128xf32>,
    %cst_24 = arith.constant 5.000000e-01 : f32
    %34 = vector.broadcast %cst_24 : f32 to vector<8x20xf32>
    %35 = arith.mulf %34, %32 : vector<8x20xf32>
    %36 = math.exp %35 : vector<8x20xf32>
    %37 = arith.mulf %2, %36 : vector<8x20xf32>
    %38 = arith.addf %37, %31 : vector<8x20xf32>
    %39 = arith.truncf %38 : vector<8x20xf32> to vector<8x20xbf16>
    %c0_25 = arith.constant 0 : index
    %c0_26 = arith.constant 0 : index
    %40 = vector.load %arg10[%c0_25, %c0_26] : memref<20x200xbf16, #tpu.memory_space<vmem>>, vector<20x200xbf16>
    %cst_27 = arith.constant dense<0.000000e+00> : vector<8x200xf32>
    %41 = tpu.matmul %39, %40, %cst_27 {dimension_numbers = #tpu.dot_dimension_numbers<[1], [0], [0], [1], [0, 0, 1, 1], [], []>} : vector<8x20xbf16>, vector<20x200xbf16>, vector<8x200xf32> -> vector<8x200xf32>
    %c0_28 = arith.constant 0 : index
    %c0_29 = arith.constant 0 : index
    %42 = vector.load %arg11[%c0_28, %c0_29] : memref<1x200xf32, #tpu.memory_space<vmem>>, vector<1x200xf32>
    %43 = vector.broadcast %42 : vector<1x200xf32> to vector<8x200xf32>
    %44 = arith.addf %41, %43 : vector<8x200xf32>
    %45 = math.tanh %44 : vector<8x200xf32>
    %46 = arith.truncf %45 : vector<8x200xf32> to vector<8x200xbf16>
    %c0_30 = arith.constant 0 : index
    %c0_31 = arith.constant 0 : index
    %47 = vector.load %arg12[%c0_30, %c0_31] : memref<200x640xbf16, #tpu.memory_space<vmem>>, vector<200x640xbf16>
    %cst_32 = arith.constant dense<0.000000e+00> : vector<8x640xf32>
    %48 = tpu.matmul %46, %47, %cst_32 {dimension_numbers = #tpu.dot_dimension_numbers<[1], [0], [0], [1], [0, 0, 1, 1], [], []>} : vector<8x200xbf16>, vector<200x640xbf16>, vector<8x640xf32> -> vector<8x640xf32>
    %c0_33 = arith.constant 0 : index
    %c0_34 = arith.constant 0 : index
    %49 = vector.load %arg13[%c0_33, %c0_34] : memref<1x640xf32, #tpu.memory_space<vmem>>, vector<1x640xf32>
    %50 = vector.broadcast %49 : vector<1x640xf32> to vector<8x640xf32>
    %51 = arith.addf %48, %50 : vector<8x640xf32>
    %cst_35 = arith.constant 0.000000e+00 : f32
    %52 = vector.broadcast %cst_35 : f32 to vector<8x640xf32>
    %53 = arith.maximumf %51, %52 : vector<8x640xf32>
    %54 = arith.truncf %53 : vector<8x640xf32> to vector<8x640xbf16>
    %c0_36 = arith.constant 0 : index
    %c0_37 = arith.constant 0 : index
    %55 = vector.load %arg14[%c0_36, %c0_37] : memref<640x640xbf16, #tpu.memory_space<vmem>>, vector<640x640xbf16>
    %cst_38 = arith.constant dense<0.000000e+00> : vector<8x640xf32>
    %56 = tpu.matmul %54, %55, %cst_38 {dimension_numbers = #tpu.dot_dimension_numbers<[1], [0], [0], [1], [0, 0, 1, 1], [], []>} : vector<8x640xbf16>, vector<640x640xbf16>, vector<8x640xf32> -> vector<8x640xf32>
    %c0_39 = arith.constant 0 : index
    %c0_40 = arith.constant 0 : index
    %57 = vector.load %arg15[%c0_39, %c0_40] : memref<1x640xf32, #tpu.memory_space<vmem>>, vector<1x640xf32>
    %58 = vector.broadcast %57 : vector<1x640xf32> to vector<8x640xf32>
    %59 = arith.addf %56, %58 : vector<8x640xf32>
    %cst_41 = arith.constant 0.000000e+00 : f32
    %60 = vector.broadcast %cst_41 : f32 to vector<8x640xf32>
    %61 = arith.maximumf %59, %60 : vector<8x640xf32>
    %62 = arith.truncf %61 : vector<8x640xf32> to vector<8x640xbf16>
    %c0_42 = arith.constant 0 : index
    %c0_43 = arith.constant 0 : index
    %63 = vector.load %arg16[%c0_42, %c0_43] : memref<640x384xbf16, #tpu.memory_space<vmem>>, vector<640x384xbf16>
    %cst_44 = arith.constant dense<0.000000e+00> : vector<8x384xf32>
    %64 = tpu.matmul %62, %63, %cst_44 {dimension_numbers = #tpu.dot_dimension_numbers<[1], [0], [0], [1], [0, 0, 1, 1], [], []>} : vector<8x640xbf16>, vector<640x384xbf16>, vector<8x384xf32> -> vector<8x384xf32>
    %c0_45 = arith.constant 0 : index
    %c0_46 = arith.constant 0 : index
    %65 = vector.load %arg17[%c0_45, %c0_46] : memref<1x384xf32, #tpu.memory_space<vmem>>, vector<1x384xf32>
    %66 = vector.broadcast %65 : vector<1x384xf32> to vector<8x384xf32>
    %67 = arith.addf %64, %66 : vector<8x384xf32>
    %cst_47 = arith.constant 0.000000e+00 : f32
    %68 = vector.broadcast %cst_47 : f32 to vector<8x384xf32>
    %69 = arith.subf %68, %67 : vector<8x384xf32>
    %70 = math.exp %69 : vector<8x384xf32>
    %cst_48 = arith.constant 1.000000e+00 : f32
    %71 = vector.broadcast %cst_48 : f32 to vector<8x384xf32>
    %72 = arith.addf %71, %70 : vector<8x384xf32>
    %73 = tpu.reciprocal %72 {approx = true} : vector<8x384xf32> -> vector<8x384xf32>
    %74 = arith.truncf %73 : vector<8x384xf32> to vector<8x384xbf16>
    %c0_49 = arith.constant 0 : index
    %c0_50 = arith.constant 0 : index
    %75 = vector.load %arg23[%c0_49, %c0_50] : memref<8x384xbf16, #tpu.memory_space<vmem>>, vector<8x384xbf16>
    tpu.vector_store %arg23[%c0_49, %c0_50], %74 {strides = array<i32>} : memref<8x384xbf16, #tpu.memory_space<vmem>>, vector<8x384xbf16>,
    %76 = arith.addf %36, %31 : vector<8x20xf32>
    %77 = arith.truncf %76 : vector<8x20xf32> to vector<8x20xbf16>
    %c0_51 = arith.constant 0 : index
    %c0_52 = arith.constant 0 : index
    %78 = vector.load %arg18[%c0_51, %c0_52] : memref<20x100xbf16, #tpu.memory_space<vmem>>, vector<20x100xbf16>
    %cst_53 = arith.constant dense<0.000000e+00> : vector<8x100xf32>
    %79 = tpu.matmul %77, %78, %cst_53 {dimension_numbers = #tpu.dot_dimension_numbers<[1], [0], [0], [1], [0, 0, 1, 1], [], []>} : vector<8x20xbf16>, vector<20x100xbf16>, vector<8x100xf32> -> vector<8x100xf32>
    %c0_54 = arith.constant 0 : index
    %c0_55 = arith.constant 0 : index
    %80 = vector.load %arg19[%c0_54, %c0_55] : memref<1x100xf32, #tpu.memory_space<vmem>>, vector<1x100xf32>
    %81 = vector.broadcast %80 : vector<1x100xf32> to vector<8x100xf32>
    %82 = arith.addf %79, %81 : vector<8x100xf32>
    %cst_56 = arith.constant 0.000000e+00 : f32
    %83 = vector.broadcast %cst_56 : f32 to vector<8x100xf32>
    %84 = arith.maximumf %82, %83 : vector<8x100xf32>
    %85 = arith.truncf %84 : vector<8x100xf32> to vector<8x100xbf16>
    %c0_57 = arith.constant 0 : index
    %c0_58 = arith.constant 0 : index
    %86 = vector.load %arg20[%c0_57, %c0_58] : memref<100x128xbf16, #tpu.memory_space<vmem>>, vector<100x128xbf16>
    %cst_59 = arith.constant dense<0.000000e+00> : vector<8x128xf32>
    %87 = tpu.matmul %85, %86, %cst_59 {dimension_numbers = #tpu.dot_dimension_numbers<[1], [0], [0], [1], [0, 0, 1, 1], [], []>} : vector<8x100xbf16>, vector<100x128xbf16>, vector<8x128xf32> -> vector<8x128xf32>
    %c0_60 = arith.constant 0 : index
    %c0_61 = arith.constant 0 : index
    %88 = vector.load %arg21[%c0_60, %c0_61] : memref<1x128xf32, #tpu.memory_space<vmem>>, vector<1x128xf32>
    %89 = vector.broadcast %88 : vector<1x128xf32> to vector<8x128xf32>
    %90 = arith.addf %87, %89 : vector<8x128xf32>
    %c0_62 = arith.constant 0 : index
    %c0_63 = arith.constant 0 : index
    %91 = vector.load %arg22[%c0_62, %c0_63] : memref<8x128xf32, #tpu.memory_space<vmem>>, vector<8x128xf32>
    %92 = arith.addf %91, %90 : vector<8x128xf32>
    %c0_64 = arith.constant 0 : index
    %c0_65 = arith.constant 0 : index
    %93 = vector.load %arg22[%c0_64, %c0_65] : memref<8x128xf32, #tpu.memory_space<vmem>>, vector<8x128xf32>
    tpu.vector_store %arg22[%c0_64, %c0_65], %92 {strides = array<i32>} : memref<8x128xf32, #tpu.memory_space<vmem>>, vector<8x128xf32>,
    return
  }
  func.func @transform_0(%arg0: i32) -> (i32, i32) {
    %c0_i32 = arith.constant 0 : i32
    %c0_i32_0 = arith.constant 0 : i32
    return %arg0, %c0_i32 : i32, i32
  }
  func.func @transform_1(%arg0: i32) -> (i32, i32) {
    %c0_i32 = arith.constant 0 : i32
    %c0_i32_0 = arith.constant 0 : i32
    %c0_i32_1 = arith.constant 0 : i32
    return %c0_i32, %c0_i32_0 : i32, i32
  }
  func.func @transform_2(%arg0: i32) -> (i32, i32) {
    %c0_i32 = arith.constant 0 : i32
    %c0_i32_0 = arith.constant 0 : i32
    %c0_i32_1 = arith.constant 0 : i32
    return %c0_i32, %c0_i32_0 : i32, i32
  }
  func.func @transform_3(%arg0: i32) -> (i32, i32) {
    %c0_i32 = arith.constant 0 : i32
    %c0_i32_0 = arith.constant 0 : i32
    %c0_i32_1 = arith.constant 0 : i32
    return %c0_i32, %c0_i32_0 : i32, i32
  }
  func.func @transform_4(%arg0: i32) -> (i32, i32) {
    %c0_i32 = arith.constant 0 : i32
    %c0_i32_0 = arith.constant 0 : i32
    %c0_i32_1 = arith.constant 0 : i32
    return %c0_i32, %c0_i32_0 : i32, i32
  }
  func.func @transform_5(%arg0: i32) -> (i32, i32) {
    %c0_i32 = arith.constant 0 : i32
    %c0_i32_0 = arith.constant 0 : i32
    %c0_i32_1 = arith.constant 0 : i32
    return %c0_i32, %c0_i32_0 : i32, i32
  }
  func.func @transform_6(%arg0: i32) -> (i32, i32) {
    %c0_i32 = arith.constant 0 : i32
    %c0_i32_0 = arith.constant 0 : i32
    %c0_i32_1 = arith.constant 0 : i32
    return %c0_i32, %c0_i32_0 : i32, i32
  }
  func.func @transform_7(%arg0: i32) -> (i32, i32) {
    %c0_i32 = arith.constant 0 : i32
    %c0_i32_0 = arith.constant 0 : i32
    %c0_i32_1 = arith.constant 0 : i32
    return %c0_i32, %c0_i32_0 : i32, i32
  }
  func.func @transform_8(%arg0: i32) -> (i32, i32) {
    %c0_i32 = arith.constant 0 : i32
    %c0_i32_0 = arith.constant 0 : i32
    %c0_i32_1 = arith.constant 0 : i32
    return %c0_i32, %c0_i32_0 : i32, i32
  }
  func.func @transform_9(%arg0: i32) -> (i32, i32) {
    %c0_i32 = arith.constant 0 : i32
    %c0_i32_0 = arith.constant 0 : i32
    %c0_i32_1 = arith.constant 0 : i32
    return %c0_i32, %c0_i32_0 : i32, i32
  }
  func.func @transform_10(%arg0: i32) -> (i32, i32) {
    %c0_i32 = arith.constant 0 : i32
    %c0_i32_0 = arith.constant 0 : i32
    %c0_i32_1 = arith.constant 0 : i32
    return %c0_i32, %c0_i32_0 : i32, i32
  }
  func.func @transform_11(%arg0: i32) -> (i32, i32) {
    %c0_i32 = arith.constant 0 : i32
    %c0_i32_0 = arith.constant 0 : i32
    %c0_i32_1 = arith.constant 0 : i32
    return %c0_i32, %c0_i32_0 : i32, i32
  }
  func.func @transform_12(%arg0: i32) -> (i32, i32) {
    %c0_i32 = arith.constant 0 : i32
    %c0_i32_0 = arith.constant 0 : i32
    %c0_i32_1 = arith.constant 0 : i32
    return %c0_i32, %c0_i32_0 : i32, i32
  }
  func.func @transform_13(%arg0: i32) -> (i32, i32) {
    %c0_i32 = arith.constant 0 : i32
    %c0_i32_0 = arith.constant 0 : i32
    %c0_i32_1 = arith.constant 0 : i32
    return %c0_i32, %c0_i32_0 : i32, i32
  }
  func.func @transform_14(%arg0: i32) -> (i32, i32) {
    %c0_i32 = arith.constant 0 : i32
    %c0_i32_0 = arith.constant 0 : i32
    %c0_i32_1 = arith.constant 0 : i32
    return %c0_i32, %c0_i32_0 : i32, i32
  }
  func.func @transform_15(%arg0: i32) -> (i32, i32) {
    %c0_i32 = arith.constant 0 : i32
    %c0_i32_0 = arith.constant 0 : i32
    %c0_i32_1 = arith.constant 0 : i32
    return %c0_i32, %c0_i32_0 : i32, i32
  }
  func.func @transform_16(%arg0: i32) -> (i32, i32) {
    %c0_i32 = arith.constant 0 : i32
    %c0_i32_0 = arith.constant 0 : i32
    %c0_i32_1 = arith.constant 0 : i32
    return %c0_i32, %c0_i32_0 : i32, i32
  }
  func.func @transform_17(%arg0: i32) -> (i32, i32) {
    %c0_i32 = arith.constant 0 : i32
    %c0_i32_0 = arith.constant 0 : i32
    %c0_i32_1 = arith.constant 0 : i32
    return %c0_i32, %c0_i32_0 : i32, i32
  }
  func.func @transform_18(%arg0: i32) -> (i32, i32) {
    %c0_i32 = arith.constant 0 : i32
    %c0_i32_0 = arith.constant 0 : i32
    %c0_i32_1 = arith.constant 0 : i32
    return %c0_i32, %c0_i32_0 : i32, i32
  }
  func.func @transform_19(%arg0: i32) -> (i32, i32) {
    %c0_i32 = arith.constant 0 : i32
    %c0_i32_0 = arith.constant 0 : i32
    %c0_i32_1 = arith.constant 0 : i32
    return %c0_i32, %c0_i32_0 : i32, i32
  }
  func.func @transform_20(%arg0: i32) -> (i32, i32) {
    %c0_i32 = arith.constant 0 : i32
    %c0_i32_0 = arith.constant 0 : i32
    %c0_i32_1 = arith.constant 0 : i32
    return %c0_i32, %c0_i32_0 : i32, i32
  }
  func.func @transform_21(%arg0: i32) -> (i32, i32) {
    %c0_i32 = arith.constant 0 : i32
    %c0_i32_0 = arith.constant 0 : i32
    return %arg0, %c0_i32 : i32, i32
  }
  func.func @transform_22(%arg0: i32) -> (i32, i32) {
    %c0_i32 = arith.constant 0 : i32
    %c0_i32_0 = arith.constant 0 : i32
    return %arg0, %c0_i32 : i32, i32
  }
}

</mosaic_0001>

<llo_original>
// kernel: tpu_custom_call.1
$region0: #{tpu_custom_call.1}
  #allocation0 [shape = 'u32[]', space=smem, size = 0x4, offset = 0x4, fixed_abs, tag = 'smem constant byte address 0x4 - core index']
  #allocation1 [shape = 'u32[144,128]{1,0:T(1,128)}', space=vmem, size = 0x12000, scoped, tag = 'internal scratch']
  %s0 = inlined_call_operand.hbm [shape: bf16[8,384], index: 0, kind: input, shape index: {}]
  %s1 = inlined_call_operand.hbm [shape: bf16[384,640], index: 1, kind: input, shape index: {}]
  %s2 = inlined_call_operand.hbm [shape: f32[1,640], index: 2, kind: input, shape index: {}]
  %s3 = inlined_call_operand.hbm [shape: bf16[640,640], index: 3, kind: input, shape index: {}]
  %s4 = inlined_call_operand.hbm [shape: f32[1,640], index: 4, kind: input, shape index: {}]
  %s5 = inlined_call_operand.hbm [shape: bf16[640,200], index: 5, kind: input, shape index: {}]
  %s6 = inlined_call_operand.hbm [shape: f32[1,200], index: 6, kind: input, shape index: {}]
  %s7 = inlined_call_operand.hbm [shape: bf16[200,128], index: 7, kind: input, shape index: {}]
  %s8 = inlined_call_operand.hbm [shape: f32[1,128], index: 8, kind: input, shape index: {}]
  %s9 = inlined_call_operand.hbm [shape: bf16[20,200], index: 9, kind: input, shape index: {}]
  %s10 = inlined_call_operand.hbm [shape: f32[1,200], index: 10, kind: input, shape index: {}]
  %s11 = inlined_call_operand.hbm [shape: bf16[200,640], index: 11, kind: input, shape index: {}]
  %s12 = inlined_call_operand.hbm [shape: f32[1,640], index: 12, kind: input, shape index: {}]
  %s13 = inlined_call_operand.hbm [shape: bf16[640,640], index: 13, kind: input, shape index: {}]
  %s14 = inlined_call_operand.hbm [shape: f32[1,640], index: 14, kind: input, shape index: {}]
  %s15 = inlined_call_operand.hbm [shape: bf16[640,384], index: 15, kind: input, shape index: {}]
  %s16 = inlined_call_operand.hbm [shape: f32[1,384], index: 16, kind: input, shape index: {}]
  %s17 = inlined_call_operand.hbm [shape: bf16[20,100], index: 17, kind: input, shape index: {}]
  %s18 = inlined_call_operand.hbm [shape: f32[1,100], index: 18, kind: input, shape index: {}]
  %s19 = inlined_call_operand.hbm [shape: bf16[100,128], index: 19, kind: input, shape index: {}]
  %s20 = inlined_call_operand.hbm [shape: f32[1,128], index: 20, kind: input, shape index: {}]
  %s21 = inlined_call_operand.hbm [shape: f32[8,128], index: 21, kind: output, shape index: {0}]
  %s22 = inlined_call_operand.hbm [shape: bf16[8,384], index: 22, kind: output, shape index: {1}]
  %23 = xla_tuple %s21, %s22
  %s24 = sld [smem:[#allocation0]]
  $region186: #{tpu_custom_call.1} parent=0
    _
  %s26 = ssub.s32 1, %s24
  %s27 = scalar_select 0, %s26, %s24
  $region1: #{tpu_custom_call.1} parent=0
    #allocation2 [shape = 'u8[6144]{0}', space=vmem, size = 0x1800, scoped, tag = 'input window, operand 0, single buffered']
    #allocation3 [shape = 's32[1]{0}', space=sflag, size = 0x4, scoped, tag = 'scoped memory for tpu_custom_call.1']
    #allocation4 [shape = 's32[1]{0}', space=sflag, size = 0x4, scoped, tag = 'scoped memory for tpu_custom_call.1']
    #allocation5 [shape = 'u8[491520]{0}', space=vmem, size = 0x78000, scoped, tag = 'input window, operand 1, single buffered']
    #allocation6 [shape = 's32[1]{0}', space=sflag, size = 0x4, scoped, tag = 'scoped memory for tpu_custom_call.1']
    #allocation7 [shape = 'u8[2560]{0}', space=vmem, size = 0xc00, scoped, tag = 'input window, operand 2, single buffered']
    #allocation8 [shape = 'u8[819200]{0}', space=vmem, size = 0xc8000, scoped, tag = 'input window, operand 3, single buffered']
    #allocation9 [shape = 's32[1]{0}', space=sflag, size = 0x4, scoped, tag = 'scoped memory for tpu_custom_call.1']
    #allocation10 [shape = 'u8[2560]{0}', space=vmem, size = 0xc00, scoped, tag = 'input window, operand 4, single buffered']
    #allocation11 [shape = 'u8[327680]{0}', space=vmem, size = 0x50000, scoped, tag = 'input window, operand 5, single buffered']
    #allocation12 [shape = 's32[1]{0}', space=sflag, size = 0x4, scoped, tag = 'scoped memory for tpu_custom_call.1']
    #allocation13 [shape = 'u8[1024]{0}', space=vmem, size = 0x400, scoped, tag = 'input window, operand 6, single buffered']
    #allocation14 [shape = 'u8[51200]{0}', space=vmem, size = 0xc800, scoped, tag = 'input window, operand 7, single buffered']
    #allocation15 [shape = 's32[1]{0}', space=sflag, size = 0x4, scoped, tag = 'scoped memory for tpu_custom_call.1']
    #allocation16 [shape = 'u8[512]{0}', space=vmem, size = 0x400, scoped, tag = 'input window, operand 8, single buffered']
    #allocation17 [shape = 'u8[12288]{0}', space=vmem, size = 0x3000, scoped, tag = 'input window, operand 9, single buffered']
    #allocation18 [shape = 's32[1]{0}', space=sflag, size = 0x4, scoped, tag = 'scoped memory for tpu_custom_call.1']
    #allocation19 [shape = 'u8[1024]{0}', space=vmem, size = 0x400, scoped, tag = 'input window, operand 10, single buffered']
    #allocation20 [shape = 'u8[256000]{0}', space=vmem, size = 0x3e800, scoped, tag = 'input window, operand 11, single buffered']
    #allocation21 [shape = 's32[1]{0}', space=sflag, size = 0x4, scoped, tag = 'scoped memory for tpu_custom_call.1']
    #allocation22 [shape = 'u8[2560]{0}', space=vmem, size = 0xc00, scoped, tag = 'input window, operand 12, single buffered']
    #allocation23 [shape = 'u8[819200]{0}', space=vmem, size = 0xc8000, scoped, tag = 'input window, operand 13, single buffered']
    #allocation24 [shape = 's32[1]{0}', space=sflag, size = 0x4, scoped, tag = 'scoped memory for tpu_custom_call.1']
    #allocation25 [shape = 'u8[2560]{0}', space=vmem, size = 0xc00, scoped, tag = 'input window, operand 14, single buffered']
    #allocation26 [shape = 'u8[491520]{0}', space=vmem, size = 0x78000, scoped, tag = 'input window, operand 15, single buffered']
    #allocation27 [shape = 's32[1]{0}', space=sflag, size = 0x4, scoped, tag = 'scoped memory for tpu_custom_call.1']
    #allocation28 [shape = 'u8[1536]{0}', space=vmem, size = 0x800, scoped, tag = 'input window, operand 16, single buffered']
    #allocation29 [shape = 'u8[6144]{0}', space=vmem, size = 0x1800, scoped, tag = 'input window, operand 17, single buffered']
    #allocation30 [shape = 's32[1]{0}', space=sflag, size = 0x4, scoped, tag = 'scoped memory for tpu_custom_call.1']
    #allocation31 [shape = 'u8[512]{0}', space=vmem, size = 0x400, scoped, tag = 'input window, operand 18, single buffered']
    #allocation32 [shape = 'u8[26624]{0}', space=vmem, size = 0x6800, scoped, tag = 'input window, operand 19, single buffered']
    #allocation33 [shape = 's32[1]{0}', space=sflag, size = 0x4, scoped, tag = 'scoped memory for tpu_custom_call.1']
    #allocation34 [shape = 'u8[512]{0}', space=vmem, size = 0x400, scoped, tag = 'input window, operand 20, single buffered']
    #allocation35 [shape = 'u8[4096]{0}', space=vmem, size = 0x1000, scoped, tag = 'output window, operand 0, single buffered']
    #allocation36 [shape = 'u8[6144]{0}', space=vmem, size = 0x1800, scoped, tag = 'output window, operand 1, single buffered']
    #allocation37 [shape = 's32[1]{0}', space=sflag, size = 0x4, scoped, tag = 'scoped memory for tpu_custom_call.1']
    %28 = vsyncpa [#allocation3], 0
    %29 = vsyncpa [#allocation6], 0
    %30 = vsyncpa [#allocation9], 0
    %31 = vsyncpa [#allocation12], 0
    %32 = vsyncpa [#allocation15], 0
    %33 = vsyncpa [#allocation18], 0
    %34 = vsyncpa [#allocation21], 0
    %35 = vsyncpa [#allocation24], 0
    %36 = vsyncpa [#allocation27], 0
    %37 = vsyncpa [#allocation30], 0
    %38 = vsyncpa [#allocation33], 0
    %39 = vsyncpa [#allocation4], 0
    %40 = vsyncpa [#allocation37], 0
    // Predicated region
    $region2: #{tpu_custom_call.1} parent=1 // pred_check
      _
    $region3: #{tpu_custom_call.1} parent=1 // pred_check_branch
      %42 = sbr.rel (0) target = $region5
    $region4: #{tpu_custom_call.1} parent=1 // pred_region
      %s44 = ssub.s32 192, 192
      %45 = vsyncadd [#allocation3], %s44
      %s47 = sshll.u32 [#allocation2], 4
      %s48 = int_to_ptr.vmem [resolvable:$true] %s47
      %50 = dma.hbm_to_vmem [thread:$0]  %s0, 192, %s48, [#allocation3]
    $region5: #{tpu_custom_call.1} parent=1 // pred_fallthru
      _
    // Predicated region
    $region6: #{tpu_custom_call.1} parent=1 // pred_check
      _
    $region7: #{tpu_custom_call.1} parent=1 // pred_check_branch
      %52 = sbr.rel (0) target = $region9
    $region8: #{tpu_custom_call.1} parent=1 // pred_region
      %s54 = ssub.s32 15360, 15360
      %55 = vsyncadd [#allocation6], %s54
      %s56 = sshll.u32 [#allocation5], 4
      %s57 = int_to_ptr.vmem [resolvable:$true] %s56
      %62 = dma.hbm_to_vmem [thread:$0]  %s1, 15360, %s57, [#allocation6], 320, 320, 20
    $region9: #{tpu_custom_call.1} parent=1 // pred_fallthru
      _
    // Predicated region
    $region10: #{tpu_custom_call.1} parent=1 // pred_check
      _
    $region11: #{tpu_custom_call.1} parent=1 // pred_check_branch
      %64 = sbr.rel (0) target = $region13
    $region12: #{tpu_custom_call.1} parent=1 // pred_region
      %s66 = ssub.s32 80, 80
      %67 = vsyncadd [#allocation6], %s66
      %s69 = sshll.u32 [#allocation7], 4
      %s70 = int_to_ptr.vmem [resolvable:$true] %s69
      %72 = dma.hbm_to_vmem [thread:$0]  %s2, 80, %s70, [#allocation6]
    $region13: #{tpu_custom_call.1} parent=1 // pred_fallthru
      _
    // Predicated region
    $region14: #{tpu_custom_call.1} parent=1 // pred_check
      _
    $region15: #{tpu_custom_call.1} parent=1 // pred_check_branch
      %74 = sbr.rel (0) target = $region17
    $region16: #{tpu_custom_call.1} parent=1 // pred_region
      %s76 = ssub.s32 25600, 25600
      %77 = vsyncadd [#allocation9], %s76
      %s78 = sshll.u32 [#allocation8], 4
      %s79 = int_to_ptr.vmem [resolvable:$true] %s78
      %84 = dma.hbm_to_vmem [thread:$0]  %s3, 25600, %s79, [#allocation9], 320, 320, 20
    $region17: #{tpu_custom_call.1} parent=1 // pred_fallthru
      _
    // Predicated region
    $region18: #{tpu_custom_call.1} parent=1 // pred_check
      _
    $region19: #{tpu_custom_call.1} parent=1 // pred_check_branch
      %86 = sbr.rel (0) target = $region21
    $region20: #{tpu_custom_call.1} parent=1 // pred_region
      %s88 = ssub.s32 80, 80
      %89 = vsyncadd [#allocation9], %s88
      %s91 = sshll.u32 [#allocation10], 4
      %s92 = int_to_ptr.vmem [resolvable:$true] %s91
      %94 = dma.hbm_to_vmem [thread:$0]  %s4, 80, %s92, [#allocation9]
    $region21: #{tpu_custom_call.1} parent=1 // pred_fallthru
      _
    // Predicated region
    $region22: #{tpu_custom_call.1} parent=1 // pred_check
      _
    $region23: #{tpu_custom_call.1} parent=1 // pred_check_branch
      %96 = sbr.rel (0) target = $region25
    $region24: #{tpu_custom_call.1} parent=1 // pred_region
      %s98 = ssub.s32 10240, 10240
      %99 = vsyncadd [#allocation12], %s98
      %s100 = sshll.u32 [#allocation11], 4
      %s101 = int_to_ptr.vmem [resolvable:$true] %s100
      %106 = dma.hbm_to_vmem [thread:$0]  %s5, 10240, %s101, [#allocation12], 128, 128, 8
    $region25: #{tpu_custom_call.1} parent=1 // pred_fallthru
      _
    // Predicated region
    $region26: #{tpu_custom_call.1} parent=1 // pred_check
      _
    $region27: #{tpu_custom_call.1} parent=1 // pred_check_branch
      %108 = sbr.rel (0) target = $region29
    $region28: #{tpu_custom_call.1} parent=1 // pred_region
      %s110 = ssub.s32 32, 32
      %111 = vsyncadd [#allocation12], %s110
      %s113 = sshll.u32 [#allocation13], 4
      %s114 = int_to_ptr.vmem [resolvable:$true] %s113
      %116 = dma.hbm_to_vmem [thread:$0]  %s6, 32, %s114, [#allocation12]
    $region29: #{tpu_custom_call.1} parent=1 // pred_fallthru
      _
    // Predicated region
    $region30: #{tpu_custom_call.1} parent=1 // pred_check
      _
    $region31: #{tpu_custom_call.1} parent=1 // pred_check_branch
      %118 = sbr.rel (0) target = $region33
    $region32: #{tpu_custom_call.1} parent=1 // pred_region
      %s120 = ssub.s32 1600, 1600
      %121 = vsyncadd [#allocation15], %s120
      %s122 = sshll.u32 [#allocation14], 4
      %s123 = int_to_ptr.vmem [resolvable:$true] %s122
      %128 = dma.hbm_to_vmem [thread:$0]  %s7, 1600, %s123, [#allocation15], 64, 64, 4
    $region33: #{tpu_custom_call.1} parent=1 // pred_fallthru
      _
    // Predicated region
    $region34: #{tpu_custom_call.1} parent=1 // pred_check
      _
    $region35: #{tpu_custom_call.1} parent=1 // pred_check_branch
      %130 = sbr.rel (0) target = $region37
    $region36: #{tpu_custom_call.1} parent=1 // pred_region
      %s132 = ssub.s32 16, 16
      %133 = vsyncadd [#allocation15], %s132
      %s135 = sshll.u32 [#allocation16], 4
      %s136 = int_to_ptr.vmem [resolvable:$true] %s135
      %138 = dma.hbm_to_vmem [thread:$0]  %s8, 16, %s136, [#allocation15]
    $region37: #{tpu_custom_call.1} parent=1 // pred_fallthru
      _
    // Predicated region
    $region38: #{tpu_custom_call.1} parent=1 // pred_check
      _
    $region39: #{tpu_custom_call.1} parent=1 // pred_check_branch
      %140 = sbr.rel (0) target = $region41
    $region40: #{tpu_custom_call.1} parent=1 // pred_region
      %s142 = ssub.s32 384, 384
      %143 = vsyncadd [#allocation18], %s142
      %s144 = sshll.u32 [#allocation17], 4
      %s145 = int_to_ptr.vmem [resolvable:$true] %s144
      %150 = dma.hbm_to_vmem [thread:$0]  %s9, 384, %s145, [#allocation18], 128, 128, 8
    $region41: #{tpu_custom_call.1} parent=1 // pred_fallthru
      _
    // Predicated region
    $region42: #{tpu_custom_call.1} parent=1 // pred_check
      _
    $region43: #{tpu_custom_call.1} parent=1 // pred_check_branch
      %152 = sbr.rel (0) target = $region45
    $region44: #{tpu_custom_call.1} parent=1 // pred_region
      %s154 = ssub.s32 32, 32
      %155 = vsyncadd [#allocation18], %s154
      %s157 = sshll.u32 [#allocation19], 4
      %s158 = int_to_ptr.vmem [resolvable:$true] %s157
      %160 = dma.hbm_to_vmem [thread:$0]  %s10, 32, %s158, [#allocation18]
    $region45: #{tpu_custom_call.1} parent=1 // pred_fallthru
      _
    // Predicated region
    $region46: #{tpu_custom_call.1} parent=1 // pred_check
      _
    $region47: #{tpu_custom_call.1} parent=1 // pred_check_branch
      %162 = sbr.rel (0) target = $region49
    $region48: #{tpu_custom_call.1} parent=1 // pred_region
      %s164 = ssub.s32 8000, 8000
      %165 = vsyncadd [#allocation21], %s164
      %s166 = sshll.u32 [#allocation20], 4
      %s167 = int_to_ptr.vmem [resolvable:$true] %s166
      %172 = dma.hbm_to_vmem [thread:$0]  %s11, 8000, %s167, [#allocation21], 320, 320, 20
    $region49: #{tpu_custom_call.1} parent=1 // pred_fallthru
      _
    // Predicated region
    $region50: #{tpu_custom_call.1} parent=1 // pred_check
      _
    $region51: #{tpu_custom_call.1} parent=1 // pred_check_branch
      %174 = sbr.rel (0) target = $region53
    $region52: #{tpu_custom_call.1} parent=1 // pred_region
      %s176 = ssub.s32 80, 80
      %177 = vsyncadd [#allocation21], %s176
      %s179 = sshll.u32 [#allocation22], 4
      %s180 = int_to_ptr.vmem [resolvable:$true] %s179
      %182 = dma.hbm_to_vmem [thread:$0]  %s12, 80, %s180, [#allocation21]
    $region53: #{tpu_custom_call.1} parent=1 // pred_fallthru
      _
    // Predicated region
    $region54: #{tpu_custom_call.1} parent=1 // pred_check
      _
    $region55: #{tpu_custom_call.1} parent=1 // pred_check_branch
      %184 = sbr.rel (0) target = $region57
    $region56: #{tpu_custom_call.1} parent=1 // pred_region
      %s186 = ssub.s32 25600, 25600
      %187 = vsyncadd [#allocation24], %s186
      %s188 = sshll.u32 [#allocation23], 4
      %s189 = int_to_ptr.vmem [resolvable:$true] %s188
      %194 = dma.hbm_to_vmem [thread:$0]  %s13, 25600, %s189, [#allocation24], 320, 320, 20
    $region57: #{tpu_custom_call.1} parent=1 // pred_fallthru
      _
    // Predicated region
    $region58: #{tpu_custom_call.1} parent=1 // pred_check
      _
    $region59: #{tpu_custom_call.1} parent=1 // pred_check_branch
      %196 = sbr.rel (0) target = $region61
    $region60: #{tpu_custom_call.1} parent=1 // pred_region
      %s198 = ssub.s32 80, 80
      %199 = vsyncadd [#allocation24], %s198
      %s201 = sshll.u32 [#allocation25], 4
      %s202 = int_to_ptr.vmem [resolvable:$true] %s201
      %204 = dma.hbm_to_vmem [thread:$0]  %s14, 80, %s202, [#allocation24]
    $region61: #{tpu_custom_call.1} parent=1 // pred_fallthru
      _
    // Predicated region
    $region62: #{tpu_custom_call.1} parent=1 // pred_check
      _
    $region63: #{tpu_custom_call.1} parent=1 // pred_check_branch
      %206 = sbr.rel (0) target = $region65
    $region64: #{tpu_custom_call.1} parent=1 // pred_region
      %s208 = ssub.s32 15360, 15360
      %209 = vsyncadd [#allocation27], %s208
      %s210 = sshll.u32 [#allocation26], 4
      %s211 = int_to_ptr.vmem [resolvable:$true] %s210
      %216 = dma.hbm_to_vmem [thread:$0]  %s15, 15360, %s211, [#allocation27], 192, 192, 12
    $region65: #{tpu_custom_call.1} parent=1 // pred_fallthru
      _
    // Predicated region
    $region66: #{tpu_custom_call.1} parent=1 // pred_check
      _
    $region67: #{tpu_custom_call.1} parent=1 // pred_check_branch
      %218 = sbr.rel (0) target = $region69
    $region68: #{tpu_custom_call.1} parent=1 // pred_region
      %s220 = ssub.s32 48, 48
      %221 = vsyncadd [#allocation27], %s220
      %s223 = sshll.u32 [#allocation28], 4
      %s224 = int_to_ptr.vmem [resolvable:$true] %s223
      %226 = dma.hbm_to_vmem [thread:$0]  %s16, 48, %s224, [#allocation27]
    $region69: #{tpu_custom_call.1} parent=1 // pred_fallthru
      _
    // Predicated region
    $region70: #{tpu_custom_call.1} parent=1 // pred_check
      _
    $region71: #{tpu_custom_call.1} parent=1 // pred_check_branch
      %228 = sbr.rel (0) target = $region73
    $region72: #{tpu_custom_call.1} parent=1 // pred_region
      %s230 = ssub.s32 192, 192
      %231 = vsyncadd [#allocation30], %s230
      %s232 = sshll.u32 [#allocation29], 4
      %s233 = int_to_ptr.vmem [resolvable:$true] %s232
      %238 = dma.hbm_to_vmem [thread:$0]  %s17, 192, %s233, [#allocation30], 64, 64, 4
    $region73: #{tpu_custom_call.1} parent=1 // pred_fallthru
      _
    // Predicated region
    $region74: #{tpu_custom_call.1} parent=1 // pred_check
      _
    $region75: #{tpu_custom_call.1} parent=1 // pred_check_branch
      %240 = sbr.rel (0) target = $region77
    $region76: #{tpu_custom_call.1} parent=1 // pred_region
      %s242 = ssub.s32 16, 16
      %243 = vsyncadd [#allocation30], %s242
      %s245 = sshll.u32 [#allocation31], 4
      %s246 = int_to_ptr.vmem [resolvable:$true] %s245
      %248 = dma.hbm_to_vmem [thread:$0]  %s18, 16, %s246, [#allocation30]
    $region77: #{tpu_custom_call.1} parent=1 // pred_fallthru
      _
    // Predicated region
    $region78: #{tpu_custom_call.1} parent=1 // pred_check
      _
    $region79: #{tpu_custom_call.1} parent=1 // pred_check_branch
      %250 = sbr.rel (0) target = $region81
    $region80: #{tpu_custom_call.1} parent=1 // pred_region
      %s252 = ssub.s32 832, 832
      %253 = vsyncadd [#allocation33], %s252
      %s254 = sshll.u32 [#allocation32], 4
      %s255 = int_to_ptr.vmem [resolvable:$true] %s254
      %260 = dma.hbm_to_vmem [thread:$0]  %s19, 832, %s255, [#allocation33], 64, 64, 4
    $region81: #{tpu_custom_call.1} parent=1 // pred_fallthru
      _
    // Predicated region
    $region82: #{tpu_custom_call.1} parent=1 // pred_check
      _
    $region83: #{tpu_custom_call.1} parent=1 // pred_check_branch
      %262 = sbr.rel (0) target = $region85
    $region84: #{tpu_custom_call.1} parent=1 // pred_region
      %s264 = ssub.s32 16, 16
      %265 = vsyncadd [#allocation33], %s264
      %s267 = sshll.u32 [#allocation34], 4
      %s268 = int_to_ptr.vmem [resolvable:$true] %s267
      %270 = dma.hbm_to_vmem [thread:$0]  %s20, 16, %s268, [#allocation33]
    $region85: #{tpu_custom_call.1} parent=1 // pred_fallthru
      _
    // Predicated region
    $region86: #{tpu_custom_call.1} parent=1 // pred_check
      _
    $region87: #{tpu_custom_call.1} parent=1 // pred_check_branch
      %272 = sbr.rel (0) target = $region89
    $region88: #{tpu_custom_call.1} parent=1 // pred_region
      %273 = dma.done [#allocation3], 192
    $region89: #{tpu_custom_call.1} parent=1 // pred_fallthru
      _
    // Predicated region
    $region90: #{tpu_custom_call.1} parent=1 // pred_check
      _
    $region91: #{tpu_custom_call.1} parent=1 // pred_check_branch
      %275 = sbr.rel (0) target = $region93
    $region92: #{tpu_custom_call.1} parent=1 // pred_region
      %276 = dma.done [#allocation6], 15360
    $region93: #{tpu_custom_call.1} parent=1 // pred_fallthru
      _
    // Predicated region
    $region94: #{tpu_custom_call.1} parent=1 // pred_check
      _
    $region95: #{tpu_custom_call.1} parent=1 // pred_check_branch
      %278 = sbr.rel (0) target = $region97
    $region96: #{tpu_custom_call.1} parent=1 // pred_region
      %279 = dma.done [#allocation6], 80
    $region97: #{tpu_custom_call.1} parent=1 // pred_fallthru
      _
    // Predicated region
    $region98: #{tpu_custom_call.1} parent=1 // pred_check
      _
    $region99: #{tpu_custom_call.1} parent=1 // pred_check_branch
      %281 = sbr.rel (0) target = $region101
    $region100: #{tpu_custom_call.1} parent=1 // pred_region
      %282 = dma.done [#allocation9], 25600
    $region101: #{tpu_custom_call.1} parent=1 // pred_fallthru
      _
    // Predicated region
    $region102: #{tpu_custom_call.1} parent=1 // pred_check
      _
    $region103: #{tpu_custom_call.1} parent=1 // pred_check_branch
      %284 = sbr.rel (0) target = $region105
    $region104: #{tpu_custom_call.1} parent=1 // pred_region
      %285 = dma.done [#allocation9], 80
    $region105: #{tpu_custom_call.1} parent=1 // pred_fallthru
      _
    // Predicated region
    $region106: #{tpu_custom_call.1} parent=1 // pred_check
      _
    $region107: #{tpu_custom_call.1} parent=1 // pred_check_branch
      %287 = sbr.rel (0) target = $region109
    $region108: #{tpu_custom_call.1} parent=1 // pred_region
      %288 = dma.done [#allocation12], 10240
    $region109: #{tpu_custom_call.1} parent=1 // pred_fallthru
      _
    // Predicated region
    $region110: #{tpu_custom_call.1} parent=1 // pred_check
      _
    $region111: #{tpu_custom_call.1} parent=1 // pred_check_branch
      %290 = sbr.rel (0) target = $region113
    $region112: #{tpu_custom_call.1} parent=1 // pred_region
      %291 = dma.done [#allocation12], 32
    $region113: #{tpu_custom_call.1} parent=1 // pred_fallthru
      _
    // Predicated region
    $region114: #{tpu_custom_call.1} parent=1 // pred_check
      _
    $region115: #{tpu_custom_call.1} parent=1 // pred_check_branch
      %293 = sbr.rel (0) target = $region117
    $region116: #{tpu_custom_call.1} parent=1 // pred_region
      %294 = dma.done [#allocation15], 1600
    $region117: #{tpu_custom_call.1} parent=1 // pred_fallthru
      _
    // Predicated region
    $region118: #{tpu_custom_call.1} parent=1 // pred_check
      _
    $region119: #{tpu_custom_call.1} parent=1 // pred_check_branch
      %296 = sbr.rel (0) target = $region121
    $region120: #{tpu_custom_call.1} parent=1 // pred_region
      %297 = dma.done [#allocation15], 16
    $region121: #{tpu_custom_call.1} parent=1 // pred_fallthru
      _
    // Predicated region
    $region122: #{tpu_custom_call.1} parent=1 // pred_check
      _
    $region123: #{tpu_custom_call.1} parent=1 // pred_check_branch
      %299 = sbr.rel (0) target = $region125
    $region124: #{tpu_custom_call.1} parent=1 // pred_region
      %300 = dma.done [#allocation18], 384
    $region125: #{tpu_custom_call.1} parent=1 // pred_fallthru
      _
    // Predicated region
    $region126: #{tpu_custom_call.1} parent=1 // pred_check
      _
    $region127: #{tpu_custom_call.1} parent=1 // pred_check_branch
      %302 = sbr.rel (0) target = $region129
    $region128: #{tpu_custom_call.1} parent=1 // pred_region
      %303 = dma.done [#allocation18], 32
    $region129: #{tpu_custom_call.1} parent=1 // pred_fallthru
      _
    // Predicated region
    $region130: #{tpu_custom_call.1} parent=1 // pred_check
      _
    $region131: #{tpu_custom_call.1} parent=1 // pred_check_branch
      %305 = sbr.rel (0) target = $region133
    $region132: #{tpu_custom_call.1} parent=1 // pred_region
      %306 = dma.done [#allocation21], 8000
    $region133: #{tpu_custom_call.1} parent=1 // pred_fallthru
      _
    // Predicated region
    $region134: #{tpu_custom_call.1} parent=1 // pred_check
      _
    $region135: #{tpu_custom_call.1} parent=1 // pred_check_branch
      %308 = sbr.rel (0) target = $region137
    $region136: #{tpu_custom_call.1} parent=1 // pred_region
      %309 = dma.done [#allocation21], 80
    $region137: #{tpu_custom_call.1} parent=1 // pred_fallthru
      _
    // Predicated region
    $region138: #{tpu_custom_call.1} parent=1 // pred_check
      _
    $region139: #{tpu_custom_call.1} parent=1 // pred_check_branch
      %311 = sbr.rel (0) target = $region141
    $region140: #{tpu_custom_call.1} parent=1 // pred_region
      %312 = dma.done [#allocation24], 25600
    $region141: #{tpu_custom_call.1} parent=1 // pred_fallthru
      _
    // Predicated region
    $region142: #{tpu_custom_call.1} parent=1 // pred_check
      _
    $region143: #{tpu_custom_call.1} parent=1 // pred_check_branch
      %314 = sbr.rel (0) target = $region145
    $region144: #{tpu_custom_call.1} parent=1 // pred_region
      %315 = dma.done [#allocation24], 80
    $region145: #{tpu_custom_call.1} parent=1 // pred_fallthru
      _
    // Predicated region
    $region146: #{tpu_custom_call.1} parent=1 // pred_check
      _
    $region147: #{tpu_custom_call.1} parent=1 // pred_check_branch
      %317 = sbr.rel (0) target = $region149
    $region148: #{tpu_custom_call.1} parent=1 // pred_region
      %318 = dma.done [#allocation27], 15360
    $region149: #{tpu_custom_call.1} parent=1 // pred_fallthru
      _
    // Predicated region
    $region150: #{tpu_custom_call.1} parent=1 // pred_check
      _
    $region151: #{tpu_custom_call.1} parent=1 // pred_check_branch
      %320 = sbr.rel (0) target = $region153
    $region152: #{tpu_custom_call.1} parent=1 // pred_region
      %321 = dma.done [#allocation27], 48
    $region153: #{tpu_custom_call.1} parent=1 // pred_fallthru
      _
    // Predicated region
    $region154: #{tpu_custom_call.1} parent=1 // pred_check
      _
    $region155: #{tpu_custom_call.1} parent=1 // pred_check_branch
      %323 = sbr.rel (0) target = $region157
    $region156: #{tpu_custom_call.1} parent=1 // pred_region
      %324 = dma.done [#allocation30], 192
    $region157: #{tpu_custom_call.1} parent=1 // pred_fallthru
      _
    // Predicated region
    $region158: #{tpu_custom_call.1} parent=1 // pred_check
      _
    $region159: #{tpu_custom_call.1} parent=1 // pred_check_branch
      %326 = sbr.rel (0) target = $region161
    $region160: #{tpu_custom_call.1} parent=1 // pred_region
      %327 = dma.done [#allocation30], 16
    $region161: #{tpu_custom_call.1} parent=1 // pred_fallthru
      _
    // Predicated region
    $region162: #{tpu_custom_call.1} parent=1 // pred_check
      _
    $region163: #{tpu_custom_call.1} parent=1 // pred_check_branch
      %329 = sbr.rel (0) target = $region165
    $region164: #{tpu_custom_call.1} parent=1 // pred_region
      %330 = dma.done [#allocation33], 832
    $region165: #{tpu_custom_call.1} parent=1 // pred_fallthru
      _
    // Predicated region
    $region166: #{tpu_custom_call.1} parent=1 // pred_check
      _
    $region167: #{tpu_custom_call.1} parent=1 // pred_check_branch
      %332 = sbr.rel (0) target = $region169
    $region168: #{tpu_custom_call.1} parent=1 // pred_region
      %333 = dma.done [#allocation33], 16
    $region169: #{tpu_custom_call.1} parent=1 // pred_fallthru
      _
    %v335 = vld [vmem:[#allocation2] sm:$0xff]
    %v336 = vld [vmem:[#allocation2 + $0x8] sm:$0xf]
    %v337 = vunpack.c.l.bf16 %v336
    %v338 = vld [vmem:[#allocation5] sm:$0xff]
    %v339 = vld [vmem:[#allocation5 + $0x8] sm:$0xff]
    %v340 = vld [vmem:[#allocation5 + $0x10] sm:$0xf]
    %v341 = vld [vmem:[#allocation5 + $0x14] sm:$0xff]
    %v342 = vld [vmem:[#allocation5 + $0x1c] sm:$0xff]
    %v343 = vld [vmem:[#allocation5 + $0x24] sm:$0xf]
    %v344 = vld [vmem:[#allocation5 + $0x28] sm:$0xff]
    %v345 = vld [vmem:[#allocation5 + $0x30] sm:$0xff]
    %v346 = vld [vmem:[#allocation5 + $0x38] sm:$0xf]
    %v347 = vld [vmem:[#allocation5 + $0x3c] sm:$0xff]
    %v348 = vld [vmem:[#allocation5 + $0x44] sm:$0xff]
    %v349 = vld [vmem:[#allocation5 + $0x4c] sm:$0xf]
    %v350 = vld [vmem:[#allocation5 + $0x50] sm:$0xff]
    %v351 = vld [vmem:[#allocation5 + $0x58] sm:$0xff]
    %v352 = vld [vmem:[#allocation5 + $0x60] sm:$0xf]
    %v353 = vld [vmem:[#allocation5 + $0x64] sm:$0xff]
    %v354 = vld [vmem:[#allocation5 + $0x6c] sm:$0xff]
    %v355 = vld [vmem:[#allocation5 + $0x74] sm:$0xf]
    %v356 = vld [vmem:[#allocation5 + $0x78] sm:$0xff]
    %v357 = vld [vmem:[#allocation5 + $0x80] sm:$0xff]
    %v358 = vld [vmem:[#allocation5 + $0x88] sm:$0xf]
    %v359 = vld [vmem:[#allocation5 + $0x8c] sm:$0xff]
    %v360 = vld [vmem:[#allocation5 + $0x94] sm:$0xff]
    %v361 = vld [vmem:[#allocation5 + $0x9c] sm:$0xf]
    %v362 = vld [vmem:[#allocation5 + $0xa0] sm:$0xff]
    %v363 = vld [vmem:[#allocation5 + $0xa8] sm:$0xff]
    %v364 = vld [vmem:[#allocation5 + $0xb0] sm:$0xf]
    %v365 = vld [vmem:[#allocation5 + $0xb4] sm:$0xff]
    %v366 = vld [vmem:[#allocation5 + $0xbc] sm:$0xff]
    %v367 = vld [vmem:[#allocation5 + $0xc4] sm:$0xf]
    %v368 = vld [vmem:[#allocation5 + $0xc8] sm:$0xff]
    %v369 = vld [vmem:[#allocation5 + $0xd0] sm:$0xff]
    %v370 = vld [vmem:[#allocation5 + $0xd8] sm:$0xf]
    %v371 = vld [vmem:[#allocation5 + $0xdc] sm:$0xff]
    %v372 = vld [vmem:[#allocation5 + $0xe4] sm:$0xff]
    %v373 = vld [vmem:[#allocation5 + $0xec] sm:$0xf]
    %v374 = vld [vmem:[#allocation5 + $0xf0] sm:$0xff]
    %v375 = vld [vmem:[#allocation5 + $0xf8] sm:$0xff]
    %v376 = vld [vmem:[#allocation5 + $0x100] sm:$0xf]
    %v377 = vld [vmem:[#allocation5 + $0x104] sm:$0xff]
    %v378 = vld [vmem:[#allocation5 + $0x10c] sm:$0xff]
    %v379 = vld [vmem:[#allocation5 + $0x114] sm:$0xf]
    %v380 = vld [vmem:[#allocation5 + $0x118] sm:$0xff]
    %v381 = vld [vmem:[#allocation5 + $0x120] sm:$0xff]
    %v382 = vld [vmem:[#allocation5 + $0x128] sm:$0xf]
    %v383 = vld [vmem:[#allocation5 + $0x12c] sm:$0xff]
    %v384 = vld [vmem:[#allocation5 + $0x134] sm:$0xff]
    %v385 = vld [vmem:[#allocation5 + $0x13c] sm:$0xf]
    %v386 = vld [vmem:[#allocation5 + $0x140] sm:$0xff]
    %v387 = vld [vmem:[#allocation5 + $0x148] sm:$0xff]
    %v388 = vld [vmem:[#allocation5 + $0x150] sm:$0xf]
    %v389 = vld [vmem:[#allocation5 + $0x154] sm:$0xff]
    %v390 = vld [vmem:[#allocation5 + $0x15c] sm:$0xff]
    %v391 = vld [vmem:[#allocation5 + $0x164] sm:$0xf]
    %v392 = vld [vmem:[#allocation5 + $0x168] sm:$0xff]
    %v393 = vld [vmem:[#allocation5 + $0x170] sm:$0xff]
    %v394 = vld [vmem:[#allocation5 + $0x178] sm:$0xf]
    %v395 = vld [vmem:[#allocation5 + $0x17c] sm:$0xff]
    %v396 = vld [vmem:[#allocation5 + $0x184] sm:$0xff]
    %v397 = vld [vmem:[#allocation5 + $0x18c] sm:$0xf]
    %v398 = vld [vmem:[#allocation5 + $0x190] sm:$0xff]
    %v399 = vld [vmem:[#allocation5 + $0x198] sm:$0xff]
    %v400 = vld [vmem:[#allocation5 + $0x1a0] sm:$0xf]
    %v401 = vld [vmem:[#allocation5 + $0x1a4] sm:$0xff]
    %v402 = vld [vmem:[#allocation5 + $0x1ac] sm:$0xff]
    %v403 = vld [vmem:[#allocation5 + $0x1b4] sm:$0xf]
    %v404 = vld [vmem:[#allocation5 + $0x1b8] sm:$0xff]
    %v405 = vld [vmem:[#allocation5 + $0x1c0] sm:$0xff]
    %v406 = vld [vmem:[#allocation5 + $0x1c8] sm:$0xf]
    %v407 = vld [vmem:[#allocation5 + $0x1cc] sm:$0xff]
    %v408 = vld [vmem:[#allocation5 + $0x1d4] sm:$0xff]
    %v409 = vld [vmem:[#allocation5 + $0x1dc] sm:$0xf]
    %v410 = vld [vmem:[#allocation5 + $0x1e0] sm:$0xff]
    %v411 = vld [vmem:[#allocation5 + $0x1e8] sm:$0xff]
    %v412 = vld [vmem:[#allocation5 + $0x1f0] sm:$0xf]
    %v413 = vld [vmem:[#allocation5 + $0x1f4] sm:$0xff]
    %v414 = vld [vmem:[#allocation5 + $0x1fc] sm:$0xff]
    %v415 = vld [vmem:[#allocation5 + $0x204] sm:$0xf]
    %v416 = vld [vmem:[#allocation5 + $0x208] sm:$0xff]
    %v417 = vld [vmem:[#allocation5 + $0x210] sm:$0xff]
    %v418 = vld [vmem:[#allocation5 + $0x218] sm:$0xf]
    %v419 = vld [vmem:[#allocation5 + $0x21c] sm:$0xff]
    %v420 = vld [vmem:[#allocation5 + $0x224] sm:$0xff]
    %v421 = vld [vmem:[#allocation5 + $0x22c] sm:$0xf]
    %v422 = vld [vmem:[#allocation5 + $0x230] sm:$0xff]
    %v423 = vld [vmem:[#allocation5 + $0x238] sm:$0xff]
    %v424 = vld [vmem:[#allocation5 + $0x240] sm:$0xf]
    %v425 = vld [vmem:[#allocation5 + $0x244] sm:$0xff]
    %v426 = vld [vmem:[#allocation5 + $0x24c] sm:$0xff]
    %v427 = vld [vmem:[#allocation5 + $0x254] sm:$0xf]
    %v428 = vld [vmem:[#allocation5 + $0x258] sm:$0xff]
    %v429 = vld [vmem:[#allocation5 + $0x260] sm:$0xff]
    %v430 = vld [vmem:[#allocation5 + $0x268] sm:$0xf]
    %v431 = vld [vmem:[#allocation5 + $0x26c] sm:$0xff]
    %v432 = vld [vmem:[#allocation5 + $0x274] sm:$0xff]
    %v433 = vld [vmem:[#allocation5 + $0x27c] sm:$0xf]
    %v434 = vld [vmem:[#allocation5 + $0x280] sm:$0xff]
    %v435 = vld [vmem:[#allocation5 + $0x288] sm:$0xff]
    %v436 = vld [vmem:[#allocation5 + $0x290] sm:$0xf]
    %v437 = vld [vmem:[#allocation5 + $0x294] sm:$0xff]
    %v438 = vld [vmem:[#allocation5 + $0x29c] sm:$0xff]
    %v439 = vld [vmem:[#allocation5 + $0x2a4] sm:$0xf]
    %v440 = vld [vmem:[#allocation5 + $0x2a8] sm:$0xff]
    %v441 = vld [vmem:[#allocation5 + $0x2b0] sm:$0xff]
    %v442 = vld [vmem:[#allocation5 + $0x2b8] sm:$0xf]
    %v443 = vld [vmem:[#allocation5 + $0x2bc] sm:$0xff]
    %v444 = vld [vmem:[#allocation5 + $0x2c4] sm:$0xff]
    %v445 = vld [vmem:[#allocation5 + $0x2cc] sm:$0xf]
    %v446 = vld [vmem:[#allocation5 + $0x2d0] sm:$0xff]
    %v447 = vld [vmem:[#allocation5 + $0x2d8] sm:$0xff]
    %v448 = vld [vmem:[#allocation5 + $0x2e0] sm:$0xf]
    %v449 = vld [vmem:[#allocation5 + $0x2e4] sm:$0xff]
    %v450 = vld [vmem:[#allocation5 + $0x2ec] sm:$0xff]
    %v451 = vld [vmem:[#allocation5 + $0x2f4] sm:$0xf]
    %v452 = vld [vmem:[#allocation5 + $0x2f8] sm:$0xff]
    %v453 = vld [vmem:[#allocation5 + $0x300] sm:$0xff]
    %v454 = vld [vmem:[#allocation5 + $0x308] sm:$0xf]
    %v455 = vld [vmem:[#allocation5 + $0x30c] sm:$0xff]
    %v456 = vld [vmem:[#allocation5 + $0x314] sm:$0xff]
    %v457 = vld [vmem:[#allocation5 + $0x31c] sm:$0xf]
    %v458 = vld [vmem:[#allocation5 + $0x320] sm:$0xff]
    %v459 = vld [vmem:[#allocation5 + $0x328] sm:$0xff]
    %v460 = vld [vmem:[#allocation5 + $0x330] sm:$0xf]
    %v461 = vld [vmem:[#allocation5 + $0x334] sm:$0xff]
    %v462 = vld [vmem:[#allocation5 + $0x33c] sm:$0xff]
    %v463 = vld [vmem:[#allocation5 + $0x344] sm:$0xf]
    %v464 = vld [vmem:[#allocation5 + $0x348] sm:$0xff]
    %v465 = vld [vmem:[#allocation5 + $0x350] sm:$0xff]
    %v466 = vld [vmem:[#allocation5 + $0x358] sm:$0xf]
    %v467 = vld [vmem:[#allocation5 + $0x35c] sm:$0xff]
    %v468 = vld [vmem:[#allocation5 + $0x364] sm:$0xff]
    %v469 = vld [vmem:[#allocation5 + $0x36c] sm:$0xf]
    %v470 = vld [vmem:[#allocation5 + $0x370] sm:$0xff]
    %v471 = vld [vmem:[#allocation5 + $0x378] sm:$0xff]
    %v472 = vld [vmem:[#allocation5 + $0x380] sm:$0xf]
    %v473 = vld [vmem:[#allocation5 + $0x384] sm:$0xff]
    %v474 = vld [vmem:[#allocation5 + $0x38c] sm:$0xff]
    %v475 = vld [vmem:[#allocation5 + $0x394] sm:$0xf]
    %v476 = vld [vmem:[#allocation5 + $0x398] sm:$0xff]
    %v477 = vld [vmem:[#allocation5 + $0x3a0] sm:$0xff]
    %v478 = vld [vmem:[#allocation5 + $0x3a8] sm:$0xf]
    %v479 = vld [vmem:[#allocation5 + $0x3ac] sm:$0xff]
    %v480 = vld [vmem:[#allocation5 + $0x3b4] sm:$0xff]
    %v481 = vld [vmem:[#allocation5 + $0x3bc] sm:$0xf]
    %v482 = vld [vmem:[#allocation7] sm:$0x1f]
    %v484 = vlaneseq
    %v485 = vshrl.u32 %v484, 7
    %v486 = vsub.s32 0, %v485
    %v487 = vrot.slane %v482, %v486
    %v488 = vlaneseq
    %v489 = vshrl.u32 %v488, 7
    %v490 = vsub.s32 1, %v489
    %v491 = vrot.slane %v482, %v490
    %v492 = vlaneseq
    %v493 = vshrl.u32 %v492, 7
    %v494 = vsub.s32 2, %v493
    %v495 = vrot.slane %v482, %v494
    %v496 = vlaneseq
    %v497 = vshrl.u32 %v496, 7
    %v498 = vsub.s32 3, %v497
    %v499 = vrot.slane %v482, %v498
    %v500 = vlaneseq
    %v501 = vshrl.u32 %v500, 7
    %v502 = vsub.s32 4, %v501
    %v503 = vrot.slane %v482, %v502
    %v511 = vunpack.c.l.b16 %v335
    %v512 = vunpack.c.h.b16 %v335
    %v513 = vunpack.c.l.b16 %v336
    %v514 = vpack.c.b16 %v511, %v511
    %v515 = vpack.c.b16 %v512, %v512
    %v516 = vpack.c.b16 %v513, %v513
    %v664 = vunpack.c.l.b16 %v338
    %v665 = vunpack.c.h.b16 %v338
    %v666 = vunpack.c.l.b16 %v339
    %v667 = vunpack.c.h.b16 %v339
    %v668 = vunpack.c.l.b16 %v340
    %v669 = vunpack.c.l.b16 %v341
    %v670 = vunpack.c.h.b16 %v341
    %v671 = vunpack.c.l.b16 %v342
    %v672 = vunpack.c.h.b16 %v342
    %v673 = vunpack.c.l.b16 %v343
    %v674 = vunpack.c.l.b16 %v344
    %v675 = vunpack.c.h.b16 %v344
    %v676 = vunpack.c.l.b16 %v345
    %v677 = vunpack.c.h.b16 %v345
    %v678 = vunpack.c.l.b16 %v346
    %v679 = vunpack.c.l.b16 %v347
    %v680 = vunpack.c.h.b16 %v347
    %v681 = vunpack.c.l.b16 %v348
    %v682 = vunpack.c.h.b16 %v348
    %v683 = vunpack.c.l.b16 %v349
    %v684 = vunpack.c.l.b16 %v350
    %v685 = vunpack.c.h.b16 %v350
    %v686 = vunpack.c.l.b16 %v351
    %v687 = vunpack.c.h.b16 %v351
    %v688 = vunpack.c.l.b16 %v352
    %v689 = vunpack.c.l.b16 %v353
    %v690 = vunpack.c.h.b16 %v353
    %v691 = vunpack.c.l.b16 %v354
    %v692 = vunpack.c.h.b16 %v354
    %v693 = vunpack.c.l.b16 %v355
    %v694 = vunpack.c.l.b16 %v356
    %v695 = vunpack.c.h.b16 %v356
    %v696 = vunpack.c.l.b16 %v357
    %v697 = vunpack.c.h.b16 %v357
    %v698 = vunpack.c.l.b16 %v358
    %v699 = vunpack.c.l.b16 %v359
    %v700 = vunpack.c.h.b16 %v359
    %v701 = vunpack.c.l.b16 %v360
    %v702 = vunpack.c.h.b16 %v360
    %v703 = vunpack.c.l.b16 %v361
    %v704 = vunpack.c.l.b16 %v362
    %v705 = vunpack.c.h.b16 %v362
    %v706 = vunpack.c.l.b16 %v363
    %v707 = vunpack.c.h.b16 %v363
    %v708 = vunpack.c.l.b16 %v364
    %v709 = vunpack.c.l.b16 %v365
    %v710 = vunpack.c.h.b16 %v365
    %v711 = vunpack.c.l.b16 %v366
    %v712 = vunpack.c.h.b16 %v366
    %v713 = vunpack.c.l.b16 %v367
    %v714 = vunpack.c.l.b16 %v368
    %v715 = vunpack.c.h.b16 %v368
    %v716 = vunpack.c.l.b16 %v369
    %v717 = vunpack.c.h.b16 %v369
    %v718 = vunpack.c.l.b16 %v370
    %v719 = vunpack.c.l.b16 %v371
    %v720 = vunpack.c.h.b16 %v371
    %v721 = vunpack.c.l.b16 %v372
    %v722 = vunpack.c.h.b16 %v372
    %v723 = vunpack.c.l.b16 %v373
    %v724 = vunpack.c.l.b16 %v374
    %v725 = vunpack.c.h.b16 %v374
    %v726 = vunpack.c.l.b16 %v375
    %v727 = vunpack.c.h.b16 %v375
    %v728 = vunpack.c.l.b16 %v376
    %v729 = vunpack.c.l.b16 %v377
    %v730 = vunpack.c.h.b16 %v377
    %v731 = vunpack.c.l.b16 %v378
    %v732 = vunpack.c.h.b16 %v378
    %v733 = vunpack.c.l.b16 %v379
    %v734 = vunpack.c.l.b16 %v380
    %v735 = vunpack.c.h.b16 %v380
    %v736 = vunpack.c.l.b16 %v381
    %v737 = vunpack.c.h.b16 %v381
    %v738 = vunpack.c.l.b16 %v382
    %v739 = vunpack.c.l.b16 %v383
    %v740 = vunpack.c.h.b16 %v383
    %v741 = vunpack.c.l.b16 %v384
    %v742 = vunpack.c.h.b16 %v384
    %v743 = vunpack.c.l.b16 %v385
    %v744 = vunpack.c.l.b16 %v386
    %v745 = vunpack.c.h.b16 %v386
    %v746 = vunpack.c.l.b16 %v387
    %v747 = vunpack.c.h.b16 %v387
    %v748 = vunpack.c.l.b16 %v388
    %v749 = vunpack.c.l.b16 %v389
    %v750 = vunpack.c.h.b16 %v389
    %v751 = vunpack.c.l.b16 %v390
    %v752 = vunpack.c.h.b16 %v390
    %v753 = vunpack.c.l.b16 %v391
    %v754 = vunpack.c.l.b16 %v392
    %v755 = vunpack.c.h.b16 %v392
    %v756 = vunpack.c.l.b16 %v393
    %v757 = vunpack.c.h.b16 %v393
    %v758 = vunpack.c.l.b16 %v394
    %v759 = vunpack.c.l.b16 %v395
    %v760 = vunpack.c.h.b16 %v395
    %v761 = vunpack.c.l.b16 %v396
    %v762 = vunpack.c.h.b16 %v396
    %v763 = vunpack.c.l.b16 %v397
    %v764 = vunpack.c.l.b16 %v398
    %v765 = vunpack.c.h.b16 %v398
    %v766 = vunpack.c.l.b16 %v399
    %v767 = vunpack.c.h.b16 %v399
    %v768 = vunpack.c.l.b16 %v400
    %v769 = vunpack.c.l.b16 %v401
    %v770 = vunpack.c.h.b16 %v401
    %v771 = vunpack.c.l.b16 %v402
    %v772 = vunpack.c.h.b16 %v402
    %v773 = vunpack.c.l.b16 %v403
    %v774 = vunpack.c.l.b16 %v404
    %v775 = vunpack.c.h.b16 %v404
    %v776 = vunpack.c.l.b16 %v405
    %v777 = vunpack.c.h.b16 %v405
    %v778 = vunpack.c.l.b16 %v406
    %v779 = vunpack.c.l.b16 %v407
    %v780 = vunpack.c.h.b16 %v407
    %v781 = vunpack.c.l.b16 %v408
    %v782 = vunpack.c.h.b16 %v408
    %v783 = vunpack.c.l.b16 %v409
    %v784 = vunpack.c.l.b16 %v410
    %v785 = vunpack.c.h.b16 %v410
    %v786 = vunpack.c.l.b16 %v411
    %v787 = vunpack.c.h.b16 %v411
    %v788 = vunpack.c.l.b16 %v412
    %v789 = vunpack.c.l.b16 %v413
    %v790 = vunpack.c.h.b16 %v413
    %v791 = vunpack.c.l.b16 %v414
    %v792 = vunpack.c.h.b16 %v414
    %v793 = vunpack.c.l.b16 %v415
    %v794 = vunpack.c.l.b16 %v416
    %v795 = vunpack.c.h.b16 %v416
    %v796 = vunpack.c.l.b16 %v417
    %v797 = vunpack.c.h.b16 %v417
    %v798 = vunpack.c.l.b16 %v418
    %v799 = vunpack.c.l.b16 %v419
    %v800 = vunpack.c.h.b16 %v419
    %v801 = vunpack.c.l.b16 %v420
    %v802 = vunpack.c.h.b16 %v420
    %v803 = vunpack.c.l.b16 %v421
    %v804 = vunpack.c.l.b16 %v422
    %v805 = vunpack.c.h.b16 %v422
    %v806 = vunpack.c.l.b16 %v423
    %v807 = vunpack.c.h.b16 %v423
    %v808 = vunpack.c.l.b16 %v424
    %v809 = vunpack.c.l.b16 %v425
    %v810 = vunpack.c.h.b16 %v425
    %v811 = vunpack.c.l.b16 %v426
    %v812 = vunpack.c.h.b16 %v426
    %v813 = vunpack.c.l.b16 %v427
    %v814 = vunpack.c.l.b16 %v428
    %v815 = vunpack.c.h.b16 %v428
    %v816 = vunpack.c.l.b16 %v429
    %v817 = vunpack.c.h.b16 %v429
    %v818 = vunpack.c.l.b16 %v430
    %v819 = vunpack.c.l.b16 %v431
    %v820 = vunpack.c.h.b16 %v431
    %v821 = vunpack.c.l.b16 %v432
    %v822 = vunpack.c.h.b16 %v432
    %v823 = vunpack.c.l.b16 %v433
    %v824 = vunpack.c.l.b16 %v434
    %v825 = vunpack.c.h.b16 %v434
    %v826 = vunpack.c.l.b16 %v435
    %v827 = vunpack.c.h.b16 %v435
    %v828 = vunpack.c.l.b16 %v436
    %v829 = vunpack.c.l.b16 %v437
    %v830 = vunpack.c.h.b16 %v437
    %v831 = vunpack.c.l.b16 %v438
    %v832 = vunpack.c.h.b16 %v438
    %v833 = vunpack.c.l.b16 %v439
    %v834 = vunpack.c.l.b16 %v440
    %v835 = vunpack.c.h.b16 %v440
    %v836 = vunpack.c.l.b16 %v441
    %v837 = vunpack.c.h.b16 %v441
    %v838 = vunpack.c.l.b16 %v442
    %v839 = vunpack.c.l.b16 %v443
    %v840 = vunpack.c.h.b16 %v443
    %v841 = vunpack.c.l.b16 %v444
    %v842 = vunpack.c.h.b16 %v444
    %v843 = vunpack.c.l.b16 %v445
    %v844 = vunpack.c.l.b16 %v446
    %v845 = vunpack.c.h.b16 %v446
    %v846 = vunpack.c.l.b16 %v447
    %v847 = vunpack.c.h.b16 %v447
    %v848 = vunpack.c.l.b16 %v448
    %v849 = vunpack.c.l.b16 %v449
    %v850 = vunpack.c.h.b16 %v449
    %v851 = vunpack.c.l.b16 %v450
    %v852 = vunpack.c.h.b16 %v450
    %v853 = vunpack.c.l.b16 %v451
    %v854 = vunpack.c.l.b16 %v452
    %v855 = vunpack.c.h.b16 %v452
    %v856 = vunpack.c.l.b16 %v453
    %v857 = vunpack.c.h.b16 %v453
    %v858 = vunpack.c.l.b16 %v454
    %v859 = vunpack.c.l.b16 %v455
    %v860 = vunpack.c.h.b16 %v455
    %v861 = vunpack.c.l.b16 %v456
    %v862 = vunpack.c.h.b16 %v456
    %v863 = vunpack.c.l.b16 %v457
    %v864 = vunpack.c.l.b16 %v458
    %v865 = vunpack.c.h.b16 %v458
    %v866 = vunpack.c.l.b16 %v459
    %v867 = vunpack.c.h.b16 %v459
    %v868 = vunpack.c.l.b16 %v460
    %v869 = vunpack.c.l.b16 %v461
    %v870 = vunpack.c.h.b16 %v461
    %v871 = vunpack.c.l.b16 %v462
    %v872 = vunpack.c.h.b16 %v462
    %v873 = vunpack.c.l.b16 %v463
    %v874 = vunpack.c.l.b16 %v464
    %v875 = vunpack.c.h.b16 %v464
    %v876 = vunpack.c.l.b16 %v465
    %v877 = vunpack.c.h.b16 %v465
    %v878 = vunpack.c.l.b16 %v466
    %v879 = vunpack.c.l.b16 %v467
    %v880 = vunpack.c.h.b16 %v467
    %v881 = vunpack.c.l.b16 %v468
    %v882 = vunpack.c.h.b16 %v468
    %v883 = vunpack.c.l.b16 %v469
    %v884 = vunpack.c.l.b16 %v470
    %v885 = vunpack.c.h.b16 %v470
    %v886 = vunpack.c.l.b16 %v471
    %v887 = vunpack.c.h.b16 %v471
    %v888 = vunpack.c.l.b16 %v472
    %v889 = vunpack.c.l.b16 %v473
    %v890 = vunpack.c.h.b16 %v473
    %v891 = vunpack.c.l.b16 %v474
    %v892 = vunpack.c.h.b16 %v474
    %v893 = vunpack.c.l.b16 %v475
    %v894 = vunpack.c.l.b16 %v476
    %v895 = vunpack.c.h.b16 %v476
    %v896 = vunpack.c.l.b16 %v477
    %v897 = vunpack.c.h.b16 %v477
    %v898 = vunpack.c.l.b16 %v478
    %v899 = vunpack.c.l.b16 %v479
    %v900 = vunpack.c.h.b16 %v479
    %v901 = vunpack.c.l.b16 %v480
    %v902 = vunpack.c.h.b16 %v480
    %v903 = vunpack.c.l.b16 %v481
    %v904 = vpack.c.b16 %v669, %v664
    %v905 = vpack.c.b16 %v670, %v665
    %v906 = vpack.c.b16 %v671, %v666
    %v907 = vpack.c.b16 %v672, %v667
    %v908 = vpack.c.b16 %v673, %v668
    %v909 = vpack.c.b16 %v679, %v674
    %v910 = vpack.c.b16 %v680, %v675
    %v911 = vpack.c.b16 %v681, %v676
    %v912 = vpack.c.b16 %v682, %v677
    %v913 = vpack.c.b16 %v683, %v678
    %v914 = vpack.c.b16 %v689, %v684
    %v915 = vpack.c.b16 %v690, %v685
    %v916 = vpack.c.b16 %v691, %v686
    %v917 = vpack.c.b16 %v692, %v687
    %v918 = vpack.c.b16 %v693, %v688
    %v919 = vpack.c.b16 %v699, %v694
    %v920 = vpack.c.b16 %v700, %v695
    %v921 = vpack.c.b16 %v701, %v696
    %v922 = vpack.c.b16 %v702, %v697
    %v923 = vpack.c.b16 %v703, %v698
    %v924 = vpack.c.b16 %v709, %v704
    %v925 = vpack.c.b16 %v710, %v705
    %v926 = vpack.c.b16 %v711, %v706
    %v927 = vpack.c.b16 %v712, %v707
    %v928 = vpack.c.b16 %v713, %v708
    %v929 = vpack.c.b16 %v719, %v714
    %v930 = vpack.c.b16 %v720, %v715
    %v931 = vpack.c.b16 %v721, %v716
    %v932 = vpack.c.b16 %v722, %v717
    %v933 = vpack.c.b16 %v723, %v718
    %v934 = vpack.c.b16 %v729, %v724
    %v935 = vpack.c.b16 %v730, %v725
    %v936 = vpack.c.b16 %v731, %v726
    %v937 = vpack.c.b16 %v732, %v727
    %v938 = vpack.c.b16 %v733, %v728
    %v939 = vpack.c.b16 %v739, %v734
    %v940 = vpack.c.b16 %v740, %v735
    %v941 = vpack.c.b16 %v741, %v736
    %v942 = vpack.c.b16 %v742, %v737
    %v943 = vpack.c.b16 %v743, %v738
    %v944 = vpack.c.b16 %v749, %v744
    %v945 = vpack.c.b16 %v750, %v745
    %v946 = vpack.c.b16 %v751, %v746
    %v947 = vpack.c.b16 %v752, %v747
    %v948 = vpack.c.b16 %v753, %v748
    %v949 = vpack.c.b16 %v759, %v754
    %v950 = vpack.c.b16 %v760, %v755
    %v951 = vpack.c.b16 %v761, %v756
    %v952 = vpack.c.b16 %v762, %v757
    %v953 = vpack.c.b16 %v763, %v758
    %v954 = vpack.c.b16 %v769, %v764
    %v955 = vpack.c.b16 %v770, %v765
    %v956 = vpack.c.b16 %v771, %v766
    %v957 = vpack.c.b16 %v772, %v767
    %v958 = vpack.c.b16 %v773, %v768
    %v959 = vpack.c.b16 %v779, %v774
    %v960 = vpack.c.b16 %v780, %v775
    %v961 = vpack.c.b16 %v781, %v776
    %v962 = vpack.c.b16 %v782, %v777
    %v963 = vpack.c.b16 %v783, %v778
    %v964 = vpack.c.b16 %v789, %v784
    %v965 = vpack.c.b16 %v790, %v785
    %v966 = vpack.c.b16 %v791, %v786
    %v967 = vpack.c.b16 %v792, %v787
    %v968 = vpack.c.b16 %v793, %v788
    %v969 = vpack.c.b16 %v799, %v794
    %v970 = vpack.c.b16 %v800, %v795
    %v971 = vpack.c.b16 %v801, %v796
    %v972 = vpack.c.b16 %v802, %v797
    %v973 = vpack.c.b16 %v803, %v798
    %v974 = vpack.c.b16 %v809, %v804
    %v975 = vpack.c.b16 %v810, %v805
    %v976 = vpack.c.b16 %v811, %v806
    %v977 = vpack.c.b16 %v812, %v807
    %v978 = vpack.c.b16 %v813, %v808
    %v979 = vpack.c.b16 %v819, %v814
    %v980 = vpack.c.b16 %v820, %v815
    %v981 = vpack.c.b16 %v821, %v816
    %v982 = vpack.c.b16 %v822, %v817
    %v983 = vpack.c.b16 %v823, %v818
    %v984 = vpack.c.b16 %v829, %v824
    %v985 = vpack.c.b16 %v830, %v825
    %v986 = vpack.c.b16 %v831, %v826
    %v987 = vpack.c.b16 %v832, %v827
    %v988 = vpack.c.b16 %v833, %v828
    %v989 = vpack.c.b16 %v839, %v834
    %v990 = vpack.c.b16 %v840, %v835
    %v991 = vpack.c.b16 %v841, %v836
    %v992 = vpack.c.b16 %v842, %v837
    %v993 = vpack.c.b16 %v843, %v838
    %v994 = vpack.c.b16 %v849, %v844
    %v995 = vpack.c.b16 %v850, %v845
    %v996 = vpack.c.b16 %v851, %v846
    %v997 = vpack.c.b16 %v852, %v847
    %v998 = vpack.c.b16 %v853, %v848
    %v999 = vpack.c.b16 %v859, %v854
    %v1000 = vpack.c.b16 %v860, %v855
    %v1001 = vpack.c.b16 %v861, %v856
    %v1002 = vpack.c.b16 %v862, %v857
    %v1003 = vpack.c.b16 %v863, %v858
    %v1004 = vpack.c.b16 %v869, %v864
    %v1005 = vpack.c.b16 %v870, %v865
    %v1006 = vpack.c.b16 %v871, %v866
    %v1007 = vpack.c.b16 %v872, %v867
    %v1008 = vpack.c.b16 %v873, %v868
    %v1009 = vpack.c.b16 %v879, %v874
    %v1010 = vpack.c.b16 %v880, %v875
    %v1011 = vpack.c.b16 %v881, %v876
    %v1012 = vpack.c.b16 %v882, %v877
    %v1013 = vpack.c.b16 %v883, %v878
    %v1014 = vpack.c.b16 %v889, %v884
    %v1015 = vpack.c.b16 %v890, %v885
    %v1016 = vpack.c.b16 %v891, %v886
    %v1017 = vpack.c.b16 %v892, %v887
    %v1018 = vpack.c.b16 %v893, %v888
    %v1019 = vpack.c.b16 %v899, %v894
    %v1020 = vpack.c.b16 %v900, %v895
    %v1021 = vpack.c.b16 %v901, %v896
    %v1022 = vpack.c.b16 %v902, %v897
    %v1023 = vpack.c.b16 %v903, %v898
    %1144 = vmatprep.subr.bf16.mxu0 %v905
    %1145 = vmatpush1.bf16.msra.mxu0 %v904
    %1146 = vmatprep.subr.bf16.mxu0 %v910
    %1147 = vmatpush1.bf16.msra.mxu0 %v909
    %1148 = vmatprep.subr.bf16.mxu0 %v915
    %1149 = vmatpush1.bf16.msra.mxu0 %v914
    %1150 = vmatprep.subr.bf16.mxu0 %v920
    %1151 = vmatpush1.bf16.msra.mxu0 %v919
    %1152 = vmatprep.subr.bf16.mxu0 %v925
    %1153 = vmatpush1.bf16.msra.mxu0 %v924
    %1154 = vmatprep.subr.bf16.mxu0 %v930
    %1155 = vmatpush1.bf16.msra.mxu0 %v929
    %1156 = vmatprep.subr.bf16.mxu0 %v935
    %1157 = vmatpush1.bf16.msra.mxu0 %v934
    %1158 = vmatprep.subr.bf16.mxu0 %v940
    %1159 = vmatpush1.bf16.msra.mxu0 %v939
    %1160 = vmatprep.subr.bf16.mxu0 %v945
    %1161 = vmatpush1.bf16.msra.mxu0 %v944
    %1162 = vmatprep.subr.bf16.mxu0 %v950
    %1163 = vmatpush1.bf16.msra.mxu0 %v949
    %1164 = vmatprep.subr.bf16.mxu0 %v955
    %1165 = vmatpush1.bf16.msra.mxu0 %v954
    %1166 = vmatprep.subr.bf16.mxu0 %v960
    %1167 = vmatpush1.bf16.msra.mxu0 %v959
    %1168 = vmatprep.subr.bf16.mxu0 %v965
    %1169 = vmatpush1.bf16.msra.mxu0 %v964
    %1170 = vmatprep.subr.bf16.mxu0 %v970
    %1171 = vmatpush1.bf16.msra.mxu0 %v969
    %1172 = vmatprep.subr.bf16.mxu0 %v975
    %1173 = vmatpush1.bf16.msra.mxu0 %v974
    %1174 = vmatprep.subr.bf16.mxu0 %v980
    %1175 = vmatpush1.bf16.msra.mxu0 %v979
    %1176 = vmatprep.mubr.bf16.mxu0 %v515
    %1177 = vmatmul.mubr.bf16.gmra.mrb[0].mxu0 %v514
    %v1178 = vpop.f32.mrb[0].mxu0
    %v1179 = vadd.f32 %v487, %v1178
    %v1180 = vpop.f32.mrb[0].mxu0
    %v1181 = vadd.f32 %v491, %v1180
    %v1182 = vpop.f32.mrb[0].mxu0
    %v1183 = vpop.f32.mrb[0].mxu0
    %1184 = vdwg.mxu0
    %1185 = vmatprep.subr.bf16.mxu0 %v985
    %1186 = vmatpush1.bf16.msra.mxu0 %v984
    %1187 = vmatprep.subr.bf16.mxu0 %v990
    %1188 = vmatpush1.bf16.msra.mxu0 %v989
    %1189 = vmatprep.subr.bf16.mxu0 %v995
    %1190 = vmatpush1.bf16.msra.mxu0 %v994
    %1191 = vmatprep.subr.bf16.mxu0 %v1000
    %1192 = vmatpush1.bf16.msra.mxu0 %v999
    %1193 = vmatprep.subr.bf16.mxu0 %v1005
    %1194 = vmatpush1.bf16.msra.mxu0 %v1004
    %1195 = vmatprep.subr.bf16.mxu0 %v1010
    %1196 = vmatpush1.bf16.msra.mxu0 %v1009
    %1197 = vmatprep.subr.bf16.mxu0 %v1015
    %1198 = vmatpush1.bf16.msra.mxu0 %v1014
    %1199 = vmatprep.subr.bf16.mxu0 %v1020
    %1200 = vmatpush1.bf16.msra.mxu0 %v1019
    %1201 = vmatprep.subr.bf16.mxu0 0
    %1202 = vmatpush1.bf16.msra.mxu0 0
    %1203 = vmatprep.subr.bf16.mxu0 0
    %1204 = vmatpush1.bf16.msra.mxu0 0
    %1205 = vmatprep.subr.bf16.mxu0 0
    %1206 = vmatpush1.bf16.msra.mxu0 0
    %1207 = vmatprep.subr.bf16.mxu0 0
    %1208 = vmatpush1.bf16.msra.mxu0 0
    %1209 = vmatprep.subr.bf16.mxu0 0
    %1210 = vmatpush1.bf16.msra.mxu0 0
    %1211 = vmatprep.subr.bf16.mxu0 0
    %1212 = vmatpush1.bf16.msra.mxu0 0
    %1213 = vmatprep.subr.bf16.mxu0 0
    %1214 = vmatpush1.bf16.msra.mxu0 0
    %1215 = vmatprep.subr.bf16.mxu0 0
    %1216 = vmatpush1.bf16.msra.mxu0 0
    %1217 = vmatprep.mubr.bf16.mxu0 0
    %1218 = vmatmul.mubr.bf16.gmra.mrb[0].mxu0 %v516
    %v1219 = vpop.f32.mrb[0].mxu0
    %v1220 = vadd.f32 %v1179, %v1219
    %v1221 = vpop.f32.mrb[0].mxu0
    %v1222 = vadd.f32 %v1181, %v1221
    %v1223 = vpop.f32.mrb[0].mxu0
    %v1224 = vpop.f32.mrb[0].mxu0
    %1225 = vdwg.mxu0
    %1226 = vmatprep.subr.bf16.mxu0 %v907
    %1227 = vmatpush1.bf16.msra.mxu0 %v906
    %1228 = vmatprep.subr.bf16.mxu0 %v912
    %1229 = vmatpush1.bf16.msra.mxu0 %v911
    %1230 = vmatprep.subr.bf16.mxu0 %v917
    %1231 = vmatpush1.bf16.msra.mxu0 %v916
    %1232 = vmatprep.subr.bf16.mxu0 %v922
    %1233 = vmatpush1.bf16.msra.mxu0 %v921
    %1234 = vmatprep.subr.bf16.mxu0 %v927
    %1235 = vmatpush1.bf16.msra.mxu0 %v926
    %1236 = vmatprep.subr.bf16.mxu0 %v932
    %1237 = vmatpush1.bf16.msra.mxu0 %v931
    %1238 = vmatprep.subr.bf16.mxu0 %v937
    %1239 = vmatpush1.bf16.msra.mxu0 %v936
    %1240 = vmatprep.subr.bf16.mxu0 %v942
    %1241 = vmatpush1.bf16.msra.mxu0 %v941
    %1242 = vmatprep.subr.bf16.mxu0 %v947
    %1243 = vmatpush1.bf16.msra.mxu0 %v946
    %1244 = vmatprep.subr.bf16.mxu0 %v952
    %1245 = vmatpush1.bf16.msra.mxu0 %v951
    %1246 = vmatprep.subr.bf16.mxu0 %v957
    %1247 = vmatpush1.bf16.msra.mxu0 %v956
    %1248 = vmatprep.subr.bf16.mxu0 %v962
    %1249 = vmatpush1.bf16.msra.mxu0 %v961
    %1250 = vmatprep.subr.bf16.mxu0 %v967
    %1251 = vmatpush1.bf16.msra.mxu0 %v966
    %1252 = vmatprep.subr.bf16.mxu0 %v972
    %1253 = vmatpush1.bf16.msra.mxu0 %v971
    %1254 = vmatprep.subr.bf16.mxu0 %v977
    %1255 = vmatpush1.bf16.msra.mxu0 %v976
    %1256 = vmatprep.subr.bf16.mxu0 %v982
    %1257 = vmatpush1.bf16.msra.mxu0 %v981
    %1258 = vmatprep.mubr.bf16.mxu0 %v515
    %1259 = vmatmul.mubr.bf16.gmra.mrb[0].mxu0 %v514
    %v1260 = vpop.f32.mrb[0].mxu0
    %v1261 = vadd.f32 %v495, %v1260
    %v1262 = vpop.f32.mrb[0].mxu0
    %v1263 = vadd.f32 %v499, %v1262
    %v1264 = vpop.f32.mrb[0].mxu0
    %v1265 = vpop.f32.mrb[0].mxu0
    %1266 = vdwg.mxu0
    %1267 = vmatprep.subr.bf16.mxu0 %v987
    %1268 = vmatpush1.bf16.msra.mxu0 %v986
    %1269 = vmatprep.subr.bf16.mxu0 %v992
    %1270 = vmatpush1.bf16.msra.mxu0 %v991
    %1271 = vmatprep.subr.bf16.mxu0 %v997
    %1272 = vmatpush1.bf16.msra.mxu0 %v996
    %1273 = vmatprep.subr.bf16.mxu0 %v1002
    %1274 = vmatpush1.bf16.msra.mxu0 %v1001
    %1275 = vmatprep.subr.bf16.mxu0 %v1007
    %1276 = vmatpush1.bf16.msra.mxu0 %v1006
    %1277 = vmatprep.subr.bf16.mxu0 %v1012
    %1278 = vmatpush1.bf16.msra.mxu0 %v1011
    %1279 = vmatprep.subr.bf16.mxu0 %v1017
    %1280 = vmatpush1.bf16.msra.mxu0 %v1016
    %1281 = vmatprep.subr.bf16.mxu0 %v1022
    %1282 = vmatpush1.bf16.msra.mxu0 %v1021
    %1283 = vmatprep.subr.bf16.mxu0 0
    %1284 = vmatpush1.bf16.msra.mxu0 0
    %1285 = vmatprep.subr.bf16.mxu0 0
    %1286 = vmatpush1.bf16.msra.mxu0 0
    %1287 = vmatprep.subr.bf16.mxu0 0
    %1288 = vmatpush1.bf16.msra.mxu0 0
    %1289 = vmatprep.subr.bf16.mxu0 0
    %1290 = vmatpush1.bf16.msra.mxu0 0
    %1291 = vmatprep.subr.bf16.mxu0 0
    %1292 = vmatpush1.bf16.msra.mxu0 0
    %1293 = vmatprep.subr.bf16.mxu0 0
    %1294 = vmatpush1.bf16.msra.mxu0 0
    %1295 = vmatprep.subr.bf16.mxu0 0
    %1296 = vmatpush1.bf16.msra.mxu0 0
    %1297 = vmatprep.subr.bf16.mxu0 0
    %1298 = vmatpush1.bf16.msra.mxu0 0
    %1299 = vmatprep.mubr.bf16.mxu0 0
    %1300 = vmatmul.mubr.bf16.gmra.mrb[0].mxu0 %v516
    %v1301 = vpop.f32.mrb[0].mxu0
    %v1302 = vadd.f32 %v1261, %v1301
    %v1303 = vpop.f32.mrb[0].mxu0
    %v1304 = vadd.f32 %v1263, %v1303
    %v1305 = vpop.f32.mrb[0].mxu0
    %v1306 = vpop.f32.mrb[0].mxu0
    %1307 = vdwg.mxu0
    %1308 = vmatprep.subr.bf16.mxu0 0
    %1309 = vmatpush1.bf16.msra.mxu0 %v908
    %1310 = vmatprep.subr.bf16.mxu0 0
    %1311 = vmatpush1.bf16.msra.mxu0 %v913
    %1312 = vmatprep.subr.bf16.mxu0 0
    %1313 = vmatpush1.bf16.msra.mxu0 %v918
    %1314 = vmatprep.subr.bf16.mxu0 0
    %1315 = vmatpush1.bf16.msra.mxu0 %v923
    %1316 = vmatprep.subr.bf16.mxu0 0
    %1317 = vmatpush1.bf16.msra.mxu0 %v928
    %1318 = vmatprep.subr.bf16.mxu0 0
    %1319 = vmatpush1.bf16.msra.mxu0 %v933
    %1320 = vmatprep.subr.bf16.mxu0 0
    %1321 = vmatpush1.bf16.msra.mxu0 %v938
    %1322 = vmatprep.subr.bf16.mxu0 0
    %1323 = vmatpush1.bf16.msra.mxu0 %v943
    %1324 = vmatprep.subr.bf16.mxu0 0
    %1325 = vmatpush1.bf16.msra.mxu0 %v948
    %1326 = vmatprep.subr.bf16.mxu0 0
    %1327 = vmatpush1.bf16.msra.mxu0 %v953
    %1328 = vmatprep.subr.bf16.mxu0 0
    %1329 = vmatpush1.bf16.msra.mxu0 %v958
    %1330 = vmatprep.subr.bf16.mxu0 0
    %1331 = vmatpush1.bf16.msra.mxu0 %v963
    %1332 = vmatprep.subr.bf16.mxu0 0
    %1333 = vmatpush1.bf16.msra.mxu0 %v968
    %1334 = vmatprep.subr.bf16.mxu0 0
    %1335 = vmatpush1.bf16.msra.mxu0 %v973
    %1336 = vmatprep.subr.bf16.mxu0 0
    %1337 = vmatpush1.bf16.msra.mxu0 %v978
    %1338 = vmatprep.subr.bf16.mxu0 0
    %1339 = vmatpush1.bf16.msra.mxu0 %v983
    %1340 = vmatprep.mubr.bf16.mxu0 %v515
    %1341 = vmatmul.mubr.bf16.gmra.mrb[0].mxu0 %v514
    %v1342 = vpop.f32.mrb[0].mxu0
    %v1343 = vadd.f32 %v503, %v1342
    %v1344 = vpop.f32.mrb[0].mxu0
    %v1345 = vpop.f32.mrb[0].mxu0
    %v1346 = vpop.f32.mrb[0].mxu0
    %1347 = vdwg.mxu0
    %1348 = vmatprep.subr.bf16.mxu0 0
    %1349 = vmatpush1.bf16.msra.mxu0 %v988
    %1350 = vmatprep.subr.bf16.mxu0 0
    %1351 = vmatpush1.bf16.msra.mxu0 %v993
    %1352 = vmatprep.subr.bf16.mxu0 0
    %1353 = vmatpush1.bf16.msra.mxu0 %v998
    %1354 = vmatprep.subr.bf16.mxu0 0
    %1355 = vmatpush1.bf16.msra.mxu0 %v1003
    %1356 = vmatprep.subr.bf16.mxu0 0
    %1357 = vmatpush1.bf16.msra.mxu0 %v1008
    %1358 = vmatprep.subr.bf16.mxu0 0
    %1359 = vmatpush1.bf16.msra.mxu0 %v1013
    %1360 = vmatprep.subr.bf16.mxu0 0
    %1361 = vmatpush1.bf16.msra.mxu0 %v1018
    %1362 = vmatprep.subr.bf16.mxu0 0
    %1363 = vmatpush1.bf16.msra.mxu0 %v1023
    %1364 = vmatprep.subr.bf16.mxu0 0
    %1365 = vmatpush1.bf16.msra.mxu0 0
    %1366 = vmatprep.subr.bf16.mxu0 0
    %1367 = vmatpush1.bf16.msra.mxu0 0
    %1368 = vmatprep.subr.bf16.mxu0 0
    %1369 = vmatpush1.bf16.msra.mxu0 0
    %1370 = vmatprep.subr.bf16.mxu0 0
    %1371 = vmatpush1.bf16.msra.mxu0 0
    %1372 = vmatprep.subr.bf16.mxu0 0
    %1373 = vmatpush1.bf16.msra.mxu0 0
    %1374 = vmatprep.subr.bf16.mxu0 0
    %1375 = vmatpush1.bf16.msra.mxu0 0
    %1376 = vmatprep.subr.bf16.mxu0 0
    %1377 = vmatpush1.bf16.msra.mxu0 0
    %1378 = vmatprep.subr.bf16.mxu0 0
    %1379 = vmatpush1.bf16.msra.mxu0 0
    %1380 = vmatprep.mubr.bf16.mxu0 0
    %1381 = vmatmul.mubr.bf16.gmra.mrb[0].mxu0 %v516
    %v1382 = vpop.f32.mrb[0].mxu0
    %v1383 = vadd.f32 %v1343, %v1382
    %v1384 = vpop.f32.mrb[0].mxu0
    %v1385 = vpop.f32.mrb[0].mxu0
    %v1386 = vpop.f32.mrb[0].mxu0
    %1387 = vdwg.mxu0
    %v1388 = vmax.f32 %v1220, 0.0
    %v1389 = vmax.f32 %v1222, 0.0
    %v1390 = vmax.f32 %v1302, 0.0
    %v1391 = vmax.f32 %v1304, 0.0
    %v1392 = vmax.f32 %v1383, 0.0
    %v1393 = vpack.c.bf16 %v1388, %v1388
    %v1394 = vpack.c.bf16 %v1389, %v1389
    %v1395 = vpack.c.bf16 %v1390, %v1390
    %v1396 = vpack.c.bf16 %v1391, %v1391
    %v1397 = vpack.c.bf16 %v1392, %v1392
    %v1398 = vld [vmem:[#allocation8] sm:$0xff]
    %v1399 = vld [vmem:[#allocation8 + $0x8] sm:$0xff]
    %v1400 = vld [vmem:[#allocation8 + $0x10] sm:$0xf]
    %v1401 = vld [vmem:[#allocation8 + $0x14] sm:$0xff]
    %v1402 = vld [vmem:[#allocation8 + $0x1c] sm:$0xff]
    %v1403 = vld [vmem:[#allocation8 + $0x24] sm:$0xf]
    %v1404 = vld [vmem:[#allocation8 + $0x28] sm:$0xff]
    %v1405 = vld [vmem:[#allocation8 + $0x30] sm:$0xff]
    %v1406 = vld [vmem:[#allocation8 + $0x38] sm:$0xf]
    %v1407 = vld [vmem:[#allocation8 + $0x3c] sm:$0xff]
    %v1408 = vld [vmem:[#allocation8 + $0x44] sm:$0xff]
    %v1409 = vld [vmem:[#allocation8 + $0x4c] sm:$0xf]
    %v1410 = vld [vmem:[#allocation8 + $0x50] sm:$0xff]
    %v1411 = vld [vmem:[#allocation8 + $0x58] sm:$0xff]
    %v1412 = vld [vmem:[#allocation8 + $0x60] sm:$0xf]
    %v1413 = vld [vmem:[#allocation8 + $0x64] sm:$0xff]
    %v1414 = vld [vmem:[#allocation8 + $0x6c] sm:$0xff]
    %v1415 = vld [vmem:[#allocation8 + $0x74] sm:$0xf]
    %v1416 = vld [vmem:[#allocation8 + $0x78] sm:$0xff]
    %v1417 = vld [vmem:[#allocation8 + $0x80] sm:$0xff]
    %v1418 = vld [vmem:[#allocation8 + $0x88] sm:$0xf]
    %v1419 = vld [vmem:[#allocation8 + $0x8c] sm:$0xff]
    %v1420 = vld [vmem:[#allocation8 + $0x94] sm:$0xff]
    %v1421 = vld [vmem:[#allocation8 + $0x9c] sm:$0xf]
    %v1422 = vld [vmem:[#allocation8 + $0xa0] sm:$0xff]
    %v1423 = vld [vmem:[#allocation8 + $0xa8] sm:$0xff]
    %v1424 = vld [vmem:[#allocation8 + $0xb0] sm:$0xf]
    %v1425 = vld [vmem:[#allocation8 + $0xb4] sm:$0xff]
    %v1426 = vld [vmem:[#allocation8 + $0xbc] sm:$0xff]
    %v1427 = vld [vmem:[#allocation8 + $0xc4] sm:$0xf]
    %v1428 = vld [vmem:[#allocation8 + $0xc8] sm:$0xff]
    %v1429 = vld [vmem:[#allocation8 + $0xd0] sm:$0xff]
    %v1430 = vld [vmem:[#allocation8 + $0xd8] sm:$0xf]
    %v1431 = vld [vmem:[#allocation8 + $0xdc] sm:$0xff]
    %v1432 = vld [vmem:[#allocation8 + $0xe4] sm:$0xff]
    %v1433 = vld [vmem:[#allocation8 + $0xec] sm:$0xf]
    %v1434 = vld [vmem:[#allocation8 + $0xf0] sm:$0xff]
    %v1435 = vld [vmem:[#allocation8 + $0xf8] sm:$0xff]
    %v1436 = vld [vmem:[#allocation8 + $0x100] sm:$0xf]
    %v1437 = vld [vmem:[#allocation8 + $0x104] sm:$0xff]
    %v1438 = vld [vmem:[#allocation8 + $0x10c] sm:$0xff]
    %v1439 = vld [vmem:[#allocation8 + $0x114] sm:$0xf]
    %v1440 = vld [vmem:[#allocation8 + $0x118] sm:$0xff]
    %v1441 = vld [vmem:[#allocation8 + $0x120] sm:$0xff]
    %v1442 = vld [vmem:[#allocation8 + $0x128] sm:$0xf]
    %v1443 = vld [vmem:[#allocation8 + $0x12c] sm:$0xff]
    %v1444 = vld [vmem:[#allocation8 + $0x134] sm:$0xff]
    %v1445 = vld [vmem:[#allocation8 + $0x13c] sm:$0xf]
    %v1446 = vld [vmem:[#allocation8 + $0x140] sm:$0xff]
    %v1447 = vld [vmem:[#allocation8 + $0x148] sm:$0xff]
    %v1448 = vld [vmem:[#allocation8 + $0x150] sm:$0xf]
    %v1449 = vld [vmem:[#allocation8 + $0x154] sm:$0xff]
    %v1450 = vld [vmem:[#allocation8 + $0x15c] sm:$0xff]
    %v1451 = vld [vmem:[#allocation8 + $0x164] sm:$0xf]
    %v1452 = vld [vmem:[#allocation8 + $0x168] sm:$0xff]
    %v1453 = vld [vmem:[#allocation8 + $0x170] sm:$0xff]
    %v1454 = vld [vmem:[#allocation8 + $0x178] sm:$0xf]
    %v1455 = vld [vmem:[#allocation8 + $0x17c] sm:$0xff]
    %v1456 = vld [vmem:[#allocation8 + $0x184] sm:$0xff]
    %v1457 = vld [vmem:[#allocation8 + $0x18c] sm:$0xf]
    %v1458 = vld [vmem:[#allocation8 + $0x190] sm:$0xff]
    %v1459 = vld [vmem:[#allocation8 + $0x198] sm:$0xff]
    %v1460 = vld [vmem:[#allocation8 + $0x1a0] sm:$0xf]
    %v1461 = vld [vmem:[#allocation8 + $0x1a4] sm:$0xff]
    %v1462 = vld [vmem:[#allocation8 + $0x1ac] sm:$0xff]
    %v1463 = vld [vmem:[#allocation8 + $0x1b4] sm:$0xf]
    %v1464 = vld [vmem:[#allocation8 + $0x1b8] sm:$0xff]
    %v1465 = vld [vmem:[#allocation8 + $0x1c0] sm:$0xff]
    %v1466 = vld [vmem:[#allocation8 + $0x1c8] sm:$0xf]
    %v1467 = vld [vmem:[#allocation8 + $0x1cc] sm:$0xff]
    %v1468 = vld [vmem:[#allocation8 + $0x1d4] sm:$0xff]
    %v1469 = vld [vmem:[#allocation8 + $0x1dc] sm:$0xf]
    %v1470 = vld [vmem:[#allocation8 + $0x1e0] sm:$0xff]
    %v1471 = vld [vmem:[#allocation8 + $0x1e8] sm:$0xff]
    %v1472 = vld [vmem:[#allocation8 + $0x1f0] sm:$0xf]
    %v1473 = vld [vmem:[#allocation8 + $0x1f4] sm:$0xff]
    %v1474 = vld [vmem:[#allocation8 + $0x1fc] sm:$0xff]
    %v1475 = vld [vmem:[#allocation8 + $0x204] sm:$0xf]
    %v1476 = vld [vmem:[#allocation8 + $0x208] sm:$0xff]
    %v1477 = vld [vmem:[#allocation8 + $0x210] sm:$0xff]
    %v1478 = vld [vmem:[#allocation8 + $0x218] sm:$0xf]
    %v1479 = vld [vmem:[#allocation8 + $0x21c] sm:$0xff]
    %v1480 = vld [vmem:[#allocation8 + $0x224] sm:$0xff]
    %v1481 = vld [vmem:[#allocation8 + $0x22c] sm:$0xf]
    %v1482 = vld [vmem:[#allocation8 + $0x230] sm:$0xff]
    %v1483 = vld [vmem:[#allocation8 + $0x238] sm:$0xff]
    %v1484 = vld [vmem:[#allocation8 + $0x240] sm:$0xf]
    %v1485 = vld [vmem:[#allocation8 + $0x244] sm:$0xff]
    %v1486 = vld [vmem:[#allocation8 + $0x24c] sm:$0xff]
    %v1487 = vld [vmem:[#allocation8 + $0x254] sm:$0xf]
    %v1488 = vld [vmem:[#allocation8 + $0x258] sm:$0xff]
    %v1489 = vld [vmem:[#allocation8 + $0x260] sm:$0xff]
    %v1490 = vld [vmem:[#allocation8 + $0x268] sm:$0xf]
    %v1491 = vld [vmem:[#allocation8 + $0x26c] sm:$0xff]
    %v1492 = vld [vmem:[#allocation8 + $0x274] sm:$0xff]
    %v1493 = vld [vmem:[#allocation8 + $0x27c] sm:$0xf]
    %v1494 = vld [vmem:[#allocation8 + $0x280] sm:$0xff]
    %v1495 = vld [vmem:[#allocation8 + $0x288] sm:$0xff]
    %v1496 = vld [vmem:[#allocation8 + $0x290] sm:$0xf]
    %v1497 = vld [vmem:[#allocation8 + $0x294] sm:$0xff]
    %v1498 = vld [vmem:[#allocation8 + $0x29c] sm:$0xff]
    %v1499 = vld [vmem:[#allocation8 + $0x2a4] sm:$0xf]
    %v1500 = vld [vmem:[#allocation8 + $0x2a8] sm:$0xff]
    %v1501 = vld [vmem:[#allocation8 + $0x2b0] sm:$0xff]
    %v1502 = vld [vmem:[#allocation8 + $0x2b8] sm:$0xf]
    %v1503 = vld [vmem:[#allocation8 + $0x2bc] sm:$0xff]
    %v1504 = vld [vmem:[#allocation8 + $0x2c4] sm:$0xff]
    %v1505 = vld [vmem:[#allocation8 + $0x2cc] sm:$0xf]
    %v1506 = vld [vmem:[#allocation8 + $0x2d0] sm:$0xff]
    %v1507 = vld [vmem:[#allocation8 + $0x2d8] sm:$0xff]
    %v1508 = vld [vmem:[#allocation8 + $0x2e0] sm:$0xf]
    %v1509 = vld [vmem:[#allocation8 + $0x2e4] sm:$0xff]
    %v1510 = vld [vmem:[#allocation8 + $0x2ec] sm:$0xff]
    %v1511 = vld [vmem:[#allocation8 + $0x2f4] sm:$0xf]
    %v1512 = vld [vmem:[#allocation8 + $0x2f8] sm:$0xff]
    %v1513 = vld [vmem:[#allocation8 + $0x300] sm:$0xff]
    %v1514 = vld [vmem:[#allocation8 + $0x308] sm:$0xf]
    %v1515 = vld [vmem:[#allocation8 + $0x30c] sm:$0xff]
    %v1516 = vld [vmem:[#allocation8 + $0x314] sm:$0xff]
    %v1517 = vld [vmem:[#allocation8 + $0x31c] sm:$0xf]
    %v1518 = vld [vmem:[#allocation8 + $0x320] sm:$0xff]
    %v1519 = vld [vmem:[#allocation8 + $0x328] sm:$0xff]
    %v1520 = vld [vmem:[#allocation8 + $0x330] sm:$0xf]
    %v1521 = vld [vmem:[#allocation8 + $0x334] sm:$0xff]
    %v1522 = vld [vmem:[#allocation8 + $0x33c] sm:$0xff]
    %v1523 = vld [vmem:[#allocation8 + $0x344] sm:$0xf]
    %v1524 = vld [vmem:[#allocation8 + $0x348] sm:$0xff]
    %v1525 = vld [vmem:[#allocation8 + $0x350] sm:$0xff]
    %v1526 = vld [vmem:[#allocation8 + $0x358] sm:$0xf]
    %v1527 = vld [vmem:[#allocation8 + $0x35c] sm:$0xff]
    %v1528 = vld [vmem:[#allocation8 + $0x364] sm:$0xff]
    %v1529 = vld [vmem:[#allocation8 + $0x36c] sm:$0xf]
    %v1530 = vld [vmem:[#allocation8 + $0x370] sm:$0xff]
    %v1531 = vld [vmem:[#allocation8 + $0x378] sm:$0xff]
    %v1532 = vld [vmem:[#allocation8 + $0x380] sm:$0xf]
    %v1533 = vld [vmem:[#allocation8 + $0x384] sm:$0xff]
    %v1534 = vld [vmem:[#allocation8 + $0x38c] sm:$0xff]
    %v1535 = vld [vmem:[#allocation8 + $0x394] sm:$0xf]
    %v1536 = vld [vmem:[#allocation8 + $0x398] sm:$0xff]
    %v1537 = vld [vmem:[#allocation8 + $0x3a0] sm:$0xff]
    %v1538 = vld [vmem:[#allocation8 + $0x3a8] sm:$0xf]
    %v1539 = vld [vmem:[#allocation8 + $0x3ac] sm:$0xff]
    %v1540 = vld [vmem:[#allocation8 + $0x3b4] sm:$0xff]
    %v1541 = vld [vmem:[#allocation8 + $0x3bc] sm:$0xf]
    %v1542 = vld [vmem:[#allocation8 + $0x3c0] sm:$0xff]
    %v1543 = vld [vmem:[#allocation8 + $0x3c8] sm:$0xff]
    %v1544 = vld [vmem:[#allocation8 + $0x3d0] sm:$0xf]
    %v1545 = vld [vmem:[#allocation8 + $0x3d4] sm:$0xff]
    %v1546 = vld [vmem:[#allocation8 + $0x3dc] sm:$0xff]
    %v1547 = vld [vmem:[#allocation8 + $0x3e4] sm:$0xf]
    %v1548 = vld [vmem:[#allocation8 + $0x3e8] sm:$0xff]
    %v1549 = vld [vmem:[#allocation8 + $0x3f0] sm:$0xff]
    %v1550 = vld [vmem:[#allocation8 + $0x3f8] sm:$0xf]
    %v1551 = vld [vmem:[#allocation8 + $0x3fc] sm:$0xff]
    %v1552 = vld [vmem:[#allocation8 + $0x404] sm:$0xff]
    %v1553 = vld [vmem:[#allocation8 + $0x40c] sm:$0xf]
    %v1554 = vld [vmem:[#allocation8 + $0x410] sm:$0xff]
    %v1555 = vld [vmem:[#allocation8 + $0x418] sm:$0xff]
    %v1556 = vld [vmem:[#allocation8 + $0x420] sm:$0xf]
    %v1557 = vld [vmem:[#allocation8 + $0x424] sm:$0xff]
    %v1558 = vld [vmem:[#allocation8 + $0x42c] sm:$0xff]
    %v1559 = vld [vmem:[#allocation8 + $0x434] sm:$0xf]
    %v1560 = vld [vmem:[#allocation8 + $0x438] sm:$0xff]
    %v1561 = vld [vmem:[#allocation8 + $0x440] sm:$0xff]
    %v1562 = vld [vmem:[#allocation8 + $0x448] sm:$0xf]
    %v1563 = vld [vmem:[#allocation8 + $0x44c] sm:$0xff]
    %v1564 = vld [vmem:[#allocation8 + $0x454] sm:$0xff]
    %v1565 = vld [vmem:[#allocation8 + $0x45c] sm:$0xf]
    %v1566 = vld [vmem:[#allocation8 + $0x460] sm:$0xff]
    %v1567 = vld [vmem:[#allocation8 + $0x468] sm:$0xff]
    %v1568 = vld [vmem:[#allocation8 + $0x470] sm:$0xf]
    %v1569 = vld [vmem:[#allocation8 + $0x474] sm:$0xff]
    %v1570 = vld [vmem:[#allocation8 + $0x47c] sm:$0xff]
    %v1571 = vld [vmem:[#allocation8 + $0x484] sm:$0xf]
    %v1572 = vld [vmem:[#allocation8 + $0x488] sm:$0xff]
    %v1573 = vld [vmem:[#allocation8 + $0x490] sm:$0xff]
    %v1574 = vld [vmem:[#allocation8 + $0x498] sm:$0xf]
    %v1575 = vld [vmem:[#allocation8 + $0x49c] sm:$0xff]
    %v1576 = vld [vmem:[#allocation8 + $0x4a4] sm:$0xff]
    %v1577 = vld [vmem:[#allocation8 + $0x4ac] sm:$0xf]
    %v1578 = vld [vmem:[#allocation8 + $0x4b0] sm:$0xff]
    %v1579 = vld [vmem:[#allocation8 + $0x4b8] sm:$0xff]
    %v1580 = vld [vmem:[#allocation8 + $0x4c0] sm:$0xf]
    %v1581 = vld [vmem:[#allocation8 + $0x4c4] sm:$0xff]
    %v1582 = vld [vmem:[#allocation8 + $0x4cc] sm:$0xff]
    %v1583 = vld [vmem:[#allocation8 + $0x4d4] sm:$0xf]
    %v1584 = vld [vmem:[#allocation8 + $0x4d8] sm:$0xff]
    %v1585 = vld [vmem:[#allocation8 + $0x4e0] sm:$0xff]
    %v1586 = vld [vmem:[#allocation8 + $0x4e8] sm:$0xf]
    %v1587 = vld [vmem:[#allocation8 + $0x4ec] sm:$0xff]
    %v1588 = vld [vmem:[#allocation8 + $0x4f4] sm:$0xff]
    %v1589 = vld [vmem:[#allocation8 + $0x4fc] sm:$0xf]
    %v1590 = vld [vmem:[#allocation8 + $0x500] sm:$0xff]
    %v1591 = vld [vmem:[#allocation8 + $0x508] sm:$0xff]
    %v1592 = vld [vmem:[#allocation8 + $0x510] sm:$0xf]
    %v1593 = vld [vmem:[#allocation8 + $0x514] sm:$0xff]
    %v1594 = vld [vmem:[#allocation8 + $0x51c] sm:$0xff]
    %v1595 = vld [vmem:[#allocation8 + $0x524] sm:$0xf]
    %v1596 = vld [vmem:[#allocation8 + $0x528] sm:$0xff]
    %v1597 = vld [vmem:[#allocation8 + $0x530] sm:$0xff]
    %v1598 = vld [vmem:[#allocation8 + $0x538] sm:$0xf]
    %v1599 = vld [vmem:[#allocation8 + $0x53c] sm:$0xff]
    %v1600 = vld [vmem:[#allocation8 + $0x544] sm:$0xff]
    %v1601 = vld [vmem:[#allocation8 + $0x54c] sm:$0xf]
    %v1602 = vld [vmem:[#allocation8 + $0x550] sm:$0xff]
    %v1603 = vld [vmem:[#allocation8 + $0x558] sm:$0xff]
    %v1604 = vld [vmem:[#allocation8 + $0x560] sm:$0xf]
    %v1605 = vld [vmem:[#allocation8 + $0x564] sm:$0xff]
    %v1606 = vld [vmem:[#allocation8 + $0x56c] sm:$0xff]
    %v1607 = vld [vmem:[#allocation8 + $0x574] sm:$0xf]
    %v1608 = vld [vmem:[#allocation8 + $0x578] sm:$0xff]
    %v1609 = vld [vmem:[#allocation8 + $0x580] sm:$0xff]
    %v1610 = vld [vmem:[#allocation8 + $0x588] sm:$0xf]
    %v1611 = vld [vmem:[#allocation8 + $0x58c] sm:$0xff]
    %v1612 = vld [vmem:[#allocation8 + $0x594] sm:$0xff]
    %v1613 = vld [vmem:[#allocation8 + $0x59c] sm:$0xf]
    %v1614 = vld [vmem:[#allocation8 + $0x5a0] sm:$0xff]
    %v1615 = vld [vmem:[#allocation8 + $0x5a8] sm:$0xff]
    %v1616 = vld [vmem:[#allocation8 + $0x5b0] sm:$0xf]
    %v1617 = vld [vmem:[#allocation8 + $0x5b4] sm:$0xff]
    %v1618 = vld [vmem:[#allocation8 + $0x5bc] sm:$0xff]
    %v1619 = vld [vmem:[#allocation8 + $0x5c4] sm:$0xf]
    %v1620 = vld [vmem:[#allocation8 + $0x5c8] sm:$0xff]
    %v1621 = vld [vmem:[#allocation8 + $0x5d0] sm:$0xff]
    %v1622 = vld [vmem:[#allocation8 + $0x5d8] sm:$0xf]
    %v1623 = vld [vmem:[#allocation8 + $0x5dc] sm:$0xff]
    %v1624 = vld [vmem:[#allocation8 + $0x5e4] sm:$0xff]
    %v1625 = vld [vmem:[#allocation8 + $0x5ec] sm:$0xf]
    %v1626 = vld [vmem:[#allocation8 + $0x5f0] sm:$0xff]
    %v1627 = vld [vmem:[#allocation8 + $0x5f8] sm:$0xff]
    %v1628 = vld [vmem:[#allocation8 + $0x600] sm:$0xf]
    %v1629 = vld [vmem:[#allocation8 + $0x604] sm:$0xff]
    %v1630 = vld [vmem:[#allocation8 + $0x60c] sm:$0xff]
    %v1631 = vld [vmem:[#allocation8 + $0x614] sm:$0xf]
    %v1632 = vld [vmem:[#allocation8 + $0x618] sm:$0xff]
    %v1633 = vld [vmem:[#allocation8 + $0x620] sm:$0xff]
    %v1634 = vld [vmem:[#allocation8 + $0x628] sm:$0xf]
    %v1635 = vld [vmem:[#allocation8 + $0x62c] sm:$0xff]
    %v1636 = vld [vmem:[#allocation8 + $0x634] sm:$0xff]
    %v1637 = vld [vmem:[#allocation8 + $0x63c] sm:$0xf]
    %v1638 = vld [vmem:[#allocation10] sm:$0x1f]
    %v1640 = vlaneseq
    %v1641 = vshrl.u32 %v1640, 7
    %v1642 = vsub.s32 0, %v1641
    %v1643 = vrot.slane %v1638, %v1642
    %v1644 = vlaneseq
    %v1645 = vshrl.u32 %v1644, 7
    %v1646 = vsub.s32 1, %v1645
    %v1647 = vrot.slane %v1638, %v1646
    %v1648 = vlaneseq
    %v1649 = vshrl.u32 %v1648, 7
    %v1650 = vsub.s32 2, %v1649
    %v1651 = vrot.slane %v1638, %v1650
    %v1652 = vlaneseq
    %v1653 = vshrl.u32 %v1652, 7
    %v1654 = vsub.s32 3, %v1653
    %v1655 = vrot.slane %v1638, %v1654
    %v1656 = vlaneseq
    %v1657 = vshrl.u32 %v1656, 7
    %v1658 = vsub.s32 4, %v1657
    %v1659 = vrot.slane %v1638, %v1658
    %v1905 = vunpack.c.l.b16 %v1398
    %v1906 = vunpack.c.h.b16 %v1398
    %v1907 = vunpack.c.l.b16 %v1399
    %v1908 = vunpack.c.h.b16 %v1399
    %v1909 = vunpack.c.l.b16 %v1400
    %v1910 = vunpack.c.l.b16 %v1401
    %v1911 = vunpack.c.h.b16 %v1401
    %v1912 = vunpack.c.l.b16 %v1402
    %v1913 = vunpack.c.h.b16 %v1402
    %v1914 = vunpack.c.l.b16 %v1403
    %v1915 = vunpack.c.l.b16 %v1404
    %v1916 = vunpack.c.h.b16 %v1404
    %v1917 = vunpack.c.l.b16 %v1405
    %v1918 = vunpack.c.h.b16 %v1405
    %v1919 = vunpack.c.l.b16 %v1406
    %v1920 = vunpack.c.l.b16 %v1407
    %v1921 = vunpack.c.h.b16 %v1407
    %v1922 = vunpack.c.l.b16 %v1408
    %v1923 = vunpack.c.h.b16 %v1408
    %v1924 = vunpack.c.l.b16 %v1409
    %v1925 = vunpack.c.l.b16 %v1410
    %v1926 = vunpack.c.h.b16 %v1410
    %v1927 = vunpack.c.l.b16 %v1411
    %v1928 = vunpack.c.h.b16 %v1411
    %v1929 = vunpack.c.l.b16 %v1412
    %v1930 = vunpack.c.l.b16 %v1413
    %v1931 = vunpack.c.h.b16 %v1413
    %v1932 = vunpack.c.l.b16 %v1414
    %v1933 = vunpack.c.h.b16 %v1414
    %v1934 = vunpack.c.l.b16 %v1415
    %v1935 = vunpack.c.l.b16 %v1416
    %v1936 = vunpack.c.h.b16 %v1416
    %v1937 = vunpack.c.l.b16 %v1417
    %v1938 = vunpack.c.h.b16 %v1417
    %v1939 = vunpack.c.l.b16 %v1418
    %v1940 = vunpack.c.l.b16 %v1419
    %v1941 = vunpack.c.h.b16 %v1419
    %v1942 = vunpack.c.l.b16 %v1420
    %v1943 = vunpack.c.h.b16 %v1420
    %v1944 = vunpack.c.l.b16 %v1421
    %v1945 = vunpack.c.l.b16 %v1422
    %v1946 = vunpack.c.h.b16 %v1422
    %v1947 = vunpack.c.l.b16 %v1423
    %v1948 = vunpack.c.h.b16 %v1423
    %v1949 = vunpack.c.l.b16 %v1424
    %v1950 = vunpack.c.l.b16 %v1425
    %v1951 = vunpack.c.h.b16 %v1425
    %v1952 = vunpack.c.l.b16 %v1426
    %v1953 = vunpack.c.h.b16 %v1426
    %v1954 = vunpack.c.l.b16 %v1427
    %v1955 = vunpack.c.l.b16 %v1428
    %v1956 = vunpack.c.h.b16 %v1428
    %v1957 = vunpack.c.l.b16 %v1429
    %v1958 = vunpack.c.h.b16 %v1429
    %v1959 = vunpack.c.l.b16 %v1430
    %v1960 = vunpack.c.l.b16 %v1431
    %v1961 = vunpack.c.h.b16 %v1431
    %v1962 = vunpack.c.l.b16 %v1432
    %v1963 = vunpack.c.h.b16 %v1432
    %v1964 = vunpack.c.l.b16 %v1433
    %v1965 = vunpack.c.l.b16 %v1434
    %v1966 = vunpack.c.h.b16 %v1434
    %v1967 = vunpack.c.l.b16 %v1435
    %v1968 = vunpack.c.h.b16 %v1435
    %v1969 = vunpack.c.l.b16 %v1436
    %v1970 = vunpack.c.l.b16 %v1437
    %v1971 = vunpack.c.h.b16 %v1437
    %v1972 = vunpack.c.l.b16 %v1438
    %v1973 = vunpack.c.h.b16 %v1438
    %v1974 = vunpack.c.l.b16 %v1439
    %v1975 = vunpack.c.l.b16 %v1440
    %v1976 = vunpack.c.h.b16 %v1440
    %v1977 = vunpack.c.l.b16 %v1441
    %v1978 = vunpack.c.h.b16 %v1441
    %v1979 = vunpack.c.l.b16 %v1442
    %v1980 = vunpack.c.l.b16 %v1443
    %v1981 = vunpack.c.h.b16 %v1443
    %v1982 = vunpack.c.l.b16 %v1444
    %v1983 = vunpack.c.h.b16 %v1444
    %v1984 = vunpack.c.l.b16 %v1445
    %v1985 = vunpack.c.l.b16 %v1446
    %v1986 = vunpack.c.h.b16 %v1446
    %v1987 = vunpack.c.l.b16 %v1447
    %v1988 = vunpack.c.h.b16 %v1447
    %v1989 = vunpack.c.l.b16 %v1448
    %v1990 = vunpack.c.l.b16 %v1449
    %v1991 = vunpack.c.h.b16 %v1449
    %v1992 = vunpack.c.l.b16 %v1450
    %v1993 = vunpack.c.h.b16 %v1450
    %v1994 = vunpack.c.l.b16 %v1451
    %v1995 = vunpack.c.l.b16 %v1452
    %v1996 = vunpack.c.h.b16 %v1452
    %v1997 = vunpack.c.l.b16 %v1453
    %v1998 = vunpack.c.h.b16 %v1453
    %v1999 = vunpack.c.l.b16 %v1454
    %v2000 = vunpack.c.l.b16 %v1455
    %v2001 = vunpack.c.h.b16 %v1455
    %v2002 = vunpack.c.l.b16 %v1456
    %v2003 = vunpack.c.h.b16 %v1456
    %v2004 = vunpack.c.l.b16 %v1457
    %v2005 = vunpack.c.l.b16 %v1458
    %v2006 = vunpack.c.h.b16 %v1458
    %v2007 = vunpack.c.l.b16 %v1459
    %v2008 = vunpack.c.h.b16 %v1459
    %v2009 = vunpack.c.l.b16 %v1460
    %v2010 = vunpack.c.l.b16 %v1461
    %v2011 = vunpack.c.h.b16 %v1461
    %v2012 = vunpack.c.l.b16 %v1462
    %v2013 = vunpack.c.h.b16 %v1462
    %v2014 = vunpack.c.l.b16 %v1463
    %v2015 = vunpack.c.l.b16 %v1464
    %v2016 = vunpack.c.h.b16 %v1464
    %v2017 = vunpack.c.l.b16 %v1465
    %v2018 = vunpack.c.h.b16 %v1465
    %v2019 = vunpack.c.l.b16 %v1466
    %v2020 = vunpack.c.l.b16 %v1467
    %v2021 = vunpack.c.h.b16 %v1467
    %v2022 = vunpack.c.l.b16 %v1468
    %v2023 = vunpack.c.h.b16 %v1468
    %v2024 = vunpack.c.l.b16 %v1469
    %v2025 = vunpack.c.l.b16 %v1470
    %v2026 = vunpack.c.h.b16 %v1470
    %v2027 = vunpack.c.l.b16 %v1471
    %v2028 = vunpack.c.h.b16 %v1471
    %v2029 = vunpack.c.l.b16 %v1472
    %v2030 = vunpack.c.l.b16 %v1473
    %v2031 = vunpack.c.h.b16 %v1473
    %v2032 = vunpack.c.l.b16 %v1474
    %v2033 = vunpack.c.h.b16 %v1474
    %v2034 = vunpack.c.l.b16 %v1475
    %v2035 = vunpack.c.l.b16 %v1476
    %v2036 = vunpack.c.h.b16 %v1476
    %v2037 = vunpack.c.l.b16 %v1477
    %v2038 = vunpack.c.h.b16 %v1477
    %v2039 = vunpack.c.l.b16 %v1478
    %v2040 = vunpack.c.l.b16 %v1479
    %v2041 = vunpack.c.h.b16 %v1479
    %v2042 = vunpack.c.l.b16 %v1480
    %v2043 = vunpack.c.h.b16 %v1480
    %v2044 = vunpack.c.l.b16 %v1481
    %v2045 = vunpack.c.l.b16 %v1482
    %v2046 = vunpack.c.h.b16 %v1482
    %v2047 = vunpack.c.l.b16 %v1483
    %v2048 = vunpack.c.h.b16 %v1483
    %v2049 = vunpack.c.l.b16 %v1484
    %v2050 = vunpack.c.l.b16 %v1485
    %v2051 = vunpack.c.h.b16 %v1485
    %v2052 = vunpack.c.l.b16 %v1486
    %v2053 = vunpack.c.h.b16 %v1486
    %v2054 = vunpack.c.l.b16 %v1487
    %v2055 = vunpack.c.l.b16 %v1488
    %v2056 = vunpack.c.h.b16 %v1488
    %v2057 = vunpack.c.l.b16 %v1489
    %v2058 = vunpack.c.h.b16 %v1489
    %v2059 = vunpack.c.l.b16 %v1490
    %v2060 = vunpack.c.l.b16 %v1491
    %v2061 = vunpack.c.h.b16 %v1491
    %v2062 = vunpack.c.l.b16 %v1492
    %v2063 = vunpack.c.h.b16 %v1492
    %v2064 = vunpack.c.l.b16 %v1493
    %v2065 = vunpack.c.l.b16 %v1494
    %v2066 = vunpack.c.h.b16 %v1494
    %v2067 = vunpack.c.l.b16 %v1495
    %v2068 = vunpack.c.h.b16 %v1495
    %v2069 = vunpack.c.l.b16 %v1496
    %v2070 = vunpack.c.l.b16 %v1497
    %v2071 = vunpack.c.h.b16 %v1497
    %v2072 = vunpack.c.l.b16 %v1498
    %v2073 = vunpack.c.h.b16 %v1498
    %v2074 = vunpack.c.l.b16 %v1499
    %v2075 = vunpack.c.l.b16 %v1500
    %v2076 = vunpack.c.h.b16 %v1500
    %v2077 = vunpack.c.l.b16 %v1501
    %v2078 = vunpack.c.h.b16 %v1501
    %v2079 = vunpack.c.l.b16 %v1502
    %v2080 = vunpack.c.l.b16 %v1503
    %v2081 = vunpack.c.h.b16 %v1503
    %v2082 = vunpack.c.l.b16 %v1504
    %v2083 = vunpack.c.h.b16 %v1504
    %v2084 = vunpack.c.l.b16 %v1505
    %v2085 = vunpack.c.l.b16 %v1506
    %v2086 = vunpack.c.h.b16 %v1506
    %v2087 = vunpack.c.l.b16 %v1507
    %v2088 = vunpack.c.h.b16 %v1507
    %v2089 = vunpack.c.l.b16 %v1508
    %v2090 = vunpack.c.l.b16 %v1509
    %v2091 = vunpack.c.h.b16 %v1509
    %v2092 = vunpack.c.l.b16 %v1510
    %v2093 = vunpack.c.h.b16 %v1510
    %v2094 = vunpack.c.l.b16 %v1511
    %v2095 = vunpack.c.l.b16 %v1512
    %v2096 = vunpack.c.h.b16 %v1512
    %v2097 = vunpack.c.l.b16 %v1513
    %v2098 = vunpack.c.h.b16 %v1513
    %v2099 = vunpack.c.l.b16 %v1514
    %v2100 = vunpack.c.l.b16 %v1515
    %v2101 = vunpack.c.h.b16 %v1515
    %v2102 = vunpack.c.l.b16 %v1516
    %v2103 = vunpack.c.h.b16 %v1516
    %v2104 = vunpack.c.l.b16 %v1517
    %v2105 = vunpack.c.l.b16 %v1518
    %v2106 = vunpack.c.h.b16 %v1518
    %v2107 = vunpack.c.l.b16 %v1519
    %v2108 = vunpack.c.h.b16 %v1519
    %v2109 = vunpack.c.l.b16 %v1520
    %v2110 = vunpack.c.l.b16 %v1521
    %v2111 = vunpack.c.h.b16 %v1521
    %v2112 = vunpack.c.l.b16 %v1522
    %v2113 = vunpack.c.h.b16 %v1522
    %v2114 = vunpack.c.l.b16 %v1523
    %v2115 = vunpack.c.l.b16 %v1524
    %v2116 = vunpack.c.h.b16 %v1524
    %v2117 = vunpack.c.l.b16 %v1525
    %v2118 = vunpack.c.h.b16 %v1525
    %v2119 = vunpack.c.l.b16 %v1526
    %v2120 = vunpack.c.l.b16 %v1527
    %v2121 = vunpack.c.h.b16 %v1527
    %v2122 = vunpack.c.l.b16 %v1528
    %v2123 = vunpack.c.h.b16 %v1528
    %v2124 = vunpack.c.l.b16 %v1529
    %v2125 = vunpack.c.l.b16 %v1530
    %v2126 = vunpack.c.h.b16 %v1530
    %v2127 = vunpack.c.l.b16 %v1531
    %v2128 = vunpack.c.h.b16 %v1531
    %v2129 = vunpack.c.l.b16 %v1532
    %v2130 = vunpack.c.l.b16 %v1533
    %v2131 = vunpack.c.h.b16 %v1533
    %v2132 = vunpack.c.l.b16 %v1534
    %v2133 = vunpack.c.h.b16 %v1534
    %v2134 = vunpack.c.l.b16 %v1535
    %v2135 = vunpack.c.l.b16 %v1536
    %v2136 = vunpack.c.h.b16 %v1536
    %v2137 = vunpack.c.l.b16 %v1537
    %v2138 = vunpack.c.h.b16 %v1537
    %v2139 = vunpack.c.l.b16 %v1538
    %v2140 = vunpack.c.l.b16 %v1539
    %v2141 = vunpack.c.h.b16 %v1539
    %v2142 = vunpack.c.l.b16 %v1540
    %v2143 = vunpack.c.h.b16 %v1540
    %v2144 = vunpack.c.l.b16 %v1541
    %v2145 = vunpack.c.l.b16 %v1542
    %v2146 = vunpack.c.h.b16 %v1542
    %v2147 = vunpack.c.l.b16 %v1543
    %v2148 = vunpack.c.h.b16 %v1543
    %v2149 = vunpack.c.l.b16 %v1544
    %v2150 = vunpack.c.l.b16 %v1545
    %v2151 = vunpack.c.h.b16 %v1545
    %v2152 = vunpack.c.l.b16 %v1546
    %v2153 = vunpack.c.h.b16 %v1546
    %v2154 = vunpack.c.l.b16 %v1547
    %v2155 = vunpack.c.l.b16 %v1548
    %v2156 = vunpack.c.h.b16 %v1548
    %v2157 = vunpack.c.l.b16 %v1549
    %v2158 = vunpack.c.h.b16 %v1549
    %v2159 = vunpack.c.l.b16 %v1550
    %v2160 = vunpack.c.l.b16 %v1551
    %v2161 = vunpack.c.h.b16 %v1551
    %v2162 = vunpack.c.l.b16 %v1552
    %v2163 = vunpack.c.h.b16 %v1552
    %v2164 = vunpack.c.l.b16 %v1553
    %v2165 = vunpack.c.l.b16 %v1554
    %v2166 = vunpack.c.h.b16 %v1554
    %v2167 = vunpack.c.l.b16 %v1555
    %v2168 = vunpack.c.h.b16 %v1555
    %v2169 = vunpack.c.l.b16 %v1556
    %v2170 = vunpack.c.l.b16 %v1557
    %v2171 = vunpack.c.h.b16 %v1557
    %v2172 = vunpack.c.l.b16 %v1558
    %v2173 = vunpack.c.h.b16 %v1558
    %v2174 = vunpack.c.l.b16 %v1559
    %v2175 = vunpack.c.l.b16 %v1560
    %v2176 = vunpack.c.h.b16 %v1560
    %v2177 = vunpack.c.l.b16 %v1561
    %v2178 = vunpack.c.h.b16 %v1561
    %v2179 = vunpack.c.l.b16 %v1562
    %v2180 = vunpack.c.l.b16 %v1563
    %v2181 = vunpack.c.h.b16 %v1563
    %v2182 = vunpack.c.l.b16 %v1564
    %v2183 = vunpack.c.h.b16 %v1564
    %v2184 = vunpack.c.l.b16 %v1565
    %v2185 = vunpack.c.l.b16 %v1566
    %v2186 = vunpack.c.h.b16 %v1566
    %v2187 = vunpack.c.l.b16 %v1567
    %v2188 = vunpack.c.h.b16 %v1567
    %v2189 = vunpack.c.l.b16 %v1568
    %v2190 = vunpack.c.l.b16 %v1569
    %v2191 = vunpack.c.h.b16 %v1569
    %v2192 = vunpack.c.l.b16 %v1570
    %v2193 = vunpack.c.h.b16 %v1570
    %v2194 = vunpack.c.l.b16 %v1571
    %v2195 = vunpack.c.l.b16 %v1572
    %v2196 = vunpack.c.h.b16 %v1572
    %v2197 = vunpack.c.l.b16 %v1573
    %v2198 = vunpack.c.h.b16 %v1573
    %v2199 = vunpack.c.l.b16 %v1574
    %v2200 = vunpack.c.l.b16 %v1575
    %v2201 = vunpack.c.h.b16 %v1575
    %v2202 = vunpack.c.l.b16 %v1576
    %v2203 = vunpack.c.h.b16 %v1576
    %v2204 = vunpack.c.l.b16 %v1577
    %v2205 = vunpack.c.l.b16 %v1578
    %v2206 = vunpack.c.h.b16 %v1578
    %v2207 = vunpack.c.l.b16 %v1579
    %v2208 = vunpack.c.h.b16 %v1579
    %v2209 = vunpack.c.l.b16 %v1580
    %v2210 = vunpack.c.l.b16 %v1581
    %v2211 = vunpack.c.h.b16 %v1581
    %v2212 = vunpack.c.l.b16 %v1582
    %v2213 = vunpack.c.h.b16 %v1582
    %v2214 = vunpack.c.l.b16 %v1583
    %v2215 = vunpack.c.l.b16 %v1584
    %v2216 = vunpack.c.h.b16 %v1584
    %v2217 = vunpack.c.l.b16 %v1585
    %v2218 = vunpack.c.h.b16 %v1585
    %v2219 = vunpack.c.l.b16 %v1586
    %v2220 = vunpack.c.l.b16 %v1587
    %v2221 = vunpack.c.h.b16 %v1587
    %v2222 = vunpack.c.l.b16 %v1588
    %v2223 = vunpack.c.h.b16 %v1588
    %v2224 = vunpack.c.l.b16 %v1589
    %v2225 = vunpack.c.l.b16 %v1590
    %v2226 = vunpack.c.h.b16 %v1590
    %v2227 = vunpack.c.l.b16 %v1591
    %v2228 = vunpack.c.h.b16 %v1591
    %v2229 = vunpack.c.l.b16 %v1592
    %v2230 = vunpack.c.l.b16 %v1593
    %v2231 = vunpack.c.h.b16 %v1593
    %v2232 = vunpack.c.l.b16 %v1594
    %v2233 = vunpack.c.h.b16 %v1594
    %v2234 = vunpack.c.l.b16 %v1595
    %v2235 = vunpack.c.l.b16 %v1596
    %v2236 = vunpack.c.h.b16 %v1596
    %v2237 = vunpack.c.l.b16 %v1597
    %v2238 = vunpack.c.h.b16 %v1597
    %v2239 = vunpack.c.l.b16 %v1598
    %v2240 = vunpack.c.l.b16 %v1599
    %v2241 = vunpack.c.h.b16 %v1599
    %v2242 = vunpack.c.l.b16 %v1600
    %v2243 = vunpack.c.h.b16 %v1600
    %v2244 = vunpack.c.l.b16 %v1601
    %v2245 = vunpack.c.l.b16 %v1602
    %v2246 = vunpack.c.h.b16 %v1602
    %v2247 = vunpack.c.l.b16 %v1603
    %v2248 = vunpack.c.h.b16 %v1603
    %v2249 = vunpack.c.l.b16 %v1604
    %v2250 = vunpack.c.l.b16 %v1605
    %v2251 = vunpack.c.h.b16 %v1605
    %v2252 = vunpack.c.l.b16 %v1606
    %v2253 = vunpack.c.h.b16 %v1606
    %v2254 = vunpack.c.l.b16 %v1607
    %v2255 = vunpack.c.l.b16 %v1608
    %v2256 = vunpack.c.h.b16 %v1608
    %v2257 = vunpack.c.l.b16 %v1609
    %v2258 = vunpack.c.h.b16 %v1609
    %v2259 = vunpack.c.l.b16 %v1610
    %v2260 = vunpack.c.l.b16 %v1611
    %v2261 = vunpack.c.h.b16 %v1611
    %v2262 = vunpack.c.l.b16 %v1612
    %v2263 = vunpack.c.h.b16 %v1612
    %v2264 = vunpack.c.l.b16 %v1613
    %v2265 = vunpack.c.l.b16 %v1614
    %v2266 = vunpack.c.h.b16 %v1614
    %v2267 = vunpack.c.l.b16 %v1615
    %v2268 = vunpack.c.h.b16 %v1615
    %v2269 = vunpack.c.l.b16 %v1616
    %v2270 = vunpack.c.l.b16 %v1617
    %v2271 = vunpack.c.h.b16 %v1617
    %v2272 = vunpack.c.l.b16 %v1618
    %v2273 = vunpack.c.h.b16 %v1618
    %v2274 = vunpack.c.l.b16 %v1619
    %v2275 = vunpack.c.l.b16 %v1620
    %v2276 = vunpack.c.h.b16 %v1620
    %v2277 = vunpack.c.l.b16 %v1621
    %v2278 = vunpack.c.h.b16 %v1621
    %v2279 = vunpack.c.l.b16 %v1622
    %v2280 = vunpack.c.l.b16 %v1623
    %v2281 = vunpack.c.h.b16 %v1623
    %v2282 = vunpack.c.l.b16 %v1624
    %v2283 = vunpack.c.h.b16 %v1624
    %v2284 = vunpack.c.l.b16 %v1625
    %v2285 = vunpack.c.l.b16 %v1626
    %v2286 = vunpack.c.h.b16 %v1626
    %v2287 = vunpack.c.l.b16 %v1627
    %v2288 = vunpack.c.h.b16 %v1627
    %v2289 = vunpack.c.l.b16 %v1628
    %v2290 = vunpack.c.l.b16 %v1629
    %v2291 = vunpack.c.h.b16 %v1629
    %v2292 = vunpack.c.l.b16 %v1630
    %v2293 = vunpack.c.h.b16 %v1630
    %v2294 = vunpack.c.l.b16 %v1631
    %v2295 = vunpack.c.l.b16 %v1632
    %v2296 = vunpack.c.h.b16 %v1632
    %v2297 = vunpack.c.l.b16 %v1633
    %v2298 = vunpack.c.h.b16 %v1633
    %v2299 = vunpack.c.l.b16 %v1634
    %v2300 = vunpack.c.l.b16 %v1635
    %v2301 = vunpack.c.h.b16 %v1635
    %v2302 = vunpack.c.l.b16 %v1636
    %v2303 = vunpack.c.h.b16 %v1636
    %v2304 = vunpack.c.l.b16 %v1637
    %v2305 = vpack.c.b16 %v1910, %v1905
    %v2306 = vpack.c.b16 %v1911, %v1906
    %v2307 = vpack.c.b16 %v1912, %v1907
    %v2308 = vpack.c.b16 %v1913, %v1908
    %v2309 = vpack.c.b16 %v1914, %v1909
    %v2310 = vpack.c.b16 %v1920, %v1915
    %v2311 = vpack.c.b16 %v1921, %v1916
    %v2312 = vpack.c.b16 %v1922, %v1917
    %v2313 = vpack.c.b16 %v1923, %v1918
    %v2314 = vpack.c.b16 %v1924, %v1919
    %v2315 = vpack.c.b16 %v1930, %v1925
    %v2316 = vpack.c.b16 %v1931, %v1926
    %v2317 = vpack.c.b16 %v1932, %v1927
    %v2318 = vpack.c.b16 %v1933, %v1928
    %v2319 = vpack.c.b16 %v1934, %v1929
    %v2320 = vpack.c.b16 %v1940, %v1935
    %v2321 = vpack.c.b16 %v1941, %v1936
    %v2322 = vpack.c.b16 %v1942, %v1937
    %v2323 = vpack.c.b16 %v1943, %v1938
    %v2324 = vpack.c.b16 %v1944, %v1939
    %v2325 = vpack.c.b16 %v1950, %v1945
    %v2326 = vpack.c.b16 %v1951, %v1946
    %v2327 = vpack.c.b16 %v1952, %v1947
    %v2328 = vpack.c.b16 %v1953, %v1948
    %v2329 = vpack.c.b16 %v1954, %v1949
    %v2330 = vpack.c.b16 %v1960, %v1955
    %v2331 = vpack.c.b16 %v1961, %v1956
    %v2332 = vpack.c.b16 %v1962, %v1957
    %v2333 = vpack.c.b16 %v1963, %v1958
    %v2334 = vpack.c.b16 %v1964, %v1959
    %v2335 = vpack.c.b16 %v1970, %v1965
    %v2336 = vpack.c.b16 %v1971, %v1966
    %v2337 = vpack.c.b16 %v1972, %v1967
    %v2338 = vpack.c.b16 %v1973, %v1968
    %v2339 = vpack.c.b16 %v1974, %v1969
    %v2340 = vpack.c.b16 %v1980, %v1975
    %v2341 = vpack.c.b16 %v1981, %v1976
    %v2342 = vpack.c.b16 %v1982, %v1977
    %v2343 = vpack.c.b16 %v1983, %v1978
    %v2344 = vpack.c.b16 %v1984, %v1979
    %v2345 = vpack.c.b16 %v1990, %v1985
    %v2346 = vpack.c.b16 %v1991, %v1986
    %v2347 = vpack.c.b16 %v1992, %v1987
    %v2348 = vpack.c.b16 %v1993, %v1988
    %v2349 = vpack.c.b16 %v1994, %v1989
    %v2350 = vpack.c.b16 %v2000, %v1995
    %v2351 = vpack.c.b16 %v2001, %v1996
    %v2352 = vpack.c.b16 %v2002, %v1997
    %v2353 = vpack.c.b16 %v2003, %v1998
    %v2354 = vpack.c.b16 %v2004, %v1999
    %v2355 = vpack.c.b16 %v2010, %v2005
    %v2356 = vpack.c.b16 %v2011, %v2006
    %v2357 = vpack.c.b16 %v2012, %v2007
    %v2358 = vpack.c.b16 %v2013, %v2008
    %v2359 = vpack.c.b16 %v2014, %v2009
    %v2360 = vpack.c.b16 %v2020, %v2015
    %v2361 = vpack.c.b16 %v2021, %v2016
    %v2362 = vpack.c.b16 %v2022, %v2017
    %v2363 = vpack.c.b16 %v2023, %v2018
    %v2364 = vpack.c.b16 %v2024, %v2019
    %v2365 = vpack.c.b16 %v2030, %v2025
    %v2366 = vpack.c.b16 %v2031, %v2026
    %v2367 = vpack.c.b16 %v2032, %v2027
    %v2368 = vpack.c.b16 %v2033, %v2028
    %v2369 = vpack.c.b16 %v2034, %v2029
    %v2370 = vpack.c.b16 %v2040, %v2035
    %v2371 = vpack.c.b16 %v2041, %v2036
    %v2372 = vpack.c.b16 %v2042, %v2037
    %v2373 = vpack.c.b16 %v2043, %v2038
    %v2374 = vpack.c.b16 %v2044, %v2039
    %v2375 = vpack.c.b16 %v2050, %v2045
    %v2376 = vpack.c.b16 %v2051, %v2046
    %v2377 = vpack.c.b16 %v2052, %v2047
    %v2378 = vpack.c.b16 %v2053, %v2048
    %v2379 = vpack.c.b16 %v2054, %v2049
    %v2380 = vpack.c.b16 %v2060, %v2055
    %v2381 = vpack.c.b16 %v2061, %v2056
    %v2382 = vpack.c.b16 %v2062, %v2057
    %v2383 = vpack.c.b16 %v2063, %v2058
    %v2384 = vpack.c.b16 %v2064, %v2059
    %v2385 = vpack.c.b16 %v2070, %v2065
    %v2386 = vpack.c.b16 %v2071, %v2066
    %v2387 = vpack.c.b16 %v2072, %v2067
    %v2388 = vpack.c.b16 %v2073, %v2068
    %v2389 = vpack.c.b16 %v2074, %v2069
    %v2390 = vpack.c.b16 %v2080, %v2075
    %v2391 = vpack.c.b16 %v2081, %v2076
    %v2392 = vpack.c.b16 %v2082, %v2077
    %v2393 = vpack.c.b16 %v2083, %v2078
    %v2394 = vpack.c.b16 %v2084, %v2079
    %v2395 = vpack.c.b16 %v2090, %v2085
    %v2396 = vpack.c.b16 %v2091, %v2086
    %v2397 = vpack.c.b16 %v2092, %v2087
    %v2398 = vpack.c.b16 %v2093, %v2088
    %v2399 = vpack.c.b16 %v2094, %v2089
    %v2400 = vpack.c.b16 %v2100, %v2095
    %v2401 = vpack.c.b16 %v2101, %v2096
    %v2402 = vpack.c.b16 %v2102, %v2097
    %v2403 = vpack.c.b16 %v2103, %v2098
    %v2404 = vpack.c.b16 %v2104, %v2099
    %v2405 = vpack.c.b16 %v2110, %v2105
    %v2406 = vpack.c.b16 %v2111, %v2106
    %v2407 = vpack.c.b16 %v2112, %v2107
    %v2408 = vpack.c.b16 %v2113, %v2108
    %v2409 = vpack.c.b16 %v2114, %v2109
    %v2410 = vpack.c.b16 %v2120, %v2115
    %v2411 = vpack.c.b16 %v2121, %v2116
    %v2412 = vpack.c.b16 %v2122, %v2117
    %v2413 = vpack.c.b16 %v2123, %v2118
    %v2414 = vpack.c.b16 %v2124, %v2119
    %v2415 = vpack.c.b16 %v2130, %v2125
    %v2416 = vpack.c.b16 %v2131, %v2126
    %v2417 = vpack.c.b16 %v2132, %v2127
    %v2418 = vpack.c.b16 %v2133, %v2128
    %v2419 = vpack.c.b16 %v2134, %v2129
    %v2420 = vpack.c.b16 %v2140, %v2135
    %v2421 = vpack.c.b16 %v2141, %v2136
    %v2422 = vpack.c.b16 %v2142, %v2137
    %v2423 = vpack.c.b16 %v2143, %v2138
    %v2424 = vpack.c.b16 %v2144, %v2139
    %v2425 = vpack.c.b16 %v2150, %v2145
    %v2426 = vpack.c.b16 %v2151, %v2146
    %v2427 = vpack.c.b16 %v2152, %v2147
    %v2428 = vpack.c.b16 %v2153, %v2148
    %v2429 = vpack.c.b16 %v2154, %v2149
    %v2430 = vpack.c.b16 %v2160, %v2155
    %v2431 = vpack.c.b16 %v2161, %v2156
    %v2432 = vpack.c.b16 %v2162, %v2157
    %v2433 = vpack.c.b16 %v2163, %v2158
    %v2434 = vpack.c.b16 %v2164, %v2159
    %v2435 = vpack.c.b16 %v2170, %v2165
    %v2436 = vpack.c.b16 %v2171, %v2166
    %v2437 = vpack.c.b16 %v2172, %v2167
    %v2438 = vpack.c.b16 %v2173, %v2168
    %v2439 = vpack.c.b16 %v2174, %v2169
    %v2440 = vpack.c.b16 %v2180, %v2175
    %v2441 = vpack.c.b16 %v2181, %v2176
    %v2442 = vpack.c.b16 %v2182, %v2177
    %v2443 = vpack.c.b16 %v2183, %v2178
    %v2444 = vpack.c.b16 %v2184, %v2179
    %v2445 = vpack.c.b16 %v2190, %v2185
    %v2446 = vpack.c.b16 %v2191, %v2186
    %v2447 = vpack.c.b16 %v2192, %v2187
    %v2448 = vpack.c.b16 %v2193, %v2188
    %v2449 = vpack.c.b16 %v2194, %v2189
    %v2450 = vpack.c.b16 %v2200, %v2195
    %v2451 = vpack.c.b16 %v2201, %v2196
    %v2452 = vpack.c.b16 %v2202, %v2197
    %v2453 = vpack.c.b16 %v2203, %v2198
    %v2454 = vpack.c.b16 %v2204, %v2199
    %v2455 = vpack.c.b16 %v2210, %v2205
    %v2456 = vpack.c.b16 %v2211, %v2206
    %v2457 = vpack.c.b16 %v2212, %v2207
    %v2458 = vpack.c.b16 %v2213, %v2208
    %v2459 = vpack.c.b16 %v2214, %v2209
    %v2460 = vpack.c.b16 %v2220, %v2215
    %v2461 = vpack.c.b16 %v2221, %v2216
    %v2462 = vpack.c.b16 %v2222, %v2217
    %v2463 = vpack.c.b16 %v2223, %v2218
    %v2464 = vpack.c.b16 %v2224, %v2219
    %v2465 = vpack.c.b16 %v2230, %v2225
    %v2466 = vpack.c.b16 %v2231, %v2226
    %v2467 = vpack.c.b16 %v2232, %v2227
    %v2468 = vpack.c.b16 %v2233, %v2228
    %v2469 = vpack.c.b16 %v2234, %v2229
    %v2470 = vpack.c.b16 %v2240, %v2235
    %v2471 = vpack.c.b16 %v2241, %v2236
    %v2472 = vpack.c.b16 %v2242, %v2237
    %v2473 = vpack.c.b16 %v2243, %v2238
    %v2474 = vpack.c.b16 %v2244, %v2239
    %v2475 = vpack.c.b16 %v2250, %v2245
    %v2476 = vpack.c.b16 %v2251, %v2246
    %v2477 = vpack.c.b16 %v2252, %v2247
    %v2478 = vpack.c.b16 %v2253, %v2248
    %v2479 = vpack.c.b16 %v2254, %v2249
    %v2480 = vpack.c.b16 %v2260, %v2255
    %v2481 = vpack.c.b16 %v2261, %v2256
    %v2482 = vpack.c.b16 %v2262, %v2257
    %v2483 = vpack.c.b16 %v2263, %v2258
    %v2484 = vpack.c.b16 %v2264, %v2259
    %v2485 = vpack.c.b16 %v2270, %v2265
    %v2486 = vpack.c.b16 %v2271, %v2266
    %v2487 = vpack.c.b16 %v2272, %v2267
    %v2488 = vpack.c.b16 %v2273, %v2268
    %v2489 = vpack.c.b16 %v2274, %v2269
    %v2490 = vpack.c.b16 %v2280, %v2275
    %v2491 = vpack.c.b16 %v2281, %v2276
    %v2492 = vpack.c.b16 %v2282, %v2277
    %v2493 = vpack.c.b16 %v2283, %v2278
    %v2494 = vpack.c.b16 %v2284, %v2279
    %v2495 = vpack.c.b16 %v2290, %v2285
    %v2496 = vpack.c.b16 %v2291, %v2286
    %v2497 = vpack.c.b16 %v2292, %v2287
    %v2498 = vpack.c.b16 %v2293, %v2288
    %v2499 = vpack.c.b16 %v2294, %v2289
    %v2500 = vpack.c.b16 %v2300, %v2295
    %v2501 = vpack.c.b16 %v2301, %v2296
    %v2502 = vpack.c.b16 %v2302, %v2297
    %v2503 = vpack.c.b16 %v2303, %v2298
    %v2504 = vpack.c.b16 %v2304, %v2299
    %2705 = vmatprep.subr.bf16.mxu0 %v2306
    %2706 = vmatpush1.bf16.msra.mxu0 %v2305
    %2707 = vmatprep.subr.bf16.mxu0 %v2311
    %2708 = vmatpush1.bf16.msra.mxu0 %v2310
    %2709 = vmatprep.subr.bf16.mxu0 %v2316
    %2710 = vmatpush1.bf16.msra.mxu0 %v2315
    %2711 = vmatprep.subr.bf16.mxu0 %v2321
    %2712 = vmatpush1.bf16.msra.mxu0 %v2320
    %2713 = vmatprep.subr.bf16.mxu0 %v2326
    %2714 = vmatpush1.bf16.msra.mxu0 %v2325
    %2715 = vmatprep.subr.bf16.mxu0 %v2331
    %2716 = vmatpush1.bf16.msra.mxu0 %v2330
    %2717 = vmatprep.subr.bf16.mxu0 %v2336
    %2718 = vmatpush1.bf16.msra.mxu0 %v2335
    %2719 = vmatprep.subr.bf16.mxu0 %v2341
    %2720 = vmatpush1.bf16.msra.mxu0 %v2340
    %2721 = vmatprep.subr.bf16.mxu0 %v2346
    %2722 = vmatpush1.bf16.msra.mxu0 %v2345
    %2723 = vmatprep.subr.bf16.mxu0 %v2351
    %2724 = vmatpush1.bf16.msra.mxu0 %v2350
    %2725 = vmatprep.subr.bf16.mxu0 %v2356
    %2726 = vmatpush1.bf16.msra.mxu0 %v2355
    %2727 = vmatprep.subr.bf16.mxu0 %v2361
    %2728 = vmatpush1.bf16.msra.mxu0 %v2360
    %2729 = vmatprep.subr.bf16.mxu0 %v2366
    %2730 = vmatpush1.bf16.msra.mxu0 %v2365
    %2731 = vmatprep.subr.bf16.mxu0 %v2371
    %2732 = vmatpush1.bf16.msra.mxu0 %v2370
    %2733 = vmatprep.subr.bf16.mxu0 %v2376
    %2734 = vmatpush1.bf16.msra.mxu0 %v2375
    %2735 = vmatprep.subr.bf16.mxu0 %v2381
    %2736 = vmatpush1.bf16.msra.mxu0 %v2380
    %2737 = vmatprep.mubr.bf16.mxu0 %v1394
    %2738 = vmatmul.mubr.bf16.gmra.mrb[0].mxu0 %v1393
    %v2739 = vpop.f32.mrb[0].mxu0
    %v2740 = vadd.f32 %v1643, %v2739
    %v2741 = vpop.f32.mrb[0].mxu0
    %v2742 = vadd.f32 %v1647, %v2741
    %v2743 = vpop.f32.mrb[0].mxu0
    %v2744 = vpop.f32.mrb[0].mxu0
    %2745 = vdwg.mxu0
    %2746 = vmatprep.subr.bf16.mxu0 %v2386
    %2747 = vmatpush1.bf16.msra.mxu0 %v2385
    %2748 = vmatprep.subr.bf16.mxu0 %v2391
    %2749 = vmatpush1.bf16.msra.mxu0 %v2390
    %2750 = vmatprep.subr.bf16.mxu0 %v2396
    %2751 = vmatpush1.bf16.msra.mxu0 %v2395
    %2752 = vmatprep.subr.bf16.mxu0 %v2401
    %2753 = vmatpush1.bf16.msra.mxu0 %v2400
    %2754 = vmatprep.subr.bf16.mxu0 %v2406
    %2755 = vmatpush1.bf16.msra.mxu0 %v2405
    %2756 = vmatprep.subr.bf16.mxu0 %v2411
    %2757 = vmatpush1.bf16.msra.mxu0 %v2410
    %2758 = vmatprep.subr.bf16.mxu0 %v2416
    %2759 = vmatpush1.bf16.msra.mxu0 %v2415
    %2760 = vmatprep.subr.bf16.mxu0 %v2421
    %2761 = vmatpush1.bf16.msra.mxu0 %v2420
    %2762 = vmatprep.subr.bf16.mxu0 %v2426
    %2763 = vmatpush1.bf16.msra.mxu0 %v2425
    %2764 = vmatprep.subr.bf16.mxu0 %v2431
    %2765 = vmatpush1.bf16.msra.mxu0 %v2430
    %2766 = vmatprep.subr.bf16.mxu0 %v2436
    %2767 = vmatpush1.bf16.msra.mxu0 %v2435
    %2768 = vmatprep.subr.bf16.mxu0 %v2441
    %2769 = vmatpush1.bf16.msra.mxu0 %v2440
    %2770 = vmatprep.subr.bf16.mxu0 %v2446
    %2771 = vmatpush1.bf16.msra.mxu0 %v2445
    %2772 = vmatprep.subr.bf16.mxu0 %v2451
    %2773 = vmatpush1.bf16.msra.mxu0 %v2450
    %2774 = vmatprep.subr.bf16.mxu0 %v2456
    %2775 = vmatpush1.bf16.msra.mxu0 %v2455
    %2776 = vmatprep.subr.bf16.mxu0 %v2461
    %2777 = vmatpush1.bf16.msra.mxu0 %v2460
    %2778 = vmatprep.mubr.bf16.mxu0 %v1396
    %2779 = vmatmul.mubr.bf16.gmra.mrb[0].mxu0 %v1395
    %v2780 = vpop.f32.mrb[0].mxu0
    %v2781 = vadd.f32 %v2740, %v2780
    %v2782 = vpop.f32.mrb[0].mxu0
    %v2783 = vadd.f32 %v2742, %v2782
    %v2784 = vpop.f32.mrb[0].mxu0
    %v2785 = vpop.f32.mrb[0].mxu0
    %2786 = vdwg.mxu0
    %2787 = vmatprep.subr.bf16.mxu0 %v2466
    %2788 = vmatpush1.bf16.msra.mxu0 %v2465
    %2789 = vmatprep.subr.bf16.mxu0 %v2471
    %2790 = vmatpush1.bf16.msra.mxu0 %v2470
    %2791 = vmatprep.subr.bf16.mxu0 %v2476
    %2792 = vmatpush1.bf16.msra.mxu0 %v2475
    %2793 = vmatprep.subr.bf16.mxu0 %v2481
    %2794 = vmatpush1.bf16.msra.mxu0 %v2480
    %2795 = vmatprep.subr.bf16.mxu0 %v2486
    %2796 = vmatpush1.bf16.msra.mxu0 %v2485
    %2797 = vmatprep.subr.bf16.mxu0 %v2491
    %2798 = vmatpush1.bf16.msra.mxu0 %v2490
    %2799 = vmatprep.subr.bf16.mxu0 %v2496
    %2800 = vmatpush1.bf16.msra.mxu0 %v2495
    %2801 = vmatprep.subr.bf16.mxu0 %v2501
    %2802 = vmatpush1.bf16.msra.mxu0 %v2500
    %2803 = vmatprep.subr.bf16.mxu0 0
    %2804 = vmatpush1.bf16.msra.mxu0 0
    %2805 = vmatprep.subr.bf16.mxu0 0
    %2806 = vmatpush1.bf16.msra.mxu0 0
    %2807 = vmatprep.subr.bf16.mxu0 0
    %2808 = vmatpush1.bf16.msra.mxu0 0
    %2809 = vmatprep.subr.bf16.mxu0 0
    %2810 = vmatpush1.bf16.msra.mxu0 0
    %2811 = vmatprep.subr.bf16.mxu0 0
    %2812 = vmatpush1.bf16.msra.mxu0 0
    %2813 = vmatprep.subr.bf16.mxu0 0
    %2814 = vmatpush1.bf16.msra.mxu0 0
    %2815 = vmatprep.subr.bf16.mxu0 0
    %2816 = vmatpush1.bf16.msra.mxu0 0
    %2817 = vmatprep.subr.bf16.mxu0 0
    %2818 = vmatpush1.bf16.msra.mxu0 0
    %2819 = vmatprep.mubr.bf16.mxu0 0
    %2820 = vmatmul.mubr.bf16.gmra.mrb[0].mxu0 %v1397
    %v2821 = vpop.f32.mrb[0].mxu0
    %v2822 = vadd.f32 %v2781, %v2821
    %v2823 = vpop.f32.mrb[0].mxu0
    %v2824 = vadd.f32 %v2783, %v2823
    %v2825 = vpop.f32.mrb[0].mxu0
    %v2826 = vpop.f32.mrb[0].mxu0
    %2827 = vdwg.mxu0
    %2828 = vmatprep.subr.bf16.mxu0 %v2308
    %2829 = vmatpush1.bf16.msra.mxu0 %v2307
    %2830 = vmatprep.subr.bf16.mxu0 %v2313
    %2831 = vmatpush1.bf16.msra.mxu0 %v2312
    %2832 = vmatprep.subr.bf16.mxu0 %v2318
    %2833 = vmatpush1.bf16.msra.mxu0 %v2317
    %2834 = vmatprep.subr.bf16.mxu0 %v2323
    %2835 = vmatpush1.bf16.msra.mxu0 %v2322
    %2836 = vmatprep.subr.bf16.mxu0 %v2328
    %2837 = vmatpush1.bf16.msra.mxu0 %v2327
    %2838 = vmatprep.subr.bf16.mxu0 %v2333
    %2839 = vmatpush1.bf16.msra.mxu0 %v2332
    %2840 = vmatprep.subr.bf16.mxu0 %v2338
    %2841 = vmatpush1.bf16.msra.mxu0 %v2337
    %2842 = vmatprep.subr.bf16.mxu0 %v2343
    %2843 = vmatpush1.bf16.msra.mxu0 %v2342
    %2844 = vmatprep.subr.bf16.mxu0 %v2348
    %2845 = vmatpush1.bf16.msra.mxu0 %v2347
    %2846 = vmatprep.subr.bf16.mxu0 %v2353
    %2847 = vmatpush1.bf16.msra.mxu0 %v2352
    %2848 = vmatprep.subr.bf16.mxu0 %v2358
    %2849 = vmatpush1.bf16.msra.mxu0 %v2357
    %2850 = vmatprep.subr.bf16.mxu0 %v2363
    %2851 = vmatpush1.bf16.msra.mxu0 %v2362
    %2852 = vmatprep.subr.bf16.mxu0 %v2368
    %2853 = vmatpush1.bf16.msra.mxu0 %v2367
    %2854 = vmatprep.subr.bf16.mxu0 %v2373
    %2855 = vmatpush1.bf16.msra.mxu0 %v2372
    %2856 = vmatprep.subr.bf16.mxu0 %v2378
    %2857 = vmatpush1.bf16.msra.mxu0 %v2377
    %2858 = vmatprep.subr.bf16.mxu0 %v2383
    %2859 = vmatpush1.bf16.msra.mxu0 %v2382
    %2860 = vmatprep.mubr.bf16.mxu0 %v1394
    %2861 = vmatmul.mubr.bf16.gmra.mrb[0].mxu0 %v1393
    %v2862 = vpop.f32.mrb[0].mxu0
    %v2863 = vadd.f32 %v1651, %v2862
    %v2864 = vpop.f32.mrb[0].mxu0
    %v2865 = vadd.f32 %v1655, %v2864
    %v2866 = vpop.f32.mrb[0].mxu0
    %v2867 = vpop.f32.mrb[0].mxu0
    %2868 = vdwg.mxu0
    %2869 = vmatprep.subr.bf16.mxu0 %v2388
    %2870 = vmatpush1.bf16.msra.mxu0 %v2387
    %2871 = vmatprep.subr.bf16.mxu0 %v2393
    %2872 = vmatpush1.bf16.msra.mxu0 %v2392
    %2873 = vmatprep.subr.bf16.mxu0 %v2398
    %2874 = vmatpush1.bf16.msra.mxu0 %v2397
    %2875 = vmatprep.subr.bf16.mxu0 %v2403
    %2876 = vmatpush1.bf16.msra.mxu0 %v2402
    %2877 = vmatprep.subr.bf16.mxu0 %v2408
    %2878 = vmatpush1.bf16.msra.mxu0 %v2407
    %2879 = vmatprep.subr.bf16.mxu0 %v2413
    %2880 = vmatpush1.bf16.msra.mxu0 %v2412
    %2881 = vmatprep.subr.bf16.mxu0 %v2418
    %2882 = vmatpush1.bf16.msra.mxu0 %v2417
    %2883 = vmatprep.subr.bf16.mxu0 %v2423
    %2884 = vmatpush1.bf16.msra.mxu0 %v2422
    %2885 = vmatprep.subr.bf16.mxu0 %v2428
    %2886 = vmatpush1.bf16.msra.mxu0 %v2427
    %2887 = vmatprep.subr.bf16.mxu0 %v2433
    %2888 = vmatpush1.bf16.msra.mxu0 %v2432
    %2889 = vmatprep.subr.bf16.mxu0 %v2438
    %2890 = vmatpush1.bf16.msra.mxu0 %v2437
    %2891 = vmatprep.subr.bf16.mxu0 %v2443
    %2892 = vmatpush1.bf16.msra.mxu0 %v2442
    %2893 = vmatprep.subr.bf16.mxu0 %v2448
    %2894 = vmatpush1.bf16.msra.mxu0 %v2447
    %2895 = vmatprep.subr.bf16.mxu0 %v2453
    %2896 = vmatpush1.bf16.msra.mxu0 %v2452
    %2897 = vmatprep.subr.bf16.mxu0 %v2458
    %2898 = vmatpush1.bf16.msra.mxu0 %v2457
    %2899 = vmatprep.subr.bf16.mxu0 %v2463
    %2900 = vmatpush1.bf16.msra.mxu0 %v2462
    %2901 = vmatprep.mubr.bf16.mxu0 %v1396
    %2902 = vmatmul.mubr.bf16.gmra.mrb[0].mxu0 %v1395
    %v2903 = vpop.f32.mrb[0].mxu0
    %v2904 = vadd.f32 %v2863, %v2903
    %v2905 = vpop.f32.mrb[0].mxu0
    %v2906 = vadd.f32 %v2865, %v2905
    %v2907 = vpop.f32.mrb[0].mxu0
    %v2908 = vpop.f32.mrb[0].mxu0
    %2909 = vdwg.mxu0
    %2910 = vmatprep.subr.bf16.mxu0 %v2468
    %2911 = vmatpush1.bf16.msra.mxu0 %v2467
    %2912 = vmatprep.subr.bf16.mxu0 %v2473
    %2913 = vmatpush1.bf16.msra.mxu0 %v2472
    %2914 = vmatprep.subr.bf16.mxu0 %v2478
    %2915 = vmatpush1.bf16.msra.mxu0 %v2477
    %2916 = vmatprep.subr.bf16.mxu0 %v2483
    %2917 = vmatpush1.bf16.msra.mxu0 %v2482
    %2918 = vmatprep.subr.bf16.mxu0 %v2488
    %2919 = vmatpush1.bf16.msra.mxu0 %v2487
    %2920 = vmatprep.subr.bf16.mxu0 %v2493
    %2921 = vmatpush1.bf16.msra.mxu0 %v2492
    %2922 = vmatprep.subr.bf16.mxu0 %v2498
    %2923 = vmatpush1.bf16.msra.mxu0 %v2497
    %2924 = vmatprep.subr.bf16.mxu0 %v2503
    %2925 = vmatpush1.bf16.msra.mxu0 %v2502
    %2926 = vmatprep.subr.bf16.mxu0 0
    %2927 = vmatpush1.bf16.msra.mxu0 0
    %2928 = vmatprep.subr.bf16.mxu0 0
    %2929 = vmatpush1.bf16.msra.mxu0 0
    %2930 = vmatprep.subr.bf16.mxu0 0
    %2931 = vmatpush1.bf16.msra.mxu0 0
    %2932 = vmatprep.subr.bf16.mxu0 0
    %2933 = vmatpush1.bf16.msra.mxu0 0
    %2934 = vmatprep.subr.bf16.mxu0 0
    %2935 = vmatpush1.bf16.msra.mxu0 0
    %2936 = vmatprep.subr.bf16.mxu0 0
    %2937 = vmatpush1.bf16.msra.mxu0 0
    %2938 = vmatprep.subr.bf16.mxu0 0
    %2939 = vmatpush1.bf16.msra.mxu0 0
    %2940 = vmatprep.subr.bf16.mxu0 0
    %2941 = vmatpush1.bf16.msra.mxu0 0
    %2942 = vmatprep.mubr.bf16.mxu0 0
    %2943 = vmatmul.mubr.bf16.gmra.mrb[0].mxu0 %v1397
    %v2944 = vpop.f32.mrb[0].mxu0
    %v2945 = vadd.f32 %v2904, %v2944
    %v2946 = vpop.f32.mrb[0].mxu0
    %v2947 = vadd.f32 %v2906, %v2946
    %v2948 = vpop.f32.mrb[0].mxu0
    %v2949 = vpop.f32.mrb[0].mxu0
    %2950 = vdwg.mxu0
    %2951 = vmatprep.subr.bf16.mxu0 0
    %2952 = vmatpush1.bf16.msra.mxu0 %v2309
    %2953 = vmatprep.subr.bf16.mxu0 0
    %2954 = vmatpush1.bf16.msra.mxu0 %v2314
    %2955 = vmatprep.subr.bf16.mxu0 0
    %2956 = vmatpush1.bf16.msra.mxu0 %v2319
    %2957 = vmatprep.subr.bf16.mxu0 0
    %2958 = vmatpush1.bf16.msra.mxu0 %v2324
    %2959 = vmatprep.subr.bf16.mxu0 0
    %2960 = vmatpush1.bf16.msra.mxu0 %v2329
    %2961 = vmatprep.subr.bf16.mxu0 0
    %2962 = vmatpush1.bf16.msra.mxu0 %v2334
    %2963 = vmatprep.subr.bf16.mxu0 0
    %2964 = vmatpush1.bf16.msra.mxu0 %v2339
    %2965 = vmatprep.subr.bf16.mxu0 0
    %2966 = vmatpush1.bf16.msra.mxu0 %v2344
    %2967 = vmatprep.subr.bf16.mxu0 0
    %2968 = vmatpush1.bf16.msra.mxu0 %v2349
    %2969 = vmatprep.subr.bf16.mxu0 0
    %2970 = vmatpush1.bf16.msra.mxu0 %v2354
    %2971 = vmatprep.subr.bf16.mxu0 0
    %2972 = vmatpush1.bf16.msra.mxu0 %v2359
    %2973 = vmatprep.subr.bf16.mxu0 0
    %2974 = vmatpush1.bf16.msra.mxu0 %v2364
    %2975 = vmatprep.subr.bf16.mxu0 0
    %2976 = vmatpush1.bf16.msra.mxu0 %v2369
    %2977 = vmatprep.subr.bf16.mxu0 0
    %2978 = vmatpush1.bf16.msra.mxu0 %v2374
    %2979 = vmatprep.subr.bf16.mxu0 0
    %2980 = vmatpush1.bf16.msra.mxu0 %v2379
    %2981 = vmatprep.subr.bf16.mxu0 0
    %2982 = vmatpush1.bf16.msra.mxu0 %v2384
    %2983 = vmatprep.mubr.bf16.mxu0 %v1394
    %2984 = vmatmul.mubr.bf16.gmra.mrb[0].mxu0 %v1393
    %v2985 = vpop.f32.mrb[0].mxu0
    %v2986 = vadd.f32 %v1659, %v2985
    %v2987 = vpop.f32.mrb[0].mxu0
    %v2988 = vpop.f32.mrb[0].mxu0
    %v2989 = vpop.f32.mrb[0].mxu0
    %2990 = vdwg.mxu0
    %2991 = vmatprep.subr.bf16.mxu0 0
    %2992 = vmatpush1.bf16.msra.mxu0 %v2389
    %2993 = vmatprep.subr.bf16.mxu0 0
    %2994 = vmatpush1.bf16.msra.mxu0 %v2394
    %2995 = vmatprep.subr.bf16.mxu0 0
    %2996 = vmatpush1.bf16.msra.mxu0 %v2399
    %2997 = vmatprep.subr.bf16.mxu0 0
    %2998 = vmatpush1.bf16.msra.mxu0 %v2404
    %2999 = vmatprep.subr.bf16.mxu0 0
    %3000 = vmatpush1.bf16.msra.mxu0 %v2409
    %3001 = vmatprep.subr.bf16.mxu0 0
    %3002 = vmatpush1.bf16.msra.mxu0 %v2414
    %3003 = vmatprep.subr.bf16.mxu0 0
    %3004 = vmatpush1.bf16.msra.mxu0 %v2419
    %3005 = vmatprep.subr.bf16.mxu0 0
    %3006 = vmatpush1.bf16.msra.mxu0 %v2424
    %3007 = vmatprep.subr.bf16.mxu0 0
    %3008 = vmatpush1.bf16.msra.mxu0 %v2429
    %3009 = vmatprep.subr.bf16.mxu0 0
    %3010 = vmatpush1.bf16.msra.mxu0 %v2434
    %3011 = vmatprep.subr.bf16.mxu0 0
    %3012 = vmatpush1.bf16.msra.mxu0 %v2439
    %3013 = vmatprep.subr.bf16.mxu0 0
    %3014 = vmatpush1.bf16.msra.mxu0 %v2444
    %3015 = vmatprep.subr.bf16.mxu0 0
    %3016 = vmatpush1.bf16.msra.mxu0 %v2449
    %3017 = vmatprep.subr.bf16.mxu0 0
    %3018 = vmatpush1.bf16.msra.mxu0 %v2454
    %3019 = vmatprep.subr.bf16.mxu0 0
    %3020 = vmatpush1.bf16.msra.mxu0 %v2459
    %3021 = vmatprep.subr.bf16.mxu0 0
    %3022 = vmatpush1.bf16.msra.mxu0 %v2464
    %3023 = vmatprep.mubr.bf16.mxu0 %v1396
    %3024 = vmatmul.mubr.bf16.gmra.mrb[0].mxu0 %v1395
    %v3025 = vpop.f32.mrb[0].mxu0
    %v3026 = vadd.f32 %v2986, %v3025
    %v3027 = vpop.f32.mrb[0].mxu0
    %v3028 = vpop.f32.mrb[0].mxu0
    %v3029 = vpop.f32.mrb[0].mxu0
    %3030 = vdwg.mxu0
    %3031 = vmatprep.subr.bf16.mxu0 0
    %3032 = vmatpush1.bf16.msra.mxu0 %v2469
    %3033 = vmatprep.subr.bf16.mxu0 0
    %3034 = vmatpush1.bf16.msra.mxu0 %v2474
    %3035 = vmatprep.subr.bf16.mxu0 0
    %3036 = vmatpush1.bf16.msra.mxu0 %v2479
    %3037 = vmatprep.subr.bf16.mxu0 0
    %3038 = vmatpush1.bf16.msra.mxu0 %v2484
    %3039 = vmatprep.subr.bf16.mxu0 0
    %3040 = vmatpush1.bf16.msra.mxu0 %v2489
    %3041 = vmatprep.subr.bf16.mxu0 0
    %3042 = vmatpush1.bf16.msra.mxu0 %v2494
    %3043 = vmatprep.subr.bf16.mxu0 0
    %3044 = vmatpush1.bf16.msra.mxu0 %v2499
    %3045 = vmatprep.subr.bf16.mxu0 0
    %3046 = vmatpush1.bf16.msra.mxu0 %v2504
    %3047 = vmatprep.subr.bf16.mxu0 0
    %3048 = vmatpush1.bf16.msra.mxu0 0
    %3049 = vmatprep.subr.bf16.mxu0 0
    %3050 = vmatpush1.bf16.msra.mxu0 0
    %3051 = vmatprep.subr.bf16.mxu0 0
    %3052 = vmatpush1.bf16.msra.mxu0 0
    %3053 = vmatprep.subr.bf16.mxu0 0
    %3054 = vmatpush1.bf16.msra.mxu0 0
    %3055 = vmatprep.subr.bf16.mxu0 0
    %3056 = vmatpush1.bf16.msra.mxu0 0
    %3057 = vmatprep.subr.bf16.mxu0 0
    %3058 = vmatpush1.bf16.msra.mxu0 0
    %3059 = vmatprep.subr.bf16.mxu0 0
    %3060 = vmatpush1.bf16.msra.mxu0 0
    %3061 = vmatprep.subr.bf16.mxu0 0
    %3062 = vmatpush1.bf16.msra.mxu0 0
    %3063 = vmatprep.mubr.bf16.mxu0 0
    %3064 = vmatmul.mubr.bf16.gmra.mrb[0].mxu0 %v1397
    %v3065 = vpop.f32.mrb[0].mxu0
    %v3066 = vadd.f32 %v3026, %v3065
    %v3067 = vpop.f32.mrb[0].mxu0
    %v3068 = vpop.f32.mrb[0].mxu0
    %v3069 = vpop.f32.mrb[0].mxu0
    %3070 = vdwg.mxu0
    %v3071 = vmax.f32 %v2822, 0.0
    %v3072 = vmax.f32 %v2824, 0.0
    %v3073 = vmax.f32 %v2945, 0.0
    %v3074 = vmax.f32 %v2947, 0.0
    %v3075 = vmax.f32 %v3066, 0.0
    %v3076 = vpack.c.bf16 %v3071, %v3071
    %v3077 = vpack.c.bf16 %v3072, %v3072
    %v3078 = vpack.c.bf16 %v3073, %v3073
    %v3079 = vpack.c.bf16 %v3074, %v3074
    %v3080 = vpack.c.bf16 %v3075, %v3075
    %v3081 = vld [vmem:[#allocation11] sm:$0xff]
    %v3082 = vld [vmem:[#allocation11 + $0x8] sm:$0xff]
    %v3083 = vld [vmem:[#allocation11 + $0x10] sm:$0xff]
    %v3084 = vld [vmem:[#allocation11 + $0x18] sm:$0xff]
    %v3085 = vld [vmem:[#allocation11 + $0x20] sm:$0xff]
    %v3086 = vld [vmem:[#allocation11 + $0x28] sm:$0xff]
    %v3087 = vld [vmem:[#allocation11 + $0x30] sm:$0xff]
    %v3088 = vld [vmem:[#allocation11 + $0x38] sm:$0xff]
    %v3089 = vld [vmem:[#allocation11 + $0x40] sm:$0xff]
    %v3090 = vld [vmem:[#allocation11 + $0x48] sm:$0xff]
    %v3091 = vld [vmem:[#allocation11 + $0x50] sm:$0xff]
    %v3092 = vld [vmem:[#allocation11 + $0x58] sm:$0xff]
    %v3093 = vld [vmem:[#allocation11 + $0x60] sm:$0xff]
    %v3094 = vld [vmem:[#allocation11 + $0x68] sm:$0xff]
    %v3095 = vld [vmem:[#allocation11 + $0x70] sm:$0xff]
    %v3096 = vld [vmem:[#allocation11 + $0x78] sm:$0xff]
    %v3097 = vld [vmem:[#allocation11 + $0x80] sm:$0xff]
    %v3098 = vld [vmem:[#allocation11 + $0x88] sm:$0xff]
    %v3099 = vld [vmem:[#allocation11 + $0x90] sm:$0xff]
    %v3100 = vld [vmem:[#allocation11 + $0x98] sm:$0xff]
    %v3101 = vld [vmem:[#allocation11 + $0xa0] sm:$0xff]
    %v3102 = vld [vmem:[#allocation11 + $0xa8] sm:$0xff]
    %v3103 = vld [vmem:[#allocation11 + $0xb0] sm:$0xff]
    %v3104 = vld [vmem:[#allocation11 + $0xb8] sm:$0xff]
    %v3105 = vld [vmem:[#allocation11 + $0xc0] sm:$0xff]
    %v3106 = vld [vmem:[#allocation11 + $0xc8] sm:$0xff]
    %v3107 = vld [vmem:[#allocation11 + $0xd0] sm:$0xff]
    %v3108 = vld [vmem:[#allocation11 + $0xd8] sm:$0xff]
    %v3109 = vld [vmem:[#allocation11 + $0xe0] sm:$0xff]
    %v3110 = vld [vmem:[#allocation11 + $0xe8] sm:$0xff]
    %v3111 = vld [vmem:[#allocation11 + $0xf0] sm:$0xff]
    %v3112 = vld [vmem:[#allocation11 + $0xf8] sm:$0xff]
    %v3113 = vld [vmem:[#allocation11 + $0x100] sm:$0xff]
    %v3114 = vld [vmem:[#allocation11 + $0x108] sm:$0xff]
    %v3115 = vld [vmem:[#allocation11 + $0x110] sm:$0xff]
    %v3116 = vld [vmem:[#allocation11 + $0x118] sm:$0xff]
    %v3117 = vld [vmem:[#allocation11 + $0x120] sm:$0xff]
    %v3118 = vld [vmem:[#allocation11 + $0x128] sm:$0xff]
    %v3119 = vld [vmem:[#allocation11 + $0x130] sm:$0xff]
    %v3120 = vld [vmem:[#allocation11 + $0x138] sm:$0xff]
    %v3121 = vld [vmem:[#allocation11 + $0x140] sm:$0xff]
    %v3122 = vld [vmem:[#allocation11 + $0x148] sm:$0xff]
    %v3123 = vld [vmem:[#allocation11 + $0x150] sm:$0xff]
    %v3124 = vld [vmem:[#allocation11 + $0x158] sm:$0xff]
    %v3125 = vld [vmem:[#allocation11 + $0x160] sm:$0xff]
    %v3126 = vld [vmem:[#allocation11 + $0x168] sm:$0xff]
    %v3127 = vld [vmem:[#allocation11 + $0x170] sm:$0xff]
    %v3128 = vld [vmem:[#allocation11 + $0x178] sm:$0xff]
    %v3129 = vld [vmem:[#allocation11 + $0x180] sm:$0xff]
    %v3130 = vld [vmem:[#allocation11 + $0x188] sm:$0xff]
    %v3131 = vld [vmem:[#allocation11 + $0x190] sm:$0xff]
    %v3132 = vld [vmem:[#allocation11 + $0x198] sm:$0xff]
    %v3133 = vld [vmem:[#allocation11 + $0x1a0] sm:$0xff]
    %v3134 = vld [vmem:[#allocation11 + $0x1a8] sm:$0xff]
    %v3135 = vld [vmem:[#allocation11 + $0x1b0] sm:$0xff]
    %v3136 = vld [vmem:[#allocation11 + $0x1b8] sm:$0xff]
    %v3137 = vld [vmem:[#allocation11 + $0x1c0] sm:$0xff]
    %v3138 = vld [vmem:[#allocation11 + $0x1c8] sm:$0xff]
    %v3139 = vld [vmem:[#allocation11 + $0x1d0] sm:$0xff]
    %v3140 = vld [vmem:[#allocation11 + $0x1d8] sm:$0xff]
    %v3141 = vld [vmem:[#allocation11 + $0x1e0] sm:$0xff]
    %v3142 = vld [vmem:[#allocation11 + $0x1e8] sm:$0xff]
    %v3143 = vld [vmem:[#allocation11 + $0x1f0] sm:$0xff]
    %v3144 = vld [vmem:[#allocation11 + $0x1f8] sm:$0xff]
    %v3145 = vld [vmem:[#allocation11 + $0x200] sm:$0xff]
    %v3146 = vld [vmem:[#allocation11 + $0x208] sm:$0xff]
    %v3147 = vld [vmem:[#allocation11 + $0x210] sm:$0xff]
    %v3148 = vld [vmem:[#allocation11 + $0x218] sm:$0xff]
    %v3149 = vld [vmem:[#allocation11 + $0x220] sm:$0xff]
    %v3150 = vld [vmem:[#allocation11 + $0x228] sm:$0xff]
    %v3151 = vld [vmem:[#allocation11 + $0x230] sm:$0xff]
    %v3152 = vld [vmem:[#allocation11 + $0x238] sm:$0xff]
    %v3153 = vld [vmem:[#allocation11 + $0x240] sm:$0xff]
    %v3154 = vld [vmem:[#allocation11 + $0x248] sm:$0xff]
    %v3155 = vld [vmem:[#allocation11 + $0x250] sm:$0xff]
    %v3156 = vld [vmem:[#allocation11 + $0x258] sm:$0xff]
    %v3157 = vld [vmem:[#allocation11 + $0x260] sm:$0xff]
    %v3158 = vld [vmem:[#allocation11 + $0x268] sm:$0xff]
    %v3159 = vld [vmem:[#allocation11 + $0x270] sm:$0xff]
    %v3160 = vld [vmem:[#allocation11 + $0x278] sm:$0xff]
    %v3161 = vld [vmem:[#allocation13] sm:$0x3]
    %v3163 = vlaneseq
    %v3164 = vshrl.u32 %v3163, 7
    %v3165 = vsub.s32 0, %v3164
    %v3166 = vrot.slane %v3161, %v3165
    %v3167 = vlaneseq
    %v3168 = vshrl.u32 %v3167, 7
    %v3169 = vsub.s32 1, %v3168
    %v3170 = vrot.slane %v3161, %v3169
    %v3253 = vunpack.c.l.b16 %v3081
    %v3254 = vunpack.c.h.b16 %v3081
    %v3255 = vunpack.c.l.b16 %v3082
    %v3256 = vunpack.c.h.b16 %v3082
    %v3257 = vunpack.c.l.b16 %v3083
    %v3258 = vunpack.c.h.b16 %v3083
    %v3259 = vunpack.c.l.b16 %v3084
    %v3260 = vunpack.c.h.b16 %v3084
    %v3261 = vunpack.c.l.b16 %v3085
    %v3262 = vunpack.c.h.b16 %v3085
    %v3263 = vunpack.c.l.b16 %v3086
    %v3264 = vunpack.c.h.b16 %v3086
    %v3265 = vunpack.c.l.b16 %v3087
    %v3266 = vunpack.c.h.b16 %v3087
    %v3267 = vunpack.c.l.b16 %v3088
    %v3268 = vunpack.c.h.b16 %v3088
    %v3269 = vunpack.c.l.b16 %v3089
    %v3270 = vunpack.c.h.b16 %v3089
    %v3271 = vunpack.c.l.b16 %v3090
    %v3272 = vunpack.c.h.b16 %v3090
    %v3273 = vunpack.c.l.b16 %v3091
    %v3274 = vunpack.c.h.b16 %v3091
    %v3275 = vunpack.c.l.b16 %v3092
    %v3276 = vunpack.c.h.b16 %v3092
    %v3277 = vunpack.c.l.b16 %v3093
    %v3278 = vunpack.c.h.b16 %v3093
    %v3279 = vunpack.c.l.b16 %v3094
    %v3280 = vunpack.c.h.b16 %v3094
    %v3281 = vunpack.c.l.b16 %v3095
    %v3282 = vunpack.c.h.b16 %v3095
    %v3283 = vunpack.c.l.b16 %v3096
    %v3284 = vunpack.c.h.b16 %v3096
    %v3285 = vunpack.c.l.b16 %v3097
    %v3286 = vunpack.c.h.b16 %v3097
    %v3287 = vunpack.c.l.b16 %v3098
    %v3288 = vunpack.c.h.b16 %v3098
    %v3289 = vunpack.c.l.b16 %v3099
    %v3290 = vunpack.c.h.b16 %v3099
    %v3291 = vunpack.c.l.b16 %v3100
    %v3292 = vunpack.c.h.b16 %v3100
    %v3293 = vunpack.c.l.b16 %v3101
    %v3294 = vunpack.c.h.b16 %v3101
    %v3295 = vunpack.c.l.b16 %v3102
    %v3296 = vunpack.c.h.b16 %v3102
    %v3297 = vunpack.c.l.b16 %v3103
    %v3298 = vunpack.c.h.b16 %v3103
    %v3299 = vunpack.c.l.b16 %v3104
    %v3300 = vunpack.c.h.b16 %v3104
    %v3301 = vunpack.c.l.b16 %v3105
    %v3302 = vunpack.c.h.b16 %v3105
    %v3303 = vunpack.c.l.b16 %v3106
    %v3304 = vunpack.c.h.b16 %v3106
    %v3305 = vunpack.c.l.b16 %v3107
    %v3306 = vunpack.c.h.b16 %v3107
    %v3307 = vunpack.c.l.b16 %v3108
    %v3308 = vunpack.c.h.b16 %v3108
    %v3309 = vunpack.c.l.b16 %v3109
    %v3310 = vunpack.c.h.b16 %v3109
    %v3311 = vunpack.c.l.b16 %v3110
    %v3312 = vunpack.c.h.b16 %v3110
    %v3313 = vunpack.c.l.b16 %v3111
    %v3314 = vunpack.c.h.b16 %v3111
    %v3315 = vunpack.c.l.b16 %v3112
    %v3316 = vunpack.c.h.b16 %v3112
    %v3317 = vunpack.c.l.b16 %v3113
    %v3318 = vunpack.c.h.b16 %v3113
    %v3319 = vunpack.c.l.b16 %v3114
    %v3320 = vunpack.c.h.b16 %v3114
    %v3321 = vunpack.c.l.b16 %v3115
    %v3322 = vunpack.c.h.b16 %v3115
    %v3323 = vunpack.c.l.b16 %v3116
    %v3324 = vunpack.c.h.b16 %v3116
    %v3325 = vunpack.c.l.b16 %v3117
    %v3326 = vunpack.c.h.b16 %v3117
    %v3327 = vunpack.c.l.b16 %v3118
    %v3328 = vunpack.c.h.b16 %v3118
    %v3329 = vunpack.c.l.b16 %v3119
    %v3330 = vunpack.c.h.b16 %v3119
    %v3331 = vunpack.c.l.b16 %v3120
    %v3332 = vunpack.c.h.b16 %v3120
    %v3333 = vunpack.c.l.b16 %v3121
    %v3334 = vunpack.c.h.b16 %v3121
    %v3335 = vunpack.c.l.b16 %v3122
    %v3336 = vunpack.c.h.b16 %v3122
    %v3337 = vunpack.c.l.b16 %v3123
    %v3338 = vunpack.c.h.b16 %v3123
    %v3339 = vunpack.c.l.b16 %v3124
    %v3340 = vunpack.c.h.b16 %v3124
    %v3341 = vunpack.c.l.b16 %v3125
    %v3342 = vunpack.c.h.b16 %v3125
    %v3343 = vunpack.c.l.b16 %v3126
    %v3344 = vunpack.c.h.b16 %v3126
    %v3345 = vunpack.c.l.b16 %v3127
    %v3346 = vunpack.c.h.b16 %v3127
    %v3347 = vunpack.c.l.b16 %v3128
    %v3348 = vunpack.c.h.b16 %v3128
    %v3349 = vunpack.c.l.b16 %v3129
    %v3350 = vunpack.c.h.b16 %v3129
    %v3351 = vunpack.c.l.b16 %v3130
    %v3352 = vunpack.c.h.b16 %v3130
    %v3353 = vunpack.c.l.b16 %v3131
    %v3354 = vunpack.c.h.b16 %v3131
    %v3355 = vunpack.c.l.b16 %v3132
    %v3356 = vunpack.c.h.b16 %v3132
    %v3357 = vunpack.c.l.b16 %v3133
    %v3358 = vunpack.c.h.b16 %v3133
    %v3359 = vunpack.c.l.b16 %v3134
    %v3360 = vunpack.c.h.b16 %v3134
    %v3361 = vunpack.c.l.b16 %v3135
    %v3362 = vunpack.c.h.b16 %v3135
    %v3363 = vunpack.c.l.b16 %v3136
    %v3364 = vunpack.c.h.b16 %v3136
    %v3365 = vunpack.c.l.b16 %v3137
    %v3366 = vunpack.c.h.b16 %v3137
    %v3367 = vunpack.c.l.b16 %v3138
    %v3368 = vunpack.c.h.b16 %v3138
    %v3369 = vunpack.c.l.b16 %v3139
    %v3370 = vunpack.c.h.b16 %v3139
    %v3371 = vunpack.c.l.b16 %v3140
    %v3372 = vunpack.c.h.b16 %v3140
    %v3373 = vunpack.c.l.b16 %v3141
    %v3374 = vunpack.c.h.b16 %v3141
    %v3375 = vunpack.c.l.b16 %v3142
    %v3376 = vunpack.c.h.b16 %v3142
    %v3377 = vunpack.c.l.b16 %v3143
    %v3378 = vunpack.c.h.b16 %v3143
    %v3379 = vunpack.c.l.b16 %v3144
    %v3380 = vunpack.c.h.b16 %v3144
    %v3381 = vunpack.c.l.b16 %v3145
    %v3382 = vunpack.c.h.b16 %v3145
    %v3383 = vunpack.c.l.b16 %v3146
    %v3384 = vunpack.c.h.b16 %v3146
    %v3385 = vunpack.c.l.b16 %v3147
    %v3386 = vunpack.c.h.b16 %v3147
    %v3387 = vunpack.c.l.b16 %v3148
    %v3388 = vunpack.c.h.b16 %v3148
    %v3389 = vunpack.c.l.b16 %v3149
    %v3390 = vunpack.c.h.b16 %v3149
    %v3391 = vunpack.c.l.b16 %v3150
    %v3392 = vunpack.c.h.b16 %v3150
    %v3393 = vunpack.c.l.b16 %v3151
    %v3394 = vunpack.c.h.b16 %v3151
    %v3395 = vunpack.c.l.b16 %v3152
    %v3396 = vunpack.c.h.b16 %v3152
    %v3397 = vunpack.c.l.b16 %v3153
    %v3398 = vunpack.c.h.b16 %v3153
    %v3399 = vunpack.c.l.b16 %v3154
    %v3400 = vunpack.c.h.b16 %v3154
    %v3401 = vunpack.c.l.b16 %v3155
    %v3402 = vunpack.c.h.b16 %v3155
    %v3403 = vunpack.c.l.b16 %v3156
    %v3404 = vunpack.c.h.b16 %v3156
    %v3405 = vunpack.c.l.b16 %v3157
    %v3406 = vunpack.c.h.b16 %v3157
    %v3407 = vunpack.c.l.b16 %v3158
    %v3408 = vunpack.c.h.b16 %v3158
    %v3409 = vunpack.c.l.b16 %v3159
    %v3410 = vunpack.c.h.b16 %v3159
    %v3411 = vunpack.c.l.b16 %v3160
    %v3412 = vunpack.c.h.b16 %v3160
    %v3413 = vpack.c.b16 %v3255, %v3253
    %v3414 = vpack.c.b16 %v3256, %v3254
    %v3415 = vpack.c.b16 %v3259, %v3257
    %v3416 = vpack.c.b16 %v3260, %v3258
    %v3417 = vpack.c.b16 %v3263, %v3261
    %v3418 = vpack.c.b16 %v3264, %v3262
    %v3419 = vpack.c.b16 %v3267, %v3265
    %v3420 = vpack.c.b16 %v3268, %v3266
    %v3421 = vpack.c.b16 %v3271, %v3269
    %v3422 = vpack.c.b16 %v3272, %v3270
    %v3423 = vpack.c.b16 %v3275, %v3273
    %v3424 = vpack.c.b16 %v3276, %v3274
    %v3425 = vpack.c.b16 %v3279, %v3277
    %v3426 = vpack.c.b16 %v3280, %v3278
    %v3427 = vpack.c.b16 %v3283, %v3281
    %v3428 = vpack.c.b16 %v3284, %v3282
    %v3429 = vpack.c.b16 %v3287, %v3285
    %v3430 = vpack.c.b16 %v3288, %v3286
    %v3431 = vpack.c.b16 %v3291, %v3289
    %v3432 = vpack.c.b16 %v3292, %v3290
    %v3433 = vpack.c.b16 %v3295, %v3293
    %v3434 = vpack.c.b16 %v3296, %v3294
    %v3435 = vpack.c.b16 %v3299, %v3297
    %v3436 = vpack.c.b16 %v3300, %v3298
    %v3437 = vpack.c.b16 %v3303, %v3301
    %v3438 = vpack.c.b16 %v3304, %v3302
    %v3439 = vpack.c.b16 %v3307, %v3305
    %v3440 = vpack.c.b16 %v3308, %v3306
    %v3441 = vpack.c.b16 %v3311, %v3309
    %v3442 = vpack.c.b16 %v3312, %v3310
    %v3443 = vpack.c.b16 %v3315, %v3313
    %v3444 = vpack.c.b16 %v3316, %v3314
    %v3445 = vpack.c.b16 %v3319, %v3317
    %v3446 = vpack.c.b16 %v3320, %v3318
    %v3447 = vpack.c.b16 %v3323, %v3321
    %v3448 = vpack.c.b16 %v3324, %v3322
    %v3449 = vpack.c.b16 %v3327, %v3325
    %v3450 = vpack.c.b16 %v3328, %v3326
    %v3451 = vpack.c.b16 %v3331, %v3329
    %v3452 = vpack.c.b16 %v3332, %v3330
    %v3453 = vpack.c.b16 %v3335, %v3333
    %v3454 = vpack.c.b16 %v3336, %v3334
    %v3455 = vpack.c.b16 %v3339, %v3337
    %v3456 = vpack.c.b16 %v3340, %v3338
    %v3457 = vpack.c.b16 %v3343, %v3341
    %v3458 = vpack.c.b16 %v3344, %v3342
    %v3459 = vpack.c.b16 %v3347, %v3345
    %v3460 = vpack.c.b16 %v3348, %v3346
    %v3461 = vpack.c.b16 %v3351, %v3349
    %v3462 = vpack.c.b16 %v3352, %v3350
    %v3463 = vpack.c.b16 %v3355, %v3353
    %v3464 = vpack.c.b16 %v3356, %v3354
    %v3465 = vpack.c.b16 %v3359, %v3357
    %v3466 = vpack.c.b16 %v3360, %v3358
    %v3467 = vpack.c.b16 %v3363, %v3361
    %v3468 = vpack.c.b16 %v3364, %v3362
    %v3469 = vpack.c.b16 %v3367, %v3365
    %v3470 = vpack.c.b16 %v3368, %v3366
    %v3471 = vpack.c.b16 %v3371, %v3369
    %v3472 = vpack.c.b16 %v3372, %v3370
    %v3473 = vpack.c.b16 %v3375, %v3373
    %v3474 = vpack.c.b16 %v3376, %v3374
    %v3475 = vpack.c.b16 %v3379, %v3377
    %v3476 = vpack.c.b16 %v3380, %v3378
    %v3477 = vpack.c.b16 %v3383, %v3381
    %v3478 = vpack.c.b16 %v3384, %v3382
    %v3479 = vpack.c.b16 %v3387, %v3385
    %v3480 = vpack.c.b16 %v3388, %v3386
    %v3481 = vpack.c.b16 %v3391, %v3389
    %v3482 = vpack.c.b16 %v3392, %v3390
    %v3483 = vpack.c.b16 %v3395, %v3393
    %v3484 = vpack.c.b16 %v3396, %v3394
    %v3485 = vpack.c.b16 %v3399, %v3397
    %v3486 = vpack.c.b16 %v3400, %v3398
    %v3487 = vpack.c.b16 %v3403, %v3401
    %v3488 = vpack.c.b16 %v3404, %v3402
    %v3489 = vpack.c.b16 %v3407, %v3405
    %v3490 = vpack.c.b16 %v3408, %v3406
    %v3491 = vpack.c.b16 %v3411, %v3409
    %v3492 = vpack.c.b16 %v3412, %v3410
    %3573 = vmatprep.subr.bf16.mxu0 %v3414
    %3574 = vmatpush1.bf16.msra.mxu0 %v3413
    %3575 = vmatprep.subr.bf16.mxu0 %v3416
    %3576 = vmatpush1.bf16.msra.mxu0 %v3415
    %3577 = vmatprep.subr.bf16.mxu0 %v3418
    %3578 = vmatpush1.bf16.msra.mxu0 %v3417
    %3579 = vmatprep.subr.bf16.mxu0 %v3420
    %3580 = vmatpush1.bf16.msra.mxu0 %v3419
    %3581 = vmatprep.subr.bf16.mxu0 %v3422
    %3582 = vmatpush1.bf16.msra.mxu0 %v3421
    %3583 = vmatprep.subr.bf16.mxu0 %v3424
    %3584 = vmatpush1.bf16.msra.mxu0 %v3423
    %3585 = vmatprep.subr.bf16.mxu0 %v3426
    %3586 = vmatpush1.bf16.msra.mxu0 %v3425
    %3587 = vmatprep.subr.bf16.mxu0 %v3428
    %3588 = vmatpush1.bf16.msra.mxu0 %v3427
    %3589 = vmatprep.subr.bf16.mxu0 %v3430
    %3590 = vmatpush1.bf16.msra.mxu0 %v3429
    %3591 = vmatprep.subr.bf16.mxu0 %v3432
    %3592 = vmatpush1.bf16.msra.mxu0 %v3431
    %3593 = vmatprep.subr.bf16.mxu0 %v3434
    %3594 = vmatpush1.bf16.msra.mxu0 %v3433
    %3595 = vmatprep.subr.bf16.mxu0 %v3436
    %3596 = vmatpush1.bf16.msra.mxu0 %v3435
    %3597 = vmatprep.subr.bf16.mxu0 %v3438
    %3598 = vmatpush1.bf16.msra.mxu0 %v3437
    %3599 = vmatprep.subr.bf16.mxu0 %v3440
    %3600 = vmatpush1.bf16.msra.mxu0 %v3439
    %3601 = vmatprep.subr.bf16.mxu0 %v3442
    %3602 = vmatpush1.bf16.msra.mxu0 %v3441
    %3603 = vmatprep.subr.bf16.mxu0 %v3444
    %3604 = vmatpush1.bf16.msra.mxu0 %v3443
    %3605 = vmatprep.mubr.bf16.mxu0 %v3077
    %3606 = vmatmul.mubr.bf16.gmra.mrb[0].mxu0 %v3076
    %v3607 = vpop.f32.mrb[0].mxu0
    %v3608 = vadd.f32 %v3166, %v3607
    %v3609 = vpop.f32.mrb[0].mxu0
    %v3610 = vadd.f32 %v3170, %v3609
    %v3611 = vpop.f32.mrb[0].mxu0
    %v3612 = vpop.f32.mrb[0].mxu0
    %3613 = vdwg.mxu0
    %3614 = vmatprep.subr.bf16.mxu0 %v3446
    %3615 = vmatpush1.bf16.msra.mxu0 %v3445
    %3616 = vmatprep.subr.bf16.mxu0 %v3448
    %3617 = vmatpush1.bf16.msra.mxu0 %v3447
    %3618 = vmatprep.subr.bf16.mxu0 %v3450
    %3619 = vmatpush1.bf16.msra.mxu0 %v3449
    %3620 = vmatprep.subr.bf16.mxu0 %v3452
    %3621 = vmatpush1.bf16.msra.mxu0 %v3451
    %3622 = vmatprep.subr.bf16.mxu0 %v3454
    %3623 = vmatpush1.bf16.msra.mxu0 %v3453
    %3624 = vmatprep.subr.bf16.mxu0 %v3456
    %3625 = vmatpush1.bf16.msra.mxu0 %v3455
    %3626 = vmatprep.subr.bf16.mxu0 %v3458
    %3627 = vmatpush1.bf16.msra.mxu0 %v3457
    %3628 = vmatprep.subr.bf16.mxu0 %v3460
    %3629 = vmatpush1.bf16.msra.mxu0 %v3459
    %3630 = vmatprep.subr.bf16.mxu0 %v3462
    %3631 = vmatpush1.bf16.msra.mxu0 %v3461
    %3632 = vmatprep.subr.bf16.mxu0 %v3464
    %3633 = vmatpush1.bf16.msra.mxu0 %v3463
    %3634 = vmatprep.subr.bf16.mxu0 %v3466
    %3635 = vmatpush1.bf16.msra.mxu0 %v3465
    %3636 = vmatprep.subr.bf16.mxu0 %v3468
    %3637 = vmatpush1.bf16.msra.mxu0 %v3467
    %3638 = vmatprep.subr.bf16.mxu0 %v3470
    %3639 = vmatpush1.bf16.msra.mxu0 %v3469
    %3640 = vmatprep.subr.bf16.mxu0 %v3472
    %3641 = vmatpush1.bf16.msra.mxu0 %v3471
    %3642 = vmatprep.subr.bf16.mxu0 %v3474
    %3643 = vmatpush1.bf16.msra.mxu0 %v3473
    %3644 = vmatprep.subr.bf16.mxu0 %v3476
    %3645 = vmatpush1.bf16.msra.mxu0 %v3475
    %3646 = vmatprep.mubr.bf16.mxu0 %v3079
    %3647 = vmatmul.mubr.bf16.gmra.mrb[0].mxu0 %v3078
    %v3648 = vpop.f32.mrb[0].mxu0
    %v3649 = vadd.f32 %v3608, %v3648
    %v3650 = vpop.f32.mrb[0].mxu0
    %v3651 = vadd.f32 %v3610, %v3650
    %v3652 = vpop.f32.mrb[0].mxu0
    %v3653 = vpop.f32.mrb[0].mxu0
    %3654 = vdwg.mxu0
    %3655 = vmatprep.subr.bf16.mxu0 %v3478
    %3656 = vmatpush1.bf16.msra.mxu0 %v3477
    %3657 = vmatprep.subr.bf16.mxu0 %v3480
    %3658 = vmatpush1.bf16.msra.mxu0 %v3479
    %3659 = vmatprep.subr.bf16.mxu0 %v3482
    %3660 = vmatpush1.bf16.msra.mxu0 %v3481
    %3661 = vmatprep.subr.bf16.mxu0 %v3484
    %3662 = vmatpush1.bf16.msra.mxu0 %v3483
    %3663 = vmatprep.subr.bf16.mxu0 %v3486
    %3664 = vmatpush1.bf16.msra.mxu0 %v3485
    %3665 = vmatprep.subr.bf16.mxu0 %v3488
    %3666 = vmatpush1.bf16.msra.mxu0 %v3487
    %3667 = vmatprep.subr.bf16.mxu0 %v3490
    %3668 = vmatpush1.bf16.msra.mxu0 %v3489
    %3669 = vmatprep.subr.bf16.mxu0 %v3492
    %3670 = vmatpush1.bf16.msra.mxu0 %v3491
    %3671 = vmatprep.subr.bf16.mxu0 0
    %3672 = vmatpush1.bf16.msra.mxu0 0
    %3673 = vmatprep.subr.bf16.mxu0 0
    %3674 = vmatpush1.bf16.msra.mxu0 0
    %3675 = vmatprep.subr.bf16.mxu0 0
    %3676 = vmatpush1.bf16.msra.mxu0 0
    %3677 = vmatprep.subr.bf16.mxu0 0
    %3678 = vmatpush1.bf16.msra.mxu0 0
    %3679 = vmatprep.subr.bf16.mxu0 0
    %3680 = vmatpush1.bf16.msra.mxu0 0
    %3681 = vmatprep.subr.bf16.mxu0 0
    %3682 = vmatpush1.bf16.msra.mxu0 0
    %3683 = vmatprep.subr.bf16.mxu0 0
    %3684 = vmatpush1.bf16.msra.mxu0 0
    %3685 = vmatprep.subr.bf16.mxu0 0
    %3686 = vmatpush1.bf16.msra.mxu0 0
    %3687 = vmatprep.mubr.bf16.mxu0 0
    %3688 = vmatmul.mubr.bf16.gmra.mrb[0].mxu0 %v3080
    %v3689 = vpop.f32.mrb[0].mxu0
    %v3690 = vadd.f32 %v3649, %v3689
    %v3691 = vpop.f32.mrb[0].mxu0
    %v3692 = vadd.f32 %v3651, %v3691
    %v3693 = vpop.f32.mrb[0].mxu0
    %v3694 = vpop.f32.mrb[0].mxu0
    %3695 = vdwg.mxu0
    %v3696 = vtanh.pop %v3690
    %v3697 = vtanh.pop %v3692
    %v3698 = vpack.c.bf16 %v3696, %v3696
    %v3699 = vpack.c.bf16 %v3697, %v3697
    %v3700 = vld [vmem:[#allocation14] sm:$0xf]
    %v3701 = vld [vmem:[#allocation14 + $0x4] sm:$0xf]
    %v3702 = vld [vmem:[#allocation14 + $0x8] sm:$0xf]
    %v3703 = vld [vmem:[#allocation14 + $0xc] sm:$0xf]
    %v3704 = vld [vmem:[#allocation14 + $0x10] sm:$0xf]
    %v3705 = vld [vmem:[#allocation14 + $0x14] sm:$0xf]
    %v3706 = vld [vmem:[#allocation14 + $0x18] sm:$0xf]
    %v3707 = vld [vmem:[#allocation14 + $0x1c] sm:$0xf]
    %v3708 = vld [vmem:[#allocation14 + $0x20] sm:$0xf]
    %v3709 = vld [vmem:[#allocation14 + $0x24] sm:$0xf]
    %v3710 = vld [vmem:[#allocation14 + $0x28] sm:$0xf]
    %v3711 = vld [vmem:[#allocation14 + $0x2c] sm:$0xf]
    %v3712 = vld [vmem:[#allocation14 + $0x30] sm:$0xf]
    %v3713 = vld [vmem:[#allocation14 + $0x34] sm:$0xf]
    %v3714 = vld [vmem:[#allocation14 + $0x38] sm:$0xf]
    %v3715 = vld [vmem:[#allocation14 + $0x3c] sm:$0xf]
    %v3716 = vld [vmem:[#allocation14 + $0x40] sm:$0xf]
    %v3717 = vld [vmem:[#allocation14 + $0x44] sm:$0xf]
    %v3718 = vld [vmem:[#allocation14 + $0x48] sm:$0xf]
    %v3719 = vld [vmem:[#allocation14 + $0x4c] sm:$0xf]
    %v3720 = vld [vmem:[#allocation14 + $0x50] sm:$0xf]
    %v3721 = vld [vmem:[#allocation14 + $0x54] sm:$0xf]
    %v3722 = vld [vmem:[#allocation14 + $0x58] sm:$0xf]
    %v3723 = vld [vmem:[#allocation14 + $0x5c] sm:$0xf]
    %v3724 = vld [vmem:[#allocation14 + $0x60] sm:$0xf]
    %v3725 = vld [vmem:[#allocation16] sm:$0x1]
    %v3727 = vlaneseq
    %v3728 = vshrl.u32 %v3727, 7
    %v3729 = vsub.s32 0, %v3728
    %v3730 = vrot.slane %v3725, %v3729
    %v3757 = vunpack.c.l.b16 %v3700
    %v3758 = vunpack.c.l.b16 %v3701
    %v3759 = vunpack.c.l.b16 %v3702
    %v3760 = vunpack.c.l.b16 %v3703
    %v3761 = vunpack.c.l.b16 %v3704
    %v3762 = vunpack.c.l.b16 %v3705
    %v3763 = vunpack.c.l.b16 %v3706
    %v3764 = vunpack.c.l.b16 %v3707
    %v3765 = vunpack.c.l.b16 %v3708
    %v3766 = vunpack.c.l.b16 %v3709
    %v3767 = vunpack.c.l.b16 %v3710
    %v3768 = vunpack.c.l.b16 %v3711
    %v3769 = vunpack.c.l.b16 %v3712
    %v3770 = vunpack.c.l.b16 %v3713
    %v3771 = vunpack.c.l.b16 %v3714
    %v3772 = vunpack.c.l.b16 %v3715
    %v3773 = vunpack.c.l.b16 %v3716
    %v3774 = vunpack.c.l.b16 %v3717
    %v3775 = vunpack.c.l.b16 %v3718
    %v3776 = vunpack.c.l.b16 %v3719
    %v3777 = vunpack.c.l.b16 %v3720
    %v3778 = vunpack.c.l.b16 %v3721
    %v3779 = vunpack.c.l.b16 %v3722
    %v3780 = vunpack.c.l.b16 %v3723
    %v3781 = vunpack.c.l.b16 %v3724
    %v3782 = vpack.c.b16 %v3758, %v3757
    %v3783 = vpack.c.b16 %v3760, %v3759
    %v3784 = vpack.c.b16 %v3762, %v3761
    %v3785 = vpack.c.b16 %v3764, %v3763
    %v3786 = vpack.c.b16 %v3766, %v3765
    %v3787 = vpack.c.b16 %v3768, %v3767
    %v3788 = vpack.c.b16 %v3770, %v3769
    %v3789 = vpack.c.b16 %v3772, %v3771
    %v3790 = vpack.c.b16 %v3774, %v3773
    %v3791 = vpack.c.b16 %v3776, %v3775
    %v3792 = vpack.c.b16 %v3778, %v3777
    %v3793 = vpack.c.b16 %v3780, %v3779
    %v3794 = vpack.c.b16 %v3781, %v3781
    %vm3807 = vcmask 588800
    %v3809 = vsel %vm3807, %v3699, 0
    %vm3811 = vcmask 1043456
    %v3813 = vsel %vm3811, %v3794, 0
    %3815 = vmatprep.subr.bf16.mxu0 0
    %3816 = vmatpush1.bf16.msra.mxu0 %v3782
    %3817 = vmatprep.subr.bf16.mxu0 0
    %3818 = vmatpush1.bf16.msra.mxu0 %v3783
    %3819 = vmatprep.subr.bf16.mxu0 0
    %3820 = vmatpush1.bf16.msra.mxu0 %v3784
    %3821 = vmatprep.subr.bf16.mxu0 0
    %3822 = vmatpush1.bf16.msra.mxu0 %v3785
    %3823 = vmatprep.subr.bf16.mxu0 0
    %3824 = vmatpush1.bf16.msra.mxu0 %v3786
    %3825 = vmatprep.subr.bf16.mxu0 0
    %3826 = vmatpush1.bf16.msra.mxu0 %v3787
    %3827 = vmatprep.subr.bf16.mxu0 0
    %3828 = vmatpush1.bf16.msra.mxu0 %v3788
    %3829 = vmatprep.subr.bf16.mxu0 0
    %3830 = vmatpush1.bf16.msra.mxu0 %v3789
    %3831 = vmatprep.subr.bf16.mxu0 0
    %3832 = vmatpush1.bf16.msra.mxu0 %v3790
    %3833 = vmatprep.subr.bf16.mxu0 0
    %3834 = vmatpush1.bf16.msra.mxu0 %v3791
    %3835 = vmatprep.subr.bf16.mxu0 0
    %3836 = vmatpush1.bf16.msra.mxu0 %v3792
    %3837 = vmatprep.subr.bf16.mxu0 0
    %3838 = vmatpush1.bf16.msra.mxu0 %v3793
    %3839 = vmatprep.subr.bf16.mxu0 0
    %3840 = vmatpush1.bf16.msra.mxu0 %v3813
    %3841 = vmatprep.subr.bf16.mxu0 0
    %3842 = vmatpush1.bf16.msra.mxu0 0
    %3843 = vmatprep.subr.bf16.mxu0 0
    %3844 = vmatpush1.bf16.msra.mxu0 0
    %3845 = vmatprep.subr.bf16.mxu0 0
    %3846 = vmatpush1.bf16.msra.mxu0 0
    %3847 = vmatprep.mubr.bf16.mxu0 %v3809
    %3848 = vmatmul.mubr.bf16.gmra.mrb[0].mxu0 %v3698
    %v3849 = vpop.f32.mrb[0].mxu0
    %v3850 = vadd.f32 %v3730, %v3849
    %v3851 = vpop.f32.mrb[0].mxu0
    %v3852 = vpop.f32.mrb[0].mxu0
    %v3853 = vpop.f32.mrb[0].mxu0
    %3854 = vdwg.mxu0
    %3855 = vst [vmem:[#allocation35] sm:$0xff] %v3850
    %v3856 = vmul.f32 %v3850, 0.5
    %v3857 = vmul.f32 %v3856, 1.442695
    %v3858 = vpow.pop %v3857
    %3860 = vrot.lane.b32.xlu0 %v3858, 124
    %v3861 = vpop.permute.xlu0 %3860
    %v3863 = vmul.f32 %v337, %v3861
    %3865 = vrot.lane.b32.xlu0 %v3850, 16
    %v3866 = vpop.permute.xlu0 %3865
    %v3868 = vadd.f32 %v3863, %v3866
    %v3869 = vpack.c.bf16 %v3868, %v3868
    %v3870 = vld [vmem:[#allocation17] sm:$0xff]
    %v3871 = vld [vmem:[#allocation17 + $0x8] sm:$0xff]
    %v3872 = vld [vmem:[#allocation17 + $0x10] sm:$0x33]
    %v3873 = vld [vmem:[#allocation19] sm:$0x3]
    %v3875 = vlaneseq
    %v3876 = vshrl.u32 %v3875, 7
    %v3877 = vsub.s32 0, %v3876
    %v3878 = vrot.slane %v3873, %v3877
    %v3879 = vlaneseq
    %v3880 = vshrl.u32 %v3879, 7
    %v3881 = vsub.s32 1, %v3880
    %v3882 = vrot.slane %v3873, %v3881
    %3886 = vrot.lane.b32.xlu0 %v3869, 112
    %v3887 = vpop.permute.xlu0 %3886
    %v3891 = vunpack.c.l.b16 %v3870
    %v3892 = vunpack.c.h.b16 %v3870
    %v3893 = vunpack.c.l.b16 %v3871
    %v3894 = vunpack.c.h.b16 %v3871
    %v3895 = vunpack.c.l.b16 %v3872
    %v3896 = vunpack.c.h.b16 %v3872
    %v3897 = vpack.c.b16 %v3893, %v3891
    %v3898 = vpack.c.b16 %v3894, %v3892
    %v3899 = vpack.c.b16 %v3895, %v3895
    %v3900 = vpack.c.b16 %v3896, %v3896
    %vm3903 = vcmask 162816
    %v3905 = vsel %vm3903, %v3887, 0
    %vm3907 = vcmask 1041408
    %v3909 = vsel %vm3907, %v3899, 0
    %v3912 = vsel %vm3907, %v3900, 0
    %3914 = vmatprep.subr.bf16.mxu0 %v3898
    %3915 = vmatpush1.bf16.msra.mxu0 %v3897
    %3916 = vmatprep.subr.bf16.mxu0 %v3912
    %3917 = vmatpush1.bf16.msra.mxu0 %v3909
    %3918 = vmatprep.subr.bf16.mxu0 0
    %3919 = vmatpush1.bf16.msra.mxu0 0
    %3920 = vmatprep.subr.bf16.mxu0 0
    %3921 = vmatpush1.bf16.msra.mxu0 0
    %3922 = vmatprep.subr.bf16.mxu0 0
    %3923 = vmatpush1.bf16.msra.mxu0 0
    %3924 = vmatprep.subr.bf16.mxu0 0
    %3925 = vmatpush1.bf16.msra.mxu0 0
    %3926 = vmatprep.subr.bf16.mxu0 0
    %3927 = vmatpush1.bf16.msra.mxu0 0
    %3928 = vmatprep.subr.bf16.mxu0 0
    %3929 = vmatpush1.bf16.msra.mxu0 0
    %3930 = vmatprep.subr.bf16.mxu0 0
    %3931 = vmatpush1.bf16.msra.mxu0 0
    %3932 = vmatprep.subr.bf16.mxu0 0
    %3933 = vmatpush1.bf16.msra.mxu0 0
    %3934 = vmatprep.subr.bf16.mxu0 0
    %3935 = vmatpush1.bf16.msra.mxu0 0
    %3936 = vmatprep.subr.bf16.mxu0 0
    %3937 = vmatpush1.bf16.msra.mxu0 0
    %3938 = vmatprep.subr.bf16.mxu0 0
    %3939 = vmatpush1.bf16.msra.mxu0 0
    %3940 = vmatprep.subr.bf16.mxu0 0
    %3941 = vmatpush1.bf16.msra.mxu0 0
    %3942 = vmatprep.subr.bf16.mxu0 0
    %3943 = vmatpush1.bf16.msra.mxu0 0
    %3944 = vmatprep.subr.bf16.mxu0 0
    %3945 = vmatpush1.bf16.msra.mxu0 0
    %3946 = vmatprep.mubr.bf16.mxu0 0
    %3947 = vmatmul.mubr.bf16.gmra.mrb[0].mxu0 %v3905
    %v3948 = vpop.f32.mrb[0].mxu0
    %v3949 = vadd.f32 %v3878, %v3948
    %v3950 = vpop.f32.mrb[0].mxu0
    %v3951 = vadd.f32 %v3882, %v3950
    %v3952 = vpop.f32.mrb[0].mxu0
    %v3953 = vpop.f32.mrb[0].mxu0
    %3954 = vdwg.mxu0
    %v3955 = vtanh.pop %v3949
    %v3956 = vtanh.pop %v3951
    %v3957 = vpack.c.bf16 %v3955, %v3955
    %v3958 = vpack.c.bf16 %v3956, %v3956
    %v3959 = vld [vmem:[#allocation20] sm:$0xff]
    %v3960 = vld [vmem:[#allocation20 + $0x8] sm:$0xff]
    %v3961 = vld [vmem:[#allocation20 + $0x10] sm:$0xf]
    %v3962 = vld [vmem:[#allocation20 + $0x14] sm:$0xff]
    %v3963 = vld [vmem:[#allocation20 + $0x1c] sm:$0xff]
    %v3964 = vld [vmem:[#allocation20 + $0x24] sm:$0xf]
    %v3965 = vld [vmem:[#allocation20 + $0x28] sm:$0xff]
    %v3966 = vld [vmem:[#allocation20 + $0x30] sm:$0xff]
    %v3967 = vld [vmem:[#allocation20 + $0x38] sm:$0xf]
    %v3968 = vld [vmem:[#allocation20 + $0x3c] sm:$0xff]
    %v3969 = vld [vmem:[#allocation20 + $0x44] sm:$0xff]
    %v3970 = vld [vmem:[#allocation20 + $0x4c] sm:$0xf]
    %v3971 = vld [vmem:[#allocation20 + $0x50] sm:$0xff]
    %v3972 = vld [vmem:[#allocation20 + $0x58] sm:$0xff]
    %v3973 = vld [vmem:[#allocation20 + $0x60] sm:$0xf]
    %v3974 = vld [vmem:[#allocation20 + $0x64] sm:$0xff]
    %v3975 = vld [vmem:[#allocation20 + $0x6c] sm:$0xff]
    %v3976 = vld [vmem:[#allocation20 + $0x74] sm:$0xf]
    %v3977 = vld [vmem:[#allocation20 + $0x78] sm:$0xff]
    %v3978 = vld [vmem:[#allocation20 + $0x80] sm:$0xff]
    %v3979 = vld [vmem:[#allocation20 + $0x88] sm:$0xf]
    %v3980 = vld [vmem:[#allocation20 + $0x8c] sm:$0xff]
    %v3981 = vld [vmem:[#allocation20 + $0x94] sm:$0xff]
    %v3982 = vld [vmem:[#allocation20 + $0x9c] sm:$0xf]
    %v3983 = vld [vmem:[#allocation20 + $0xa0] sm:$0xff]
    %v3984 = vld [vmem:[#allocation20 + $0xa8] sm:$0xff]
    %v3985 = vld [vmem:[#allocation20 + $0xb0] sm:$0xf]
    %v3986 = vld [vmem:[#allocation20 + $0xb4] sm:$0xff]
    %v3987 = vld [vmem:[#allocation20 + $0xbc] sm:$0xff]
    %v3988 = vld [vmem:[#allocation20 + $0xc4] sm:$0xf]
    %v3989 = vld [vmem:[#allocation20 + $0xc8] sm:$0xff]
    %v3990 = vld [vmem:[#allocation20 + $0xd0] sm:$0xff]
    %v3991 = vld [vmem:[#allocation20 + $0xd8] sm:$0xf]
    %v3992 = vld [vmem:[#allocation20 + $0xdc] sm:$0xff]
    %v3993 = vld [vmem:[#allocation20 + $0xe4] sm:$0xff]
    %v3994 = vld [vmem:[#allocation20 + $0xec] sm:$0xf]
    %v3995 = vld [vmem:[#allocation20 + $0xf0] sm:$0xff]
    %v3996 = vld [vmem:[#allocation20 + $0xf8] sm:$0xff]
    %v3997 = vld [vmem:[#allocation20 + $0x100] sm:$0xf]
    %v3998 = vld [vmem:[#allocation20 + $0x104] sm:$0xff]
    %v3999 = vld [vmem:[#allocation20 + $0x10c] sm:$0xff]
    %v4000 = vld [vmem:[#allocation20 + $0x114] sm:$0xf]
    %v4001 = vld [vmem:[#allocation20 + $0x118] sm:$0xff]
    %v4002 = vld [vmem:[#allocation20 + $0x120] sm:$0xff]
    %v4003 = vld [vmem:[#allocation20 + $0x128] sm:$0xf]
    %v4004 = vld [vmem:[#allocation20 + $0x12c] sm:$0xff]
    %v4005 = vld [vmem:[#allocation20 + $0x134] sm:$0xff]
    %v4006 = vld [vmem:[#allocation20 + $0x13c] sm:$0xf]
    %v4007 = vld [vmem:[#allocation20 + $0x140] sm:$0xff]
    %v4008 = vld [vmem:[#allocation20 + $0x148] sm:$0xff]
    %v4009 = vld [vmem:[#allocation20 + $0x150] sm:$0xf]
    %v4010 = vld [vmem:[#allocation20 + $0x154] sm:$0xff]
    %v4011 = vld [vmem:[#allocation20 + $0x15c] sm:$0xff]
    %v4012 = vld [vmem:[#allocation20 + $0x164] sm:$0xf]
    %v4013 = vld [vmem:[#allocation20 + $0x168] sm:$0xff]
    %v4014 = vld [vmem:[#allocation20 + $0x170] sm:$0xff]
    %v4015 = vld [vmem:[#allocation20 + $0x178] sm:$0xf]
    %v4016 = vld [vmem:[#allocation20 + $0x17c] sm:$0xff]
    %v4017 = vld [vmem:[#allocation20 + $0x184] sm:$0xff]
    %v4018 = vld [vmem:[#allocation20 + $0x18c] sm:$0xf]
    %v4019 = vld [vmem:[#allocation20 + $0x190] sm:$0xff]
    %v4020 = vld [vmem:[#allocation20 + $0x198] sm:$0xff]
    %v4021 = vld [vmem:[#allocation20 + $0x1a0] sm:$0xf]
    %v4022 = vld [vmem:[#allocation20 + $0x1a4] sm:$0xff]
    %v4023 = vld [vmem:[#allocation20 + $0x1ac] sm:$0xff]
    %v4024 = vld [vmem:[#allocation20 + $0x1b4] sm:$0xf]
    %v4025 = vld [vmem:[#allocation20 + $0x1b8] sm:$0xff]
    %v4026 = vld [vmem:[#allocation20 + $0x1c0] sm:$0xff]
    %v4027 = vld [vmem:[#allocation20 + $0x1c8] sm:$0xf]
    %v4028 = vld [vmem:[#allocation20 + $0x1cc] sm:$0xff]
    %v4029 = vld [vmem:[#allocation20 + $0x1d4] sm:$0xff]
    %v4030 = vld [vmem:[#allocation20 + $0x1dc] sm:$0xf]
    %v4031 = vld [vmem:[#allocation20 + $0x1e0] sm:$0xff]
    %v4032 = vld [vmem:[#allocation20 + $0x1e8] sm:$0xff]
    %v4033 = vld [vmem:[#allocation20 + $0x1f0] sm:$0xf]
    %v4034 = vld [vmem:[#allocation22] sm:$0x1f]
    %v4036 = vlaneseq
    %v4037 = vshrl.u32 %v4036, 7
    %v4038 = vsub.s32 0, %v4037
    %v4039 = vrot.slane %v4034, %v4038
    %v4040 = vlaneseq
    %v4041 = vshrl.u32 %v4040, 7
    %v4042 = vsub.s32 1, %v4041
    %v4043 = vrot.slane %v4034, %v4042
    %v4044 = vlaneseq
    %v4045 = vshrl.u32 %v4044, 7
    %v4046 = vsub.s32 2, %v4045
    %v4047 = vrot.slane %v4034, %v4046
    %v4048 = vlaneseq
    %v4049 = vshrl.u32 %v4048, 7
    %v4050 = vsub.s32 3, %v4049
    %v4051 = vrot.slane %v4034, %v4050
    %v4052 = vlaneseq
    %v4053 = vshrl.u32 %v4052, 7
    %v4054 = vsub.s32 4, %v4053
    %v4055 = vrot.slane %v4034, %v4054
    %v4136 = vunpack.c.l.b16 %v3959
    %v4137 = vunpack.c.h.b16 %v3959
    %v4138 = vunpack.c.l.b16 %v3960
    %v4139 = vunpack.c.h.b16 %v3960
    %v4140 = vunpack.c.l.b16 %v3961
    %v4141 = vunpack.c.l.b16 %v3962
    %v4142 = vunpack.c.h.b16 %v3962
    %v4143 = vunpack.c.l.b16 %v3963
    %v4144 = vunpack.c.h.b16 %v3963
    %v4145 = vunpack.c.l.b16 %v3964
    %v4146 = vunpack.c.l.b16 %v3965
    %v4147 = vunpack.c.h.b16 %v3965
    %v4148 = vunpack.c.l.b16 %v3966
    %v4149 = vunpack.c.h.b16 %v3966
    %v4150 = vunpack.c.l.b16 %v3967
    %v4151 = vunpack.c.l.b16 %v3968
    %v4152 = vunpack.c.h.b16 %v3968
    %v4153 = vunpack.c.l.b16 %v3969
    %v4154 = vunpack.c.h.b16 %v3969
    %v4155 = vunpack.c.l.b16 %v3970
    %v4156 = vunpack.c.l.b16 %v3971
    %v4157 = vunpack.c.h.b16 %v3971
    %v4158 = vunpack.c.l.b16 %v3972
    %v4159 = vunpack.c.h.b16 %v3972
    %v4160 = vunpack.c.l.b16 %v3973
    %v4161 = vunpack.c.l.b16 %v3974
    %v4162 = vunpack.c.h.b16 %v3974
    %v4163 = vunpack.c.l.b16 %v3975
    %v4164 = vunpack.c.h.b16 %v3975
    %v4165 = vunpack.c.l.b16 %v3976
    %v4166 = vunpack.c.l.b16 %v3977
    %v4167 = vunpack.c.h.b16 %v3977
    %v4168 = vunpack.c.l.b16 %v3978
    %v4169 = vunpack.c.h.b16 %v3978
    %v4170 = vunpack.c.l.b16 %v3979
    %v4171 = vunpack.c.l.b16 %v3980
    %v4172 = vunpack.c.h.b16 %v3980
    %v4173 = vunpack.c.l.b16 %v3981
    %v4174 = vunpack.c.h.b16 %v3981
    %v4175 = vunpack.c.l.b16 %v3982
    %v4176 = vunpack.c.l.b16 %v3983
    %v4177 = vunpack.c.h.b16 %v3983
    %v4178 = vunpack.c.l.b16 %v3984
    %v4179 = vunpack.c.h.b16 %v3984
    %v4180 = vunpack.c.l.b16 %v3985
    %v4181 = vunpack.c.l.b16 %v3986
    %v4182 = vunpack.c.h.b16 %v3986
    %v4183 = vunpack.c.l.b16 %v3987
    %v4184 = vunpack.c.h.b16 %v3987
    %v4185 = vunpack.c.l.b16 %v3988
    %v4186 = vunpack.c.l.b16 %v3989
    %v4187 = vunpack.c.h.b16 %v3989
    %v4188 = vunpack.c.l.b16 %v3990
    %v4189 = vunpack.c.h.b16 %v3990
    %v4190 = vunpack.c.l.b16 %v3991
    %v4191 = vunpack.c.l.b16 %v3992
    %v4192 = vunpack.c.h.b16 %v3992
    %v4193 = vunpack.c.l.b16 %v3993
    %v4194 = vunpack.c.h.b16 %v3993
    %v4195 = vunpack.c.l.b16 %v3994
    %v4196 = vunpack.c.l.b16 %v3995
    %v4197 = vunpack.c.h.b16 %v3995
    %v4198 = vunpack.c.l.b16 %v3996
    %v4199 = vunpack.c.h.b16 %v3996
    %v4200 = vunpack.c.l.b16 %v3997
    %v4201 = vunpack.c.l.b16 %v3998
    %v4202 = vunpack.c.h.b16 %v3998
    %v4203 = vunpack.c.l.b16 %v3999
    %v4204 = vunpack.c.h.b16 %v3999
    %v4205 = vunpack.c.l.b16 %v4000
    %v4206 = vunpack.c.l.b16 %v4001
    %v4207 = vunpack.c.h.b16 %v4001
    %v4208 = vunpack.c.l.b16 %v4002
    %v4209 = vunpack.c.h.b16 %v4002
    %v4210 = vunpack.c.l.b16 %v4003
    %v4211 = vunpack.c.l.b16 %v4004
    %v4212 = vunpack.c.h.b16 %v4004
    %v4213 = vunpack.c.l.b16 %v4005
    %v4214 = vunpack.c.h.b16 %v4005
    %v4215 = vunpack.c.l.b16 %v4006
    %v4216 = vunpack.c.l.b16 %v4007
    %v4217 = vunpack.c.h.b16 %v4007
    %v4218 = vunpack.c.l.b16 %v4008
    %v4219 = vunpack.c.h.b16 %v4008
    %v4220 = vunpack.c.l.b16 %v4009
    %v4221 = vunpack.c.l.b16 %v4010
    %v4222 = vunpack.c.h.b16 %v4010
    %v4223 = vunpack.c.l.b16 %v4011
    %v4224 = vunpack.c.h.b16 %v4011
    %v4225 = vunpack.c.l.b16 %v4012
    %v4226 = vunpack.c.l.b16 %v4013
    %v4227 = vunpack.c.h.b16 %v4013
    %v4228 = vunpack.c.l.b16 %v4014
    %v4229 = vunpack.c.h.b16 %v4014
    %v4230 = vunpack.c.l.b16 %v4015
    %v4231 = vunpack.c.l.b16 %v4016
    %v4232 = vunpack.c.h.b16 %v4016
    %v4233 = vunpack.c.l.b16 %v4017
    %v4234 = vunpack.c.h.b16 %v4017
    %v4235 = vunpack.c.l.b16 %v4018
    %v4236 = vunpack.c.l.b16 %v4019
    %v4237 = vunpack.c.h.b16 %v4019
    %v4238 = vunpack.c.l.b16 %v4020
    %v4239 = vunpack.c.h.b16 %v4020
    %v4240 = vunpack.c.l.b16 %v4021
    %v4241 = vunpack.c.l.b16 %v4022
    %v4242 = vunpack.c.h.b16 %v4022
    %v4243 = vunpack.c.l.b16 %v4023
    %v4244 = vunpack.c.h.b16 %v4023
    %v4245 = vunpack.c.l.b16 %v4024
    %v4246 = vunpack.c.l.b16 %v4025
    %v4247 = vunpack.c.h.b16 %v4025
    %v4248 = vunpack.c.l.b16 %v4026
    %v4249 = vunpack.c.h.b16 %v4026
    %v4250 = vunpack.c.l.b16 %v4027
    %v4251 = vunpack.c.l.b16 %v4028
    %v4252 = vunpack.c.h.b16 %v4028
    %v4253 = vunpack.c.l.b16 %v4029
    %v4254 = vunpack.c.h.b16 %v4029
    %v4255 = vunpack.c.l.b16 %v4030
    %v4256 = vunpack.c.l.b16 %v4031
    %v4257 = vunpack.c.h.b16 %v4031
    %v4258 = vunpack.c.l.b16 %v4032
    %v4259 = vunpack.c.h.b16 %v4032
    %v4260 = vunpack.c.l.b16 %v4033
    %v4261 = vpack.c.b16 %v4141, %v4136
    %v4262 = vpack.c.b16 %v4142, %v4137
    %v4263 = vpack.c.b16 %v4143, %v4138
    %v4264 = vpack.c.b16 %v4144, %v4139
    %v4265 = vpack.c.b16 %v4145, %v4140
    %v4266 = vpack.c.b16 %v4151, %v4146
    %v4267 = vpack.c.b16 %v4152, %v4147
    %v4268 = vpack.c.b16 %v4153, %v4148
    %v4269 = vpack.c.b16 %v4154, %v4149
    %v4270 = vpack.c.b16 %v4155, %v4150
    %v4271 = vpack.c.b16 %v4161, %v4156
    %v4272 = vpack.c.b16 %v4162, %v4157
    %v4273 = vpack.c.b16 %v4163, %v4158
    %v4274 = vpack.c.b16 %v4164, %v4159
    %v4275 = vpack.c.b16 %v4165, %v4160
    %v4276 = vpack.c.b16 %v4171, %v4166
    %v4277 = vpack.c.b16 %v4172, %v4167
    %v4278 = vpack.c.b16 %v4173, %v4168
    %v4279 = vpack.c.b16 %v4174, %v4169
    %v4280 = vpack.c.b16 %v4175, %v4170
    %v4281 = vpack.c.b16 %v4181, %v4176
    %v4282 = vpack.c.b16 %v4182, %v4177
    %v4283 = vpack.c.b16 %v4183, %v4178
    %v4284 = vpack.c.b16 %v4184, %v4179
    %v4285 = vpack.c.b16 %v4185, %v4180
    %v4286 = vpack.c.b16 %v4191, %v4186
    %v4287 = vpack.c.b16 %v4192, %v4187
    %v4288 = vpack.c.b16 %v4193, %v4188
    %v4289 = vpack.c.b16 %v4194, %v4189
    %v4290 = vpack.c.b16 %v4195, %v4190
    %v4291 = vpack.c.b16 %v4201, %v4196
    %v4292 = vpack.c.b16 %v4202, %v4197
    %v4293 = vpack.c.b16 %v4203, %v4198
    %v4294 = vpack.c.b16 %v4204, %v4199
    %v4295 = vpack.c.b16 %v4205, %v4200
    %v4296 = vpack.c.b16 %v4211, %v4206
    %v4297 = vpack.c.b16 %v4212, %v4207
    %v4298 = vpack.c.b16 %v4213, %v4208
    %v4299 = vpack.c.b16 %v4214, %v4209
    %v4300 = vpack.c.b16 %v4215, %v4210
    %v4301 = vpack.c.b16 %v4221, %v4216
    %v4302 = vpack.c.b16 %v4222, %v4217
    %v4303 = vpack.c.b16 %v4223, %v4218
    %v4304 = vpack.c.b16 %v4224, %v4219
    %v4305 = vpack.c.b16 %v4225, %v4220
    %v4306 = vpack.c.b16 %v4231, %v4226
    %v4307 = vpack.c.b16 %v4232, %v4227
    %v4308 = vpack.c.b16 %v4233, %v4228
    %v4309 = vpack.c.b16 %v4234, %v4229
    %v4310 = vpack.c.b16 %v4235, %v4230
    %v4311 = vpack.c.b16 %v4241, %v4236
    %v4312 = vpack.c.b16 %v4242, %v4237
    %v4313 = vpack.c.b16 %v4243, %v4238
    %v4314 = vpack.c.b16 %v4244, %v4239
    %v4315 = vpack.c.b16 %v4245, %v4240
    %v4316 = vpack.c.b16 %v4251, %v4246
    %v4317 = vpack.c.b16 %v4252, %v4247
    %v4318 = vpack.c.b16 %v4253, %v4248
    %v4319 = vpack.c.b16 %v4254, %v4249
    %v4320 = vpack.c.b16 %v4255, %v4250
    %v4321 = vpack.c.b16 %v4256, %v4256
    %v4322 = vpack.c.b16 %v4257, %v4257
    %v4323 = vpack.c.b16 %v4258, %v4258
    %v4324 = vpack.c.b16 %v4259, %v4259
    %v4325 = vpack.c.b16 %v4260, %v4260
    %v4387 = vsel %vm3807, %v3958, 0
    %v4390 = vsel %vm3811, %v4321, 0
    %v4393 = vsel %vm3811, %v4322, 0
    %v4396 = vsel %vm3811, %v4323, 0
    %v4399 = vsel %vm3811, %v4324, 0
    %v4402 = vsel %vm3811, %v4325, 0
    %4404 = vmatprep.subr.bf16.mxu0 %v4262
    %4405 = vmatpush1.bf16.msra.mxu0 %v4261
    %4406 = vmatprep.subr.bf16.mxu0 %v4267
    %4407 = vmatpush1.bf16.msra.mxu0 %v4266
    %4408 = vmatprep.subr.bf16.mxu0 %v4272
    %4409 = vmatpush1.bf16.msra.mxu0 %v4271
    %4410 = vmatprep.subr.bf16.mxu0 %v4277
    %4411 = vmatpush1.bf16.msra.mxu0 %v4276
    %4412 = vmatprep.subr.bf16.mxu0 %v4282
    %4413 = vmatpush1.bf16.msra.mxu0 %v4281
    %4414 = vmatprep.subr.bf16.mxu0 %v4287
    %4415 = vmatpush1.bf16.msra.mxu0 %v4286
    %4416 = vmatprep.subr.bf16.mxu0 %v4292
    %4417 = vmatpush1.bf16.msra.mxu0 %v4291
    %4418 = vmatprep.subr.bf16.mxu0 %v4297
    %4419 = vmatpush1.bf16.msra.mxu0 %v4296
    %4420 = vmatprep.subr.bf16.mxu0 %v4302
    %4421 = vmatpush1.bf16.msra.mxu0 %v4301
    %4422 = vmatprep.subr.bf16.mxu0 %v4307
    %4423 = vmatpush1.bf16.msra.mxu0 %v4306
    %4424 = vmatprep.subr.bf16.mxu0 %v4312
    %4425 = vmatpush1.bf16.msra.mxu0 %v4311
    %4426 = vmatprep.subr.bf16.mxu0 %v4317
    %4427 = vmatpush1.bf16.msra.mxu0 %v4316
    %4428 = vmatprep.subr.bf16.mxu0 %v4393
    %4429 = vmatpush1.bf16.msra.mxu0 %v4390
    %4430 = vmatprep.subr.bf16.mxu0 0
    %4431 = vmatpush1.bf16.msra.mxu0 0
    %4432 = vmatprep.subr.bf16.mxu0 0
    %4433 = vmatpush1.bf16.msra.mxu0 0
    %4434 = vmatprep.subr.bf16.mxu0 0
    %4435 = vmatpush1.bf16.msra.mxu0 0
    %4436 = vmatprep.mubr.bf16.mxu0 %v4387
    %4437 = vmatmul.mubr.bf16.gmra.mrb[0].mxu0 %v3957
    %v4438 = vpop.f32.mrb[0].mxu0
    %v4439 = vadd.f32 %v4039, %v4438
    %v4440 = vpop.f32.mrb[0].mxu0
    %v4441 = vadd.f32 %v4043, %v4440
    %v4442 = vpop.f32.mrb[0].mxu0
    %v4443 = vpop.f32.mrb[0].mxu0
    %4444 = vdwg.mxu0
    %4445 = vmatprep.subr.bf16.mxu0 %v4264
    %4446 = vmatpush1.bf16.msra.mxu0 %v4263
    %4447 = vmatprep.subr.bf16.mxu0 %v4269
    %4448 = vmatpush1.bf16.msra.mxu0 %v4268
    %4449 = vmatprep.subr.bf16.mxu0 %v4274
    %4450 = vmatpush1.bf16.msra.mxu0 %v4273
    %4451 = vmatprep.subr.bf16.mxu0 %v4279
    %4452 = vmatpush1.bf16.msra.mxu0 %v4278
    %4453 = vmatprep.subr.bf16.mxu0 %v4284
    %4454 = vmatpush1.bf16.msra.mxu0 %v4283
    %4455 = vmatprep.subr.bf16.mxu0 %v4289
    %4456 = vmatpush1.bf16.msra.mxu0 %v4288
    %4457 = vmatprep.subr.bf16.mxu0 %v4294
    %4458 = vmatpush1.bf16.msra.mxu0 %v4293
    %4459 = vmatprep.subr.bf16.mxu0 %v4299
    %4460 = vmatpush1.bf16.msra.mxu0 %v4298
    %4461 = vmatprep.subr.bf16.mxu0 %v4304
    %4462 = vmatpush1.bf16.msra.mxu0 %v4303
    %4463 = vmatprep.subr.bf16.mxu0 %v4309
    %4464 = vmatpush1.bf16.msra.mxu0 %v4308
    %4465 = vmatprep.subr.bf16.mxu0 %v4314
    %4466 = vmatpush1.bf16.msra.mxu0 %v4313
    %4467 = vmatprep.subr.bf16.mxu0 %v4319
    %4468 = vmatpush1.bf16.msra.mxu0 %v4318
    %4469 = vmatprep.subr.bf16.mxu0 %v4399
    %4470 = vmatpush1.bf16.msra.mxu0 %v4396
    %4471 = vmatprep.subr.bf16.mxu0 0
    %4472 = vmatpush1.bf16.msra.mxu0 0
    %4473 = vmatprep.subr.bf16.mxu0 0
    %4474 = vmatpush1.bf16.msra.mxu0 0
    %4475 = vmatprep.subr.bf16.mxu0 0
    %4476 = vmatpush1.bf16.msra.mxu0 0
    %4477 = vmatprep.mubr.bf16.mxu0 %v4387
    %4478 = vmatmul.mubr.bf16.gmra.mrb[0].mxu0 %v3957
    %v4479 = vpop.f32.mrb[0].mxu0
    %v4480 = vadd.f32 %v4047, %v4479
    %v4481 = vpop.f32.mrb[0].mxu0
    %v4482 = vadd.f32 %v4051, %v4481
    %v4483 = vpop.f32.mrb[0].mxu0
    %v4484 = vpop.f32.mrb[0].mxu0
    %4485 = vdwg.mxu0
    %4486 = vmatprep.subr.bf16.mxu0 0
    %4487 = vmatpush1.bf16.msra.mxu0 %v4265
    %4488 = vmatprep.subr.bf16.mxu0 0
    %4489 = vmatpush1.bf16.msra.mxu0 %v4270
    %4490 = vmatprep.subr.bf16.mxu0 0
    %4491 = vmatpush1.bf16.msra.mxu0 %v4275
    %4492 = vmatprep.subr.bf16.mxu0 0
    %4493 = vmatpush1.bf16.msra.mxu0 %v4280
    %4494 = vmatprep.subr.bf16.mxu0 0
    %4495 = vmatpush1.bf16.msra.mxu0 %v4285
    %4496 = vmatprep.subr.bf16.mxu0 0
    %4497 = vmatpush1.bf16.msra.mxu0 %v4290
    %4498 = vmatprep.subr.bf16.mxu0 0
    %4499 = vmatpush1.bf16.msra.mxu0 %v4295
    %4500 = vmatprep.subr.bf16.mxu0 0
    %4501 = vmatpush1.bf16.msra.mxu0 %v4300
    %4502 = vmatprep.subr.bf16.mxu0 0
    %4503 = vmatpush1.bf16.msra.mxu0 %v4305
    %4504 = vmatprep.subr.bf16.mxu0 0
    %4505 = vmatpush1.bf16.msra.mxu0 %v4310
    %4506 = vmatprep.subr.bf16.mxu0 0
    %4507 = vmatpush1.bf16.msra.mxu0 %v4315
    %4508 = vmatprep.subr.bf16.mxu0 0
    %4509 = vmatpush1.bf16.msra.mxu0 %v4320
    %4510 = vmatprep.subr.bf16.mxu0 0
    %4511 = vmatpush1.bf16.msra.mxu0 %v4402
    %4512 = vmatprep.subr.bf16.mxu0 0
    %4513 = vmatpush1.bf16.msra.mxu0 0
    %4514 = vmatprep.subr.bf16.mxu0 0
    %4515 = vmatpush1.bf16.msra.mxu0 0
    %4516 = vmatprep.subr.bf16.mxu0 0
    %4517 = vmatpush1.bf16.msra.mxu0 0
    %4518 = vmatprep.mubr.bf16.mxu0 %v4387
    %4519 = vmatmul.mubr.bf16.gmra.mrb[0].mxu0 %v3957
    %v4520 = vpop.f32.mrb[0].mxu0
    %v4521 = vadd.f32 %v4055, %v4520
    %v4522 = vpop.f32.mrb[0].mxu0
    %v4523 = vpop.f32.mrb[0].mxu0
    %v4524 = vpop.f32.mrb[0].mxu0
    %4525 = vdwg.mxu0
    %v4526 = vmax.f32 %v4439, 0.0
    %v4527 = vmax.f32 %v4441, 0.0
    %v4528 = vmax.f32 %v4480, 0.0
    %v4529 = vmax.f32 %v4482, 0.0
    %v4530 = vmax.f32 %v4521, 0.0
    %v4531 = vpack.c.bf16 %v4526, %v4526
    %v4532 = vpack.c.bf16 %v4527, %v4527
    %v4533 = vpack.c.bf16 %v4528, %v4528
    %v4534 = vpack.c.bf16 %v4529, %v4529
    %v4535 = vpack.c.bf16 %v4530, %v4530
    %v4536 = vld [vmem:[#allocation23] sm:$0xff]
    %v4537 = vld [vmem:[#allocation23 + $0x8] sm:$0xff]
    %v4538 = vld [vmem:[#allocation23 + $0x10] sm:$0xf]
    %v4539 = vld [vmem:[#allocation23 + $0x14] sm:$0xff]
    %v4540 = vld [vmem:[#allocation23 + $0x1c] sm:$0xff]
    %v4541 = vld [vmem:[#allocation23 + $0x24] sm:$0xf]
    %v4542 = vld [vmem:[#allocation23 + $0x28] sm:$0xff]
    %v4543 = vld [vmem:[#allocation23 + $0x30] sm:$0xff]
    %v4544 = vld [vmem:[#allocation23 + $0x38] sm:$0xf]
    %v4545 = vld [vmem:[#allocation23 + $0x3c] sm:$0xff]
    %v4546 = vld [vmem:[#allocation23 + $0x44] sm:$0xff]
    %v4547 = vld [vmem:[#allocation23 + $0x4c] sm:$0xf]
    %v4548 = vld [vmem:[#allocation23 + $0x50] sm:$0xff]
    %v4549 = vld [vmem:[#allocation23 + $0x58] sm:$0xff]
    %v4550 = vld [vmem:[#allocation23 + $0x60] sm:$0xf]
    %v4551 = vld [vmem:[#allocation23 + $0x64] sm:$0xff]
    %v4552 = vld [vmem:[#allocation23 + $0x6c] sm:$0xff]
    %v4553 = vld [vmem:[#allocation23 + $0x74] sm:$0xf]
    %v4554 = vld [vmem:[#allocation23 + $0x78] sm:$0xff]
    %v4555 = vld [vmem:[#allocation23 + $0x80] sm:$0xff]
    %v4556 = vld [vmem:[#allocation23 + $0x88] sm:$0xf]
    %v4557 = vld [vmem:[#allocation23 + $0x8c] sm:$0xff]
    %v4558 = vld [vmem:[#allocation23 + $0x94] sm:$0xff]
    %v4559 = vld [vmem:[#allocation23 + $0x9c] sm:$0xf]
    %v4560 = vld [vmem:[#allocation23 + $0xa0] sm:$0xff]
    %v4561 = vld [vmem:[#allocation23 + $0xa8] sm:$0xff]
    %v4562 = vld [vmem:[#allocation23 + $0xb0] sm:$0xf]
    %v4563 = vld [vmem:[#allocation23 + $0xb4] sm:$0xff]
    %v4564 = vld [vmem:[#allocation23 + $0xbc] sm:$0xff]
    %v4565 = vld [vmem:[#allocation23 + $0xc4] sm:$0xf]
    %v4566 = vld [vmem:[#allocation23 + $0xc8] sm:$0xff]
    %v4567 = vld [vmem:[#allocation23 + $0xd0] sm:$0xff]
    %v4568 = vld [vmem:[#allocation23 + $0xd8] sm:$0xf]
    %v4569 = vld [vmem:[#allocation23 + $0xdc] sm:$0xff]
    %v4570 = vld [vmem:[#allocation23 + $0xe4] sm:$0xff]
    %v4571 = vld [vmem:[#allocation23 + $0xec] sm:$0xf]
    %v4572 = vld [vmem:[#allocation23 + $0xf0] sm:$0xff]
    %v4573 = vld [vmem:[#allocation23 + $0xf8] sm:$0xff]
    %v4574 = vld [vmem:[#allocation23 + $0x100] sm:$0xf]
    %v4575 = vld [vmem:[#allocation23 + $0x104] sm:$0xff]
    %v4576 = vld [vmem:[#allocation23 + $0x10c] sm:$0xff]
    %v4577 = vld [vmem:[#allocation23 + $0x114] sm:$0xf]
    %v4578 = vld [vmem:[#allocation23 + $0x118] sm:$0xff]
    %v4579 = vld [vmem:[#allocation23 + $0x120] sm:$0xff]
    %v4580 = vld [vmem:[#allocation23 + $0x128] sm:$0xf]
    %v4581 = vld [vmem:[#allocation23 + $0x12c] sm:$0xff]
    %v4582 = vld [vmem:[#allocation23 + $0x134] sm:$0xff]
    %v4583 = vld [vmem:[#allocation23 + $0x13c] sm:$0xf]
    %v4584 = vld [vmem:[#allocation23 + $0x140] sm:$0xff]
    %v4585 = vld [vmem:[#allocation23 + $0x148] sm:$0xff]
    %v4586 = vld [vmem:[#allocation23 + $0x150] sm:$0xf]
    %v4587 = vld [vmem:[#allocation23 + $0x154] sm:$0xff]
    %v4588 = vld [vmem:[#allocation23 + $0x15c] sm:$0xff]
    %v4589 = vld [vmem:[#allocation23 + $0x164] sm:$0xf]
    %v4590 = vld [vmem:[#allocation23 + $0x168] sm:$0xff]
    %v4591 = vld [vmem:[#allocation23 + $0x170] sm:$0xff]
    %v4592 = vld [vmem:[#allocation23 + $0x178] sm:$0xf]
    %v4593 = vld [vmem:[#allocation23 + $0x17c] sm:$0xff]
    %v4594 = vld [vmem:[#allocation23 + $0x184] sm:$0xff]
    %v4595 = vld [vmem:[#allocation23 + $0x18c] sm:$0xf]
    %v4596 = vld [vmem:[#allocation23 + $0x190] sm:$0xff]
    %v4597 = vld [vmem:[#allocation23 + $0x198] sm:$0xff]
    %v4598 = vld [vmem:[#allocation23 + $0x1a0] sm:$0xf]
    %v4599 = vld [vmem:[#allocation23 + $0x1a4] sm:$0xff]
    %v4600 = vld [vmem:[#allocation23 + $0x1ac] sm:$0xff]
    %v4601 = vld [vmem:[#allocation23 + $0x1b4] sm:$0xf]
    %v4602 = vld [vmem:[#allocation23 + $0x1b8] sm:$0xff]
    %v4603 = vld [vmem:[#allocation23 + $0x1c0] sm:$0xff]
    %v4604 = vld [vmem:[#allocation23 + $0x1c8] sm:$0xf]
    %v4605 = vld [vmem:[#allocation23 + $0x1cc] sm:$0xff]
    %v4606 = vld [vmem:[#allocation23 + $0x1d4] sm:$0xff]
    %v4607 = vld [vmem:[#allocation23 + $0x1dc] sm:$0xf]
    %v4608 = vld [vmem:[#allocation23 + $0x1e0] sm:$0xff]
    %v4609 = vld [vmem:[#allocation23 + $0x1e8] sm:$0xff]
    %v4610 = vld [vmem:[#allocation23 + $0x1f0] sm:$0xf]
    %v4611 = vld [vmem:[#allocation23 + $0x1f4] sm:$0xff]
    %v4612 = vld [vmem:[#allocation23 + $0x1fc] sm:$0xff]
    %v4613 = vld [vmem:[#allocation23 + $0x204] sm:$0xf]
    %v4614 = vld [vmem:[#allocation23 + $0x208] sm:$0xff]
    %v4615 = vld [vmem:[#allocation23 + $0x210] sm:$0xff]
    %v4616 = vld [vmem:[#allocation23 + $0x218] sm:$0xf]
    %v4617 = vld [vmem:[#allocation23 + $0x21c] sm:$0xff]
    %v4618 = vld [vmem:[#allocation23 + $0x224] sm:$0xff]
    %v4619 = vld [vmem:[#allocation23 + $0x22c] sm:$0xf]
    %v4620 = vld [vmem:[#allocation23 + $0x230] sm:$0xff]
    %v4621 = vld [vmem:[#allocation23 + $0x238] sm:$0xff]
    %v4622 = vld [vmem:[#allocation23 + $0x240] sm:$0xf]
    %v4623 = vld [vmem:[#allocation23 + $0x244] sm:$0xff]
    %v4624 = vld [vmem:[#allocation23 + $0x24c] sm:$0xff]
    %v4625 = vld [vmem:[#allocation23 + $0x254] sm:$0xf]
    %v4626 = vld [vmem:[#allocation23 + $0x258] sm:$0xff]
    %v4627 = vld [vmem:[#allocation23 + $0x260] sm:$0xff]
    %v4628 = vld [vmem:[#allocation23 + $0x268] sm:$0xf]
    %v4629 = vld [vmem:[#allocation23 + $0x26c] sm:$0xff]
    %v4630 = vld [vmem:[#allocation23 + $0x274] sm:$0xff]
    %v4631 = vld [vmem:[#allocation23 + $0x27c] sm:$0xf]
    %v4632 = vld [vmem:[#allocation23 + $0x280] sm:$0xff]
    %v4633 = vld [vmem:[#allocation23 + $0x288] sm:$0xff]
    %v4634 = vld [vmem:[#allocation23 + $0x290] sm:$0xf]
    %v4635 = vld [vmem:[#allocation23 + $0x294] sm:$0xff]
    %v4636 = vld [vmem:[#allocation23 + $0x29c] sm:$0xff]
    %v4637 = vld [vmem:[#allocation23 + $0x2a4] sm:$0xf]
    %v4638 = vld [vmem:[#allocation23 + $0x2a8] sm:$0xff]
    %v4639 = vld [vmem:[#allocation23 + $0x2b0] sm:$0xff]
    %v4640 = vld [vmem:[#allocation23 + $0x2b8] sm:$0xf]
    %v4641 = vld [vmem:[#allocation23 + $0x2bc] sm:$0xff]
    %v4642 = vld [vmem:[#allocation23 + $0x2c4] sm:$0xff]
    %v4643 = vld [vmem:[#allocation23 + $0x2cc] sm:$0xf]
    %v4644 = vld [vmem:[#allocation23 + $0x2d0] sm:$0xff]
    %v4645 = vld [vmem:[#allocation23 + $0x2d8] sm:$0xff]
    %v4646 = vld [vmem:[#allocation23 + $0x2e0] sm:$0xf]
    %v4647 = vld [vmem:[#allocation23 + $0x2e4] sm:$0xff]
    %v4648 = vld [vmem:[#allocation23 + $0x2ec] sm:$0xff]
    %v4649 = vld [vmem:[#allocation23 + $0x2f4] sm:$0xf]
    %v4650 = vld [vmem:[#allocation23 + $0x2f8] sm:$0xff]
    %v4651 = vld [vmem:[#allocation23 + $0x300] sm:$0xff]
    %v4652 = vld [vmem:[#allocation23 + $0x308] sm:$0xf]
    %v4653 = vld [vmem:[#allocation23 + $0x30c] sm:$0xff]
    %v4654 = vld [vmem:[#allocation23 + $0x314] sm:$0xff]
    %v4655 = vld [vmem:[#allocation23 + $0x31c] sm:$0xf]
    %v4656 = vld [vmem:[#allocation23 + $0x320] sm:$0xff]
    %v4657 = vld [vmem:[#allocation23 + $0x328] sm:$0xff]
    %v4658 = vld [vmem:[#allocation23 + $0x330] sm:$0xf]
    %v4659 = vld [vmem:[#allocation23 + $0x334] sm:$0xff]
    %v4660 = vld [vmem:[#allocation23 + $0x33c] sm:$0xff]
    %v4661 = vld [vmem:[#allocation23 + $0x344] sm:$0xf]
    %v4662 = vld [vmem:[#allocation23 + $0x348] sm:$0xff]
    %v4663 = vld [vmem:[#allocation23 + $0x350] sm:$0xff]
    %v4664 = vld [vmem:[#allocation23 + $0x358] sm:$0xf]
    %v4665 = vld [vmem:[#allocation23 + $0x35c] sm:$0xff]
    %v4666 = vld [vmem:[#allocation23 + $0x364] sm:$0xff]
    %v4667 = vld [vmem:[#allocation23 + $0x36c] sm:$0xf]
    %v4668 = vld [vmem:[#allocation23 + $0x370] sm:$0xff]
    %v4669 = vld [vmem:[#allocation23 + $0x378] sm:$0xff]
    %v4670 = vld [vmem:[#allocation23 + $0x380] sm:$0xf]
    %v4671 = vld [vmem:[#allocation23 + $0x384] sm:$0xff]
    %v4672 = vld [vmem:[#allocation23 + $0x38c] sm:$0xff]
    %v4673 = vld [vmem:[#allocation23 + $0x394] sm:$0xf]
    %v4674 = vld [vmem:[#allocation23 + $0x398] sm:$0xff]
    %v4675 = vld [vmem:[#allocation23 + $0x3a0] sm:$0xff]
    %v4676 = vld [vmem:[#allocation23 + $0x3a8] sm:$0xf]
    %v4677 = vld [vmem:[#allocation23 + $0x3ac] sm:$0xff]
    %v4678 = vld [vmem:[#allocation23 + $0x3b4] sm:$0xff]
    %v4679 = vld [vmem:[#allocation23 + $0x3bc] sm:$0xf]
    %v4680 = vld [vmem:[#allocation23 + $0x3c0] sm:$0xff]
    %v4681 = vld [vmem:[#allocation23 + $0x3c8] sm:$0xff]
    %v4682 = vld [vmem:[#allocation23 + $0x3d0] sm:$0xf]
    %v4683 = vld [vmem:[#allocation23 + $0x3d4] sm:$0xff]
    %v4684 = vld [vmem:[#allocation23 + $0x3dc] sm:$0xff]
    %v4685 = vld [vmem:[#allocation23 + $0x3e4] sm:$0xf]
    %v4686 = vld [vmem:[#allocation23 + $0x3e8] sm:$0xff]
    %v4687 = vld [vmem:[#allocation23 + $0x3f0] sm:$0xff]
    %v4688 = vld [vmem:[#allocation23 + $0x3f8] sm:$0xf]
    %v4689 = vld [vmem:[#allocation23 + $0x3fc] sm:$0xff]
    %v4690 = vld [vmem:[#allocation23 + $0x404] sm:$0xff]
    %v4691 = vld [vmem:[#allocation23 + $0x40c] sm:$0xf]
    %v4692 = vld [vmem:[#allocation23 + $0x410] sm:$0xff]
    %v4693 = vld [vmem:[#allocation23 + $0x418] sm:$0xff]
    %v4694 = vld [vmem:[#allocation23 + $0x420] sm:$0xf]
    %v4695 = vld [vmem:[#allocation23 + $0x424] sm:$0xff]
    %v4696 = vld [vmem:[#allocation23 + $0x42c] sm:$0xff]
    %v4697 = vld [vmem:[#allocation23 + $0x434] sm:$0xf]
    %v4698 = vld [vmem:[#allocation23 + $0x438] sm:$0xff]
    %v4699 = vld [vmem:[#allocation23 + $0x440] sm:$0xff]
    %v4700 = vld [vmem:[#allocation23 + $0x448] sm:$0xf]
    %v4701 = vld [vmem:[#allocation23 + $0x44c] sm:$0xff]
    %v4702 = vld [vmem:[#allocation23 + $0x454] sm:$0xff]
    %v4703 = vld [vmem:[#allocation23 + $0x45c] sm:$0xf]
    %v4704 = vld [vmem:[#allocation23 + $0x460] sm:$0xff]
    %v4705 = vld [vmem:[#allocation23 + $0x468] sm:$0xff]
    %v4706 = vld [vmem:[#allocation23 + $0x470] sm:$0xf]
    %v4707 = vld [vmem:[#allocation23 + $0x474] sm:$0xff]
    %v4708 = vld [vmem:[#allocation23 + $0x47c] sm:$0xff]
    %v4709 = vld [vmem:[#allocation23 + $0x484] sm:$0xf]
    %v4710 = vld [vmem:[#allocation23 + $0x488] sm:$0xff]
    %v4711 = vld [vmem:[#allocation23 + $0x490] sm:$0xff]
    %v4712 = vld [vmem:[#allocation23 + $0x498] sm:$0xf]
    %v4713 = vld [vmem:[#allocation23 + $0x49c] sm:$0xff]
    %v4714 = vld [vmem:[#allocation23 + $0x4a4] sm:$0xff]
    %v4715 = vld [vmem:[#allocation23 + $0x4ac] sm:$0xf]
    %v4716 = vld [vmem:[#allocation23 + $0x4b0] sm:$0xff]
    %v4717 = vld [vmem:[#allocation23 + $0x4b8] sm:$0xff]
    %v4718 = vld [vmem:[#allocation23 + $0x4c0] sm:$0xf]
    %v4719 = vld [vmem:[#allocation23 + $0x4c4] sm:$0xff]
    %v4720 = vld [vmem:[#allocation23 + $0x4cc] sm:$0xff]
    %v4721 = vld [vmem:[#allocation23 + $0x4d4] sm:$0xf]
    %v4722 = vld [vmem:[#allocation23 + $0x4d8] sm:$0xff]
    %v4723 = vld [vmem:[#allocation23 + $0x4e0] sm:$0xff]
    %v4724 = vld [vmem:[#allocation23 + $0x4e8] sm:$0xf]
    %v4725 = vld [vmem:[#allocation23 + $0x4ec] sm:$0xff]
    %v4726 = vld [vmem:[#allocation23 + $0x4f4] sm:$0xff]
    %v4727 = vld [vmem:[#allocation23 + $0x4fc] sm:$0xf]
    %v4728 = vld [vmem:[#allocation23 + $0x500] sm:$0xff]
    %v4729 = vld [vmem:[#allocation23 + $0x508] sm:$0xff]
    %v4730 = vld [vmem:[#allocation23 + $0x510] sm:$0xf]
    %v4731 = vld [vmem:[#allocation23 + $0x514] sm:$0xff]
    %v4732 = vld [vmem:[#allocation23 + $0x51c] sm:$0xff]
    %v4733 = vld [vmem:[#allocation23 + $0x524] sm:$0xf]
    %v4734 = vld [vmem:[#allocation23 + $0x528] sm:$0xff]
    %v4735 = vld [vmem:[#allocation23 + $0x530] sm:$0xff]
    %v4736 = vld [vmem:[#allocation23 + $0x538] sm:$0xf]
    %v4737 = vld [vmem:[#allocation23 + $0x53c] sm:$0xff]
    %v4738 = vld [vmem:[#allocation23 + $0x544] sm:$0xff]
    %v4739 = vld [vmem:[#allocation23 + $0x54c] sm:$0xf]
    %v4740 = vld [vmem:[#allocation23 + $0x550] sm:$0xff]
    %v4741 = vld [vmem:[#allocation23 + $0x558] sm:$0xff]
    %v4742 = vld [vmem:[#allocation23 + $0x560] sm:$0xf]
    %v4743 = vld [vmem:[#allocation23 + $0x564] sm:$0xff]
    %v4744 = vld [vmem:[#allocation23 + $0x56c] sm:$0xff]
    %v4745 = vld [vmem:[#allocation23 + $0x574] sm:$0xf]
    %v4746 = vld [vmem:[#allocation23 + $0x578] sm:$0xff]
    %v4747 = vld [vmem:[#allocation23 + $0x580] sm:$0xff]
    %v4748 = vld [vmem:[#allocation23 + $0x588] sm:$0xf]
    %v4749 = vld [vmem:[#allocation23 + $0x58c] sm:$0xff]
    %v4750 = vld [vmem:[#allocation23 + $0x594] sm:$0xff]
    %v4751 = vld [vmem:[#allocation23 + $0x59c] sm:$0xf]
    %v4752 = vld [vmem:[#allocation23 + $0x5a0] sm:$0xff]
    %v4753 = vld [vmem:[#allocation23 + $0x5a8] sm:$0xff]
    %v4754 = vld [vmem:[#allocation23 + $0x5b0] sm:$0xf]
    %v4755 = vld [vmem:[#allocation23 + $0x5b4] sm:$0xff]
    %v4756 = vld [vmem:[#allocation23 + $0x5bc] sm:$0xff]
    %v4757 = vld [vmem:[#allocation23 + $0x5c4] sm:$0xf]
    %v4758 = vld [vmem:[#allocation23 + $0x5c8] sm:$0xff]
    %v4759 = vld [vmem:[#allocation23 + $0x5d0] sm:$0xff]
    %v4760 = vld [vmem:[#allocation23 + $0x5d8] sm:$0xf]
    %v4761 = vld [vmem:[#allocation23 + $0x5dc] sm:$0xff]
    %v4762 = vld [vmem:[#allocation23 + $0x5e4] sm:$0xff]
    %v4763 = vld [vmem:[#allocation23 + $0x5ec] sm:$0xf]
    %v4764 = vld [vmem:[#allocation23 + $0x5f0] sm:$0xff]
    %v4765 = vld [vmem:[#allocation23 + $0x5f8] sm:$0xff]
    %v4766 = vld [vmem:[#allocation23 + $0x600] sm:$0xf]
    %v4767 = vld [vmem:[#allocation23 + $0x604] sm:$0xff]
    %v4768 = vld [vmem:[#allocation23 + $0x60c] sm:$0xff]
    %v4769 = vld [vmem:[#allocation23 + $0x614] sm:$0xf]
    %v4770 = vld [vmem:[#allocation23 + $0x618] sm:$0xff]
    %v4771 = vld [vmem:[#allocation23 + $0x620] sm:$0xff]
    %v4772 = vld [vmem:[#allocation23 + $0x628] sm:$0xf]
    %v4773 = vld [vmem:[#allocation23 + $0x62c] sm:$0xff]
    %v4774 = vld [vmem:[#allocation23 + $0x634] sm:$0xff]
    %v4775 = vld [vmem:[#allocation23 + $0x63c] sm:$0xf]
    %v4776 = vld [vmem:[#allocation25] sm:$0x1f]
    %v4778 = vlaneseq
    %v4779 = vshrl.u32 %v4778, 7
    %v4780 = vsub.s32 0, %v4779
    %v4781 = vrot.slane %v4776, %v4780
    %v4782 = vlaneseq
    %v4783 = vshrl.u32 %v4782, 7
    %v4784 = vsub.s32 1, %v4783
    %v4785 = vrot.slane %v4776, %v4784
    %v4786 = vlaneseq
    %v4787 = vshrl.u32 %v4786, 7
    %v4788 = vsub.s32 2, %v4787
    %v4789 = vrot.slane %v4776, %v4788
    %v4790 = vlaneseq
    %v4791 = vshrl.u32 %v4790, 7
    %v4792 = vsub.s32 3, %v4791
    %v4793 = vrot.slane %v4776, %v4792
    %v4794 = vlaneseq
    %v4795 = vshrl.u32 %v4794, 7
    %v4796 = vsub.s32 4, %v4795
    %v4797 = vrot.slane %v4776, %v4796
    %v5043 = vunpack.c.l.b16 %v4536
    %v5044 = vunpack.c.h.b16 %v4536
    %v5045 = vunpack.c.l.b16 %v4537
    %v5046 = vunpack.c.h.b16 %v4537
    %v5047 = vunpack.c.l.b16 %v4538
    %v5048 = vunpack.c.l.b16 %v4539
    %v5049 = vunpack.c.h.b16 %v4539
    %v5050 = vunpack.c.l.b16 %v4540
    %v5051 = vunpack.c.h.b16 %v4540
    %v5052 = vunpack.c.l.b16 %v4541
    %v5053 = vunpack.c.l.b16 %v4542
    %v5054 = vunpack.c.h.b16 %v4542
    %v5055 = vunpack.c.l.b16 %v4543
    %v5056 = vunpack.c.h.b16 %v4543
    %v5057 = vunpack.c.l.b16 %v4544
    %v5058 = vunpack.c.l.b16 %v4545
    %v5059 = vunpack.c.h.b16 %v4545
    %v5060 = vunpack.c.l.b16 %v4546
    %v5061 = vunpack.c.h.b16 %v4546
    %v5062 = vunpack.c.l.b16 %v4547
    %v5063 = vunpack.c.l.b16 %v4548
    %v5064 = vunpack.c.h.b16 %v4548
    %v5065 = vunpack.c.l.b16 %v4549
    %v5066 = vunpack.c.h.b16 %v4549
    %v5067 = vunpack.c.l.b16 %v4550
    %v5068 = vunpack.c.l.b16 %v4551
    %v5069 = vunpack.c.h.b16 %v4551
    %v5070 = vunpack.c.l.b16 %v4552
    %v5071 = vunpack.c.h.b16 %v4552
    %v5072 = vunpack.c.l.b16 %v4553
    %v5073 = vunpack.c.l.b16 %v4554
    %v5074 = vunpack.c.h.b16 %v4554
    %v5075 = vunpack.c.l.b16 %v4555
    %v5076 = vunpack.c.h.b16 %v4555
    %v5077 = vunpack.c.l.b16 %v4556
    %v5078 = vunpack.c.l.b16 %v4557
    %v5079 = vunpack.c.h.b16 %v4557
    %v5080 = vunpack.c.l.b16 %v4558
    %v5081 = vunpack.c.h.b16 %v4558
    %v5082 = vunpack.c.l.b16 %v4559
    %v5083 = vunpack.c.l.b16 %v4560
    %v5084 = vunpack.c.h.b16 %v4560
    %v5085 = vunpack.c.l.b16 %v4561
    %v5086 = vunpack.c.h.b16 %v4561
    %v5087 = vunpack.c.l.b16 %v4562
    %v5088 = vunpack.c.l.b16 %v4563
    %v5089 = vunpack.c.h.b16 %v4563
    %v5090 = vunpack.c.l.b16 %v4564
    %v5091 = vunpack.c.h.b16 %v4564
    %v5092 = vunpack.c.l.b16 %v4565
    %v5093 = vunpack.c.l.b16 %v4566
    %v5094 = vunpack.c.h.b16 %v4566
    %v5095 = vunpack.c.l.b16 %v4567
    %v5096 = vunpack.c.h.b16 %v4567
    %v5097 = vunpack.c.l.b16 %v4568
    %v5098 = vunpack.c.l.b16 %v4569
    %v5099 = vunpack.c.h.b16 %v4569
    %v5100 = vunpack.c.l.b16 %v4570
    %v5101 = vunpack.c.h.b16 %v4570
    %v5102 = vunpack.c.l.b16 %v4571
    %v5103 = vunpack.c.l.b16 %v4572
    %v5104 = vunpack.c.h.b16 %v4572
    %v5105 = vunpack.c.l.b16 %v4573
    %v5106 = vunpack.c.h.b16 %v4573
    %v5107 = vunpack.c.l.b16 %v4574
    %v5108 = vunpack.c.l.b16 %v4575
    %v5109 = vunpack.c.h.b16 %v4575
    %v5110 = vunpack.c.l.b16 %v4576
    %v5111 = vunpack.c.h.b16 %v4576
    %v5112 = vunpack.c.l.b16 %v4577
    %v5113 = vunpack.c.l.b16 %v4578
    %v5114 = vunpack.c.h.b16 %v4578
    %v5115 = vunpack.c.l.b16 %v4579
    %v5116 = vunpack.c.h.b16 %v4579
    %v5117 = vunpack.c.l.b16 %v4580
    %v5118 = vunpack.c.l.b16 %v4581
    %v5119 = vunpack.c.h.b16 %v4581
    %v5120 = vunpack.c.l.b16 %v4582
    %v5121 = vunpack.c.h.b16 %v4582
    %v5122 = vunpack.c.l.b16 %v4583
    %v5123 = vunpack.c.l.b16 %v4584
    %v5124 = vunpack.c.h.b16 %v4584
    %v5125 = vunpack.c.l.b16 %v4585
    %v5126 = vunpack.c.h.b16 %v4585
    %v5127 = vunpack.c.l.b16 %v4586
    %v5128 = vunpack.c.l.b16 %v4587
    %v5129 = vunpack.c.h.b16 %v4587
    %v5130 = vunpack.c.l.b16 %v4588
    %v5131 = vunpack.c.h.b16 %v4588
    %v5132 = vunpack.c.l.b16 %v4589
    %v5133 = vunpack.c.l.b16 %v4590
    %v5134 = vunpack.c.h.b16 %v4590
    %v5135 = vunpack.c.l.b16 %v4591
    %v5136 = vunpack.c.h.b16 %v4591
    %v5137 = vunpack.c.l.b16 %v4592
    %v5138 = vunpack.c.l.b16 %v4593
    %v5139 = vunpack.c.h.b16 %v4593
    %v5140 = vunpack.c.l.b16 %v4594
    %v5141 = vunpack.c.h.b16 %v4594
    %v5142 = vunpack.c.l.b16 %v4595
    %v5143 = vunpack.c.l.b16 %v4596
    %v5144 = vunpack.c.h.b16 %v4596
    %v5145 = vunpack.c.l.b16 %v4597
    %v5146 = vunpack.c.h.b16 %v4597
    %v5147 = vunpack.c.l.b16 %v4598
    %v5148 = vunpack.c.l.b16 %v4599
    %v5149 = vunpack.c.h.b16 %v4599
    %v5150 = vunpack.c.l.b16 %v4600
    %v5151 = vunpack.c.h.b16 %v4600
    %v5152 = vunpack.c.l.b16 %v4601
    %v5153 = vunpack.c.l.b16 %v4602
    %v5154 = vunpack.c.h.b16 %v4602
    %v5155 = vunpack.c.l.b16 %v4603
    %v5156 = vunpack.c.h.b16 %v4603
    %v5157 = vunpack.c.l.b16 %v4604
    %v5158 = vunpack.c.l.b16 %v4605
    %v5159 = vunpack.c.h.b16 %v4605
    %v5160 = vunpack.c.l.b16 %v4606
    %v5161 = vunpack.c.h.b16 %v4606
    %v5162 = vunpack.c.l.b16 %v4607
    %v5163 = vunpack.c.l.b16 %v4608
    %v5164 = vunpack.c.h.b16 %v4608
    %v5165 = vunpack.c.l.b16 %v4609
    %v5166 = vunpack.c.h.b16 %v4609
    %v5167 = vunpack.c.l.b16 %v4610
    %v5168 = vunpack.c.l.b16 %v4611
    %v5169 = vunpack.c.h.b16 %v4611
    %v5170 = vunpack.c.l.b16 %v4612
    %v5171 = vunpack.c.h.b16 %v4612
    %v5172 = vunpack.c.l.b16 %v4613
    %v5173 = vunpack.c.l.b16 %v4614
    %v5174 = vunpack.c.h.b16 %v4614
    %v5175 = vunpack.c.l.b16 %v4615
    %v5176 = vunpack.c.h.b16 %v4615
    %v5177 = vunpack.c.l.b16 %v4616
    %v5178 = vunpack.c.l.b16 %v4617
    %v5179 = vunpack.c.h.b16 %v4617
    %v5180 = vunpack.c.l.b16 %v4618
    %v5181 = vunpack.c.h.b16 %v4618
    %v5182 = vunpack.c.l.b16 %v4619
    %v5183 = vunpack.c.l.b16 %v4620
    %v5184 = vunpack.c.h.b16 %v4620
    %v5185 = vunpack.c.l.b16 %v4621
    %v5186 = vunpack.c.h.b16 %v4621
    %v5187 = vunpack.c.l.b16 %v4622
    %v5188 = vunpack.c.l.b16 %v4623
    %v5189 = vunpack.c.h.b16 %v4623
    %v5190 = vunpack.c.l.b16 %v4624
    %v5191 = vunpack.c.h.b16 %v4624
    %v5192 = vunpack.c.l.b16 %v4625
    %v5193 = vunpack.c.l.b16 %v4626
    %v5194 = vunpack.c.h.b16 %v4626
    %v5195 = vunpack.c.l.b16 %v4627
    %v5196 = vunpack.c.h.b16 %v4627
    %v5197 = vunpack.c.l.b16 %v4628
    %v5198 = vunpack.c.l.b16 %v4629
    %v5199 = vunpack.c.h.b16 %v4629
    %v5200 = vunpack.c.l.b16 %v4630
    %v5201 = vunpack.c.h.b16 %v4630
    %v5202 = vunpack.c.l.b16 %v4631
    %v5203 = vunpack.c.l.b16 %v4632
    %v5204 = vunpack.c.h.b16 %v4632
    %v5205 = vunpack.c.l.b16 %v4633
    %v5206 = vunpack.c.h.b16 %v4633
    %v5207 = vunpack.c.l.b16 %v4634
    %v5208 = vunpack.c.l.b16 %v4635
    %v5209 = vunpack.c.h.b16 %v4635
    %v5210 = vunpack.c.l.b16 %v4636
    %v5211 = vunpack.c.h.b16 %v4636
    %v5212 = vunpack.c.l.b16 %v4637
    %v5213 = vunpack.c.l.b16 %v4638
    %v5214 = vunpack.c.h.b16 %v4638
    %v5215 = vunpack.c.l.b16 %v4639
    %v5216 = vunpack.c.h.b16 %v4639
    %v5217 = vunpack.c.l.b16 %v4640
    %v5218 = vunpack.c.l.b16 %v4641
    %v5219 = vunpack.c.h.b16 %v4641
    %v5220 = vunpack.c.l.b16 %v4642
    %v5221 = vunpack.c.h.b16 %v4642
    %v5222 = vunpack.c.l.b16 %v4643
    %v5223 = vunpack.c.l.b16 %v4644
    %v5224 = vunpack.c.h.b16 %v4644
    %v5225 = vunpack.c.l.b16 %v4645
    %v5226 = vunpack.c.h.b16 %v4645
    %v5227 = vunpack.c.l.b16 %v4646
    %v5228 = vunpack.c.l.b16 %v4647
    %v5229 = vunpack.c.h.b16 %v4647
    %v5230 = vunpack.c.l.b16 %v4648
    %v5231 = vunpack.c.h.b16 %v4648
    %v5232 = vunpack.c.l.b16 %v4649
    %v5233 = vunpack.c.l.b16 %v4650
    %v5234 = vunpack.c.h.b16 %v4650
    %v5235 = vunpack.c.l.b16 %v4651
    %v5236 = vunpack.c.h.b16 %v4651
    %v5237 = vunpack.c.l.b16 %v4652
    %v5238 = vunpack.c.l.b16 %v4653
    %v5239 = vunpack.c.h.b16 %v4653
    %v5240 = vunpack.c.l.b16 %v4654
    %v5241 = vunpack.c.h.b16 %v4654
    %v5242 = vunpack.c.l.b16 %v4655
    %v5243 = vunpack.c.l.b16 %v4656
    %v5244 = vunpack.c.h.b16 %v4656
    %v5245 = vunpack.c.l.b16 %v4657
    %v5246 = vunpack.c.h.b16 %v4657
    %v5247 = vunpack.c.l.b16 %v4658
    %v5248 = vunpack.c.l.b16 %v4659
    %v5249 = vunpack.c.h.b16 %v4659
    %v5250 = vunpack.c.l.b16 %v4660
    %v5251 = vunpack.c.h.b16 %v4660
    %v5252 = vunpack.c.l.b16 %v4661
    %v5253 = vunpack.c.l.b16 %v4662
    %v5254 = vunpack.c.h.b16 %v4662
    %v5255 = vunpack.c.l.b16 %v4663
    %v5256 = vunpack.c.h.b16 %v4663
    %v5257 = vunpack.c.l.b16 %v4664
    %v5258 = vunpack.c.l.b16 %v4665
    %v5259 = vunpack.c.h.b16 %v4665
    %v5260 = vunpack.c.l.b16 %v4666
    %v5261 = vunpack.c.h.b16 %v4666
    %v5262 = vunpack.c.l.b16 %v4667
    %v5263 = vunpack.c.l.b16 %v4668
    %v5264 = vunpack.c.h.b16 %v4668
    %v5265 = vunpack.c.l.b16 %v4669
    %v5266 = vunpack.c.h.b16 %v4669
    %v5267 = vunpack.c.l.b16 %v4670
    %v5268 = vunpack.c.l.b16 %v4671
    %v5269 = vunpack.c.h.b16 %v4671
    %v5270 = vunpack.c.l.b16 %v4672
    %v5271 = vunpack.c.h.b16 %v4672
    %v5272 = vunpack.c.l.b16 %v4673
    %v5273 = vunpack.c.l.b16 %v4674
    %v5274 = vunpack.c.h.b16 %v4674
    %v5275 = vunpack.c.l.b16 %v4675
    %v5276 = vunpack.c.h.b16 %v4675
    %v5277 = vunpack.c.l.b16 %v4676
    %v5278 = vunpack.c.l.b16 %v4677
    %v5279 = vunpack.c.h.b16 %v4677
    %v5280 = vunpack.c.l.b16 %v4678
    %v5281 = vunpack.c.h.b16 %v4678
    %v5282 = vunpack.c.l.b16 %v4679
    %v5283 = vunpack.c.l.b16 %v4680
    %v5284 = vunpack.c.h.b16 %v4680
    %v5285 = vunpack.c.l.b16 %v4681
    %v5286 = vunpack.c.h.b16 %v4681
    %v5287 = vunpack.c.l.b16 %v4682
    %v5288 = vunpack.c.l.b16 %v4683
    %v5289 = vunpack.c.h.b16 %v4683
    %v5290 = vunpack.c.l.b16 %v4684
    %v5291 = vunpack.c.h.b16 %v4684
    %v5292 = vunpack.c.l.b16 %v4685
    %v5293 = vunpack.c.l.b16 %v4686
    %v5294 = vunpack.c.h.b16 %v4686
    %v5295 = vunpack.c.l.b16 %v4687
    %v5296 = vunpack.c.h.b16 %v4687
    %v5297 = vunpack.c.l.b16 %v4688
    %v5298 = vunpack.c.l.b16 %v4689
    %v5299 = vunpack.c.h.b16 %v4689
    %v5300 = vunpack.c.l.b16 %v4690
    %v5301 = vunpack.c.h.b16 %v4690
    %v5302 = vunpack.c.l.b16 %v4691
    %v5303 = vunpack.c.l.b16 %v4692
    %v5304 = vunpack.c.h.b16 %v4692
    %v5305 = vunpack.c.l.b16 %v4693
    %v5306 = vunpack.c.h.b16 %v4693
    %v5307 = vunpack.c.l.b16 %v4694
    %v5308 = vunpack.c.l.b16 %v4695
    %v5309 = vunpack.c.h.b16 %v4695
    %v5310 = vunpack.c.l.b16 %v4696
    %v5311 = vunpack.c.h.b16 %v4696
    %v5312 = vunpack.c.l.b16 %v4697
    %v5313 = vunpack.c.l.b16 %v4698
    %v5314 = vunpack.c.h.b16 %v4698
    %v5315 = vunpack.c.l.b16 %v4699
    %v5316 = vunpack.c.h.b16 %v4699
    %v5317 = vunpack.c.l.b16 %v4700
    %v5318 = vunpack.c.l.b16 %v4701
    %v5319 = vunpack.c.h.b16 %v4701
    %v5320 = vunpack.c.l.b16 %v4702
    %v5321 = vunpack.c.h.b16 %v4702
    %v5322 = vunpack.c.l.b16 %v4703
    %v5323 = vunpack.c.l.b16 %v4704
    %v5324 = vunpack.c.h.b16 %v4704
    %v5325 = vunpack.c.l.b16 %v4705
    %v5326 = vunpack.c.h.b16 %v4705
    %v5327 = vunpack.c.l.b16 %v4706
    %v5328 = vunpack.c.l.b16 %v4707
    %v5329 = vunpack.c.h.b16 %v4707
    %v5330 = vunpack.c.l.b16 %v4708
    %v5331 = vunpack.c.h.b16 %v4708
    %v5332 = vunpack.c.l.b16 %v4709
    %v5333 = vunpack.c.l.b16 %v4710
    %v5334 = vunpack.c.h.b16 %v4710
    %v5335 = vunpack.c.l.b16 %v4711
    %v5336 = vunpack.c.h.b16 %v4711
    %v5337 = vunpack.c.l.b16 %v4712
    %v5338 = vunpack.c.l.b16 %v4713
    %v5339 = vunpack.c.h.b16 %v4713
    %v5340 = vunpack.c.l.b16 %v4714
    %v5341 = vunpack.c.h.b16 %v4714
    %v5342 = vunpack.c.l.b16 %v4715
    %v5343 = vunpack.c.l.b16 %v4716
    %v5344 = vunpack.c.h.b16 %v4716
    %v5345 = vunpack.c.l.b16 %v4717
    %v5346 = vunpack.c.h.b16 %v4717
    %v5347 = vunpack.c.l.b16 %v4718
    %v5348 = vunpack.c.l.b16 %v4719
    %v5349 = vunpack.c.h.b16 %v4719
    %v5350 = vunpack.c.l.b16 %v4720
    %v5351 = vunpack.c.h.b16 %v4720
    %v5352 = vunpack.c.l.b16 %v4721
    %v5353 = vunpack.c.l.b16 %v4722
    %v5354 = vunpack.c.h.b16 %v4722
    %v5355 = vunpack.c.l.b16 %v4723
    %v5356 = vunpack.c.h.b16 %v4723
    %v5357 = vunpack.c.l.b16 %v4724
    %v5358 = vunpack.c.l.b16 %v4725
    %v5359 = vunpack.c.h.b16 %v4725
    %v5360 = vunpack.c.l.b16 %v4726
    %v5361 = vunpack.c.h.b16 %v4726
    %v5362 = vunpack.c.l.b16 %v4727
    %v5363 = vunpack.c.l.b16 %v4728
    %v5364 = vunpack.c.h.b16 %v4728
    %v5365 = vunpack.c.l.b16 %v4729
    %v5366 = vunpack.c.h.b16 %v4729
    %v5367 = vunpack.c.l.b16 %v4730
    %v5368 = vunpack.c.l.b16 %v4731
    %v5369 = vunpack.c.h.b16 %v4731
    %v5370 = vunpack.c.l.b16 %v4732
    %v5371 = vunpack.c.h.b16 %v4732
    %v5372 = vunpack.c.l.b16 %v4733
    %v5373 = vunpack.c.l.b16 %v4734
    %v5374 = vunpack.c.h.b16 %v4734
    %v5375 = vunpack.c.l.b16 %v4735
    %v5376 = vunpack.c.h.b16 %v4735
    %v5377 = vunpack.c.l.b16 %v4736
    %v5378 = vunpack.c.l.b16 %v4737
    %v5379 = vunpack.c.h.b16 %v4737
    %v5380 = vunpack.c.l.b16 %v4738
    %v5381 = vunpack.c.h.b16 %v4738
    %v5382 = vunpack.c.l.b16 %v4739
    %v5383 = vunpack.c.l.b16 %v4740
    %v5384 = vunpack.c.h.b16 %v4740
    %v5385 = vunpack.c.l.b16 %v4741
    %v5386 = vunpack.c.h.b16 %v4741
    %v5387 = vunpack.c.l.b16 %v4742
    %v5388 = vunpack.c.l.b16 %v4743
    %v5389 = vunpack.c.h.b16 %v4743
    %v5390 = vunpack.c.l.b16 %v4744
    %v5391 = vunpack.c.h.b16 %v4744
    %v5392 = vunpack.c.l.b16 %v4745
    %v5393 = vunpack.c.l.b16 %v4746
    %v5394 = vunpack.c.h.b16 %v4746
    %v5395 = vunpack.c.l.b16 %v4747
    %v5396 = vunpack.c.h.b16 %v4747
    %v5397 = vunpack.c.l.b16 %v4748
    %v5398 = vunpack.c.l.b16 %v4749
    %v5399 = vunpack.c.h.b16 %v4749
    %v5400 = vunpack.c.l.b16 %v4750
    %v5401 = vunpack.c.h.b16 %v4750
    %v5402 = vunpack.c.l.b16 %v4751
    %v5403 = vunpack.c.l.b16 %v4752
    %v5404 = vunpack.c.h.b16 %v4752
    %v5405 = vunpack.c.l.b16 %v4753
    %v5406 = vunpack.c.h.b16 %v4753
    %v5407 = vunpack.c.l.b16 %v4754
    %v5408 = vunpack.c.l.b16 %v4755
    %v5409 = vunpack.c.h.b16 %v4755
    %v5410 = vunpack.c.l.b16 %v4756
    %v5411 = vunpack.c.h.b16 %v4756
    %v5412 = vunpack.c.l.b16 %v4757
    %v5413 = vunpack.c.l.b16 %v4758
    %v5414 = vunpack.c.h.b16 %v4758
    %v5415 = vunpack.c.l.b16 %v4759
    %v5416 = vunpack.c.h.b16 %v4759
    %v5417 = vunpack.c.l.b16 %v4760
    %v5418 = vunpack.c.l.b16 %v4761
    %v5419 = vunpack.c.h.b16 %v4761
    %v5420 = vunpack.c.l.b16 %v4762
    %v5421 = vunpack.c.h.b16 %v4762
    %v5422 = vunpack.c.l.b16 %v4763
    %v5423 = vunpack.c.l.b16 %v4764
    %v5424 = vunpack.c.h.b16 %v4764
    %v5425 = vunpack.c.l.b16 %v4765
    %v5426 = vunpack.c.h.b16 %v4765
    %v5427 = vunpack.c.l.b16 %v4766
    %v5428 = vunpack.c.l.b16 %v4767
    %v5429 = vunpack.c.h.b16 %v4767
    %v5430 = vunpack.c.l.b16 %v4768
    %v5431 = vunpack.c.h.b16 %v4768
    %v5432 = vunpack.c.l.b16 %v4769
    %v5433 = vunpack.c.l.b16 %v4770
    %v5434 = vunpack.c.h.b16 %v4770
    %v5435 = vunpack.c.l.b16 %v4771
    %v5436 = vunpack.c.h.b16 %v4771
    %v5437 = vunpack.c.l.b16 %v4772
    %v5438 = vunpack.c.l.b16 %v4773
    %v5439 = vunpack.c.h.b16 %v4773
    %v5440 = vunpack.c.l.b16 %v4774
    %v5441 = vunpack.c.h.b16 %v4774
    %v5442 = vunpack.c.l.b16 %v4775
    %v5443 = vpack.c.b16 %v5048, %v5043
    %v5444 = vpack.c.b16 %v5049, %v5044
    %v5445 = vpack.c.b16 %v5050, %v5045
    %v5446 = vpack.c.b16 %v5051, %v5046
    %v5447 = vpack.c.b16 %v5052, %v5047
    %v5448 = vpack.c.b16 %v5058, %v5053
    %v5449 = vpack.c.b16 %v5059, %v5054
    %v5450 = vpack.c.b16 %v5060, %v5055
    %v5451 = vpack.c.b16 %v5061, %v5056
    %v5452 = vpack.c.b16 %v5062, %v5057
    %v5453 = vpack.c.b16 %v5068, %v5063
    %v5454 = vpack.c.b16 %v5069, %v5064
    %v5455 = vpack.c.b16 %v5070, %v5065
    %v5456 = vpack.c.b16 %v5071, %v5066
    %v5457 = vpack.c.b16 %v5072, %v5067
    %v5458 = vpack.c.b16 %v5078, %v5073
    %v5459 = vpack.c.b16 %v5079, %v5074
    %v5460 = vpack.c.b16 %v5080, %v5075
    %v5461 = vpack.c.b16 %v5081, %v5076
    %v5462 = vpack.c.b16 %v5082, %v5077
    %v5463 = vpack.c.b16 %v5088, %v5083
    %v5464 = vpack.c.b16 %v5089, %v5084
    %v5465 = vpack.c.b16 %v5090, %v5085
    %v5466 = vpack.c.b16 %v5091, %v5086
    %v5467 = vpack.c.b16 %v5092, %v5087
    %v5468 = vpack.c.b16 %v5098, %v5093
    %v5469 = vpack.c.b16 %v5099, %v5094
    %v5470 = vpack.c.b16 %v5100, %v5095
    %v5471 = vpack.c.b16 %v5101, %v5096
    %v5472 = vpack.c.b16 %v5102, %v5097
    %v5473 = vpack.c.b16 %v5108, %v5103
    %v5474 = vpack.c.b16 %v5109, %v5104
    %v5475 = vpack.c.b16 %v5110, %v5105
    %v5476 = vpack.c.b16 %v5111, %v5106
    %v5477 = vpack.c.b16 %v5112, %v5107
    %v5478 = vpack.c.b16 %v5118, %v5113
    %v5479 = vpack.c.b16 %v5119, %v5114
    %v5480 = vpack.c.b16 %v5120, %v5115
    %v5481 = vpack.c.b16 %v5121, %v5116
    %v5482 = vpack.c.b16 %v5122, %v5117
    %v5483 = vpack.c.b16 %v5128, %v5123
    %v5484 = vpack.c.b16 %v5129, %v5124
    %v5485 = vpack.c.b16 %v5130, %v5125
    %v5486 = vpack.c.b16 %v5131, %v5126
    %v5487 = vpack.c.b16 %v5132, %v5127
    %v5488 = vpack.c.b16 %v5138, %v5133
    %v5489 = vpack.c.b16 %v5139, %v5134
    %v5490 = vpack.c.b16 %v5140, %v5135
    %v5491 = vpack.c.b16 %v5141, %v5136
    %v5492 = vpack.c.b16 %v5142, %v5137
    %v5493 = vpack.c.b16 %v5148, %v5143
    %v5494 = vpack.c.b16 %v5149, %v5144
    %v5495 = vpack.c.b16 %v5150, %v5145
    %v5496 = vpack.c.b16 %v5151, %v5146
    %v5497 = vpack.c.b16 %v5152, %v5147
    %v5498 = vpack.c.b16 %v5158, %v5153
    %v5499 = vpack.c.b16 %v5159, %v5154
    %v5500 = vpack.c.b16 %v5160, %v5155
    %v5501 = vpack.c.b16 %v5161, %v5156
    %v5502 = vpack.c.b16 %v5162, %v5157
    %v5503 = vpack.c.b16 %v5168, %v5163
    %v5504 = vpack.c.b16 %v5169, %v5164
    %v5505 = vpack.c.b16 %v5170, %v5165
    %v5506 = vpack.c.b16 %v5171, %v5166
    %v5507 = vpack.c.b16 %v5172, %v5167
    %v5508 = vpack.c.b16 %v5178, %v5173
    %v5509 = vpack.c.b16 %v5179, %v5174
    %v5510 = vpack.c.b16 %v5180, %v5175
    %v5511 = vpack.c.b16 %v5181, %v5176
    %v5512 = vpack.c.b16 %v5182, %v5177
    %v5513 = vpack.c.b16 %v5188, %v5183
    %v5514 = vpack.c.b16 %v5189, %v5184
    %v5515 = vpack.c.b16 %v5190, %v5185
    %v5516 = vpack.c.b16 %v5191, %v5186
    %v5517 = vpack.c.b16 %v5192, %v5187
    %v5518 = vpack.c.b16 %v5198, %v5193
    %v5519 = vpack.c.b16 %v5199, %v5194
    %v5520 = vpack.c.b16 %v5200, %v5195
    %v5521 = vpack.c.b16 %v5201, %v5196
    %v5522 = vpack.c.b16 %v5202, %v5197
    %v5523 = vpack.c.b16 %v5208, %v5203
    %v5524 = vpack.c.b16 %v5209, %v5204
    %v5525 = vpack.c.b16 %v5210, %v5205
    %v5526 = vpack.c.b16 %v5211, %v5206
    %v5527 = vpack.c.b16 %v5212, %v5207
    %v5528 = vpack.c.b16 %v5218, %v5213
    %v5529 = vpack.c.b16 %v5219, %v5214
    %v5530 = vpack.c.b16 %v5220, %v5215
    %v5531 = vpack.c.b16 %v5221, %v5216
    %v5532 = vpack.c.b16 %v5222, %v5217
    %v5533 = vpack.c.b16 %v5228, %v5223
    %v5534 = vpack.c.b16 %v5229, %v5224
    %v5535 = vpack.c.b16 %v5230, %v5225
    %v5536 = vpack.c.b16 %v5231, %v5226
    %v5537 = vpack.c.b16 %v5232, %v5227
    %v5538 = vpack.c.b16 %v5238, %v5233
    %v5539 = vpack.c.b16 %v5239, %v5234
    %v5540 = vpack.c.b16 %v5240, %v5235
    %v5541 = vpack.c.b16 %v5241, %v5236
    %v5542 = vpack.c.b16 %v5242, %v5237
    %v5543 = vpack.c.b16 %v5248, %v5243
    %v5544 = vpack.c.b16 %v5249, %v5244
    %v5545 = vpack.c.b16 %v5250, %v5245
    %v5546 = vpack.c.b16 %v5251, %v5246
    %v5547 = vpack.c.b16 %v5252, %v5247
    %v5548 = vpack.c.b16 %v5258, %v5253
    %v5549 = vpack.c.b16 %v5259, %v5254
    %v5550 = vpack.c.b16 %v5260, %v5255
    %v5551 = vpack.c.b16 %v5261, %v5256
    %v5552 = vpack.c.b16 %v5262, %v5257
    %v5553 = vpack.c.b16 %v5268, %v5263
    %v5554 = vpack.c.b16 %v5269, %v5264
    %v5555 = vpack.c.b16 %v5270, %v5265
    %v5556 = vpack.c.b16 %v5271, %v5266
    %v5557 = vpack.c.b16 %v5272, %v5267
    %v5558 = vpack.c.b16 %v5278, %v5273
    %v5559 = vpack.c.b16 %v5279, %v5274
    %v5560 = vpack.c.b16 %v5280, %v5275
    %v5561 = vpack.c.b16 %v5281, %v5276
    %v5562 = vpack.c.b16 %v5282, %v5277
    %v5563 = vpack.c.b16 %v5288, %v5283
    %v5564 = vpack.c.b16 %v5289, %v5284
    %v5565 = vpack.c.b16 %v5290, %v5285
    %v5566 = vpack.c.b16 %v5291, %v5286
    %v5567 = vpack.c.b16 %v5292, %v5287
    %v5568 = vpack.c.b16 %v5298, %v5293
    %v5569 = vpack.c.b16 %v5299, %v5294
    %v5570 = vpack.c.b16 %v5300, %v5295
    %v5571 = vpack.c.b16 %v5301, %v5296
    %v5572 = vpack.c.b16 %v5302, %v5297
    %v5573 = vpack.c.b16 %v5308, %v5303
    %v5574 = vpack.c.b16 %v5309, %v5304
    %v5575 = vpack.c.b16 %v5310, %v5305
    %v5576 = vpack.c.b16 %v5311, %v5306
    %v5577 = vpack.c.b16 %v5312, %v5307
    %v5578 = vpack.c.b16 %v5318, %v5313
    %v5579 = vpack.c.b16 %v5319, %v5314
    %v5580 = vpack.c.b16 %v5320, %v5315
    %v5581 = vpack.c.b16 %v5321, %v5316
    %v5582 = vpack.c.b16 %v5322, %v5317
    %v5583 = vpack.c.b16 %v5328, %v5323
    %v5584 = vpack.c.b16 %v5329, %v5324
    %v5585 = vpack.c.b16 %v5330, %v5325
    %v5586 = vpack.c.b16 %v5331, %v5326
    %v5587 = vpack.c.b16 %v5332, %v5327
    %v5588 = vpack.c.b16 %v5338, %v5333
    %v5589 = vpack.c.b16 %v5339, %v5334
    %v5590 = vpack.c.b16 %v5340, %v5335
    %v5591 = vpack.c.b16 %v5341, %v5336
    %v5592 = vpack.c.b16 %v5342, %v5337
    %v5593 = vpack.c.b16 %v5348, %v5343
    %v5594 = vpack.c.b16 %v5349, %v5344
    %v5595 = vpack.c.b16 %v5350, %v5345
    %v5596 = vpack.c.b16 %v5351, %v5346
    %v5597 = vpack.c.b16 %v5352, %v5347
    %v5598 = vpack.c.b16 %v5358, %v5353
    %v5599 = vpack.c.b16 %v5359, %v5354
    %v5600 = vpack.c.b16 %v5360, %v5355
    %v5601 = vpack.c.b16 %v5361, %v5356
    %v5602 = vpack.c.b16 %v5362, %v5357
    %v5603 = vpack.c.b16 %v5368, %v5363
    %v5604 = vpack.c.b16 %v5369, %v5364
    %v5605 = vpack.c.b16 %v5370, %v5365
    %v5606 = vpack.c.b16 %v5371, %v5366
    %v5607 = vpack.c.b16 %v5372, %v5367
    %v5608 = vpack.c.b16 %v5378, %v5373
    %v5609 = vpack.c.b16 %v5379, %v5374
    %v5610 = vpack.c.b16 %v5380, %v5375
    %v5611 = vpack.c.b16 %v5381, %v5376
    %v5612 = vpack.c.b16 %v5382, %v5377
    %v5613 = vpack.c.b16 %v5388, %v5383
    %v5614 = vpack.c.b16 %v5389, %v5384
    %v5615 = vpack.c.b16 %v5390, %v5385
    %v5616 = vpack.c.b16 %v5391, %v5386
    %v5617 = vpack.c.b16 %v5392, %v5387
    %v5618 = vpack.c.b16 %v5398, %v5393
    %v5619 = vpack.c.b16 %v5399, %v5394
    %v5620 = vpack.c.b16 %v5400, %v5395
    %v5621 = vpack.c.b16 %v5401, %v5396
    %v5622 = vpack.c.b16 %v5402, %v5397
    %v5623 = vpack.c.b16 %v5408, %v5403
    %v5624 = vpack.c.b16 %v5409, %v5404
    %v5625 = vpack.c.b16 %v5410, %v5405
    %v5626 = vpack.c.b16 %v5411, %v5406
    %v5627 = vpack.c.b16 %v5412, %v5407
    %v5628 = vpack.c.b16 %v5418, %v5413
    %v5629 = vpack.c.b16 %v5419, %v5414
    %v5630 = vpack.c.b16 %v5420, %v5415
    %v5631 = vpack.c.b16 %v5421, %v5416
    %v5632 = vpack.c.b16 %v5422, %v5417
    %v5633 = vpack.c.b16 %v5428, %v5423
    %v5634 = vpack.c.b16 %v5429, %v5424
    %v5635 = vpack.c.b16 %v5430, %v5425
    %v5636 = vpack.c.b16 %v5431, %v5426
    %v5637 = vpack.c.b16 %v5432, %v5427
    %v5638 = vpack.c.b16 %v5438, %v5433
    %v5639 = vpack.c.b16 %v5439, %v5434
    %v5640 = vpack.c.b16 %v5440, %v5435
    %v5641 = vpack.c.b16 %v5441, %v5436
    %v5642 = vpack.c.b16 %v5442, %v5437
    %5843 = vmatprep.subr.bf16.mxu0 %v5444
    %5844 = vmatpush1.bf16.msra.mxu0 %v5443
    %5845 = vmatprep.subr.bf16.mxu0 %v5449
    %5846 = vmatpush1.bf16.msra.mxu0 %v5448
    %5847 = vmatprep.subr.bf16.mxu0 %v5454
    %5848 = vmatpush1.bf16.msra.mxu0 %v5453
    %5849 = vmatprep.subr.bf16.mxu0 %v5459
    %5850 = vmatpush1.bf16.msra.mxu0 %v5458
    %5851 = vmatprep.subr.bf16.mxu0 %v5464
    %5852 = vmatpush1.bf16.msra.mxu0 %v5463
    %5853 = vmatprep.subr.bf16.mxu0 %v5469
    %5854 = vmatpush1.bf16.msra.mxu0 %v5468
    %5855 = vmatprep.subr.bf16.mxu0 %v5474
    %5856 = vmatpush1.bf16.msra.mxu0 %v5473
    %5857 = vmatprep.subr.bf16.mxu0 %v5479
    %5858 = vmatpush1.bf16.msra.mxu0 %v5478
    %5859 = vmatprep.subr.bf16.mxu0 %v5484
    %5860 = vmatpush1.bf16.msra.mxu0 %v5483
    %5861 = vmatprep.subr.bf16.mxu0 %v5489
    %5862 = vmatpush1.bf16.msra.mxu0 %v5488
    %5863 = vmatprep.subr.bf16.mxu0 %v5494
    %5864 = vmatpush1.bf16.msra.mxu0 %v5493
    %5865 = vmatprep.subr.bf16.mxu0 %v5499
    %5866 = vmatpush1.bf16.msra.mxu0 %v5498
    %5867 = vmatprep.subr.bf16.mxu0 %v5504
    %5868 = vmatpush1.bf16.msra.mxu0 %v5503
    %5869 = vmatprep.subr.bf16.mxu0 %v5509
    %5870 = vmatpush1.bf16.msra.mxu0 %v5508
    %5871 = vmatprep.subr.bf16.mxu0 %v5514
    %5872 = vmatpush1.bf16.msra.mxu0 %v5513
    %5873 = vmatprep.subr.bf16.mxu0 %v5519
    %5874 = vmatpush1.bf16.msra.mxu0 %v5518
    %5875 = vmatprep.mubr.bf16.mxu0 %v4532
    %5876 = vmatmul.mubr.bf16.gmra.mrb[0].mxu0 %v4531
    %v5877 = vpop.f32.mrb[0].mxu0
    %v5878 = vadd.f32 %v4781, %v5877
    %v5879 = vpop.f32.mrb[0].mxu0
    %v5880 = vadd.f32 %v4785, %v5879
    %v5881 = vpop.f32.mrb[0].mxu0
    %v5882 = vpop.f32.mrb[0].mxu0
    %5883 = vdwg.mxu0
    %5884 = vmatprep.subr.bf16.mxu0 %v5524
    %5885 = vmatpush1.bf16.msra.mxu0 %v5523
    %5886 = vmatprep.subr.bf16.mxu0 %v5529
    %5887 = vmatpush1.bf16.msra.mxu0 %v5528
    %5888 = vmatprep.subr.bf16.mxu0 %v5534
    %5889 = vmatpush1.bf16.msra.mxu0 %v5533
    %5890 = vmatprep.subr.bf16.mxu0 %v5539
    %5891 = vmatpush1.bf16.msra.mxu0 %v5538
    %5892 = vmatprep.subr.bf16.mxu0 %v5544
    %5893 = vmatpush1.bf16.msra.mxu0 %v5543
    %5894 = vmatprep.subr.bf16.mxu0 %v5549
    %5895 = vmatpush1.bf16.msra.mxu0 %v5548
    %5896 = vmatprep.subr.bf16.mxu0 %v5554
    %5897 = vmatpush1.bf16.msra.mxu0 %v5553
    %5898 = vmatprep.subr.bf16.mxu0 %v5559
    %5899 = vmatpush1.bf16.msra.mxu0 %v5558
    %5900 = vmatprep.subr.bf16.mxu0 %v5564
    %5901 = vmatpush1.bf16.msra.mxu0 %v5563
    %5902 = vmatprep.subr.bf16.mxu0 %v5569
    %5903 = vmatpush1.bf16.msra.mxu0 %v5568
    %5904 = vmatprep.subr.bf16.mxu0 %v5574
    %5905 = vmatpush1.bf16.msra.mxu0 %v5573
    %5906 = vmatprep.subr.bf16.mxu0 %v5579
    %5907 = vmatpush1.bf16.msra.mxu0 %v5578
    %5908 = vmatprep.subr.bf16.mxu0 %v5584
    %5909 = vmatpush1.bf16.msra.mxu0 %v5583
    %5910 = vmatprep.subr.bf16.mxu0 %v5589
    %5911 = vmatpush1.bf16.msra.mxu0 %v5588
    %5912 = vmatprep.subr.bf16.mxu0 %v5594
    %5913 = vmatpush1.bf16.msra.mxu0 %v5593
    %5914 = vmatprep.subr.bf16.mxu0 %v5599
    %5915 = vmatpush1.bf16.msra.mxu0 %v5598
    %5916 = vmatprep.mubr.bf16.mxu0 %v4534
    %5917 = vmatmul.mubr.bf16.gmra.mrb[0].mxu0 %v4533
    %v5918 = vpop.f32.mrb[0].mxu0
    %v5919 = vadd.f32 %v5878, %v5918
    %v5920 = vpop.f32.mrb[0].mxu0
    %v5921 = vadd.f32 %v5880, %v5920
    %v5922 = vpop.f32.mrb[0].mxu0
    %v5923 = vpop.f32.mrb[0].mxu0
    %5924 = vdwg.mxu0
    %5925 = vmatprep.subr.bf16.mxu0 %v5604
    %5926 = vmatpush1.bf16.msra.mxu0 %v5603
    %5927 = vmatprep.subr.bf16.mxu0 %v5609
    %5928 = vmatpush1.bf16.msra.mxu0 %v5608
    %5929 = vmatprep.subr.bf16.mxu0 %v5614
    %5930 = vmatpush1.bf16.msra.mxu0 %v5613
    %5931 = vmatprep.subr.bf16.mxu0 %v5619
    %5932 = vmatpush1.bf16.msra.mxu0 %v5618
    %5933 = vmatprep.subr.bf16.mxu0 %v5624
    %5934 = vmatpush1.bf16.msra.mxu0 %v5623
    %5935 = vmatprep.subr.bf16.mxu0 %v5629
    %5936 = vmatpush1.bf16.msra.mxu0 %v5628
    %5937 = vmatprep.subr.bf16.mxu0 %v5634
    %5938 = vmatpush1.bf16.msra.mxu0 %v5633
    %5939 = vmatprep.subr.bf16.mxu0 %v5639
    %5940 = vmatpush1.bf16.msra.mxu0 %v5638
    %5941 = vmatprep.subr.bf16.mxu0 0
    %5942 = vmatpush1.bf16.msra.mxu0 0
    %5943 = vmatprep.subr.bf16.mxu0 0
    %5944 = vmatpush1.bf16.msra.mxu0 0
    %5945 = vmatprep.subr.bf16.mxu0 0
    %5946 = vmatpush1.bf16.msra.mxu0 0
    %5947 = vmatprep.subr.bf16.mxu0 0
    %5948 = vmatpush1.bf16.msra.mxu0 0
    %5949 = vmatprep.subr.bf16.mxu0 0
    %5950 = vmatpush1.bf16.msra.mxu0 0
    %5951 = vmatprep.subr.bf16.mxu0 0
    %5952 = vmatpush1.bf16.msra.mxu0 0
    %5953 = vmatprep.subr.bf16.mxu0 0
    %5954 = vmatpush1.bf16.msra.mxu0 0
    %5955 = vmatprep.subr.bf16.mxu0 0
    %5956 = vmatpush1.bf16.msra.mxu0 0
    %5957 = vmatprep.mubr.bf16.mxu0 0
    %5958 = vmatmul.mubr.bf16.gmra.mrb[0].mxu0 %v4535
    %v5959 = vpop.f32.mrb[0].mxu0
    %v5960 = vadd.f32 %v5919, %v5959
    %v5961 = vpop.f32.mrb[0].mxu0
    %v5962 = vadd.f32 %v5921, %v5961
    %v5963 = vpop.f32.mrb[0].mxu0
    %v5964 = vpop.f32.mrb[0].mxu0
    %5965 = vdwg.mxu0
    %5966 = vmatprep.subr.bf16.mxu0 %v5446
    %5967 = vmatpush1.bf16.msra.mxu0 %v5445
    %5968 = vmatprep.subr.bf16.mxu0 %v5451
    %5969 = vmatpush1.bf16.msra.mxu0 %v5450
    %5970 = vmatprep.subr.bf16.mxu0 %v5456
    %5971 = vmatpush1.bf16.msra.mxu0 %v5455
    %5972 = vmatprep.subr.bf16.mxu0 %v5461
    %5973 = vmatpush1.bf16.msra.mxu0 %v5460
    %5974 = vmatprep.subr.bf16.mxu0 %v5466
    %5975 = vmatpush1.bf16.msra.mxu0 %v5465
    %5976 = vmatprep.subr.bf16.mxu0 %v5471
    %5977 = vmatpush1.bf16.msra.mxu0 %v5470
    %5978 = vmatprep.subr.bf16.mxu0 %v5476
    %5979 = vmatpush1.bf16.msra.mxu0 %v5475
    %5980 = vmatprep.subr.bf16.mxu0 %v5481
    %5981 = vmatpush1.bf16.msra.mxu0 %v5480
    %5982 = vmatprep.subr.bf16.mxu0 %v5486
    %5983 = vmatpush1.bf16.msra.mxu0 %v5485
    %5984 = vmatprep.subr.bf16.mxu0 %v5491
    %5985 = vmatpush1.bf16.msra.mxu0 %v5490
    %5986 = vmatprep.subr.bf16.mxu0 %v5496
    %5987 = vmatpush1.bf16.msra.mxu0 %v5495
    %5988 = vmatprep.subr.bf16.mxu0 %v5501
    %5989 = vmatpush1.bf16.msra.mxu0 %v5500
    %5990 = vmatprep.subr.bf16.mxu0 %v5506
    %5991 = vmatpush1.bf16.msra.mxu0 %v5505
    %5992 = vmatprep.subr.bf16.mxu0 %v5511
    %5993 = vmatpush1.bf16.msra.mxu0 %v5510
    %5994 = vmatprep.subr.bf16.mxu0 %v5516
    %5995 = vmatpush1.bf16.msra.mxu0 %v5515
    %5996 = vmatprep.subr.bf16.mxu0 %v5521
    %5997 = vmatpush1.bf16.msra.mxu0 %v5520
    %5998 = vmatprep.mubr.bf16.mxu0 %v4532
    %5999 = vmatmul.mubr.bf16.gmra.mrb[0].mxu0 %v4531
    %v6000 = vpop.f32.mrb[0].mxu0
    %v6001 = vadd.f32 %v4789, %v6000
    %v6002 = vpop.f32.mrb[0].mxu0
    %v6003 = vadd.f32 %v4793, %v6002
    %v6004 = vpop.f32.mrb[0].mxu0
    %v6005 = vpop.f32.mrb[0].mxu0
    %6006 = vdwg.mxu0
    %6007 = vmatprep.subr.bf16.mxu0 %v5526
    %6008 = vmatpush1.bf16.msra.mxu0 %v5525
    %6009 = vmatprep.subr.bf16.mxu0 %v5531
    %6010 = vmatpush1.bf16.msra.mxu0 %v5530
    %6011 = vmatprep.subr.bf16.mxu0 %v5536
    %6012 = vmatpush1.bf16.msra.mxu0 %v5535
    %6013 = vmatprep.subr.bf16.mxu0 %v5541
    %6014 = vmatpush1.bf16.msra.mxu0 %v5540
    %6015 = vmatprep.subr.bf16.mxu0 %v5546
    %6016 = vmatpush1.bf16.msra.mxu0 %v5545
    %6017 = vmatprep.subr.bf16.mxu0 %v5551
    %6018 = vmatpush1.bf16.msra.mxu0 %v5550
    %6019 = vmatprep.subr.bf16.mxu0 %v5556
    %6020 = vmatpush1.bf16.msra.mxu0 %v5555
    %6021 = vmatprep.subr.bf16.mxu0 %v5561
    %6022 = vmatpush1.bf16.msra.mxu0 %v5560
    %6023 = vmatprep.subr.bf16.mxu0 %v5566
    %6024 = vmatpush1.bf16.msra.mxu0 %v5565
    %6025 = vmatprep.subr.bf16.mxu0 %v5571
    %6026 = vmatpush1.bf16.msra.mxu0 %v5570
    %6027 = vmatprep.subr.bf16.mxu0 %v5576
    %6028 = vmatpush1.bf16.msra.mxu0 %v5575
    %6029 = vmatprep.subr.bf16.mxu0 %v5581
    %6030 = vmatpush1.bf16.msra.mxu0 %v5580
    %6031 = vmatprep.subr.bf16.mxu0 %v5586
    %6032 = vmatpush1.bf16.msra.mxu0 %v5585
    %6033 = vmatprep.subr.bf16.mxu0 %v5591
    %6034 = vmatpush1.bf16.msra.mxu0 %v5590
    %6035 = vmatprep.subr.bf16.mxu0 %v5596
    %6036 = vmatpush1.bf16.msra.mxu0 %v5595
    %6037 = vmatprep.subr.bf16.mxu0 %v5601
    %6038 = vmatpush1.bf16.msra.mxu0 %v5600
    %6039 = vmatprep.mubr.bf16.mxu0 %v4534
    %6040 = vmatmul.mubr.bf16.gmra.mrb[0].mxu0 %v4533
    %v6041 = vpop.f32.mrb[0].mxu0
    %v6042 = vadd.f32 %v6001, %v6041
    %v6043 = vpop.f32.mrb[0].mxu0
    %v6044 = vadd.f32 %v6003, %v6043
    %v6045 = vpop.f32.mrb[0].mxu0
    %v6046 = vpop.f32.mrb[0].mxu0
    %6047 = vdwg.mxu0
    %6048 = vmatprep.subr.bf16.mxu0 %v5606
    %6049 = vmatpush1.bf16.msra.mxu0 %v5605
    %6050 = vmatprep.subr.bf16.mxu0 %v5611
    %6051 = vmatpush1.bf16.msra.mxu0 %v5610
    %6052 = vmatprep.subr.bf16.mxu0 %v5616
    %6053 = vmatpush1.bf16.msra.mxu0 %v5615
    %6054 = vmatprep.subr.bf16.mxu0 %v5621
    %6055 = vmatpush1.bf16.msra.mxu0 %v5620
    %6056 = vmatprep.subr.bf16.mxu0 %v5626
    %6057 = vmatpush1.bf16.msra.mxu0 %v5625
    %6058 = vmatprep.subr.bf16.mxu0 %v5631
    %6059 = vmatpush1.bf16.msra.mxu0 %v5630
    %6060 = vmatprep.subr.bf16.mxu0 %v5636
    %6061 = vmatpush1.bf16.msra.mxu0 %v5635
    %6062 = vmatprep.subr.bf16.mxu0 %v5641
    %6063 = vmatpush1.bf16.msra.mxu0 %v5640
    %6064 = vmatprep.subr.bf16.mxu0 0
    %6065 = vmatpush1.bf16.msra.mxu0 0
    %6066 = vmatprep.subr.bf16.mxu0 0
    %6067 = vmatpush1.bf16.msra.mxu0 0
    %6068 = vmatprep.subr.bf16.mxu0 0
    %6069 = vmatpush1.bf16.msra.mxu0 0
    %6070 = vmatprep.subr.bf16.mxu0 0
    %6071 = vmatpush1.bf16.msra.mxu0 0
    %6072 = vmatprep.subr.bf16.mxu0 0
    %6073 = vmatpush1.bf16.msra.mxu0 0
    %6074 = vmatprep.subr.bf16.mxu0 0
    %6075 = vmatpush1.bf16.msra.mxu0 0
    %6076 = vmatprep.subr.bf16.mxu0 0
    %6077 = vmatpush1.bf16.msra.mxu0 0
    %6078 = vmatprep.subr.bf16.mxu0 0
    %6079 = vmatpush1.bf16.msra.mxu0 0
    %6080 = vmatprep.mubr.bf16.mxu0 0
    %6081 = vmatmul.mubr.bf16.gmra.mrb[0].mxu0 %v4535
    %v6082 = vpop.f32.mrb[0].mxu0
    %v6083 = vadd.f32 %v6042, %v6082
    %v6084 = vpop.f32.mrb[0].mxu0
    %v6085 = vadd.f32 %v6044, %v6084
    %v6086 = vpop.f32.mrb[0].mxu0
    %v6087 = vpop.f32.mrb[0].mxu0
    %6088 = vdwg.mxu0
    %6089 = vmatprep.subr.bf16.mxu0 0
    %6090 = vmatpush1.bf16.msra.mxu0 %v5447
    %6091 = vmatprep.subr.bf16.mxu0 0
    %6092 = vmatpush1.bf16.msra.mxu0 %v5452
    %6093 = vmatprep.subr.bf16.mxu0 0
    %6094 = vmatpush1.bf16.msra.mxu0 %v5457
    %6095 = vmatprep.subr.bf16.mxu0 0
    %6096 = vmatpush1.bf16.msra.mxu0 %v5462
    %6097 = vmatprep.subr.bf16.mxu0 0
    %6098 = vmatpush1.bf16.msra.mxu0 %v5467
    %6099 = vmatprep.subr.bf16.mxu0 0
    %6100 = vmatpush1.bf16.msra.mxu0 %v5472
    %6101 = vmatprep.subr.bf16.mxu0 0
    %6102 = vmatpush1.bf16.msra.mxu0 %v5477
    %6103 = vmatprep.subr.bf16.mxu0 0
    %6104 = vmatpush1.bf16.msra.mxu0 %v5482
    %6105 = vmatprep.subr.bf16.mxu0 0
    %6106 = vmatpush1.bf16.msra.mxu0 %v5487
    %6107 = vmatprep.subr.bf16.mxu0 0
    %6108 = vmatpush1.bf16.msra.mxu0 %v5492
    %6109 = vmatprep.subr.bf16.mxu0 0
    %6110 = vmatpush1.bf16.msra.mxu0 %v5497
    %6111 = vmatprep.subr.bf16.mxu0 0
    %6112 = vmatpush1.bf16.msra.mxu0 %v5502
    %6113 = vmatprep.subr.bf16.mxu0 0
    %6114 = vmatpush1.bf16.msra.mxu0 %v5507
    %6115 = vmatprep.subr.bf16.mxu0 0
    %6116 = vmatpush1.bf16.msra.mxu0 %v5512
    %6117 = vmatprep.subr.bf16.mxu0 0
    %6118 = vmatpush1.bf16.msra.mxu0 %v5517
    %6119 = vmatprep.subr.bf16.mxu0 0
    %6120 = vmatpush1.bf16.msra.mxu0 %v5522
    %6121 = vmatprep.mubr.bf16.mxu0 %v4532
    %6122 = vmatmul.mubr.bf16.gmra.mrb[0].mxu0 %v4531
    %v6123 = vpop.f32.mrb[0].mxu0
    %v6124 = vadd.f32 %v4797, %v6123
    %v6125 = vpop.f32.mrb[0].mxu0
    %v6126 = vpop.f32.mrb[0].mxu0
    %v6127 = vpop.f32.mrb[0].mxu0
    %6128 = vdwg.mxu0
    %6129 = vmatprep.subr.bf16.mxu0 0
    %6130 = vmatpush1.bf16.msra.mxu0 %v5527
    %6131 = vmatprep.subr.bf16.mxu0 0
    %6132 = vmatpush1.bf16.msra.mxu0 %v5532
    %6133 = vmatprep.subr.bf16.mxu0 0
    %6134 = vmatpush1.bf16.msra.mxu0 %v5537
    %6135 = vmatprep.subr.bf16.mxu0 0
    %6136 = vmatpush1.bf16.msra.mxu0 %v5542
    %6137 = vmatprep.subr.bf16.mxu0 0
    %6138 = vmatpush1.bf16.msra.mxu0 %v5547
    %6139 = vmatprep.subr.bf16.mxu0 0
    %6140 = vmatpush1.bf16.msra.mxu0 %v5552
    %6141 = vmatprep.subr.bf16.mxu0 0
    %6142 = vmatpush1.bf16.msra.mxu0 %v5557
    %6143 = vmatprep.subr.bf16.mxu0 0
    %6144 = vmatpush1.bf16.msra.mxu0 %v5562
    %6145 = vmatprep.subr.bf16.mxu0 0
    %6146 = vmatpush1.bf16.msra.mxu0 %v5567
    %6147 = vmatprep.subr.bf16.mxu0 0
    %6148 = vmatpush1.bf16.msra.mxu0 %v5572
    %6149 = vmatprep.subr.bf16.mxu0 0
    %6150 = vmatpush1.bf16.msra.mxu0 %v5577
    %6151 = vmatprep.subr.bf16.mxu0 0
    %6152 = vmatpush1.bf16.msra.mxu0 %v5582
    %6153 = vmatprep.subr.bf16.mxu0 0
    %6154 = vmatpush1.bf16.msra.mxu0 %v5587
    %6155 = vmatprep.subr.bf16.mxu0 0
    %6156 = vmatpush1.bf16.msra.mxu0 %v5592
    %6157 = vmatprep.subr.bf16.mxu0 0
    %6158 = vmatpush1.bf16.msra.mxu0 %v5597
    %6159 = vmatprep.subr.bf16.mxu0 0
    %6160 = vmatpush1.bf16.msra.mxu0 %v5602
    %6161 = vmatprep.mubr.bf16.mxu0 %v4534
    %6162 = vmatmul.mubr.bf16.gmra.mrb[0].mxu0 %v4533
    %v6163 = vpop.f32.mrb[0].mxu0
    %v6164 = vadd.f32 %v6124, %v6163
    %v6165 = vpop.f32.mrb[0].mxu0
    %v6166 = vpop.f32.mrb[0].mxu0
    %v6167 = vpop.f32.mrb[0].mxu0
    %6168 = vdwg.mxu0
    %6169 = vmatprep.subr.bf16.mxu0 0
    %6170 = vmatpush1.bf16.msra.mxu0 %v5607
    %6171 = vmatprep.subr.bf16.mxu0 0
    %6172 = vmatpush1.bf16.msra.mxu0 %v5612
    %6173 = vmatprep.subr.bf16.mxu0 0
    %6174 = vmatpush1.bf16.msra.mxu0 %v5617
    %6175 = vmatprep.subr.bf16.mxu0 0
    %6176 = vmatpush1.bf16.msra.mxu0 %v5622
    %6177 = vmatprep.subr.bf16.mxu0 0
    %6178 = vmatpush1.bf16.msra.mxu0 %v5627
    %6179 = vmatprep.subr.bf16.mxu0 0
    %6180 = vmatpush1.bf16.msra.mxu0 %v5632
    %6181 = vmatprep.subr.bf16.mxu0 0
    %6182 = vmatpush1.bf16.msra.mxu0 %v5637
    %6183 = vmatprep.subr.bf16.mxu0 0
    %6184 = vmatpush1.bf16.msra.mxu0 %v5642
    %6185 = vmatprep.subr.bf16.mxu0 0
    %6186 = vmatpush1.bf16.msra.mxu0 0
    %6187 = vmatprep.subr.bf16.mxu0 0
    %6188 = vmatpush1.bf16.msra.mxu0 0
    %6189 = vmatprep.subr.bf16.mxu0 0
    %6190 = vmatpush1.bf16.msra.mxu0 0
    %6191 = vmatprep.subr.bf16.mxu0 0
    %6192 = vmatpush1.bf16.msra.mxu0 0
    %6193 = vmatprep.subr.bf16.mxu0 0
    %6194 = vmatpush1.bf16.msra.mxu0 0
    %6195 = vmatprep.subr.bf16.mxu0 0
    %6196 = vmatpush1.bf16.msra.mxu0 0
    %6197 = vmatprep.subr.bf16.mxu0 0
    %6198 = vmatpush1.bf16.msra.mxu0 0
    %6199 = vmatprep.subr.bf16.mxu0 0
    %6200 = vmatpush1.bf16.msra.mxu0 0
    %6201 = vmatprep.mubr.bf16.mxu0 0
    %6202 = vmatmul.mubr.bf16.gmra.mrb[0].mxu0 %v4535
    %v6203 = vpop.f32.mrb[0].mxu0
    %v6204 = vadd.f32 %v6164, %v6203
    %v6205 = vpop.f32.mrb[0].mxu0
    %v6206 = vpop.f32.mrb[0].mxu0
    %v6207 = vpop.f32.mrb[0].mxu0
    %6208 = vdwg.mxu0
    %v6209 = vmax.f32 %v5960, 0.0
    %v6210 = vmax.f32 %v5962, 0.0
    %v6211 = vmax.f32 %v6083, 0.0
    %v6212 = vmax.f32 %v6085, 0.0
    %v6213 = vmax.f32 %v6204, 0.0
    %v6214 = vpack.c.bf16 %v6209, %v6209
    %v6215 = vpack.c.bf16 %v6210, %v6210
    %v6216 = vpack.c.bf16 %v6211, %v6211
    %v6217 = vpack.c.bf16 %v6212, %v6212
    %v6218 = vpack.c.bf16 %v6213, %v6213
    %v6219 = vld [vmem:[#allocation26] sm:$0xff]
    %v6220 = vld [vmem:[#allocation26 + $0x8] sm:$0xf]
    %v6221 = vld [vmem:[#allocation26 + $0xc] sm:$0xff]
    %v6222 = vld [vmem:[#allocation26 + $0x14] sm:$0xf]
    %v6223 = vld [vmem:[#allocation26 + $0x18] sm:$0xff]
    %v6224 = vld [vmem:[#allocation26 + $0x20] sm:$0xf]
    %v6225 = vld [vmem:[#allocation26 + $0x24] sm:$0xff]
    %v6226 = vld [vmem:[#allocation26 + $0x2c] sm:$0xf]
    %v6227 = vld [vmem:[#allocation26 + $0x30] sm:$0xff]
    %v6228 = vld [vmem:[#allocation26 + $0x38] sm:$0xf]
    %v6229 = vld [vmem:[#allocation26 + $0x3c] sm:$0xff]
    %v6230 = vld [vmem:[#allocation26 + $0x44] sm:$0xf]
    %v6231 = vld [vmem:[#allocation26 + $0x48] sm:$0xff]
    %v6232 = vld [vmem:[#allocation26 + $0x50] sm:$0xf]
    %v6233 = vld [vmem:[#allocation26 + $0x54] sm:$0xff]
    %v6234 = vld [vmem:[#allocation26 + $0x5c] sm:$0xf]
    %v6235 = vld [vmem:[#allocation26 + $0x60] sm:$0xff]
    %v6236 = vld [vmem:[#allocation26 + $0x68] sm:$0xf]
    %v6237 = vld [vmem:[#allocation26 + $0x6c] sm:$0xff]
    %v6238 = vld [vmem:[#allocation26 + $0x74] sm:$0xf]
    %v6239 = vld [vmem:[#allocation26 + $0x78] sm:$0xff]
    %v6240 = vld [vmem:[#allocation26 + $0x80] sm:$0xf]
    %v6241 = vld [vmem:[#allocation26 + $0x84] sm:$0xff]
    %v6242 = vld [vmem:[#allocation26 + $0x8c] sm:$0xf]
    %v6243 = vld [vmem:[#allocation26 + $0x90] sm:$0xff]
    %v6244 = vld [vmem:[#allocation26 + $0x98] sm:$0xf]
    %v6245 = vld [vmem:[#allocation26 + $0x9c] sm:$0xff]
    %v6246 = vld [vmem:[#allocation26 + $0xa4] sm:$0xf]
    %v6247 = vld [vmem:[#allocation26 + $0xa8] sm:$0xff]
    %v6248 = vld [vmem:[#allocation26 + $0xb0] sm:$0xf]
    %v6249 = vld [vmem:[#allocation26 + $0xb4] sm:$0xff]
    %v6250 = vld [vmem:[#allocation26 + $0xbc] sm:$0xf]
    %v6251 = vld [vmem:[#allocation26 + $0xc0] sm:$0xff]
    %v6252 = vld [vmem:[#allocation26 + $0xc8] sm:$0xf]
    %v6253 = vld [vmem:[#allocation26 + $0xcc] sm:$0xff]
    %v6254 = vld [vmem:[#allocation26 + $0xd4] sm:$0xf]
    %v6255 = vld [vmem:[#allocation26 + $0xd8] sm:$0xff]
    %v6256 = vld [vmem:[#allocation26 + $0xe0] sm:$0xf]
    %v6257 = vld [vmem:[#allocation26 + $0xe4] sm:$0xff]
    %v6258 = vld [vmem:[#allocation26 + $0xec] sm:$0xf]
    %v6259 = vld [vmem:[#allocation26 + $0xf0] sm:$0xff]
    %v6260 = vld [vmem:[#allocation26 + $0xf8] sm:$0xf]
    %v6261 = vld [vmem:[#allocation26 + $0xfc] sm:$0xff]
    %v6262 = vld [vmem:[#allocation26 + $0x104] sm:$0xf]
    %v6263 = vld [vmem:[#allocation26 + $0x108] sm:$0xff]
    %v6264 = vld [vmem:[#allocation26 + $0x110] sm:$0xf]
    %v6265 = vld [vmem:[#allocation26 + $0x114] sm:$0xff]
    %v6266 = vld [vmem:[#allocation26 + $0x11c] sm:$0xf]
    %v6267 = vld [vmem:[#allocation26 + $0x120] sm:$0xff]
    %v6268 = vld [vmem:[#allocation26 + $0x128] sm:$0xf]
    %v6269 = vld [vmem:[#allocation26 + $0x12c] sm:$0xff]
    %v6270 = vld [vmem:[#allocation26 + $0x134] sm:$0xf]
    %v6271 = vld [vmem:[#allocation26 + $0x138] sm:$0xff]
    %v6272 = vld [vmem:[#allocation26 + $0x140] sm:$0xf]
    %v6273 = vld [vmem:[#allocation26 + $0x144] sm:$0xff]
    %v6274 = vld [vmem:[#allocation26 + $0x14c] sm:$0xf]
    %v6275 = vld [vmem:[#allocation26 + $0x150] sm:$0xff]
    %v6276 = vld [vmem:[#allocation26 + $0x158] sm:$0xf]
    %v6277 = vld [vmem:[#allocation26 + $0x15c] sm:$0xff]
    %v6278 = vld [vmem:[#allocation26 + $0x164] sm:$0xf]
    %v6279 = vld [vmem:[#allocation26 + $0x168] sm:$0xff]
    %v6280 = vld [vmem:[#allocation26 + $0x170] sm:$0xf]
    %v6281 = vld [vmem:[#allocation26 + $0x174] sm:$0xff]
    %v6282 = vld [vmem:[#allocation26 + $0x17c] sm:$0xf]
    %v6283 = vld [vmem:[#allocation26 + $0x180] sm:$0xff]
    %v6284 = vld [vmem:[#allocation26 + $0x188] sm:$0xf]
    %v6285 = vld [vmem:[#allocation26 + $0x18c] sm:$0xff]
    %v6286 = vld [vmem:[#allocation26 + $0x194] sm:$0xf]
    %v6287 = vld [vmem:[#allocation26 + $0x198] sm:$0xff]
    %v6288 = vld [vmem:[#allocation26 + $0x1a0] sm:$0xf]
    %v6289 = vld [vmem:[#allocation26 + $0x1a4] sm:$0xff]
    %v6290 = vld [vmem:[#allocation26 + $0x1ac] sm:$0xf]
    %v6291 = vld [vmem:[#allocation26 + $0x1b0] sm:$0xff]
    %v6292 = vld [vmem:[#allocation26 + $0x1b8] sm:$0xf]
    %v6293 = vld [vmem:[#allocation26 + $0x1bc] sm:$0xff]
    %v6294 = vld [vmem:[#allocation26 + $0x1c4] sm:$0xf]
    %v6295 = vld [vmem:[#allocation26 + $0x1c8] sm:$0xff]
    %v6296 = vld [vmem:[#allocation26 + $0x1d0] sm:$0xf]
    %v6297 = vld [vmem:[#allocation26 + $0x1d4] sm:$0xff]
    %v6298 = vld [vmem:[#allocation26 + $0x1dc] sm:$0xf]
    %v6299 = vld [vmem:[#allocation26 + $0x1e0] sm:$0xff]
    %v6300 = vld [vmem:[#allocation26 + $0x1e8] sm:$0xf]
    %v6301 = vld [vmem:[#allocation26 + $0x1ec] sm:$0xff]
    %v6302 = vld [vmem:[#allocation26 + $0x1f4] sm:$0xf]
    %v6303 = vld [vmem:[#allocation26 + $0x1f8] sm:$0xff]
    %v6304 = vld [vmem:[#allocation26 + $0x200] sm:$0xf]
    %v6305 = vld [vmem:[#allocation26 + $0x204] sm:$0xff]
    %v6306 = vld [vmem:[#allocation26 + $0x20c] sm:$0xf]
    %v6307 = vld [vmem:[#allocation26 + $0x210] sm:$0xff]
    %v6308 = vld [vmem:[#allocation26 + $0x218] sm:$0xf]
    %v6309 = vld [vmem:[#allocation26 + $0x21c] sm:$0xff]
    %v6310 = vld [vmem:[#allocation26 + $0x224] sm:$0xf]
    %v6311 = vld [vmem:[#allocation26 + $0x228] sm:$0xff]
    %v6312 = vld [vmem:[#allocation26 + $0x230] sm:$0xf]
    %v6313 = vld [vmem:[#allocation26 + $0x234] sm:$0xff]
    %v6314 = vld [vmem:[#allocation26 + $0x23c] sm:$0xf]
    %v6315 = vld [vmem:[#allocation26 + $0x240] sm:$0xff]
    %v6316 = vld [vmem:[#allocation26 + $0x248] sm:$0xf]
    %v6317 = vld [vmem:[#allocation26 + $0x24c] sm:$0xff]
    %v6318 = vld [vmem:[#allocation26 + $0x254] sm:$0xf]
    %v6319 = vld [vmem:[#allocation26 + $0x258] sm:$0xff]
    %v6320 = vld [vmem:[#allocation26 + $0x260] sm:$0xf]
    %v6321 = vld [vmem:[#allocation26 + $0x264] sm:$0xff]
    %v6322 = vld [vmem:[#allocation26 + $0x26c] sm:$0xf]
    %v6323 = vld [vmem:[#allocation26 + $0x270] sm:$0xff]
    %v6324 = vld [vmem:[#allocation26 + $0x278] sm:$0xf]
    %v6325 = vld [vmem:[#allocation26 + $0x27c] sm:$0xff]
    %v6326 = vld [vmem:[#allocation26 + $0x284] sm:$0xf]
    %v6327 = vld [vmem:[#allocation26 + $0x288] sm:$0xff]
    %v6328 = vld [vmem:[#allocation26 + $0x290] sm:$0xf]
    %v6329 = vld [vmem:[#allocation26 + $0x294] sm:$0xff]
    %v6330 = vld [vmem:[#allocation26 + $0x29c] sm:$0xf]
    %v6331 = vld [vmem:[#allocation26 + $0x2a0] sm:$0xff]
    %v6332 = vld [vmem:[#allocation26 + $0x2a8] sm:$0xf]
    %v6333 = vld [vmem:[#allocation26 + $0x2ac] sm:$0xff]
    %v6334 = vld [vmem:[#allocation26 + $0x2b4] sm:$0xf]
    %v6335 = vld [vmem:[#allocation26 + $0x2b8] sm:$0xff]
    %v6336 = vld [vmem:[#allocation26 + $0x2c0] sm:$0xf]
    %v6337 = vld [vmem:[#allocation26 + $0x2c4] sm:$0xff]
    %v6338 = vld [vmem:[#allocation26 + $0x2cc] sm:$0xf]
    %v6339 = vld [vmem:[#allocation26 + $0x2d0] sm:$0xff]
    %v6340 = vld [vmem:[#allocation26 + $0x2d8] sm:$0xf]
    %v6341 = vld [vmem:[#allocation26 + $0x2dc] sm:$0xff]
    %v6342 = vld [vmem:[#allocation26 + $0x2e4] sm:$0xf]
    %v6343 = vld [vmem:[#allocation26 + $0x2e8] sm:$0xff]
    %v6344 = vld [vmem:[#allocation26 + $0x2f0] sm:$0xf]
    %v6345 = vld [vmem:[#allocation26 + $0x2f4] sm:$0xff]
    %v6346 = vld [vmem:[#allocation26 + $0x2fc] sm:$0xf]
    %v6347 = vld [vmem:[#allocation26 + $0x300] sm:$0xff]
    %v6348 = vld [vmem:[#allocation26 + $0x308] sm:$0xf]
    %v6349 = vld [vmem:[#allocation26 + $0x30c] sm:$0xff]
    %v6350 = vld [vmem:[#allocation26 + $0x314] sm:$0xf]
    %v6351 = vld [vmem:[#allocation26 + $0x318] sm:$0xff]
    %v6352 = vld [vmem:[#allocation26 + $0x320] sm:$0xf]
    %v6353 = vld [vmem:[#allocation26 + $0x324] sm:$0xff]
    %v6354 = vld [vmem:[#allocation26 + $0x32c] sm:$0xf]
    %v6355 = vld [vmem:[#allocation26 + $0x330] sm:$0xff]
    %v6356 = vld [vmem:[#allocation26 + $0x338] sm:$0xf]
    %v6357 = vld [vmem:[#allocation26 + $0x33c] sm:$0xff]
    %v6358 = vld [vmem:[#allocation26 + $0x344] sm:$0xf]
    %v6359 = vld [vmem:[#allocation26 + $0x348] sm:$0xff]
    %v6360 = vld [vmem:[#allocation26 + $0x350] sm:$0xf]
    %v6361 = vld [vmem:[#allocation26 + $0x354] sm:$0xff]
    %v6362 = vld [vmem:[#allocation26 + $0x35c] sm:$0xf]
    %v6363 = vld [vmem:[#allocation26 + $0x360] sm:$0xff]
    %v6364 = vld [vmem:[#allocation26 + $0x368] sm:$0xf]
    %v6365 = vld [vmem:[#allocation26 + $0x36c] sm:$0xff]
    %v6366 = vld [vmem:[#allocation26 + $0x374] sm:$0xf]
    %v6367 = vld [vmem:[#allocation26 + $0x378] sm:$0xff]
    %v6368 = vld [vmem:[#allocation26 + $0x380] sm:$0xf]
    %v6369 = vld [vmem:[#allocation26 + $0x384] sm:$0xff]
    %v6370 = vld [vmem:[#allocation26 + $0x38c] sm:$0xf]
    %v6371 = vld [vmem:[#allocation26 + $0x390] sm:$0xff]
    %v6372 = vld [vmem:[#allocation26 + $0x398] sm:$0xf]
    %v6373 = vld [vmem:[#allocation26 + $0x39c] sm:$0xff]
    %v6374 = vld [vmem:[#allocation26 + $0x3a4] sm:$0xf]
    %v6375 = vld [vmem:[#allocation26 + $0x3a8] sm:$0xff]
    %v6376 = vld [vmem:[#allocation26 + $0x3b0] sm:$0xf]
    %v6377 = vld [vmem:[#allocation26 + $0x3b4] sm:$0xff]
    %v6378 = vld [vmem:[#allocation26 + $0x3bc] sm:$0xf]
    %v6379 = vld [vmem:[#allocation28] sm:$0x7]
    %v6381 = vlaneseq
    %v6382 = vshrl.u32 %v6381, 7
    %v6383 = vsub.s32 0, %v6382
    %v6384 = vrot.slane %v6379, %v6383
    %v6385 = vlaneseq
    %v6386 = vshrl.u32 %v6385, 7
    %v6387 = vsub.s32 1, %v6386
    %v6388 = vrot.slane %v6379, %v6387
    %v6389 = vlaneseq
    %v6390 = vshrl.u32 %v6389, 7
    %v6391 = vsub.s32 2, %v6390
    %v6392 = vrot.slane %v6379, %v6391
    %v6556 = vunpack.c.l.b16 %v6219
    %v6557 = vunpack.c.h.b16 %v6219
    %v6558 = vunpack.c.l.b16 %v6220
    %v6559 = vunpack.c.l.b16 %v6221
    %v6560 = vunpack.c.h.b16 %v6221
    %v6561 = vunpack.c.l.b16 %v6222
    %v6562 = vunpack.c.l.b16 %v6223
    %v6563 = vunpack.c.h.b16 %v6223
    %v6564 = vunpack.c.l.b16 %v6224
    %v6565 = vunpack.c.l.b16 %v6225
    %v6566 = vunpack.c.h.b16 %v6225
    %v6567 = vunpack.c.l.b16 %v6226
    %v6568 = vunpack.c.l.b16 %v6227
    %v6569 = vunpack.c.h.b16 %v6227
    %v6570 = vunpack.c.l.b16 %v6228
    %v6571 = vunpack.c.l.b16 %v6229
    %v6572 = vunpack.c.h.b16 %v6229
    %v6573 = vunpack.c.l.b16 %v6230
    %v6574 = vunpack.c.l.b16 %v6231
    %v6575 = vunpack.c.h.b16 %v6231
    %v6576 = vunpack.c.l.b16 %v6232
    %v6577 = vunpack.c.l.b16 %v6233
    %v6578 = vunpack.c.h.b16 %v6233
    %v6579 = vunpack.c.l.b16 %v6234
    %v6580 = vunpack.c.l.b16 %v6235
    %v6581 = vunpack.c.h.b16 %v6235
    %v6582 = vunpack.c.l.b16 %v6236
    %v6583 = vunpack.c.l.b16 %v6237
    %v6584 = vunpack.c.h.b16 %v6237
    %v6585 = vunpack.c.l.b16 %v6238
    %v6586 = vunpack.c.l.b16 %v6239
    %v6587 = vunpack.c.h.b16 %v6239
    %v6588 = vunpack.c.l.b16 %v6240
    %v6589 = vunpack.c.l.b16 %v6241
    %v6590 = vunpack.c.h.b16 %v6241
    %v6591 = vunpack.c.l.b16 %v6242
    %v6592 = vunpack.c.l.b16 %v6243
    %v6593 = vunpack.c.h.b16 %v6243
    %v6594 = vunpack.c.l.b16 %v6244
    %v6595 = vunpack.c.l.b16 %v6245
    %v6596 = vunpack.c.h.b16 %v6245
    %v6597 = vunpack.c.l.b16 %v6246
    %v6598 = vunpack.c.l.b16 %v6247
    %v6599 = vunpack.c.h.b16 %v6247
    %v6600 = vunpack.c.l.b16 %v6248
    %v6601 = vunpack.c.l.b16 %v6249
    %v6602 = vunpack.c.h.b16 %v6249
    %v6603 = vunpack.c.l.b16 %v6250
    %v6604 = vunpack.c.l.b16 %v6251
    %v6605 = vunpack.c.h.b16 %v6251
    %v6606 = vunpack.c.l.b16 %v6252
    %v6607 = vunpack.c.l.b16 %v6253
    %v6608 = vunpack.c.h.b16 %v6253
    %v6609 = vunpack.c.l.b16 %v6254
    %v6610 = vunpack.c.l.b16 %v6255
    %v6611 = vunpack.c.h.b16 %v6255
    %v6612 = vunpack.c.l.b16 %v6256
    %v6613 = vunpack.c.l.b16 %v6257
    %v6614 = vunpack.c.h.b16 %v6257
    %v6615 = vunpack.c.l.b16 %v6258
    %v6616 = vunpack.c.l.b16 %v6259
    %v6617 = vunpack.c.h.b16 %v6259
    %v6618 = vunpack.c.l.b16 %v6260
    %v6619 = vunpack.c.l.b16 %v6261
    %v6620 = vunpack.c.h.b16 %v6261
    %v6621 = vunpack.c.l.b16 %v6262
    %v6622 = vunpack.c.l.b16 %v6263
    %v6623 = vunpack.c.h.b16 %v6263
    %v6624 = vunpack.c.l.b16 %v6264
    %v6625 = vunpack.c.l.b16 %v6265
    %v6626 = vunpack.c.h.b16 %v6265
    %v6627 = vunpack.c.l.b16 %v6266
    %v6628 = vunpack.c.l.b16 %v6267
    %v6629 = vunpack.c.h.b16 %v6267
    %v6630 = vunpack.c.l.b16 %v6268
    %v6631 = vunpack.c.l.b16 %v6269
    %v6632 = vunpack.c.h.b16 %v6269
    %v6633 = vunpack.c.l.b16 %v6270
    %v6634 = vunpack.c.l.b16 %v6271
    %v6635 = vunpack.c.h.b16 %v6271
    %v6636 = vunpack.c.l.b16 %v6272
    %v6637 = vunpack.c.l.b16 %v6273
    %v6638 = vunpack.c.h.b16 %v6273
    %v6639 = vunpack.c.l.b16 %v6274
    %v6640 = vunpack.c.l.b16 %v6275
    %v6641 = vunpack.c.h.b16 %v6275
    %v6642 = vunpack.c.l.b16 %v6276
    %v6643 = vunpack.c.l.b16 %v6277
    %v6644 = vunpack.c.h.b16 %v6277
    %v6645 = vunpack.c.l.b16 %v6278
    %v6646 = vunpack.c.l.b16 %v6279
    %v6647 = vunpack.c.h.b16 %v6279
    %v6648 = vunpack.c.l.b16 %v6280
    %v6649 = vunpack.c.l.b16 %v6281
    %v6650 = vunpack.c.h.b16 %v6281
    %v6651 = vunpack.c.l.b16 %v6282
    %v6652 = vunpack.c.l.b16 %v6283
    %v6653 = vunpack.c.h.b16 %v6283
    %v6654 = vunpack.c.l.b16 %v6284
    %v6655 = vunpack.c.l.b16 %v6285
    %v6656 = vunpack.c.h.b16 %v6285
    %v6657 = vunpack.c.l.b16 %v6286
    %v6658 = vunpack.c.l.b16 %v6287
    %v6659 = vunpack.c.h.b16 %v6287
    %v6660 = vunpack.c.l.b16 %v6288
    %v6661 = vunpack.c.l.b16 %v6289
    %v6662 = vunpack.c.h.b16 %v6289
    %v6663 = vunpack.c.l.b16 %v6290
    %v6664 = vunpack.c.l.b16 %v6291
    %v6665 = vunpack.c.h.b16 %v6291
    %v6666 = vunpack.c.l.b16 %v6292
    %v6667 = vunpack.c.l.b16 %v6293
    %v6668 = vunpack.c.h.b16 %v6293
    %v6669 = vunpack.c.l.b16 %v6294
    %v6670 = vunpack.c.l.b16 %v6295
    %v6671 = vunpack.c.h.b16 %v6295
    %v6672 = vunpack.c.l.b16 %v6296
    %v6673 = vunpack.c.l.b16 %v6297
    %v6674 = vunpack.c.h.b16 %v6297
    %v6675 = vunpack.c.l.b16 %v6298
    %v6676 = vunpack.c.l.b16 %v6299
    %v6677 = vunpack.c.h.b16 %v6299
    %v6678 = vunpack.c.l.b16 %v6300
    %v6679 = vunpack.c.l.b16 %v6301
    %v6680 = vunpack.c.h.b16 %v6301
    %v6681 = vunpack.c.l.b16 %v6302
    %v6682 = vunpack.c.l.b16 %v6303
    %v6683 = vunpack.c.h.b16 %v6303
    %v6684 = vunpack.c.l.b16 %v6304
    %v6685 = vunpack.c.l.b16 %v6305
    %v6686 = vunpack.c.h.b16 %v6305
    %v6687 = vunpack.c.l.b16 %v6306
    %v6688 = vunpack.c.l.b16 %v6307
    %v6689 = vunpack.c.h.b16 %v6307
    %v6690 = vunpack.c.l.b16 %v6308
    %v6691 = vunpack.c.l.b16 %v6309
    %v6692 = vunpack.c.h.b16 %v6309
    %v6693 = vunpack.c.l.b16 %v6310
    %v6694 = vunpack.c.l.b16 %v6311
    %v6695 = vunpack.c.h.b16 %v6311
    %v6696 = vunpack.c.l.b16 %v6312
    %v6697 = vunpack.c.l.b16 %v6313
    %v6698 = vunpack.c.h.b16 %v6313
    %v6699 = vunpack.c.l.b16 %v6314
    %v6700 = vunpack.c.l.b16 %v6315
    %v6701 = vunpack.c.h.b16 %v6315
    %v6702 = vunpack.c.l.b16 %v6316
    %v6703 = vunpack.c.l.b16 %v6317
    %v6704 = vunpack.c.h.b16 %v6317
    %v6705 = vunpack.c.l.b16 %v6318
    %v6706 = vunpack.c.l.b16 %v6319
    %v6707 = vunpack.c.h.b16 %v6319
    %v6708 = vunpack.c.l.b16 %v6320
    %v6709 = vunpack.c.l.b16 %v6321
    %v6710 = vunpack.c.h.b16 %v6321
    %v6711 = vunpack.c.l.b16 %v6322
    %v6712 = vunpack.c.l.b16 %v6323
    %v6713 = vunpack.c.h.b16 %v6323
    %v6714 = vunpack.c.l.b16 %v6324
    %v6715 = vunpack.c.l.b16 %v6325
    %v6716 = vunpack.c.h.b16 %v6325
    %v6717 = vunpack.c.l.b16 %v6326
    %v6718 = vunpack.c.l.b16 %v6327
    %v6719 = vunpack.c.h.b16 %v6327
    %v6720 = vunpack.c.l.b16 %v6328
    %v6721 = vunpack.c.l.b16 %v6329
    %v6722 = vunpack.c.h.b16 %v6329
    %v6723 = vunpack.c.l.b16 %v6330
    %v6724 = vunpack.c.l.b16 %v6331
    %v6725 = vunpack.c.h.b16 %v6331
    %v6726 = vunpack.c.l.b16 %v6332
    %v6727 = vunpack.c.l.b16 %v6333
    %v6728 = vunpack.c.h.b16 %v6333
    %v6729 = vunpack.c.l.b16 %v6334
    %v6730 = vunpack.c.l.b16 %v6335
    %v6731 = vunpack.c.h.b16 %v6335
    %v6732 = vunpack.c.l.b16 %v6336
    %v6733 = vunpack.c.l.b16 %v6337
    %v6734 = vunpack.c.h.b16 %v6337
    %v6735 = vunpack.c.l.b16 %v6338
    %v6736 = vunpack.c.l.b16 %v6339
    %v6737 = vunpack.c.h.b16 %v6339
    %v6738 = vunpack.c.l.b16 %v6340
    %v6739 = vunpack.c.l.b16 %v6341
    %v6740 = vunpack.c.h.b16 %v6341
    %v6741 = vunpack.c.l.b16 %v6342
    %v6742 = vunpack.c.l.b16 %v6343
    %v6743 = vunpack.c.h.b16 %v6343
    %v6744 = vunpack.c.l.b16 %v6344
    %v6745 = vunpack.c.l.b16 %v6345
    %v6746 = vunpack.c.h.b16 %v6345
    %v6747 = vunpack.c.l.b16 %v6346
    %v6748 = vunpack.c.l.b16 %v6347
    %v6749 = vunpack.c.h.b16 %v6347
    %v6750 = vunpack.c.l.b16 %v6348
    %v6751 = vunpack.c.l.b16 %v6349
    %v6752 = vunpack.c.h.b16 %v6349
    %v6753 = vunpack.c.l.b16 %v6350
    %v6754 = vunpack.c.l.b16 %v6351
    %v6755 = vunpack.c.h.b16 %v6351
    %v6756 = vunpack.c.l.b16 %v6352
    %v6757 = vunpack.c.l.b16 %v6353
    %v6758 = vunpack.c.h.b16 %v6353
    %v6759 = vunpack.c.l.b16 %v6354
    %v6760 = vunpack.c.l.b16 %v6355
    %v6761 = vunpack.c.h.b16 %v6355
    %v6762 = vunpack.c.l.b16 %v6356
    %v6763 = vunpack.c.l.b16 %v6357
    %v6764 = vunpack.c.h.b16 %v6357
    %v6765 = vunpack.c.l.b16 %v6358
    %v6766 = vunpack.c.l.b16 %v6359
    %v6767 = vunpack.c.h.b16 %v6359
    %v6768 = vunpack.c.l.b16 %v6360
    %v6769 = vunpack.c.l.b16 %v6361
    %v6770 = vunpack.c.h.b16 %v6361
    %v6771 = vunpack.c.l.b16 %v6362
    %v6772 = vunpack.c.l.b16 %v6363
    %v6773 = vunpack.c.h.b16 %v6363
    %v6774 = vunpack.c.l.b16 %v6364
    %v6775 = vunpack.c.l.b16 %v6365
    %v6776 = vunpack.c.h.b16 %v6365
    %v6777 = vunpack.c.l.b16 %v6366
    %v6778 = vunpack.c.l.b16 %v6367
    %v6779 = vunpack.c.h.b16 %v6367
    %v6780 = vunpack.c.l.b16 %v6368
    %v6781 = vunpack.c.l.b16 %v6369
    %v6782 = vunpack.c.h.b16 %v6369
    %v6783 = vunpack.c.l.b16 %v6370
    %v6784 = vunpack.c.l.b16 %v6371
    %v6785 = vunpack.c.h.b16 %v6371
    %v6786 = vunpack.c.l.b16 %v6372
    %v6787 = vunpack.c.l.b16 %v6373
    %v6788 = vunpack.c.h.b16 %v6373
    %v6789 = vunpack.c.l.b16 %v6374
    %v6790 = vunpack.c.l.b16 %v6375
    %v6791 = vunpack.c.h.b16 %v6375
    %v6792 = vunpack.c.l.b16 %v6376
    %v6793 = vunpack.c.l.b16 %v6377
    %v6794 = vunpack.c.h.b16 %v6377
    %v6795 = vunpack.c.l.b16 %v6378
    %v6796 = vpack.c.b16 %v6559, %v6556
    %v6797 = vpack.c.b16 %v6560, %v6557
    %v6798 = vpack.c.b16 %v6561, %v6558
    %v6799 = vpack.c.b16 %v6565, %v6562
    %v6800 = vpack.c.b16 %v6566, %v6563
    %v6801 = vpack.c.b16 %v6567, %v6564
    %v6802 = vpack.c.b16 %v6571, %v6568
    %v6803 = vpack.c.b16 %v6572, %v6569
    %v6804 = vpack.c.b16 %v6573, %v6570
    %v6805 = vpack.c.b16 %v6577, %v6574
    %v6806 = vpack.c.b16 %v6578, %v6575
    %v6807 = vpack.c.b16 %v6579, %v6576
    %v6808 = vpack.c.b16 %v6583, %v6580
    %v6809 = vpack.c.b16 %v6584, %v6581
    %v6810 = vpack.c.b16 %v6585, %v6582
    %v6811 = vpack.c.b16 %v6589, %v6586
    %v6812 = vpack.c.b16 %v6590, %v6587
    %v6813 = vpack.c.b16 %v6591, %v6588
    %v6814 = vpack.c.b16 %v6595, %v6592
    %v6815 = vpack.c.b16 %v6596, %v6593
    %v6816 = vpack.c.b16 %v6597, %v6594
    %v6817 = vpack.c.b16 %v6601, %v6598
    %v6818 = vpack.c.b16 %v6602, %v6599
    %v6819 = vpack.c.b16 %v6603, %v6600
    %v6820 = vpack.c.b16 %v6607, %v6604
    %v6821 = vpack.c.b16 %v6608, %v6605
    %v6822 = vpack.c.b16 %v6609, %v6606
    %v6823 = vpack.c.b16 %v6613, %v6610
    %v6824 = vpack.c.b16 %v6614, %v6611
    %v6825 = vpack.c.b16 %v6615, %v6612
    %v6826 = vpack.c.b16 %v6619, %v6616
    %v6827 = vpack.c.b16 %v6620, %v6617
    %v6828 = vpack.c.b16 %v6621, %v6618
    %v6829 = vpack.c.b16 %v6625, %v6622
    %v6830 = vpack.c.b16 %v6626, %v6623
    %v6831 = vpack.c.b16 %v6627, %v6624
    %v6832 = vpack.c.b16 %v6631, %v6628
    %v6833 = vpack.c.b16 %v6632, %v6629
    %v6834 = vpack.c.b16 %v6633, %v6630
    %v6835 = vpack.c.b16 %v6637, %v6634
    %v6836 = vpack.c.b16 %v6638, %v6635
    %v6837 = vpack.c.b16 %v6639, %v6636
    %v6838 = vpack.c.b16 %v6643, %v6640
    %v6839 = vpack.c.b16 %v6644, %v6641
    %v6840 = vpack.c.b16 %v6645, %v6642
    %v6841 = vpack.c.b16 %v6649, %v6646
    %v6842 = vpack.c.b16 %v6650, %v6647
    %v6843 = vpack.c.b16 %v6651, %v6648
    %v6844 = vpack.c.b16 %v6655, %v6652
    %v6845 = vpack.c.b16 %v6656, %v6653
    %v6846 = vpack.c.b16 %v6657, %v6654
    %v6847 = vpack.c.b16 %v6661, %v6658
    %v6848 = vpack.c.b16 %v6662, %v6659
    %v6849 = vpack.c.b16 %v6663, %v6660
    %v6850 = vpack.c.b16 %v6667, %v6664
    %v6851 = vpack.c.b16 %v6668, %v6665
    %v6852 = vpack.c.b16 %v6669, %v6666
    %v6853 = vpack.c.b16 %v6673, %v6670
    %v6854 = vpack.c.b16 %v6674, %v6671
    %v6855 = vpack.c.b16 %v6675, %v6672
    %v6856 = vpack.c.b16 %v6679, %v6676
    %v6857 = vpack.c.b16 %v6680, %v6677
    %v6858 = vpack.c.b16 %v6681, %v6678
    %v6859 = vpack.c.b16 %v6685, %v6682
    %v6860 = vpack.c.b16 %v6686, %v6683
    %v6861 = vpack.c.b16 %v6687, %v6684
    %v6862 = vpack.c.b16 %v6691, %v6688
    %v6863 = vpack.c.b16 %v6692, %v6689
    %v6864 = vpack.c.b16 %v6693, %v6690
    %v6865 = vpack.c.b16 %v6697, %v6694
    %v6866 = vpack.c.b16 %v6698, %v6695
    %v6867 = vpack.c.b16 %v6699, %v6696
    %v6868 = vpack.c.b16 %v6703, %v6700
    %v6869 = vpack.c.b16 %v6704, %v6701
    %v6870 = vpack.c.b16 %v6705, %v6702
    %v6871 = vpack.c.b16 %v6709, %v6706
    %v6872 = vpack.c.b16 %v6710, %v6707
    %v6873 = vpack.c.b16 %v6711, %v6708
    %v6874 = vpack.c.b16 %v6715, %v6712
    %v6875 = vpack.c.b16 %v6716, %v6713
    %v6876 = vpack.c.b16 %v6717, %v6714
    %v6877 = vpack.c.b16 %v6721, %v6718
    %v6878 = vpack.c.b16 %v6722, %v6719
    %v6879 = vpack.c.b16 %v6723, %v6720
    %v6880 = vpack.c.b16 %v6727, %v6724
    %v6881 = vpack.c.b16 %v6728, %v6725
    %v6882 = vpack.c.b16 %v6729, %v6726
    %v6883 = vpack.c.b16 %v6733, %v6730
    %v6884 = vpack.c.b16 %v6734, %v6731
    %v6885 = vpack.c.b16 %v6735, %v6732
    %v6886 = vpack.c.b16 %v6739, %v6736
    %v6887 = vpack.c.b16 %v6740, %v6737
    %v6888 = vpack.c.b16 %v6741, %v6738
    %v6889 = vpack.c.b16 %v6745, %v6742
    %v6890 = vpack.c.b16 %v6746, %v6743
    %v6891 = vpack.c.b16 %v6747, %v6744
    %v6892 = vpack.c.b16 %v6751, %v6748
    %v6893 = vpack.c.b16 %v6752, %v6749
    %v6894 = vpack.c.b16 %v6753, %v6750
    %v6895 = vpack.c.b16 %v6757, %v6754
    %v6896 = vpack.c.b16 %v6758, %v6755
    %v6897 = vpack.c.b16 %v6759, %v6756
    %v6898 = vpack.c.b16 %v6763, %v6760
    %v6899 = vpack.c.b16 %v6764, %v6761
    %v6900 = vpack.c.b16 %v6765, %v6762
    %v6901 = vpack.c.b16 %v6769, %v6766
    %v6902 = vpack.c.b16 %v6770, %v6767
    %v6903 = vpack.c.b16 %v6771, %v6768
    %v6904 = vpack.c.b16 %v6775, %v6772
    %v6905 = vpack.c.b16 %v6776, %v6773
    %v6906 = vpack.c.b16 %v6777, %v6774
    %v6907 = vpack.c.b16 %v6781, %v6778
    %v6908 = vpack.c.b16 %v6782, %v6779
    %v6909 = vpack.c.b16 %v6783, %v6780
    %v6910 = vpack.c.b16 %v6787, %v6784
    %v6911 = vpack.c.b16 %v6788, %v6785
    %v6912 = vpack.c.b16 %v6789, %v6786
    %v6913 = vpack.c.b16 %v6793, %v6790
    %v6914 = vpack.c.b16 %v6794, %v6791
    %v6915 = vpack.c.b16 %v6795, %v6792
    %7036 = vmatprep.subr.bf16.mxu0 %v6797
    %7037 = vmatpush1.bf16.msra.mxu0 %v6796
    %7038 = vmatprep.subr.bf16.mxu0 %v6800
    %7039 = vmatpush1.bf16.msra.mxu0 %v6799
    %7040 = vmatprep.subr.bf16.mxu0 %v6803
    %7041 = vmatpush1.bf16.msra.mxu0 %v6802
    %7042 = vmatprep.subr.bf16.mxu0 %v6806
    %7043 = vmatpush1.bf16.msra.mxu0 %v6805
    %7044 = vmatprep.subr.bf16.mxu0 %v6809
    %7045 = vmatpush1.bf16.msra.mxu0 %v6808
    %7046 = vmatprep.subr.bf16.mxu0 %v6812
    %7047 = vmatpush1.bf16.msra.mxu0 %v6811
    %7048 = vmatprep.subr.bf16.mxu0 %v6815
    %7049 = vmatpush1.bf16.msra.mxu0 %v6814
    %7050 = vmatprep.subr.bf16.mxu0 %v6818
    %7051 = vmatpush1.bf16.msra.mxu0 %v6817
    %7052 = vmatprep.subr.bf16.mxu0 %v6821
    %7053 = vmatpush1.bf16.msra.mxu0 %v6820
    %7054 = vmatprep.subr.bf16.mxu0 %v6824
    %7055 = vmatpush1.bf16.msra.mxu0 %v6823
    %7056 = vmatprep.subr.bf16.mxu0 %v6827
    %7057 = vmatpush1.bf16.msra.mxu0 %v6826
    %7058 = vmatprep.subr.bf16.mxu0 %v6830
    %7059 = vmatpush1.bf16.msra.mxu0 %v6829
    %7060 = vmatprep.subr.bf16.mxu0 %v6833
    %7061 = vmatpush1.bf16.msra.mxu0 %v6832
    %7062 = vmatprep.subr.bf16.mxu0 %v6836
    %7063 = vmatpush1.bf16.msra.mxu0 %v6835
    %7064 = vmatprep.subr.bf16.mxu0 %v6839
    %7065 = vmatpush1.bf16.msra.mxu0 %v6838
    %7066 = vmatprep.subr.bf16.mxu0 %v6842
    %7067 = vmatpush1.bf16.msra.mxu0 %v6841
    %7068 = vmatprep.mubr.bf16.mxu0 %v6215
    %7069 = vmatmul.mubr.bf16.gmra.mrb[0].mxu0 %v6214
    %v7070 = vpop.f32.mrb[0].mxu0
    %v7071 = vadd.f32 %v6384, %v7070
    %v7072 = vpop.f32.mrb[0].mxu0
    %v7073 = vadd.f32 %v6388, %v7072
    %v7074 = vpop.f32.mrb[0].mxu0
    %v7075 = vpop.f32.mrb[0].mxu0
    %7076 = vdwg.mxu0
    %7077 = vmatprep.subr.bf16.mxu0 %v6845
    %7078 = vmatpush1.bf16.msra.mxu0 %v6844
    %7079 = vmatprep.subr.bf16.mxu0 %v6848
    %7080 = vmatpush1.bf16.msra.mxu0 %v6847
    %7081 = vmatprep.subr.bf16.mxu0 %v6851
    %7082 = vmatpush1.bf16.msra.mxu0 %v6850
    %7083 = vmatprep.subr.bf16.mxu0 %v6854
    %7084 = vmatpush1.bf16.msra.mxu0 %v6853
    %7085 = vmatprep.subr.bf16.mxu0 %v6857
    %7086 = vmatpush1.bf16.msra.mxu0 %v6856
    %7087 = vmatprep.subr.bf16.mxu0 %v6860
    %7088 = vmatpush1.bf16.msra.mxu0 %v6859
    %7089 = vmatprep.subr.bf16.mxu0 %v6863
    %7090 = vmatpush1.bf16.msra.mxu0 %v6862
    %7091 = vmatprep.subr.bf16.mxu0 %v6866
    %7092 = vmatpush1.bf16.msra.mxu0 %v6865
    %7093 = vmatprep.subr.bf16.mxu0 %v6869
    %7094 = vmatpush1.bf16.msra.mxu0 %v6868
    %7095 = vmatprep.subr.bf16.mxu0 %v6872
    %7096 = vmatpush1.bf16.msra.mxu0 %v6871
    %7097 = vmatprep.subr.bf16.mxu0 %v6875
    %7098 = vmatpush1.bf16.msra.mxu0 %v6874
    %7099 = vmatprep.subr.bf16.mxu0 %v6878
    %7100 = vmatpush1.bf16.msra.mxu0 %v6877
    %7101 = vmatprep.subr.bf16.mxu0 %v6881
    %7102 = vmatpush1.bf16.msra.mxu0 %v6880
    %7103 = vmatprep.subr.bf16.mxu0 %v6884
    %7104 = vmatpush1.bf16.msra.mxu0 %v6883
    %7105 = vmatprep.subr.bf16.mxu0 %v6887
    %7106 = vmatpush1.bf16.msra.mxu0 %v6886
    %7107 = vmatprep.subr.bf16.mxu0 %v6890
    %7108 = vmatpush1.bf16.msra.mxu0 %v6889
    %7109 = vmatprep.mubr.bf16.mxu0 %v6217
    %7110 = vmatmul.mubr.bf16.gmra.mrb[0].mxu0 %v6216
    %v7111 = vpop.f32.mrb[0].mxu0
    %v7112 = vadd.f32 %v7071, %v7111
    %v7113 = vpop.f32.mrb[0].mxu0
    %v7114 = vadd.f32 %v7073, %v7113
    %v7115 = vpop.f32.mrb[0].mxu0
    %v7116 = vpop.f32.mrb[0].mxu0
    %7117 = vdwg.mxu0
    %7118 = vmatprep.subr.bf16.mxu0 %v6893
    %7119 = vmatpush1.bf16.msra.mxu0 %v6892
    %7120 = vmatprep.subr.bf16.mxu0 %v6896
    %7121 = vmatpush1.bf16.msra.mxu0 %v6895
    %7122 = vmatprep.subr.bf16.mxu0 %v6899
    %7123 = vmatpush1.bf16.msra.mxu0 %v6898
    %7124 = vmatprep.subr.bf16.mxu0 %v6902
    %7125 = vmatpush1.bf16.msra.mxu0 %v6901
    %7126 = vmatprep.subr.bf16.mxu0 %v6905
    %7127 = vmatpush1.bf16.msra.mxu0 %v6904
    %7128 = vmatprep.subr.bf16.mxu0 %v6908
    %7129 = vmatpush1.bf16.msra.mxu0 %v6907
    %7130 = vmatprep.subr.bf16.mxu0 %v6911
    %7131 = vmatpush1.bf16.msra.mxu0 %v6910
    %7132 = vmatprep.subr.bf16.mxu0 %v6914
    %7133 = vmatpush1.bf16.msra.mxu0 %v6913
    %7134 = vmatprep.subr.bf16.mxu0 0
    %7135 = vmatpush1.bf16.msra.mxu0 0
    %7136 = vmatprep.subr.bf16.mxu0 0
    %7137 = vmatpush1.bf16.msra.mxu0 0
    %7138 = vmatprep.subr.bf16.mxu0 0
    %7139 = vmatpush1.bf16.msra.mxu0 0
    %7140 = vmatprep.subr.bf16.mxu0 0
    %7141 = vmatpush1.bf16.msra.mxu0 0
    %7142 = vmatprep.subr.bf16.mxu0 0
    %7143 = vmatpush1.bf16.msra.mxu0 0
    %7144 = vmatprep.subr.bf16.mxu0 0
    %7145 = vmatpush1.bf16.msra.mxu0 0
    %7146 = vmatprep.subr.bf16.mxu0 0
    %7147 = vmatpush1.bf16.msra.mxu0 0
    %7148 = vmatprep.subr.bf16.mxu0 0
    %7149 = vmatpush1.bf16.msra.mxu0 0
    %7150 = vmatprep.mubr.bf16.mxu0 0
    %7151 = vmatmul.mubr.bf16.gmra.mrb[0].mxu0 %v6218
    %v7152 = vpop.f32.mrb[0].mxu0
    %v7153 = vadd.f32 %v7112, %v7152
    %v7154 = vpop.f32.mrb[0].mxu0
    %v7155 = vadd.f32 %v7114, %v7154
    %v7156 = vpop.f32.mrb[0].mxu0
    %v7157 = vpop.f32.mrb[0].mxu0
    %7158 = vdwg.mxu0
    %7159 = vmatprep.subr.bf16.mxu0 0
    %7160 = vmatpush1.bf16.msra.mxu0 %v6798
    %7161 = vmatprep.subr.bf16.mxu0 0
    %7162 = vmatpush1.bf16.msra.mxu0 %v6801
    %7163 = vmatprep.subr.bf16.mxu0 0
    %7164 = vmatpush1.bf16.msra.mxu0 %v6804
    %7165 = vmatprep.subr.bf16.mxu0 0
    %7166 = vmatpush1.bf16.msra.mxu0 %v6807
    %7167 = vmatprep.subr.bf16.mxu0 0
    %7168 = vmatpush1.bf16.msra.mxu0 %v6810
    %7169 = vmatprep.subr.bf16.mxu0 0
    %7170 = vmatpush1.bf16.msra.mxu0 %v6813
    %7171 = vmatprep.subr.bf16.mxu0 0
    %7172 = vmatpush1.bf16.msra.mxu0 %v6816
    %7173 = vmatprep.subr.bf16.mxu0 0
    %7174 = vmatpush1.bf16.msra.mxu0 %v6819
    %7175 = vmatprep.subr.bf16.mxu0 0
    %7176 = vmatpush1.bf16.msra.mxu0 %v6822
    %7177 = vmatprep.subr.bf16.mxu0 0
    %7178 = vmatpush1.bf16.msra.mxu0 %v6825
    %7179 = vmatprep.subr.bf16.mxu0 0
    %7180 = vmatpush1.bf16.msra.mxu0 %v6828
    %7181 = vmatprep.subr.bf16.mxu0 0
    %7182 = vmatpush1.bf16.msra.mxu0 %v6831
    %7183 = vmatprep.subr.bf16.mxu0 0
    %7184 = vmatpush1.bf16.msra.mxu0 %v6834
    %7185 = vmatprep.subr.bf16.mxu0 0
    %7186 = vmatpush1.bf16.msra.mxu0 %v6837
    %7187 = vmatprep.subr.bf16.mxu0 0
    %7188 = vmatpush1.bf16.msra.mxu0 %v6840
    %7189 = vmatprep.subr.bf16.mxu0 0
    %7190 = vmatpush1.bf16.msra.mxu0 %v6843
    %7191 = vmatprep.mubr.bf16.mxu0 %v6215
    %7192 = vmatmul.mubr.bf16.gmra.mrb[0].mxu0 %v6214
    %v7193 = vpop.f32.mrb[0].mxu0
    %v7194 = vadd.f32 %v6392, %v7193
    %v7195 = vpop.f32.mrb[0].mxu0
    %v7196 = vpop.f32.mrb[0].mxu0
    %v7197 = vpop.f32.mrb[0].mxu0
    %7198 = vdwg.mxu0
    %7199 = vmatprep.subr.bf16.mxu0 0
    %7200 = vmatpush1.bf16.msra.mxu0 %v6846
    %7201 = vmatprep.subr.bf16.mxu0 0
    %7202 = vmatpush1.bf16.msra.mxu0 %v6849
    %7203 = vmatprep.subr.bf16.mxu0 0
    %7204 = vmatpush1.bf16.msra.mxu0 %v6852
    %7205 = vmatprep.subr.bf16.mxu0 0
    %7206 = vmatpush1.bf16.msra.mxu0 %v6855
    %7207 = vmatprep.subr.bf16.mxu0 0
    %7208 = vmatpush1.bf16.msra.mxu0 %v6858
    %7209 = vmatprep.subr.bf16.mxu0 0
    %7210 = vmatpush1.bf16.msra.mxu0 %v6861
    %7211 = vmatprep.subr.bf16.mxu0 0
    %7212 = vmatpush1.bf16.msra.mxu0 %v6864
    %7213 = vmatprep.subr.bf16.mxu0 0
    %7214 = vmatpush1.bf16.msra.mxu0 %v6867
    %7215 = vmatprep.subr.bf16.mxu0 0
    %7216 = vmatpush1.bf16.msra.mxu0 %v6870
    %7217 = vmatprep.subr.bf16.mxu0 0
    %7218 = vmatpush1.bf16.msra.mxu0 %v6873
    %7219 = vmatprep.subr.bf16.mxu0 0
    %7220 = vmatpush1.bf16.msra.mxu0 %v6876
    %7221 = vmatprep.subr.bf16.mxu0 0
    %7222 = vmatpush1.bf16.msra.mxu0 %v6879
    %7223 = vmatprep.subr.bf16.mxu0 0
    %7224 = vmatpush1.bf16.msra.mxu0 %v6882
    %7225 = vmatprep.subr.bf16.mxu0 0
    %7226 = vmatpush1.bf16.msra.mxu0 %v6885
    %7227 = vmatprep.subr.bf16.mxu0 0
    %7228 = vmatpush1.bf16.msra.mxu0 %v6888
    %7229 = vmatprep.subr.bf16.mxu0 0
    %7230 = vmatpush1.bf16.msra.mxu0 %v6891
    %7231 = vmatprep.mubr.bf16.mxu0 %v6217
    %7232 = vmatmul.mubr.bf16.gmra.mrb[0].mxu0 %v6216
    %v7233 = vpop.f32.mrb[0].mxu0
    %v7234 = vadd.f32 %v7194, %v7233
    %v7235 = vpop.f32.mrb[0].mxu0
    %v7236 = vpop.f32.mrb[0].mxu0
    %v7237 = vpop.f32.mrb[0].mxu0
    %7238 = vdwg.mxu0
    %7239 = vmatprep.subr.bf16.mxu0 0
    %7240 = vmatpush1.bf16.msra.mxu0 %v6894
    %7241 = vmatprep.subr.bf16.mxu0 0
    %7242 = vmatpush1.bf16.msra.mxu0 %v6897
    %7243 = vmatprep.subr.bf16.mxu0 0
    %7244 = vmatpush1.bf16.msra.mxu0 %v6900
    %7245 = vmatprep.subr.bf16.mxu0 0
    %7246 = vmatpush1.bf16.msra.mxu0 %v6903
    %7247 = vmatprep.subr.bf16.mxu0 0
    %7248 = vmatpush1.bf16.msra.mxu0 %v6906
    %7249 = vmatprep.subr.bf16.mxu0 0
    %7250 = vmatpush1.bf16.msra.mxu0 %v6909
    %7251 = vmatprep.subr.bf16.mxu0 0
    %7252 = vmatpush1.bf16.msra.mxu0 %v6912
    %7253 = vmatprep.subr.bf16.mxu0 0
    %7254 = vmatpush1.bf16.msra.mxu0 %v6915
    %7255 = vmatprep.subr.bf16.mxu0 0
    %7256 = vmatpush1.bf16.msra.mxu0 0
    %7257 = vmatprep.subr.bf16.mxu0 0
    %7258 = vmatpush1.bf16.msra.mxu0 0
    %7259 = vmatprep.subr.bf16.mxu0 0
    %7260 = vmatpush1.bf16.msra.mxu0 0
    %7261 = vmatprep.subr.bf16.mxu0 0
    %7262 = vmatpush1.bf16.msra.mxu0 0
    %7263 = vmatprep.subr.bf16.mxu0 0
    %7264 = vmatpush1.bf16.msra.mxu0 0
    %7265 = vmatprep.subr.bf16.mxu0 0
    %7266 = vmatpush1.bf16.msra.mxu0 0
    %7267 = vmatprep.subr.bf16.mxu0 0
    %7268 = vmatpush1.bf16.msra.mxu0 0
    %7269 = vmatprep.subr.bf16.mxu0 0
    %7270 = vmatpush1.bf16.msra.mxu0 0
    %7271 = vmatprep.mubr.bf16.mxu0 0
    %7272 = vmatmul.mubr.bf16.gmra.mrb[0].mxu0 %v6218
    %v7273 = vpop.f32.mrb[0].mxu0
    %v7274 = vadd.f32 %v7234, %v7273
    %v7275 = vpop.f32.mrb[0].mxu0
    %v7276 = vpop.f32.mrb[0].mxu0
    %v7277 = vpop.f32.mrb[0].mxu0
    %7278 = vdwg.mxu0
    %v7279 = vsub.f32 0.0, %v7153
    %v7280 = vsub.f32 0.0, %v7155
    %v7281 = vsub.f32 0.0, %v7274
    %v7282 = vmul.f32 %v7279, 1.442695
    %v7283 = vpow.pop %v7282
    %v7284 = vmul.f32 %v7280, 1.442695
    %v7285 = vpow.pop %v7284
    %v7286 = vmul.f32 %v7281, 1.442695
    %v7287 = vpow.pop %v7286
    %v7288 = vadd.f32 %v7283, 1.0
    %v7289 = vadd.f32 %v7285, 1.0
    %v7290 = vadd.f32 %v7287, 1.0
    %v7291 = vrcp.pop %v7288
    %v7292 = vrcp.pop %v7289
    %v7293 = vrcp.pop %v7290
    %v7294 = vpack.c.bf16 %v7291, %v7291
    %v7295 = vpack.c.bf16 %v7292, %v7292
    %v7296 = vpack.c.bf16 %v7293, %v7293
    %v7300 = vunpack.c.l.b16 %v7294
    %v7301 = vunpack.c.l.b16 %v7295
    %v7302 = vunpack.c.l.b16 %v7296
    %v7303 = vpack.c.b16 %v7301, %v7300
    %v7304 = vpack.c.b16 %v7302, %v7302
    %7307 = vst [vmem:[#allocation36] sm:$0xff] %v7303
    %7308 = vst [vmem:[#allocation36 + $0x8] sm:$0xf] %v7304
    %7309 = vrot.lane.b32.xlu0 %v3850, 20
    %v7310 = vpop.permute.xlu0 %7309
    %v7312 = vadd.f32 %v3858, %v7310
    %v7313 = vpack.c.bf16 %v7312, %v7312
    %v7314 = vld [vmem:[#allocation29] sm:$0xf]
    %v7315 = vld [vmem:[#allocation29 + $0x4] sm:$0xf]
    %v7316 = vld [vmem:[#allocation29 + $0x8] sm:$0x3]
    %v7317 = vld [vmem:[#allocation31] sm:$0x1]
    %v7319 = vlaneseq
    %v7320 = vshrl.u32 %v7319, 7
    %v7321 = vsub.s32 0, %v7320
    %v7322 = vrot.slane %v7317, %v7321
    %7325 = vrot.lane.b32.xlu0 %v7313, 108
    %v7326 = vpop.permute.xlu0 %7325
    %v7330 = vunpack.c.l.b16 %v7314
    %v7331 = vunpack.c.l.b16 %v7315
    %v7332 = vunpack.c.l.b16 %v7316
    %v7333 = vpack.c.b16 %v7331, %v7330
    %v7334 = vpack.c.b16 %v7332, %v7332
    %v7337 = vsel %vm3903, %v7326, 0
    %v7340 = vsel %vm3907, %v7334, 0
    %7342 = vmatprep.subr.bf16.mxu0 0
    %7343 = vmatpush1.bf16.msra.mxu0 %v7333
    %7344 = vmatprep.subr.bf16.mxu0 0
    %7345 = vmatpush1.bf16.msra.mxu0 %v7340
    %7346 = vmatprep.subr.bf16.mxu0 0
    %7347 = vmatpush1.bf16.msra.mxu0 0
    %7348 = vmatprep.subr.bf16.mxu0 0
    %7349 = vmatpush1.bf16.msra.mxu0 0
    %7350 = vmatprep.subr.bf16.mxu0 0
    %7351 = vmatpush1.bf16.msra.mxu0 0
    %7352 = vmatprep.subr.bf16.mxu0 0
    %7353 = vmatpush1.bf16.msra.mxu0 0
    %7354 = vmatprep.subr.bf16.mxu0 0
    %7355 = vmatpush1.bf16.msra.mxu0 0
    %7356 = vmatprep.subr.bf16.mxu0 0
    %7357 = vmatpush1.bf16.msra.mxu0 0
    %7358 = vmatprep.subr.bf16.mxu0 0
    %7359 = vmatpush1.bf16.msra.mxu0 0
    %7360 = vmatprep.subr.bf16.mxu0 0
    %7361 = vmatpush1.bf16.msra.mxu0 0
    %7362 = vmatprep.subr.bf16.mxu0 0
    %7363 = vmatpush1.bf16.msra.mxu0 0
    %7364 = vmatprep.subr.bf16.mxu0 0
    %7365 = vmatpush1.bf16.msra.mxu0 0
    %7366 = vmatprep.subr.bf16.mxu0 0
    %7367 = vmatpush1.bf16.msra.mxu0 0
    %7368 = vmatprep.subr.bf16.mxu0 0
    %7369 = vmatpush1.bf16.msra.mxu0 0
    %7370 = vmatprep.subr.bf16.mxu0 0
    %7371 = vmatpush1.bf16.msra.mxu0 0
    %7372 = vmatprep.subr.bf16.mxu0 0
    %7373 = vmatpush1.bf16.msra.mxu0 0
    %7374 = vmatprep.mubr.bf16.mxu0 0
    %7375 = vmatmul.mubr.bf16.gmra.mrb[0].mxu0 %v7337
    %v7376 = vpop.f32.mrb[0].mxu0
    %v7377 = vadd.f32 %v7322, %v7376
    %v7378 = vpop.f32.mrb[0].mxu0
    %v7379 = vpop.f32.mrb[0].mxu0
    %v7380 = vpop.f32.mrb[0].mxu0
    %7381 = vdwg.mxu0
    %v7382 = vmax.f32 %v7377, 0.0
    %v7383 = vpack.c.bf16 %v7382, %v7382
    %v7384 = vld [vmem:[#allocation32] sm:$0xf]
    %v7385 = vld [vmem:[#allocation32 + $0x4] sm:$0xf]
    %v7386 = vld [vmem:[#allocation32 + $0x8] sm:$0xf]
    %v7387 = vld [vmem:[#allocation32 + $0xc] sm:$0xf]
    %v7388 = vld [vmem:[#allocation32 + $0x10] sm:$0xf]
    %v7389 = vld [vmem:[#allocation32 + $0x14] sm:$0xf]
    %v7390 = vld [vmem:[#allocation32 + $0x18] sm:$0xf]
    %v7391 = vld [vmem:[#allocation32 + $0x1c] sm:$0xf]
    %v7392 = vld [vmem:[#allocation32 + $0x20] sm:$0xf]
    %v7393 = vld [vmem:[#allocation32 + $0x24] sm:$0xf]
    %v7394 = vld [vmem:[#allocation32 + $0x28] sm:$0xf]
    %v7395 = vld [vmem:[#allocation32 + $0x2c] sm:$0xf]
    %v7396 = vld [vmem:[#allocation32 + $0x30] sm:$0x3]
    %v7397 = vld [vmem:[#allocation34] sm:$0x1]
    %v7399 = vlaneseq
    %v7400 = vshrl.u32 %v7399, 7
    %v7401 = vsub.s32 0, %v7400
    %v7402 = vrot.slane %v7397, %v7401
    %v7417 = vunpack.c.l.b16 %v7384
    %v7418 = vunpack.c.l.b16 %v7385
    %v7419 = vunpack.c.l.b16 %v7386
    %v7420 = vunpack.c.l.b16 %v7387
    %v7421 = vunpack.c.l.b16 %v7388
    %v7422 = vunpack.c.l.b16 %v7389
    %v7423 = vunpack.c.l.b16 %v7390
    %v7424 = vunpack.c.l.b16 %v7391
    %v7425 = vunpack.c.l.b16 %v7392
    %v7426 = vunpack.c.l.b16 %v7393
    %v7427 = vunpack.c.l.b16 %v7394
    %v7428 = vunpack.c.l.b16 %v7395
    %v7429 = vunpack.c.l.b16 %v7396
    %v7430 = vpack.c.b16 %v7418, %v7417
    %v7431 = vpack.c.b16 %v7420, %v7419
    %v7432 = vpack.c.b16 %v7422, %v7421
    %v7433 = vpack.c.b16 %v7424, %v7423
    %v7434 = vpack.c.b16 %v7426, %v7425
    %v7435 = vpack.c.b16 %v7428, %v7427
    %v7436 = vpack.c.b16 %v7429, %v7429
    %vm7443 = vcmask 818176
    %v7445 = vsel %vm7443, %v7383, 0
    %v7448 = vsel %vm3907, %v7436, 0
    %7450 = vmatprep.subr.bf16.mxu0 0
    %7451 = vmatpush1.bf16.msra.mxu0 %v7430
    %7452 = vmatprep.subr.bf16.mxu0 0
    %7453 = vmatpush1.bf16.msra.mxu0 %v7431
    %7454 = vmatprep.subr.bf16.mxu0 0
    %7455 = vmatpush1.bf16.msra.mxu0 %v7432
    %7456 = vmatprep.subr.bf16.mxu0 0
    %7457 = vmatpush1.bf16.msra.mxu0 %v7433
    %7458 = vmatprep.subr.bf16.mxu0 0
    %7459 = vmatpush1.bf16.msra.mxu0 %v7434
    %7460 = vmatprep.subr.bf16.mxu0 0
    %7461 = vmatpush1.bf16.msra.mxu0 %v7435
    %7462 = vmatprep.subr.bf16.mxu0 0
    %7463 = vmatpush1.bf16.msra.mxu0 %v7448
    %7464 = vmatprep.subr.bf16.mxu0 0
    %7465 = vmatpush1.bf16.msra.mxu0 0
    %7466 = vmatprep.subr.bf16.mxu0 0
    %7467 = vmatpush1.bf16.msra.mxu0 0
    %7468 = vmatprep.subr.bf16.mxu0 0
    %7469 = vmatpush1.bf16.msra.mxu0 0
    %7470 = vmatprep.subr.bf16.mxu0 0
    %7471 = vmatpush1.bf16.msra.mxu0 0
    %7472 = vmatprep.subr.bf16.mxu0 0
    %7473 = vmatpush1.bf16.msra.mxu0 0
    %7474 = vmatprep.subr.bf16.mxu0 0
    %7475 = vmatpush1.bf16.msra.mxu0 0
    %7476 = vmatprep.subr.bf16.mxu0 0
    %7477 = vmatpush1.bf16.msra.mxu0 0
    %7478 = vmatprep.subr.bf16.mxu0 0
    %7479 = vmatpush1.bf16.msra.mxu0 0
    %7480 = vmatprep.subr.bf16.mxu0 0
    %7481 = vmatpush1.bf16.msra.mxu0 0
    %7482 = vmatprep.mubr.bf16.mxu0 0
    %7483 = vmatmul.mubr.bf16.gmra.mrb[0].mxu0 %v7445
    %v7484 = vpop.f32.mrb[0].mxu0
    %v7485 = vadd.f32 %v7402, %v7484
    %v7486 = vpop.f32.mrb[0].mxu0
    %v7487 = vpop.f32.mrb[0].mxu0
    %v7488 = vpop.f32.mrb[0].mxu0
    %7489 = vdwg.mxu0
    %v7490 = vld [vmem:[#allocation35] sm:$0xff]
    %v7491 = vadd.f32 %v7490, %v7485
    %7492 = vst [vmem:[#allocation35] sm:$0xff] %v7491
    // Predicated region
    $region170: #{tpu_custom_call.1} parent=1 // pred_check
      _
    $region171: #{tpu_custom_call.1} parent=1 // pred_check_branch
      %7494 = sbr.rel (0) target = $region173
    $region172: #{tpu_custom_call.1} parent=1 // pred_region
      %s7496 = ssub.s32 128, 128
      %7497 = vsyncadd [#allocation4], %s7496
      %s7499 = sshll.u32 [#allocation35], 4
      %s7500 = int_to_ptr.vmem [resolvable:$true] %s7499
      %7502 = dma.vmem_to_hbm [thread:$0]  %s7500, 128, %s21, [#allocation4]
    $region173: #{tpu_custom_call.1} parent=1 // pred_fallthru
      _
    // Predicated region
    $region174: #{tpu_custom_call.1} parent=1 // pred_check
      _
    $region175: #{tpu_custom_call.1} parent=1 // pred_check_branch
      %7504 = sbr.rel (0) target = $region177
    $region176: #{tpu_custom_call.1} parent=1 // pred_region
      %s7506 = ssub.s32 192, 192
      %7507 = vsyncadd [#allocation37], %s7506
      %s7509 = sshll.u32 [#allocation36], 4
      %s7510 = int_to_ptr.vmem [resolvable:$true] %s7509
      %7512 = dma.vmem_to_hbm [thread:$0]  %s7510, 192, %s22, [#allocation37]
    $region177: #{tpu_custom_call.1} parent=1 // pred_fallthru
      _
    // Predicated region
    $region178: #{tpu_custom_call.1} parent=1 // pred_check
      _
    $region179: #{tpu_custom_call.1} parent=1 // pred_check_branch
      %7514 = sbr.rel (0) target = $region181
    $region180: #{tpu_custom_call.1} parent=1 // pred_region
      %7515 = dma.done [#allocation4], 128
    $region181: #{tpu_custom_call.1} parent=1 // pred_fallthru
      _
    // Predicated region
    $region182: #{tpu_custom_call.1} parent=1 // pred_check
      _
    $region183: #{tpu_custom_call.1} parent=1 // pred_check_branch
      %7517 = sbr.rel (0) target = $region185
    $region184: #{tpu_custom_call.1} parent=1 // pred_region
      %7518 = dma.done [#allocation37], 192
    $region185: #{tpu_custom_call.1} parent=1 // pred_fallthru
      _
    %7519 = vsyncpa [#allocation3], 1
    %7520 = vsyncpa [#allocation6], 1
    %7521 = vsyncpa [#allocation9], 1
    %7522 = vsyncpa [#allocation12], 1
    %7523 = vsyncpa [#allocation15], 1
    %7524 = vsyncpa [#allocation18], 1
    %7525 = vsyncpa [#allocation21], 1
    %7526 = vsyncpa [#allocation24], 1
    %7527 = vsyncpa [#allocation27], 1
    %7528 = vsyncpa [#allocation30], 1
    %7529 = vsyncpa [#allocation33], 1
    %7530 = vsyncpa [#allocation4], 1
    %7531 = vsyncpa [#allocation37], 1

</llo_original>
